<compile_context>
chip_gen: v6e
topology: v6e:2x2x1
jax: 0.10.0
libtpu: 0.0.40
codegen_flags: <defaults>
</compile_context>

<pallas_src>
import jax
import jax.numpy as jnp
from jax import lax
from jax.experimental import pallas as pl
from jax.experimental.pallas import tpu as pltpu

LANE = 128
SUBLANE_BF16 = 16          # a bf16 VMEM tile is (16, 128)


def _round_up(x, m):
    return (x + m - 1) // m * m


def _make_kernel(T, Bp, Hp, mxu_dtype):
    f32 = jnp.float32
    H4 = 4 * Hp

    def kernel(feat_ref, wih_ref, bih_ref, whh_ref, wproj_ref, bproj_ref,
               out_ref, g_buf, h_buf):
        # ---- one hoisted input-to-hidden gate matmul for BOTH directions ----
        # (T*Bp, Din) x (Din, 8*Hp); bias folded once; stored bf16.
        g_buf[...] = (jnp.dot(feat_ref[...], wih_ref[...],
                              preferred_element_type=f32)
                      + bih_ref[...]).astype(g_buf.dtype)

        def cell(gates, c):
            # gate packing [i, f, g, o]; each gate is a 128-lane-aligned slab,
            # so these slices are plain lane-slab selects (no XLU extraction).
            i = jax.nn.sigmoid(gates[:, 0 * Hp:1 * Hp])
            f = jax.nn.sigmoid(gates[:, 1 * Hp:2 * Hp])
            g = jnp.tanh(gates[:, 2 * Hp:3 * Hp])
            o = jax.nn.sigmoid(gates[:, 3 * Hp:4 * Hp])
            c_new = f * c + i * g
            return o * jnp.tanh(c_new), c_new

        h0 = jnp.zeros((Bp, 2 * Hp), mxu_dtype)
        c0 = jnp.zeros((Bp, Hp), f32)

        def step(t, carry):
            h_cat, cf, cb = carry
            tb = T - 1 - t
            rf = pl.multiple_of(t * Bp, Bp)
            rb = pl.multiple_of(tb * Bp, Bp)
            # ONE block-diagonal recurrent matmul covers both directions
            # (K = 2*Hp = full 256-wide MXU fill on v6e/v7x).  whh_ref is read
            # inside the dot, not hoisted: the unrolled loop never has to keep
            # the (2Hp, 8Hp) weight live in vregs.
            rec = jnp.dot(h_cat, whh_ref[...], preferred_element_type=f32)
            gf = g_buf[pl.ds(rf, Bp), 0:H4].astype(f32) + rec[:, 0:H4]
            gb = g_buf[pl.ds(rb, Bp), H4:2 * H4].astype(f32) + rec[:, H4:2 * H4]
            hf, cf = cell(gf, cf)
            hb, cb = cell(gb, cb)
            # time-aligned hidden stash: fwd -> row block t, bwd -> row block
            # tb; disjoint lane slabs, so no RMW hazard even when t == tb.
            h_buf[pl.ds(rf, Bp), 0:Hp] = hf.astype(h_buf.dtype)
            h_buf[pl.ds(rb, Bp), Hp:2 * Hp] = hb.astype(h_buf.dtype)
            h_cat = jnp.concatenate([hf, hb], axis=-1).astype(mxu_dtype)
            return h_cat, cf, cb

        # bounded unroll: lets the LLO scheduler interleave the two chains and
        # hide MXU/EUP latency without blowing up imem / live ranges at large T
        lax.fori_loop(0, T, step, (h0, c0, c0), unroll=min(T, 8))

        # ---- post-loop projection: ONE well-shaped K=2*Hp MXU pass over all
        # timesteps, directly into the lane-dense f32 output.
        out_ref[...] = (jnp.dot(h_buf[...], wproj_ref[...],
                                preferred_element_type=f32)
                        + bproj_ref[...])

    return kernel


def bilstm_forward(feat, params, *, mxu_dtype=jnp.bfloat16):
    """Forward pass of BiLSTM (num_layers=1, bidirectional) + Linear projection."""
    T, B, Din = feat.shape
    H = params["whh_f"].shape[1]           # whh is (4H, H)
    OUT = params["wproj"].shape[0]
    Hp = _round_up(H, LANE)
    OUTp = _round_up(OUT, LANE)
    # pad batch to the bf16 sublane tile: all scratch accesses and all f32 cell
    # vector ops become full, unmasked tile ops; padded batch rows are sliced
    # off at the end (they never interact with real rows).
    Bp = _round_up(B, SUBLANE_BF16)

    # ---- wrapper-side glue: transpose + zero-pad so every gate / output slab
    # ---- is 128-lane aligned inside the kernel (padded lanes stay exactly 0).
    def pad_ih(w):          # (4H, Din) -> (Din, 4*Hp)
        w4 = jnp.pad(w.reshape(4, H, Din), ((0, 0), (0, Hp - H), (0, 0)))
        return w4.reshape(4 * Hp, Din).T.astype(mxu_dtype)

    def pad_hh(w):          # (4H, H) -> (Hp, 4*Hp)
        w4 = jnp.pad(w.reshape(4, H, H), ((0, 0), (0, Hp - H), (0, Hp - H)))
        return w4.reshape(4 * Hp, Hp).T.astype(mxu_dtype)

    def pad_bias(bih, bhh):  # (4H,) -> (1, 4*Hp), f32
        b = jnp.pad((bih + bhh).reshape(4, H), ((0, 0), (0, Hp - H)))
        return b.reshape(1, 4 * Hp).astype(jnp.float32)

    # fused input-to-hidden weights / bias for both directions (one MXU pass)
    wih_cat = jnp.concatenate([pad_ih(params["wih_f"]),
                               pad_ih(params["wih_b"])], axis=1)      # (Din, 8Hp)
    bih_cat = jnp.concatenate([pad_bias(params["bih_f"], params["bhh_f"]),
                               pad_bias(params["bih_b"], params["bhh_b"])],
                              axis=1)                                 # (1, 8Hp)

    # block-diagonal recurrent weight: [hf | hb] @ blockdiag(whh_f, whh_b)
    zero_hh = jnp.zeros((Hp, 4 * Hp), mxu_dtype)
    whh_bd = jnp.concatenate([
        jnp.concatenate([pad_hh(params["whh_f"]), zero_hh], axis=1),
        jnp.concatenate([zero_hh, pad_hh(params["whh_b"])], axis=1)],
        axis=0)                                                       # (2Hp, 8Hp)

    wp = params["wproj"]                                              # (OUT, 2H)

    def pad_proj(w_half):   # (OUT, H) -> (Hp, OUTp)
        return jnp.pad(w_half.T, ((0, Hp - H), (0, OUTp - OUT))).astype(mxu_dtype)

    wproj_cat = jnp.concatenate([pad_proj(wp[:, :H]), pad_proj(wp[:, H:])],
                                axis=0)                               # (2Hp, OUTp)
    bproj = jnp.pad(params["bproj"], (0, OUTp - OUT)).reshape(1, OUTp).astype(jnp.float32)

    feat_p = jnp.pad(feat, ((0, 0), (0, Bp - B), (0, 0)))
    args = (
        feat_p.reshape(T * Bp, Din).astype(mxu_dtype),
        wih_cat, bih_cat, whh_bd, wproj_cat, bproj,
    )

    itemsize = jnp.dtype(mxu_dtype).itemsize
    arg_bytes = sum(int(a.size) * a.dtype.itemsize for a in args)
    out_bytes = T * Bp * OUTp * 4
    scratch_bytes = T * Bp * (8 * Hp + 2 * Hp) * itemsize
    needed = arg_bytes + out_bytes + scratch_bytes
    # size the VMEM limit from the actual footprint + per-generation capacity
    try:
        vmem_phys = int(pltpu.get_tpu_info().vmem_capacity_bytes)
    except Exception:
        vmem_phys = 64 * 1024 * 1024          # conservative: v7x per-TC VMEM
    cap = max(vmem_phys - (16 << 20), 32 << 20)   # leave compiler headroom
    vmem_limit = int(min(max(needed + (4 << 20), 32 << 20), cap))

    flops = int(2 * T * Bp * Din * 8 * Hp          # hoisted input-gate matmul
                + T * 2 * Bp * 2 * Hp * 8 * Hp     # block-diag recurrent matmuls
                + 2 * T * Bp * 2 * Hp * OUTp)      # post-loop projection
    transcendentals = int(T * Bp * 2 * 5 * Hp)
    bytes_accessed = int(arg_bytes + out_bytes)

    vmem = pl.BlockSpec(memory_space=pltpu.MemorySpace.VMEM)
    kernel = _make_kernel(T, Bp, Hp, mxu_dtype)
    out_padded = pl.pallas_call(
        kernel,
        out_shape=jax.ShapeDtypeStruct((T * Bp, OUTp), jnp.float32),
        in_specs=[vmem] * len(args),
        out_specs=vmem,
        scratch_shapes=[
            pltpu.VMEM((T * Bp, 8 * Hp), mxu_dtype),   # fused input-gate precompute
            pltpu.VMEM((T * Bp, 2 * Hp), mxu_dtype),   # time-aligned [hf | hb] stash
        ],
        compiler_params=pltpu.CompilerParams(vmem_limit_bytes=vmem_limit),
        cost_estimate=pl.CostEstimate(flops=flops,
                                      transcendentals=transcendentals,
                                      bytes_accessed=bytes_accessed),
    )(*args)

    # strip batch / lane padding outside the kernel
    return out_padded.reshape(T, Bp, OUTp)[:, :B, :OUT]


def _ref_bilstm(feat, params):
    """Pure-JAX f32 reference matching PyTorch nn.LSTM(bidirectional) + Linear."""
    def direction(wih, whh, bih, bhh, xs):
        H = whh.shape[1]
        def step(carry, x):
            h, c = carry
            g = x @ wih.T + h @ whh.T + bih + bhh
            i, f, gg, o = jnp.split(g, 4, axis=-1)
            i, f, o = jax.nn.sigmoid(i), jax.nn.sigmoid(f), jax.nn.sigmoid(o)
            c = f * c + i * jnp.tanh(gg)
            h = o * jnp.tanh(c)
            return (h, c), h
        B = xs.shape[1]
        init = (jnp.zeros((B, H)), jnp.zeros((B, H)))
        _, hs = lax.scan(step, init, xs)
        return hs
    hf = direction(params["wih_f"], params["whh_f"],
                   params["bih_f"], params["bhh_f"], feat)
    hb = direction(params["wih_b"], params["whh_b"],
                   params["bih_b"], params["bhh_b"], feat[::-1])[::-1]
    h = jnp.concatenate([hf, hb], axis=-1)
    return h @ params["wproj"].T + params["bproj"]


if __name__ == "__main__":
    T, B, Din, H, OUT = 8, 2, 16, 32, 16       # num_layers=1, bidirectional
    key = jax.random.PRNGKey(0)
    ks = jax.random.split(key, 11)
    scale = 1.0 / jnp.sqrt(jnp.float32(H))

    def u(k, shape):
        return jax.random.uniform(k, shape, jnp.float32, -scale, scale)

    params = dict(
        wih_f=u(ks[0], (4 * H, Din)), whh_f=u(ks[1], (4 * H, H)),
        bih_f=u(ks[2], (4 * H,)),     bhh_f=u(ks[3], (4 * H,)),
        wih_b=u(ks[4], (4 * H, Din)), whh_b=u(ks[5], (4 * H, H)),
        bih_b=u(ks[6], (4 * H,)),     bhh_b=u(ks[7], (4 * H,)),
        wproj=u(ks[8], (OUT, 2 * H)), bproj=u(ks[9], (OUT,)),
    )
    feat = jax.random.normal(ks[10], (T, B, Din), jnp.float32)

    out = bilstm_forward(feat, params)
    jax.block_until_ready(out)
    assert out.shape == (T, B, OUT) and out.dtype == jnp.float32

    ref = _ref_bilstm(feat, params)
    err = float(jnp.max(jnp.abs(out - ref)))
    assert err < 5e-2, f"max abs error vs f32 reference too large: {err}"
    print("KERNEL_OK")
</pallas_src>

<mosaic_0001>
module attributes {stable_mosaic.version = 11 : i64} {
  func.func @kernel(%arg0: memref<128x16xbf16, #tpu.memory_space<vmem>>, %arg1: memref<16x1024xbf16, #tpu.memory_space<vmem>>, %arg2: memref<1x1024xf32, #tpu.memory_space<vmem>>, %arg3: memref<256x1024xbf16, #tpu.memory_space<vmem>>, %arg4: memref<256x128xbf16, #tpu.memory_space<vmem>>, %arg5: memref<1x128xf32, #tpu.memory_space<vmem>>, %arg6: memref<128x128xf32, #tpu.memory_space<vmem>>, %arg7: memref<128x1024xbf16, #tpu.memory_space<vmem>>, %arg8: memref<128x256xbf16, #tpu.memory_space<vmem>>) attributes {dimension_semantics = [], scalar_prefetch = 0 : i64, scratch_operands = 2 : i64, tpu.core_type = #tpu.core_type<tc>} {
    %c0 = arith.constant 0 : index
    %c0_0 = arith.constant 0 : index
    %0 = vector.load %arg0[%c0, %c0_0] : memref<128x16xbf16, #tpu.memory_space<vmem>>, vector<128x16xbf16>
    %c0_1 = arith.constant 0 : index
    %c0_2 = arith.constant 0 : index
    %1 = vector.load %arg1[%c0_1, %c0_2] : memref<16x1024xbf16, #tpu.memory_space<vmem>>, vector<16x1024xbf16>
    %cst = arith.constant dense<0.000000e+00> : vector<128x1024xf32>
    %2 = tpu.matmul %0, %1, %cst {dimension_numbers = #tpu.dot_dimension_numbers<[1], [0], [0], [1], [0, 0, 1, 1], [], []>} : vector<128x16xbf16>, vector<16x1024xbf16>, vector<128x1024xf32> -> vector<128x1024xf32>
    %c0_3 = arith.constant 0 : index
    %c0_4 = arith.constant 0 : index
    %3 = vector.load %arg2[%c0_3, %c0_4] : memref<1x1024xf32, #tpu.memory_space<vmem>>, vector<1x1024xf32>
    %4 = vector.broadcast %3 : vector<1x1024xf32> to vector<128x1024xf32>
    %5 = arith.addf %2, %4 : vector<128x1024xf32>
    %6 = arith.truncf %5 : vector<128x1024xf32> to vector<128x1024xbf16>
    %c0_5 = arith.constant 0 : index
    %c0_6 = arith.constant 0 : index
    %7 = vector.load %arg7[%c0_5, %c0_6] : memref<128x1024xbf16, #tpu.memory_space<vmem>>, vector<128x1024xbf16>
    tpu.vector_store %arg7[%c0_5, %c0_6], %6 {strides = array<i32>} : memref<128x1024xbf16, #tpu.memory_space<vmem>>, vector<128x1024xbf16>,
    %cst_7 = arith.constant 0.000000e+00 : bf16
    %8 = vector.broadcast %cst_7 : bf16 to vector<16x256xbf16>
    %cst_8 = arith.constant 0.000000e+00 : f32
    %9 = vector.broadcast %cst_8 : f32 to vector<16x128xf32>
    %c0_i32 = arith.constant 0 : i32
    %c7_i32 = arith.constant 7 : i32
    %10 = arith.subi %c7_i32, %c0_i32 : i32
    %c16_i32 = arith.constant 16 : i32
    %11 = arith.muli %c0_i32, %c16_i32 : i32
    %12 = tpu.assume_multiple %11, 16 : i32
    %c16_i32_9 = arith.constant 16 : i32
    %13 = arith.muli %10, %c16_i32_9 : i32
    %14 = tpu.assume_multiple %13, 16 : i32
    %c0_10 = arith.constant 0 : index
    %c0_11 = arith.constant 0 : index
    %15 = vector.load %arg3[%c0_10, %c0_11] : memref<256x1024xbf16, #tpu.memory_space<vmem>>, vector<256x1024xbf16>
    %cst_12 = arith.constant dense<0.000000e+00> : vector<16x1024xf32>
    %16 = tpu.matmul %8, %15, %cst_12 {dimension_numbers = #tpu.dot_dimension_numbers<[1], [0], [0], [1], [0, 0, 1, 1], [], []>} : vector<16x256xbf16>, vector<256x1024xbf16>, vector<16x1024xf32> -> vector<16x1024xf32>
    %17 = arith.index_cast %12 : i32 to index
    %c0_13 = arith.constant 0 : index
    %18 = vector.load %arg7[%17, %c0_13] : memref<128x1024xbf16, #tpu.memory_space<vmem>>, vector<16x512xbf16>
    %19 = arith.extf %18 : vector<16x512xbf16> to vector<16x512xf32>
    %20 = vector.extract_strided_slice %16 {offsets = [0, 0], sizes = [16, 512], strides = [1, 1]} : vector<16x1024xf32> to vector<16x512xf32>
    %21 = arith.addf %19, %20 : vector<16x512xf32>
    %22 = arith.index_cast %14 : i32 to index
    %c512 = arith.constant 512 : index
    %23 = vector.load %arg7[%22, %c512] : memref<128x1024xbf16, #tpu.memory_space<vmem>>, vector<16x512xbf16>
    %24 = arith.extf %23 : vector<16x512xbf16> to vector<16x512xf32>
    %25 = vector.extract_strided_slice %16 {offsets = [0, 512], sizes = [16, 512], strides = [1, 1]} : vector<16x1024xf32> to vector<16x512xf32>
    %26 = arith.addf %24, %25 : vector<16x512xf32>
    %27 = vector.extract_strided_slice %21 {offsets = [0, 0], sizes = [16, 128], strides = [1, 1]} : vector<16x512xf32> to vector<16x128xf32>
    %28 = arith.negf %27 : vector<16x128xf32>
    %29 = math.exp %28 : vector<16x128xf32>
    %cst_14 = arith.constant 1.000000e+00 : f32
    %30 = vector.broadcast %cst_14 : f32 to vector<16x128xf32>
    %31 = arith.addf %30, %29 : vector<16x128xf32>
    %32 = arith.divf %30, %31 : vector<16x128xf32>
    %33 = vector.extract_strided_slice %21 {offsets = [0, 128], sizes = [16, 128], strides = [1, 1]} : vector<16x512xf32> to vector<16x128xf32>
    %34 = arith.negf %33 : vector<16x128xf32>
    %35 = math.exp %34 : vector<16x128xf32>
    %cst_15 = arith.constant 1.000000e+00 : f32
    %36 = vector.broadcast %cst_15 : f32 to vector<16x128xf32>
    %37 = arith.addf %36, %35 : vector<16x128xf32>
    %38 = arith.divf %36, %37 : vector<16x128xf32>
    %39 = vector.extract_strided_slice %21 {offsets = [0, 256], sizes = [16, 128], strides = [1, 1]} : vector<16x512xf32> to vector<16x128xf32>
    %40 = math.tanh %39 : vector<16x128xf32>
    %41 = vector.extract_strided_slice %21 {offsets = [0, 384], sizes = [16, 128], strides = [1, 1]} : vector<16x512xf32> to vector<16x128xf32>
    %42 = arith.negf %41 : vector<16x128xf32>
    %43 = math.exp %42 : vector<16x128xf32>
    %cst_16 = arith.constant 1.000000e+00 : f32
    %44 = vector.broadcast %cst_16 : f32 to vector<16x128xf32>
    %45 = arith.addf %44, %43 : vector<16x128xf32>
    %46 = arith.divf %44, %45 : vector<16x128xf32>
    %47 = arith.mulf %38, %9 : vector<16x128xf32>
    %48 = arith.mulf %32, %40 : vector<16x128xf32>
    %49 = arith.addf %47, %48 : vector<16x128xf32>
    %50 = math.tanh %49 : vector<16x128xf32>
    %51 = arith.mulf %46, %50 : vector<16x128xf32>
    %52 = vector.extract_strided_slice %26 {offsets = [0, 0], sizes = [16, 128], strides = [1, 1]} : vector<16x512xf32> to vector<16x128xf32>
    %53 = arith.negf %52 : vector<16x128xf32>
    %54 = math.exp %53 : vector<16x128xf32>
    %cst_17 = arith.constant 1.000000e+00 : f32
    %55 = vector.broadcast %cst_17 : f32 to vector<16x128xf32>
    %56 = arith.addf %55, %54 : vector<16x128xf32>
    %57 = arith.divf %55, %56 : vector<16x128xf32>
    %58 = vector.extract_strided_slice %26 {offsets = [0, 128], sizes = [16, 128], strides = [1, 1]} : vector<16x512xf32> to vector<16x128xf32>
    %59 = arith.negf %58 : vector<16x128xf32>
    %60 = math.exp %59 : vector<16x128xf32>
    %cst_18 = arith.constant 1.000000e+00 : f32
    %61 = vector.broadcast %cst_18 : f32 to vector<16x128xf32>
    %62 = arith.addf %61, %60 : vector<16x128xf32>
    %63 = arith.divf %61, %62 : vector<16x128xf32>
    %64 = vector.extract_strided_slice %26 {offsets = [0, 256], sizes = [16, 128], strides = [1, 1]} : vector<16x512xf32> to vector<16x128xf32>
    %65 = math.tanh %64 : vector<16x128xf32>
    %66 = vector.extract_strided_slice %26 {offsets = [0, 384], sizes = [16, 128], strides = [1, 1]} : vector<16x512xf32> to vector<16x128xf32>
    %67 = arith.negf %66 : vector<16x128xf32>
    %68 = math.exp %67 : vector<16x128xf32>
    %cst_19 = arith.constant 1.000000e+00 : f32
    %69 = vector.broadcast %cst_19 : f32 to vector<16x128xf32>
    %70 = arith.addf %69, %68 : vector<16x128xf32>
    %71 = arith.divf %69, %70 : vector<16x128xf32>
    %72 = arith.mulf %63, %9 : vector<16x128xf32>
    %73 = arith.mulf %57, %65 : vector<16x128xf32>
    %74 = arith.addf %72, %73 : vector<16x128xf32>
    %75 = math.tanh %74 : vector<16x128xf32>
    %76 = arith.mulf %71, %75 : vector<16x128xf32>
    %77 = arith.truncf %51 : vector<16x128xf32> to vector<16x128xbf16>
    %78 = arith.index_cast %12 : i32 to index
    %c0_20 = arith.constant 0 : index
    %79 = vector.load %arg8[%78, %c0_20] : memref<128x256xbf16, #tpu.memory_space<vmem>>, vector<16x128xbf16>
    tpu.vector_store %arg8[%78, %c0_20], %77 {strides = array<i32>} : memref<128x256xbf16, #tpu.memory_space<vmem>>, vector<16x128xbf16>,
    %80 = arith.truncf %76 : vector<16x128xf32> to vector<16x128xbf16>
    %81 = arith.index_cast %14 : i32 to index
    %c128 = arith.constant 128 : index
    %82 = vector.load %arg8[%81, %c128] : memref<128x256xbf16, #tpu.memory_space<vmem>>, vector<16x128xbf16>
    tpu.vector_store %arg8[%81, %c128], %80 {strides = array<i32>} : memref<128x256xbf16, #tpu.memory_space<vmem>>, vector<16x128xbf16>,
    %83 = tpu.concatenate %51, %76 in 1 : vector<16x128xf32>, vector<16x128xf32> -> vector<16x256xf32>
    %84 = arith.truncf %83 : vector<16x256xf32> to vector<16x256xbf16>
    %c1_i32 = arith.constant 1 : i32
    %c7_i32_21 = arith.constant 7 : i32
    %85 = arith.subi %c7_i32_21, %c1_i32 : i32
    %c16_i32_22 = arith.constant 16 : i32
    %86 = arith.muli %c1_i32, %c16_i32_22 : i32
    %87 = tpu.assume_multiple %86, 16 : i32
    %c16_i32_23 = arith.constant 16 : i32
    %88 = arith.muli %85, %c16_i32_23 : i32
    %89 = tpu.assume_multiple %88, 16 : i32
    %c0_24 = arith.constant 0 : index
    %c0_25 = arith.constant 0 : index
    %90 = vector.load %arg3[%c0_24, %c0_25] : memref<256x1024xbf16, #tpu.memory_space<vmem>>, vector<256x1024xbf16>
    %cst_26 = arith.constant dense<0.000000e+00> : vector<16x1024xf32>
    %91 = tpu.matmul %84, %90, %cst_26 {dimension_numbers = #tpu.dot_dimension_numbers<[1], [0], [0], [1], [0, 0, 1, 1], [], []>} : vector<16x256xbf16>, vector<256x1024xbf16>, vector<16x1024xf32> -> vector<16x1024xf32>
    %92 = arith.index_cast %87 : i32 to index
    %c0_27 = arith.constant 0 : index
    %93 = vector.load %arg7[%92, %c0_27] : memref<128x1024xbf16, #tpu.memory_space<vmem>>, vector<16x512xbf16>
    %94 = arith.extf %93 : vector<16x512xbf16> to vector<16x512xf32>
    %95 = vector.extract_strided_slice %91 {offsets = [0, 0], sizes = [16, 512], strides = [1, 1]} : vector<16x1024xf32> to vector<16x512xf32>
    %96 = arith.addf %94, %95 : vector<16x512xf32>
    %97 = arith.index_cast %89 : i32 to index
    %c512_28 = arith.constant 512 : index
    %98 = vector.load %arg7[%97, %c512_28] : memref<128x1024xbf16, #tpu.memory_space<vmem>>, vector<16x512xbf16>
    %99 = arith.extf %98 : vector<16x512xbf16> to vector<16x512xf32>
    %100 = vector.extract_strided_slice %91 {offsets = [0, 512], sizes = [16, 512], strides = [1, 1]} : vector<16x1024xf32> to vector<16x512xf32>
    %101 = arith.addf %99, %100 : vector<16x512xf32>
    %102 = vector.extract_strided_slice %96 {offsets = [0, 0], sizes = [16, 128], strides = [1, 1]} : vector<16x512xf32> to vector<16x128xf32>
    %103 = arith.negf %102 : vector<16x128xf32>
    %104 = math.exp %103 : vector<16x128xf32>
    %cst_29 = arith.constant 1.000000e+00 : f32
    %105 = vector.broadcast %cst_29 : f32 to vector<16x128xf32>
    %106 = arith.addf %105, %104 : vector<16x128xf32>
    %107 = arith.divf %105, %106 : vector<16x128xf32>
    %108 = vector.extract_strided_slice %96 {offsets = [0, 128], sizes = [16, 128], strides = [1, 1]} : vector<16x512xf32> to vector<16x128xf32>
    %109 = arith.negf %108 : vector<16x128xf32>
    %110 = math.exp %109 : vector<16x128xf32>
    %cst_30 = arith.constant 1.000000e+00 : f32
    %111 = vector.broadcast %cst_30 : f32 to vector<16x128xf32>
    %112 = arith.addf %111, %110 : vector<16x128xf32>
    %113 = arith.divf %111, %112 : vector<16x128xf32>
    %114 = vector.extract_strided_slice %96 {offsets = [0, 256], sizes = [16, 128], strides = [1, 1]} : vector<16x512xf32> to vector<16x128xf32>
    %115 = math.tanh %114 : vector<16x128xf32>
    %116 = vector.extract_strided_slice %96 {offsets = [0, 384], sizes = [16, 128], strides = [1, 1]} : vector<16x512xf32> to vector<16x128xf32>
    %117 = arith.negf %116 : vector<16x128xf32>
    %118 = math.exp %117 : vector<16x128xf32>
    %cst_31 = arith.constant 1.000000e+00 : f32
    %119 = vector.broadcast %cst_31 : f32 to vector<16x128xf32>
    %120 = arith.addf %119, %118 : vector<16x128xf32>
    %121 = arith.divf %119, %120 : vector<16x128xf32>
    %122 = arith.mulf %113, %49 : vector<16x128xf32>
    %123 = arith.mulf %107, %115 : vector<16x128xf32>
    %124 = arith.addf %122, %123 : vector<16x128xf32>
    %125 = math.tanh %124 : vector<16x128xf32>
    %126 = arith.mulf %121, %125 : vector<16x128xf32>
    %127 = vector.extract_strided_slice %101 {offsets = [0, 0], sizes = [16, 128], strides = [1, 1]} : vector<16x512xf32> to vector<16x128xf32>
    %128 = arith.negf %127 : vector<16x128xf32>
    %129 = math.exp %128 : vector<16x128xf32>
    %cst_32 = arith.constant 1.000000e+00 : f32
    %130 = vector.broadcast %cst_32 : f32 to vector<16x128xf32>
    %131 = arith.addf %130, %129 : vector<16x128xf32>
    %132 = arith.divf %130, %131 : vector<16x128xf32>
    %133 = vector.extract_strided_slice %101 {offsets = [0, 128], sizes = [16, 128], strides = [1, 1]} : vector<16x512xf32> to vector<16x128xf32>
    %134 = arith.negf %133 : vector<16x128xf32>
    %135 = math.exp %134 : vector<16x128xf32>
    %cst_33 = arith.constant 1.000000e+00 : f32
    %136 = vector.broadcast %cst_33 : f32 to vector<16x128xf32>
    %137 = arith.addf %136, %135 : vector<16x128xf32>
    %138 = arith.divf %136, %137 : vector<16x128xf32>
    %139 = vector.extract_strided_slice %101 {offsets = [0, 256], sizes = [16, 128], strides = [1, 1]} : vector<16x512xf32> to vector<16x128xf32>
    %140 = math.tanh %139 : vector<16x128xf32>
    %141 = vector.extract_strided_slice %101 {offsets = [0, 384], sizes = [16, 128], strides = [1, 1]} : vector<16x512xf32> to vector<16x128xf32>
    %142 = arith.negf %141 : vector<16x128xf32>
    %143 = math.exp %142 : vector<16x128xf32>
    %cst_34 = arith.constant 1.000000e+00 : f32
    %144 = vector.broadcast %cst_34 : f32 to vector<16x128xf32>
    %145 = arith.addf %144, %143 : vector<16x128xf32>
    %146 = arith.divf %144, %145 : vector<16x128xf32>
    %147 = arith.mulf %138, %74 : vector<16x128xf32>
    %148 = arith.mulf %132, %140 : vector<16x128xf32>
    %149 = arith.addf %147, %148 : vector<16x128xf32>
    %150 = math.tanh %149 : vector<16x128xf32>
    %151 = arith.mulf %146, %150 : vector<16x128xf32>
    %152 = arith.truncf %126 : vector<16x128xf32> to vector<16x128xbf16>
    %153 = arith.index_cast %87 : i32 to index
    %c0_35 = arith.constant 0 : index
    %154 = vector.load %arg8[%153, %c0_35] : memref<128x256xbf16, #tpu.memory_space<vmem>>, vector<16x128xbf16>
    tpu.vector_store %arg8[%153, %c0_35], %152 {strides = array<i32>} : memref<128x256xbf16, #tpu.memory_space<vmem>>, vector<16x128xbf16>,
    %155 = arith.truncf %151 : vector<16x128xf32> to vector<16x128xbf16>
    %156 = arith.index_cast %89 : i32 to index
    %c128_36 = arith.constant 128 : index
    %157 = vector.load %arg8[%156, %c128_36] : memref<128x256xbf16, #tpu.memory_space<vmem>>, vector<16x128xbf16>
    tpu.vector_store %arg8[%156, %c128_36], %155 {strides = array<i32>} : memref<128x256xbf16, #tpu.memory_space<vmem>>, vector<16x128xbf16>,
    %158 = tpu.concatenate %126, %151 in 1 : vector<16x128xf32>, vector<16x128xf32> -> vector<16x256xf32>
    %159 = arith.truncf %158 : vector<16x256xf32> to vector<16x256xbf16>
    %c2_i32 = arith.constant 2 : i32
    %c7_i32_37 = arith.constant 7 : i32
    %160 = arith.subi %c7_i32_37, %c2_i32 : i32
    %c16_i32_38 = arith.constant 16 : i32
    %161 = arith.muli %c2_i32, %c16_i32_38 : i32
    %162 = tpu.assume_multiple %161, 16 : i32
    %c16_i32_39 = arith.constant 16 : i32
    %163 = arith.muli %160, %c16_i32_39 : i32
    %164 = tpu.assume_multiple %163, 16 : i32
    %c0_40 = arith.constant 0 : index
    %c0_41 = arith.constant 0 : index
    %165 = vector.load %arg3[%c0_40, %c0_41] : memref<256x1024xbf16, #tpu.memory_space<vmem>>, vector<256x1024xbf16>
    %cst_42 = arith.constant dense<0.000000e+00> : vector<16x1024xf32>
    %166 = tpu.matmul %159, %165, %cst_42 {dimension_numbers = #tpu.dot_dimension_numbers<[1], [0], [0], [1], [0, 0, 1, 1], [], []>} : vector<16x256xbf16>, vector<256x1024xbf16>, vector<16x1024xf32> -> vector<16x1024xf32>
    %167 = arith.index_cast %162 : i32 to index
    %c0_43 = arith.constant 0 : index
    %168 = vector.load %arg7[%167, %c0_43] : memref<128x1024xbf16, #tpu.memory_space<vmem>>, vector<16x512xbf16>
    %169 = arith.extf %168 : vector<16x512xbf16> to vector<16x512xf32>
    %170 = vector.extract_strided_slice %166 {offsets = [0, 0], sizes = [16, 512], strides = [1, 1]} : vector<16x1024xf32> to vector<16x512xf32>
    %171 = arith.addf %169, %170 : vector<16x512xf32>
    %172 = arith.index_cast %164 : i32 to index
    %c512_44 = arith.constant 512 : index
    %173 = vector.load %arg7[%172, %c512_44] : memref<128x1024xbf16, #tpu.memory_space<vmem>>, vector<16x512xbf16>
    %174 = arith.extf %173 : vector<16x512xbf16> to vector<16x512xf32>
    %175 = vector.extract_strided_slice %166 {offsets = [0, 512], sizes = [16, 512], strides = [1, 1]} : vector<16x1024xf32> to vector<16x512xf32>
    %176 = arith.addf %174, %175 : vector<16x512xf32>
    %177 = vector.extract_strided_slice %171 {offsets = [0, 0], sizes = [16, 128], strides = [1, 1]} : vector<16x512xf32> to vector<16x128xf32>
    %178 = arith.negf %177 : vector<16x128xf32>
    %179 = math.exp %178 : vector<16x128xf32>
    %cst_45 = arith.constant 1.000000e+00 : f32
    %180 = vector.broadcast %cst_45 : f32 to vector<16x128xf32>
    %181 = arith.addf %180, %179 : vector<16x128xf32>
    %182 = arith.divf %180, %181 : vector<16x128xf32>
    %183 = vector.extract_strided_slice %171 {offsets = [0, 128], sizes = [16, 128], strides = [1, 1]} : vector<16x512xf32> to vector<16x128xf32>
    %184 = arith.negf %183 : vector<16x128xf32>
    %185 = math.exp %184 : vector<16x128xf32>
    %cst_46 = arith.constant 1.000000e+00 : f32
    %186 = vector.broadcast %cst_46 : f32 to vector<16x128xf32>
    %187 = arith.addf %186, %185 : vector<16x128xf32>
    %188 = arith.divf %186, %187 : vector<16x128xf32>
    %189 = vector.extract_strided_slice %171 {offsets = [0, 256], sizes = [16, 128], strides = [1, 1]} : vector<16x512xf32> to vector<16x128xf32>
    %190 = math.tanh %189 : vector<16x128xf32>
    %191 = vector.extract_strided_slice %171 {offsets = [0, 384], sizes = [16, 128], strides = [1, 1]} : vector<16x512xf32> to vector<16x128xf32>
    %192 = arith.negf %191 : vector<16x128xf32>
    %193 = math.exp %192 : vector<16x128xf32>
    %cst_47 = arith.constant 1.000000e+00 : f32
    %194 = vector.broadcast %cst_47 : f32 to vector<16x128xf32>
    %195 = arith.addf %194, %193 : vector<16x128xf32>
    %196 = arith.divf %194, %195 : vector<16x128xf32>
    %197 = arith.mulf %188, %124 : vector<16x128xf32>
    %198 = arith.mulf %182, %190 : vector<16x128xf32>
    %199 = arith.addf %197, %198 : vector<16x128xf32>
    %200 = math.tanh %199 : vector<16x128xf32>
    %201 = arith.mulf %196, %200 : vector<16x128xf32>
    %202 = vector.extract_strided_slice %176 {offsets = [0, 0], sizes = [16, 128], strides = [1, 1]} : vector<16x512xf32> to vector<16x128xf32>
    %203 = arith.negf %202 : vector<16x128xf32>
    %204 = math.exp %203 : vector<16x128xf32>
    %cst_48 = arith.constant 1.000000e+00 : f32
    %205 = vector.broadcast %cst_48 : f32 to vector<16x128xf32>
    %206 = arith.addf %205, %204 : vector<16x128xf32>
    %207 = arith.divf %205, %206 : vector<16x128xf32>
    %208 = vector.extract_strided_slice %176 {offsets = [0, 128], sizes = [16, 128], strides = [1, 1]} : vector<16x512xf32> to vector<16x128xf32>
    %209 = arith.negf %208 : vector<16x128xf32>
    %210 = math.exp %209 : vector<16x128xf32>
    %cst_49 = arith.constant 1.000000e+00 : f32
    %211 = vector.broadcast %cst_49 : f32 to vector<16x128xf32>
    %212 = arith.addf %211, %210 : vector<16x128xf32>
    %213 = arith.divf %211, %212 : vector<16x128xf32>
    %214 = vector.extract_strided_slice %176 {offsets = [0, 256], sizes = [16, 128], strides = [1, 1]} : vector<16x512xf32> to vector<16x128xf32>
    %215 = math.tanh %214 : vector<16x128xf32>
    %216 = vector.extract_strided_slice %176 {offsets = [0, 384], sizes = [16, 128], strides = [1, 1]} : vector<16x512xf32> to vector<16x128xf32>
    %217 = arith.negf %216 : vector<16x128xf32>
    %218 = math.exp %217 : vector<16x128xf32>
    %cst_50 = arith.constant 1.000000e+00 : f32
    %219 = vector.broadcast %cst_50 : f32 to vector<16x128xf32>
    %220 = arith.addf %219, %218 : vector<16x128xf32>
    %221 = arith.divf %219, %220 : vector<16x128xf32>
    %222 = arith.mulf %213, %149 : vector<16x128xf32>
    %223 = arith.mulf %207, %215 : vector<16x128xf32>
    %224 = arith.addf %222, %223 : vector<16x128xf32>
    %225 = math.tanh %224 : vector<16x128xf32>
    %226 = arith.mulf %221, %225 : vector<16x128xf32>
    %227 = arith.truncf %201 : vector<16x128xf32> to vector<16x128xbf16>
    %228 = arith.index_cast %162 : i32 to index
    %c0_51 = arith.constant 0 : index
    %229 = vector.load %arg8[%228, %c0_51] : memref<128x256xbf16, #tpu.memory_space<vmem>>, vector<16x128xbf16>
    tpu.vector_store %arg8[%228, %c0_51], %227 {strides = array<i32>} : memref<128x256xbf16, #tpu.memory_space<vmem>>, vector<16x128xbf16>,
    %230 = arith.truncf %226 : vector<16x128xf32> to vector<16x128xbf16>
    %231 = arith.index_cast %164 : i32 to index
    %c128_52 = arith.constant 128 : index
    %232 = vector.load %arg8[%231, %c128_52] : memref<128x256xbf16, #tpu.memory_space<vmem>>, vector<16x128xbf16>
    tpu.vector_store %arg8[%231, %c128_52], %230 {strides = array<i32>} : memref<128x256xbf16, #tpu.memory_space<vmem>>, vector<16x128xbf16>,
    %233 = tpu.concatenate %201, %226 in 1 : vector<16x128xf32>, vector<16x128xf32> -> vector<16x256xf32>
    %234 = arith.truncf %233 : vector<16x256xf32> to vector<16x256xbf16>
    %c3_i32 = arith.constant 3 : i32
    %c7_i32_53 = arith.constant 7 : i32
    %235 = arith.subi %c7_i32_53, %c3_i32 : i32
    %c16_i32_54 = arith.constant 16 : i32
    %236 = arith.muli %c3_i32, %c16_i32_54 : i32
    %237 = tpu.assume_multiple %236, 16 : i32
    %c16_i32_55 = arith.constant 16 : i32
    %238 = arith.muli %235, %c16_i32_55 : i32
    %239 = tpu.assume_multiple %238, 16 : i32
    %c0_56 = arith.constant 0 : index
    %c0_57 = arith.constant 0 : index
    %240 = vector.load %arg3[%c0_56, %c0_57] : memref<256x1024xbf16, #tpu.memory_space<vmem>>, vector<256x1024xbf16>
    %cst_58 = arith.constant dense<0.000000e+00> : vector<16x1024xf32>
    %241 = tpu.matmul %234, %240, %cst_58 {dimension_numbers = #tpu.dot_dimension_numbers<[1], [0], [0], [1], [0, 0, 1, 1], [], []>} : vector<16x256xbf16>, vector<256x1024xbf16>, vector<16x1024xf32> -> vector<16x1024xf32>
    %242 = arith.index_cast %237 : i32 to index
    %c0_59 = arith.constant 0 : index
    %243 = vector.load %arg7[%242, %c0_59] : memref<128x1024xbf16, #tpu.memory_space<vmem>>, vector<16x512xbf16>
    %244 = arith.extf %243 : vector<16x512xbf16> to vector<16x512xf32>
    %245 = vector.extract_strided_slice %241 {offsets = [0, 0], sizes = [16, 512], strides = [1, 1]} : vector<16x1024xf32> to vector<16x512xf32>
    %246 = arith.addf %244, %245 : vector<16x512xf32>
    %247 = arith.index_cast %239 : i32 to index
    %c512_60 = arith.constant 512 : index
    %248 = vector.load %arg7[%247, %c512_60] : memref<128x1024xbf16, #tpu.memory_space<vmem>>, vector<16x512xbf16>
    %249 = arith.extf %248 : vector<16x512xbf16> to vector<16x512xf32>
    %250 = vector.extract_strided_slice %241 {offsets = [0, 512], sizes = [16, 512], strides = [1, 1]} : vector<16x1024xf32> to vector<16x512xf32>
    %251 = arith.addf %249, %250 : vector<16x512xf32>
    %252 = vector.extract_strided_slice %246 {offsets = [0, 0], sizes = [16, 128], strides = [1, 1]} : vector<16x512xf32> to vector<16x128xf32>
    %253 = arith.negf %252 : vector<16x128xf32>
    %254 = math.exp %253 : vector<16x128xf32>
    %cst_61 = arith.constant 1.000000e+00 : f32
    %255 = vector.broadcast %cst_61 : f32 to vector<16x128xf32>
    %256 = arith.addf %255, %254 : vector<16x128xf32>
    %257 = arith.divf %255, %256 : vector<16x128xf32>
    %258 = vector.extract_strided_slice %246 {offsets = [0, 128], sizes = [16, 128], strides = [1, 1]} : vector<16x512xf32> to vector<16x128xf32>
    %259 = arith.negf %258 : vector<16x128xf32>
    %260 = math.exp %259 : vector<16x128xf32>
    %cst_62 = arith.constant 1.000000e+00 : f32
    %261 = vector.broadcast %cst_62 : f32 to vector<16x128xf32>
    %262 = arith.addf %261, %260 : vector<16x128xf32>
    %263 = arith.divf %261, %262 : vector<16x128xf32>
    %264 = vector.extract_strided_slice %246 {offsets = [0, 256], sizes = [16, 128], strides = [1, 1]} : vector<16x512xf32> to vector<16x128xf32>
    %265 = math.tanh %264 : vector<16x128xf32>
    %266 = vector.extract_strided_slice %246 {offsets = [0, 384], sizes = [16, 128], strides = [1, 1]} : vector<16x512xf32> to vector<16x128xf32>
    %267 = arith.negf %266 : vector<16x128xf32>
    %268 = math.exp %267 : vector<16x128xf32>
    %cst_63 = arith.constant 1.000000e+00 : f32
    %269 = vector.broadcast %cst_63 : f32 to vector<16x128xf32>
    %270 = arith.addf %269, %268 : vector<16x128xf32>
    %271 = arith.divf %269, %270 : vector<16x128xf32>
    %272 = arith.mulf %263, %199 : vector<16x128xf32>
    %273 = arith.mulf %257, %265 : vector<16x128xf32>
    %274 = arith.addf %272, %273 : vector<16x128xf32>
    %275 = math.tanh %274 : vector<16x128xf32>
    %276 = arith.mulf %271, %275 : vector<16x128xf32>
    %277 = vector.extract_strided_slice %251 {offsets = [0, 0], sizes = [16, 128], strides = [1, 1]} : vector<16x512xf32> to vector<16x128xf32>
    %278 = arith.negf %277 : vector<16x128xf32>
    %279 = math.exp %278 : vector<16x128xf32>
    %cst_64 = arith.constant 1.000000e+00 : f32
    %280 = vector.broadcast %cst_64 : f32 to vector<16x128xf32>
    %281 = arith.addf %280, %279 : vector<16x128xf32>
    %282 = arith.divf %280, %281 : vector<16x128xf32>
    %283 = vector.extract_strided_slice %251 {offsets = [0, 128], sizes = [16, 128], strides = [1, 1]} : vector<16x512xf32> to vector<16x128xf32>
    %284 = arith.negf %283 : vector<16x128xf32>
    %285 = math.exp %284 : vector<16x128xf32>
    %cst_65 = arith.constant 1.000000e+00 : f32
    %286 = vector.broadcast %cst_65 : f32 to vector<16x128xf32>
    %287 = arith.addf %286, %285 : vector<16x128xf32>
    %288 = arith.divf %286, %287 : vector<16x128xf32>
    %289 = vector.extract_strided_slice %251 {offsets = [0, 256], sizes = [16, 128], strides = [1, 1]} : vector<16x512xf32> to vector<16x128xf32>
    %290 = math.tanh %289 : vector<16x128xf32>
    %291 = vector.extract_strided_slice %251 {offsets = [0, 384], sizes = [16, 128], strides = [1, 1]} : vector<16x512xf32> to vector<16x128xf32>
    %292 = arith.negf %291 : vector<16x128xf32>
    %293 = math.exp %292 : vector<16x128xf32>
    %cst_66 = arith.constant 1.000000e+00 : f32
    %294 = vector.broadcast %cst_66 : f32 to vector<16x128xf32>
    %295 = arith.addf %294, %293 : vector<16x128xf32>
    %296 = arith.divf %294, %295 : vector<16x128xf32>
    %297 = arith.mulf %288, %224 : vector<16x128xf32>
    %298 = arith.mulf %282, %290 : vector<16x128xf32>
    %299 = arith.addf %297, %298 : vector<16x128xf32>
    %300 = math.tanh %299 : vector<16x128xf32>
    %301 = arith.mulf %296, %300 : vector<16x128xf32>
    %302 = arith.truncf %276 : vector<16x128xf32> to vector<16x128xbf16>
    %303 = arith.index_cast %237 : i32 to index
    %c0_67 = arith.constant 0 : index
    %304 = vector.load %arg8[%303, %c0_67] : memref<128x256xbf16, #tpu.memory_space<vmem>>, vector<16x128xbf16>
    tpu.vector_store %arg8[%303, %c0_67], %302 {strides = array<i32>} : memref<128x256xbf16, #tpu.memory_space<vmem>>, vector<16x128xbf16>,
    %305 = arith.truncf %301 : vector<16x128xf32> to vector<16x128xbf16>
    %306 = arith.index_cast %239 : i32 to index
    %c128_68 = arith.constant 128 : index
    %307 = vector.load %arg8[%306, %c128_68] : memref<128x256xbf16, #tpu.memory_space<vmem>>, vector<16x128xbf16>
    tpu.vector_store %arg8[%306, %c128_68], %305 {strides = array<i32>} : memref<128x256xbf16, #tpu.memory_space<vmem>>, vector<16x128xbf16>,
    %308 = tpu.concatenate %276, %301 in 1 : vector<16x128xf32>, vector<16x128xf32> -> vector<16x256xf32>
    %309 = arith.truncf %308 : vector<16x256xf32> to vector<16x256xbf16>
    %c4_i32 = arith.constant 4 : i32
    %c7_i32_69 = arith.constant 7 : i32
    %310 = arith.subi %c7_i32_69, %c4_i32 : i32
    %c16_i32_70 = arith.constant 16 : i32
    %311 = arith.muli %c4_i32, %c16_i32_70 : i32
    %312 = tpu.assume_multiple %311, 16 : i32
    %c16_i32_71 = arith.constant 16 : i32
    %313 = arith.muli %310, %c16_i32_71 : i32
    %314 = tpu.assume_multiple %313, 16 : i32
    %c0_72 = arith.constant 0 : index
    %c0_73 = arith.constant 0 : index
    %315 = vector.load %arg3[%c0_72, %c0_73] : memref<256x1024xbf16, #tpu.memory_space<vmem>>, vector<256x1024xbf16>
    %cst_74 = arith.constant dense<0.000000e+00> : vector<16x1024xf32>
    %316 = tpu.matmul %309, %315, %cst_74 {dimension_numbers = #tpu.dot_dimension_numbers<[1], [0], [0], [1], [0, 0, 1, 1], [], []>} : vector<16x256xbf16>, vector<256x1024xbf16>, vector<16x1024xf32> -> vector<16x1024xf32>
    %317 = arith.index_cast %312 : i32 to index
    %c0_75 = arith.constant 0 : index
    %318 = vector.load %arg7[%317, %c0_75] : memref<128x1024xbf16, #tpu.memory_space<vmem>>, vector<16x512xbf16>
    %319 = arith.extf %318 : vector<16x512xbf16> to vector<16x512xf32>
    %320 = vector.extract_strided_slice %316 {offsets = [0, 0], sizes = [16, 512], strides = [1, 1]} : vector<16x1024xf32> to vector<16x512xf32>
    %321 = arith.addf %319, %320 : vector<16x512xf32>
    %322 = arith.index_cast %314 : i32 to index
    %c512_76 = arith.constant 512 : index
    %323 = vector.load %arg7[%322, %c512_76] : memref<128x1024xbf16, #tpu.memory_space<vmem>>, vector<16x512xbf16>
    %324 = arith.extf %323 : vector<16x512xbf16> to vector<16x512xf32>
    %325 = vector.extract_strided_slice %316 {offsets = [0, 512], sizes = [16, 512], strides = [1, 1]} : vector<16x1024xf32> to vector<16x512xf32>
    %326 = arith.addf %324, %325 : vector<16x512xf32>
    %327 = vector.extract_strided_slice %321 {offsets = [0, 0], sizes = [16, 128], strides = [1, 1]} : vector<16x512xf32> to vector<16x128xf32>
    %328 = arith.negf %327 : vector<16x128xf32>
    %329 = math.exp %328 : vector<16x128xf32>
    %cst_77 = arith.constant 1.000000e+00 : f32
    %330 = vector.broadcast %cst_77 : f32 to vector<16x128xf32>
    %331 = arith.addf %330, %329 : vector<16x128xf32>
    %332 = arith.divf %330, %331 : vector<16x128xf32>
    %333 = vector.extract_strided_slice %321 {offsets = [0, 128], sizes = [16, 128], strides = [1, 1]} : vector<16x512xf32> to vector<16x128xf32>
    %334 = arith.negf %333 : vector<16x128xf32>
    %335 = math.exp %334 : vector<16x128xf32>
    %cst_78 = arith.constant 1.000000e+00 : f32
    %336 = vector.broadcast %cst_78 : f32 to vector<16x128xf32>
    %337 = arith.addf %336, %335 : vector<16x128xf32>
    %338 = arith.divf %336, %337 : vector<16x128xf32>
    %339 = vector.extract_strided_slice %321 {offsets = [0, 256], sizes = [16, 128], strides = [1, 1]} : vector<16x512xf32> to vector<16x128xf32>
    %340 = math.tanh %339 : vector<16x128xf32>
    %341 = vector.extract_strided_slice %321 {offsets = [0, 384], sizes = [16, 128], strides = [1, 1]} : vector<16x512xf32> to vector<16x128xf32>
    %342 = arith.negf %341 : vector<16x128xf32>
    %343 = math.exp %342 : vector<16x128xf32>
    %cst_79 = arith.constant 1.000000e+00 : f32
    %344 = vector.broadcast %cst_79 : f32 to vector<16x128xf32>
    %345 = arith.addf %344, %343 : vector<16x128xf32>
    %346 = arith.divf %344, %345 : vector<16x128xf32>
    %347 = arith.mulf %338, %274 : vector<16x128xf32>
    %348 = arith.mulf %332, %340 : vector<16x128xf32>
    %349 = arith.addf %347, %348 : vector<16x128xf32>
    %350 = math.tanh %349 : vector<16x128xf32>
    %351 = arith.mulf %346, %350 : vector<16x128xf32>
    %352 = vector.extract_strided_slice %326 {offsets = [0, 0], sizes = [16, 128], strides = [1, 1]} : vector<16x512xf32> to vector<16x128xf32>
    %353 = arith.negf %352 : vector<16x128xf32>
    %354 = math.exp %353 : vector<16x128xf32>
    %cst_80 = arith.constant 1.000000e+00 : f32
    %355 = vector.broadcast %cst_80 : f32 to vector<16x128xf32>
    %356 = arith.addf %355, %354 : vector<16x128xf32>
    %357 = arith.divf %355, %356 : vector<16x128xf32>
    %358 = vector.extract_strided_slice %326 {offsets = [0, 128], sizes = [16, 128], strides = [1, 1]} : vector<16x512xf32> to vector<16x128xf32>
    %359 = arith.negf %358 : vector<16x128xf32>
    %360 = math.exp %359 : vector<16x128xf32>
    %cst_81 = arith.constant 1.000000e+00 : f32
    %361 = vector.broadcast %cst_81 : f32 to vector<16x128xf32>
    %362 = arith.addf %361, %360 : vector<16x128xf32>
    %363 = arith.divf %361, %362 : vector<16x128xf32>
    %364 = vector.extract_strided_slice %326 {offsets = [0, 256], sizes = [16, 128], strides = [1, 1]} : vector<16x512xf32> to vector<16x128xf32>
    %365 = math.tanh %364 : vector<16x128xf32>
    %366 = vector.extract_strided_slice %326 {offsets = [0, 384], sizes = [16, 128], strides = [1, 1]} : vector<16x512xf32> to vector<16x128xf32>
    %367 = arith.negf %366 : vector<16x128xf32>
    %368 = math.exp %367 : vector<16x128xf32>
    %cst_82 = arith.constant 1.000000e+00 : f32
    %369 = vector.broadcast %cst_82 : f32 to vector<16x128xf32>
    %370 = arith.addf %369, %368 : vector<16x128xf32>
    %371 = arith.divf %369, %370 : vector<16x128xf32>
    %372 = arith.mulf %363, %299 : vector<16x128xf32>
    %373 = arith.mulf %357, %365 : vector<16x128xf32>
    %374 = arith.addf %372, %373 : vector<16x128xf32>
    %375 = math.tanh %374 : vector<16x128xf32>
    %376 = arith.mulf %371, %375 : vector<16x128xf32>
    %377 = arith.truncf %351 : vector<16x128xf32> to vector<16x128xbf16>
    %378 = arith.index_cast %312 : i32 to index
    %c0_83 = arith.constant 0 : index
    %379 = vector.load %arg8[%378, %c0_83] : memref<128x256xbf16, #tpu.memory_space<vmem>>, vector<16x128xbf16>
    tpu.vector_store %arg8[%378, %c0_83], %377 {strides = array<i32>} : memref<128x256xbf16, #tpu.memory_space<vmem>>, vector<16x128xbf16>,
    %380 = arith.truncf %376 : vector<16x128xf32> to vector<16x128xbf16>
    %381 = arith.index_cast %314 : i32 to index
    %c128_84 = arith.constant 128 : index
    %382 = vector.load %arg8[%381, %c128_84] : memref<128x256xbf16, #tpu.memory_space<vmem>>, vector<16x128xbf16>
    tpu.vector_store %arg8[%381, %c128_84], %380 {strides = array<i32>} : memref<128x256xbf16, #tpu.memory_space<vmem>>, vector<16x128xbf16>,
    %383 = tpu.concatenate %351, %376 in 1 : vector<16x128xf32>, vector<16x128xf32> -> vector<16x256xf32>
    %384 = arith.truncf %383 : vector<16x256xf32> to vector<16x256xbf16>
    %c5_i32 = arith.constant 5 : i32
    %c7_i32_85 = arith.constant 7 : i32
    %385 = arith.subi %c7_i32_85, %c5_i32 : i32
    %c16_i32_86 = arith.constant 16 : i32
    %386 = arith.muli %c5_i32, %c16_i32_86 : i32
    %387 = tpu.assume_multiple %386, 16 : i32
    %c16_i32_87 = arith.constant 16 : i32
    %388 = arith.muli %385, %c16_i32_87 : i32
    %389 = tpu.assume_multiple %388, 16 : i32
    %c0_88 = arith.constant 0 : index
    %c0_89 = arith.constant 0 : index
    %390 = vector.load %arg3[%c0_88, %c0_89] : memref<256x1024xbf16, #tpu.memory_space<vmem>>, vector<256x1024xbf16>
    %cst_90 = arith.constant dense<0.000000e+00> : vector<16x1024xf32>
    %391 = tpu.matmul %384, %390, %cst_90 {dimension_numbers = #tpu.dot_dimension_numbers<[1], [0], [0], [1], [0, 0, 1, 1], [], []>} : vector<16x256xbf16>, vector<256x1024xbf16>, vector<16x1024xf32> -> vector<16x1024xf32>
    %392 = arith.index_cast %387 : i32 to index
    %c0_91 = arith.constant 0 : index
    %393 = vector.load %arg7[%392, %c0_91] : memref<128x1024xbf16, #tpu.memory_space<vmem>>, vector<16x512xbf16>
    %394 = arith.extf %393 : vector<16x512xbf16> to vector<16x512xf32>
    %395 = vector.extract_strided_slice %391 {offsets = [0, 0], sizes = [16, 512], strides = [1, 1]} : vector<16x1024xf32> to vector<16x512xf32>
    %396 = arith.addf %394, %395 : vector<16x512xf32>
    %397 = arith.index_cast %389 : i32 to index
    %c512_92 = arith.constant 512 : index
    %398 = vector.load %arg7[%397, %c512_92] : memref<128x1024xbf16, #tpu.memory_space<vmem>>, vector<16x512xbf16>
    %399 = arith.extf %398 : vector<16x512xbf16> to vector<16x512xf32>
    %400 = vector.extract_strided_slice %391 {offsets = [0, 512], sizes = [16, 512], strides = [1, 1]} : vector<16x1024xf32> to vector<16x512xf32>
    %401 = arith.addf %399, %400 : vector<16x512xf32>
    %402 = vector.extract_strided_slice %396 {offsets = [0, 0], sizes = [16, 128], strides = [1, 1]} : vector<16x512xf32> to vector<16x128xf32>
    %403 = arith.negf %402 : vector<16x128xf32>
    %404 = math.exp %403 : vector<16x128xf32>
    %cst_93 = arith.constant 1.000000e+00 : f32
    %405 = vector.broadcast %cst_93 : f32 to vector<16x128xf32>
    %406 = arith.addf %405, %404 : vector<16x128xf32>
    %407 = arith.divf %405, %406 : vector<16x128xf32>
    %408 = vector.extract_strided_slice %396 {offsets = [0, 128], sizes = [16, 128], strides = [1, 1]} : vector<16x512xf32> to vector<16x128xf32>
    %409 = arith.negf %408 : vector<16x128xf32>
    %410 = math.exp %409 : vector<16x128xf32>
    %cst_94 = arith.constant 1.000000e+00 : f32
    %411 = vector.broadcast %cst_94 : f32 to vector<16x128xf32>
    %412 = arith.addf %411, %410 : vector<16x128xf32>
    %413 = arith.divf %411, %412 : vector<16x128xf32>
    %414 = vector.extract_strided_slice %396 {offsets = [0, 256], sizes = [16, 128], strides = [1, 1]} : vector<16x512xf32> to vector<16x128xf32>
    %415 = math.tanh %414 : vector<16x128xf32>
    %416 = vector.extract_strided_slice %396 {offsets = [0, 384], sizes = [16, 128], strides = [1, 1]} : vector<16x512xf32> to vector<16x128xf32>
    %417 = arith.negf %416 : vector<16x128xf32>
    %418 = math.exp %417 : vector<16x128xf32>
    %cst_95 = arith.constant 1.000000e+00 : f32
    %419 = vector.broadcast %cst_95 : f32 to vector<16x128xf32>
    %420 = arith.addf %419, %418 : vector<16x128xf32>
    %421 = arith.divf %419, %420 : vector<16x128xf32>
    %422 = arith.mulf %413, %349 : vector<16x128xf32>
    %423 = arith.mulf %407, %415 : vector<16x128xf32>
    %424 = arith.addf %422, %423 : vector<16x128xf32>
    %425 = math.tanh %424 : vector<16x128xf32>
    %426 = arith.mulf %421, %425 : vector<16x128xf32>
    %427 = vector.extract_strided_slice %401 {offsets = [0, 0], sizes = [16, 128], strides = [1, 1]} : vector<16x512xf32> to vector<16x128xf32>
    %428 = arith.negf %427 : vector<16x128xf32>
    %429 = math.exp %428 : vector<16x128xf32>
    %cst_96 = arith.constant 1.000000e+00 : f32
    %430 = vector.broadcast %cst_96 : f32 to vector<16x128xf32>
    %431 = arith.addf %430, %429 : vector<16x128xf32>
    %432 = arith.divf %430, %431 : vector<16x128xf32>
    %433 = vector.extract_strided_slice %401 {offsets = [0, 128], sizes = [16, 128], strides = [1, 1]} : vector<16x512xf32> to vector<16x128xf32>
    %434 = arith.negf %433 : vector<16x128xf32>
    %435 = math.exp %434 : vector<16x128xf32>
    %cst_97 = arith.constant 1.000000e+00 : f32
    %436 = vector.broadcast %cst_97 : f32 to vector<16x128xf32>
    %437 = arith.addf %436, %435 : vector<16x128xf32>
    %438 = arith.divf %436, %437 : vector<16x128xf32>
    %439 = vector.extract_strided_slice %401 {offsets = [0, 256], sizes = [16, 128], strides = [1, 1]} : vector<16x512xf32> to vector<16x128xf32>
    %440 = math.tanh %439 : vector<16x128xf32>
    %441 = vector.extract_strided_slice %401 {offsets = [0, 384], sizes = [16, 128], strides = [1, 1]} : vector<16x512xf32> to vector<16x128xf32>
    %442 = arith.negf %441 : vector<16x128xf32>
    %443 = math.exp %442 : vector<16x128xf32>
    %cst_98 = arith.constant 1.000000e+00 : f32
    %444 = vector.broadcast %cst_98 : f32 to vector<16x128xf32>
    %445 = arith.addf %444, %443 : vector<16x128xf32>
    %446 = arith.divf %444, %445 : vector<16x128xf32>
    %447 = arith.mulf %438, %374 : vector<16x128xf32>
    %448 = arith.mulf %432, %440 : vector<16x128xf32>
    %449 = arith.addf %447, %448 : vector<16x128xf32>
    %450 = math.tanh %449 : vector<16x128xf32>
    %451 = arith.mulf %446, %450 : vector<16x128xf32>
    %452 = arith.truncf %426 : vector<16x128xf32> to vector<16x128xbf16>
    %453 = arith.index_cast %387 : i32 to index
    %c0_99 = arith.constant 0 : index
    %454 = vector.load %arg8[%453, %c0_99] : memref<128x256xbf16, #tpu.memory_space<vmem>>, vector<16x128xbf16>
    tpu.vector_store %arg8[%453, %c0_99], %452 {strides = array<i32>} : memref<128x256xbf16, #tpu.memory_space<vmem>>, vector<16x128xbf16>,
    %455 = arith.truncf %451 : vector<16x128xf32> to vector<16x128xbf16>
    %456 = arith.index_cast %389 : i32 to index
    %c128_100 = arith.constant 128 : index
    %457 = vector.load %arg8[%456, %c128_100] : memref<128x256xbf16, #tpu.memory_space<vmem>>, vector<16x128xbf16>
    tpu.vector_store %arg8[%456, %c128_100], %455 {strides = array<i32>} : memref<128x256xbf16, #tpu.memory_space<vmem>>, vector<16x128xbf16>,
    %458 = tpu.concatenate %426, %451 in 1 : vector<16x128xf32>, vector<16x128xf32> -> vector<16x256xf32>
    %459 = arith.truncf %458 : vector<16x256xf32> to vector<16x256xbf16>
    %c6_i32 = arith.constant 6 : i32
    %c7_i32_101 = arith.constant 7 : i32
    %460 = arith.subi %c7_i32_101, %c6_i32 : i32
    %c16_i32_102 = arith.constant 16 : i32
    %461 = arith.muli %c6_i32, %c16_i32_102 : i32
    %462 = tpu.assume_multiple %461, 16 : i32
    %c16_i32_103 = arith.constant 16 : i32
    %463 = arith.muli %460, %c16_i32_103 : i32
    %464 = tpu.assume_multiple %463, 16 : i32
    %c0_104 = arith.constant 0 : index
    %c0_105 = arith.constant 0 : index
    %465 = vector.load %arg3[%c0_104, %c0_105] : memref<256x1024xbf16, #tpu.memory_space<vmem>>, vector<256x1024xbf16>
    %cst_106 = arith.constant dense<0.000000e+00> : vector<16x1024xf32>
    %466 = tpu.matmul %459, %465, %cst_106 {dimension_numbers = #tpu.dot_dimension_numbers<[1], [0], [0], [1], [0, 0, 1, 1], [], []>} : vector<16x256xbf16>, vector<256x1024xbf16>, vector<16x1024xf32> -> vector<16x1024xf32>
    %467 = arith.index_cast %462 : i32 to index
    %c0_107 = arith.constant 0 : index
    %468 = vector.load %arg7[%467, %c0_107] : memref<128x1024xbf16, #tpu.memory_space<vmem>>, vector<16x512xbf16>
    %469 = arith.extf %468 : vector<16x512xbf16> to vector<16x512xf32>
    %470 = vector.extract_strided_slice %466 {offsets = [0, 0], sizes = [16, 512], strides = [1, 1]} : vector<16x1024xf32> to vector<16x512xf32>
    %471 = arith.addf %469, %470 : vector<16x512xf32>
    %472 = arith.index_cast %464 : i32 to index
    %c512_108 = arith.constant 512 : index
    %473 = vector.load %arg7[%472, %c512_108] : memref<128x1024xbf16, #tpu.memory_space<vmem>>, vector<16x512xbf16>
    %474 = arith.extf %473 : vector<16x512xbf16> to vector<16x512xf32>
    %475 = vector.extract_strided_slice %466 {offsets = [0, 512], sizes = [16, 512], strides = [1, 1]} : vector<16x1024xf32> to vector<16x512xf32>
    %476 = arith.addf %474, %475 : vector<16x512xf32>
    %477 = vector.extract_strided_slice %471 {offsets = [0, 0], sizes = [16, 128], strides = [1, 1]} : vector<16x512xf32> to vector<16x128xf32>
    %478 = arith.negf %477 : vector<16x128xf32>
    %479 = math.exp %478 : vector<16x128xf32>
    %cst_109 = arith.constant 1.000000e+00 : f32
    %480 = vector.broadcast %cst_109 : f32 to vector<16x128xf32>
    %481 = arith.addf %480, %479 : vector<16x128xf32>
    %482 = arith.divf %480, %481 : vector<16x128xf32>
    %483 = vector.extract_strided_slice %471 {offsets = [0, 128], sizes = [16, 128], strides = [1, 1]} : vector<16x512xf32> to vector<16x128xf32>
    %484 = arith.negf %483 : vector<16x128xf32>
    %485 = math.exp %484 : vector<16x128xf32>
    %cst_110 = arith.constant 1.000000e+00 : f32
    %486 = vector.broadcast %cst_110 : f32 to vector<16x128xf32>
    %487 = arith.addf %486, %485 : vector<16x128xf32>
    %488 = arith.divf %486, %487 : vector<16x128xf32>
    %489 = vector.extract_strided_slice %471 {offsets = [0, 256], sizes = [16, 128], strides = [1, 1]} : vector<16x512xf32> to vector<16x128xf32>
    %490 = math.tanh %489 : vector<16x128xf32>
    %491 = vector.extract_strided_slice %471 {offsets = [0, 384], sizes = [16, 128], strides = [1, 1]} : vector<16x512xf32> to vector<16x128xf32>
    %492 = arith.negf %491 : vector<16x128xf32>
    %493 = math.exp %492 : vector<16x128xf32>
    %cst_111 = arith.constant 1.000000e+00 : f32
    %494 = vector.broadcast %cst_111 : f32 to vector<16x128xf32>
    %495 = arith.addf %494, %493 : vector<16x128xf32>
    %496 = arith.divf %494, %495 : vector<16x128xf32>
    %497 = arith.mulf %488, %424 : vector<16x128xf32>
    %498 = arith.mulf %482, %490 : vector<16x128xf32>
    %499 = arith.addf %497, %498 : vector<16x128xf32>
    %500 = math.tanh %499 : vector<16x128xf32>
    %501 = arith.mulf %496, %500 : vector<16x128xf32>
    %502 = vector.extract_strided_slice %476 {offsets = [0, 0], sizes = [16, 128], strides = [1, 1]} : vector<16x512xf32> to vector<16x128xf32>
    %503 = arith.negf %502 : vector<16x128xf32>
    %504 = math.exp %503 : vector<16x128xf32>
    %cst_112 = arith.constant 1.000000e+00 : f32
    %505 = vector.broadcast %cst_112 : f32 to vector<16x128xf32>
    %506 = arith.addf %505, %504 : vector<16x128xf32>
    %507 = arith.divf %505, %506 : vector<16x128xf32>
    %508 = vector.extract_strided_slice %476 {offsets = [0, 128], sizes = [16, 128], strides = [1, 1]} : vector<16x512xf32> to vector<16x128xf32>
    %509 = arith.negf %508 : vector<16x128xf32>
    %510 = math.exp %509 : vector<16x128xf32>
    %cst_113 = arith.constant 1.000000e+00 : f32
    %511 = vector.broadcast %cst_113 : f32 to vector<16x128xf32>
    %512 = arith.addf %511, %510 : vector<16x128xf32>
    %513 = arith.divf %511, %512 : vector<16x128xf32>
    %514 = vector.extract_strided_slice %476 {offsets = [0, 256], sizes = [16, 128], strides = [1, 1]} : vector<16x512xf32> to vector<16x128xf32>
    %515 = math.tanh %514 : vector<16x128xf32>
    %516 = vector.extract_strided_slice %476 {offsets = [0, 384], sizes = [16, 128], strides = [1, 1]} : vector<16x512xf32> to vector<16x128xf32>
    %517 = arith.negf %516 : vector<16x128xf32>
    %518 = math.exp %517 : vector<16x128xf32>
    %cst_114 = arith.constant 1.000000e+00 : f32
    %519 = vector.broadcast %cst_114 : f32 to vector<16x128xf32>
    %520 = arith.addf %519, %518 : vector<16x128xf32>
    %521 = arith.divf %519, %520 : vector<16x128xf32>
    %522 = arith.mulf %513, %449 : vector<16x128xf32>
    %523 = arith.mulf %507, %515 : vector<16x128xf32>
    %524 = arith.addf %522, %523 : vector<16x128xf32>
    %525 = math.tanh %524 : vector<16x128xf32>
    %526 = arith.mulf %521, %525 : vector<16x128xf32>
    %527 = arith.truncf %501 : vector<16x128xf32> to vector<16x128xbf16>
    %528 = arith.index_cast %462 : i32 to index
    %c0_115 = arith.constant 0 : index
    %529 = vector.load %arg8[%528, %c0_115] : memref<128x256xbf16, #tpu.memory_space<vmem>>, vector<16x128xbf16>
    tpu.vector_store %arg8[%528, %c0_115], %527 {strides = array<i32>} : memref<128x256xbf16, #tpu.memory_space<vmem>>, vector<16x128xbf16>,
    %530 = arith.truncf %526 : vector<16x128xf32> to vector<16x128xbf16>
    %531 = arith.index_cast %464 : i32 to index
    %c128_116 = arith.constant 128 : index
    %532 = vector.load %arg8[%531, %c128_116] : memref<128x256xbf16, #tpu.memory_space<vmem>>, vector<16x128xbf16>
    tpu.vector_store %arg8[%531, %c128_116], %530 {strides = array<i32>} : memref<128x256xbf16, #tpu.memory_space<vmem>>, vector<16x128xbf16>,
    %533 = tpu.concatenate %501, %526 in 1 : vector<16x128xf32>, vector<16x128xf32> -> vector<16x256xf32>
    %534 = arith.truncf %533 : vector<16x256xf32> to vector<16x256xbf16>
    %c7_i32_117 = arith.constant 7 : i32
    %c7_i32_118 = arith.constant 7 : i32
    %535 = arith.subi %c7_i32_118, %c7_i32_117 : i32
    %c16_i32_119 = arith.constant 16 : i32
    %536 = arith.muli %c7_i32_117, %c16_i32_119 : i32
    %537 = tpu.assume_multiple %536, 16 : i32
    %c16_i32_120 = arith.constant 16 : i32
    %538 = arith.muli %535, %c16_i32_120 : i32
    %539 = tpu.assume_multiple %538, 16 : i32
    %c0_121 = arith.constant 0 : index
    %c0_122 = arith.constant 0 : index
    %540 = vector.load %arg3[%c0_121, %c0_122] : memref<256x1024xbf16, #tpu.memory_space<vmem>>, vector<256x1024xbf16>
    %cst_123 = arith.constant dense<0.000000e+00> : vector<16x1024xf32>
    %541 = tpu.matmul %534, %540, %cst_123 {dimension_numbers = #tpu.dot_dimension_numbers<[1], [0], [0], [1], [0, 0, 1, 1], [], []>} : vector<16x256xbf16>, vector<256x1024xbf16>, vector<16x1024xf32> -> vector<16x1024xf32>
    %542 = arith.index_cast %537 : i32 to index
    %c0_124 = arith.constant 0 : index
    %543 = vector.load %arg7[%542, %c0_124] : memref<128x1024xbf16, #tpu.memory_space<vmem>>, vector<16x512xbf16>
    %544 = arith.extf %543 : vector<16x512xbf16> to vector<16x512xf32>
    %545 = vector.extract_strided_slice %541 {offsets = [0, 0], sizes = [16, 512], strides = [1, 1]} : vector<16x1024xf32> to vector<16x512xf32>
    %546 = arith.addf %544, %545 : vector<16x512xf32>
    %547 = arith.index_cast %539 : i32 to index
    %c512_125 = arith.constant 512 : index
    %548 = vector.load %arg7[%547, %c512_125] : memref<128x1024xbf16, #tpu.memory_space<vmem>>, vector<16x512xbf16>
    %549 = arith.extf %548 : vector<16x512xbf16> to vector<16x512xf32>
    %550 = vector.extract_strided_slice %541 {offsets = [0, 512], sizes = [16, 512], strides = [1, 1]} : vector<16x1024xf32> to vector<16x512xf32>
    %551 = arith.addf %549, %550 : vector<16x512xf32>
    %552 = vector.extract_strided_slice %546 {offsets = [0, 0], sizes = [16, 128], strides = [1, 1]} : vector<16x512xf32> to vector<16x128xf32>
    %553 = arith.negf %552 : vector<16x128xf32>
    %554 = math.exp %553 : vector<16x128xf32>
    %cst_126 = arith.constant 1.000000e+00 : f32
    %555 = vector.broadcast %cst_126 : f32 to vector<16x128xf32>
    %556 = arith.addf %555, %554 : vector<16x128xf32>
    %557 = arith.divf %555, %556 : vector<16x128xf32>
    %558 = vector.extract_strided_slice %546 {offsets = [0, 128], sizes = [16, 128], strides = [1, 1]} : vector<16x512xf32> to vector<16x128xf32>
    %559 = arith.negf %558 : vector<16x128xf32>
    %560 = math.exp %559 : vector<16x128xf32>
    %cst_127 = arith.constant 1.000000e+00 : f32
    %561 = vector.broadcast %cst_127 : f32 to vector<16x128xf32>
    %562 = arith.addf %561, %560 : vector<16x128xf32>
    %563 = arith.divf %561, %562 : vector<16x128xf32>
    %564 = vector.extract_strided_slice %546 {offsets = [0, 256], sizes = [16, 128], strides = [1, 1]} : vector<16x512xf32> to vector<16x128xf32>
    %565 = math.tanh %564 : vector<16x128xf32>
    %566 = vector.extract_strided_slice %546 {offsets = [0, 384], sizes = [16, 128], strides = [1, 1]} : vector<16x512xf32> to vector<16x128xf32>
    %567 = arith.negf %566 : vector<16x128xf32>
    %568 = math.exp %567 : vector<16x128xf32>
    %cst_128 = arith.constant 1.000000e+00 : f32
    %569 = vector.broadcast %cst_128 : f32 to vector<16x128xf32>
    %570 = arith.addf %569, %568 : vector<16x128xf32>
    %571 = arith.divf %569, %570 : vector<16x128xf32>
    %572 = arith.mulf %563, %499 : vector<16x128xf32>
    %573 = arith.mulf %557, %565 : vector<16x128xf32>
    %574 = arith.addf %572, %573 : vector<16x128xf32>
    %575 = math.tanh %574 : vector<16x128xf32>
    %576 = arith.mulf %571, %575 : vector<16x128xf32>
    %577 = vector.extract_strided_slice %551 {offsets = [0, 0], sizes = [16, 128], strides = [1, 1]} : vector<16x512xf32> to vector<16x128xf32>
    %578 = arith.negf %577 : vector<16x128xf32>
    %579 = math.exp %578 : vector<16x128xf32>
    %cst_129 = arith.constant 1.000000e+00 : f32
    %580 = vector.broadcast %cst_129 : f32 to vector<16x128xf32>
    %581 = arith.addf %580, %579 : vector<16x128xf32>
    %582 = arith.divf %580, %581 : vector<16x128xf32>
    %583 = vector.extract_strided_slice %551 {offsets = [0, 128], sizes = [16, 128], strides = [1, 1]} : vector<16x512xf32> to vector<16x128xf32>
    %584 = arith.negf %583 : vector<16x128xf32>
    %585 = math.exp %584 : vector<16x128xf32>
    %cst_130 = arith.constant 1.000000e+00 : f32
    %586 = vector.broadcast %cst_130 : f32 to vector<16x128xf32>
    %587 = arith.addf %586, %585 : vector<16x128xf32>
    %588 = arith.divf %586, %587 : vector<16x128xf32>
    %589 = vector.extract_strided_slice %551 {offsets = [0, 256], sizes = [16, 128], strides = [1, 1]} : vector<16x512xf32> to vector<16x128xf32>
    %590 = math.tanh %589 : vector<16x128xf32>
    %591 = vector.extract_strided_slice %551 {offsets = [0, 384], sizes = [16, 128], strides = [1, 1]} : vector<16x512xf32> to vector<16x128xf32>
    %592 = arith.negf %591 : vector<16x128xf32>
    %593 = math.exp %592 : vector<16x128xf32>
    %cst_131 = arith.constant 1.000000e+00 : f32
    %594 = vector.broadcast %cst_131 : f32 to vector<16x128xf32>
    %595 = arith.addf %594, %593 : vector<16x128xf32>
    %596 = arith.divf %594, %595 : vector<16x128xf32>
    %597 = arith.mulf %588, %524 : vector<16x128xf32>
    %598 = arith.mulf %582, %590 : vector<16x128xf32>
    %599 = arith.addf %597, %598 : vector<16x128xf32>
    %600 = math.tanh %599 : vector<16x128xf32>
    %601 = arith.mulf %596, %600 : vector<16x128xf32>
    %602 = arith.truncf %576 : vector<16x128xf32> to vector<16x128xbf16>
    %603 = arith.index_cast %537 : i32 to index
    %c0_132 = arith.constant 0 : index
    %604 = vector.load %arg8[%603, %c0_132] : memref<128x256xbf16, #tpu.memory_space<vmem>>, vector<16x128xbf16>
    tpu.vector_store %arg8[%603, %c0_132], %602 {strides = array<i32>} : memref<128x256xbf16, #tpu.memory_space<vmem>>, vector<16x128xbf16>,
    %605 = arith.truncf %601 : vector<16x128xf32> to vector<16x128xbf16>
    %606 = arith.index_cast %539 : i32 to index
    %c128_133 = arith.constant 128 : index
    %607 = vector.load %arg8[%606, %c128_133] : memref<128x256xbf16, #tpu.memory_space<vmem>>, vector<16x128xbf16>
    tpu.vector_store %arg8[%606, %c128_133], %605 {strides = array<i32>} : memref<128x256xbf16, #tpu.memory_space<vmem>>, vector<16x128xbf16>,
    %608 = tpu.concatenate %576, %601 in 1 : vector<16x128xf32>, vector<16x128xf32> -> vector<16x256xf32>
    %609 = arith.truncf %608 : vector<16x256xf32> to vector<16x256xbf16>
    %c8_i32 = arith.constant 8 : i32
    %c0_134 = arith.constant 0 : index
    %c0_135 = arith.constant 0 : index
    %610 = vector.load %arg8[%c0_134, %c0_135] : memref<128x256xbf16, #tpu.memory_space<vmem>>, vector<128x256xbf16>
    %c0_136 = arith.constant 0 : index
    %c0_137 = arith.constant 0 : index
    %611 = vector.load %arg4[%c0_136, %c0_137] : memref<256x128xbf16, #tpu.memory_space<vmem>>, vector<256x128xbf16>
    %cst_138 = arith.constant dense<0.000000e+00> : vector<128x128xf32>
    %612 = tpu.matmul %610, %611, %cst_138 {dimension_numbers = #tpu.dot_dimension_numbers<[1], [0], [0], [1], [0, 0, 1, 1], [], []>} : vector<128x256xbf16>, vector<256x128xbf16>, vector<128x128xf32> -> vector<128x128xf32>
    %c0_139 = arith.constant 0 : index
    %c0_140 = arith.constant 0 : index
    %613 = vector.load %arg5[%c0_139, %c0_140] : memref<1x128xf32, #tpu.memory_space<vmem>>, vector<1x128xf32>
    %614 = vector.broadcast %613 : vector<1x128xf32> to vector<128x128xf32>
    %615 = arith.addf %612, %614 : vector<128x128xf32>
    %c0_141 = arith.constant 0 : index
    %c0_142 = arith.constant 0 : index
    %616 = vector.load %arg6[%c0_141, %c0_142] : memref<128x128xf32, #tpu.memory_space<vmem>>, vector<128x128xf32>
    tpu.vector_store %arg6[%c0_141, %c0_142], %615 {strides = array<i32>} : memref<128x128xf32, #tpu.memory_space<vmem>>, vector<128x128xf32>,
    return
  }
}

</mosaic_0001>

<llo_original>
// kernel: tpu_custom_call.1
$region0: #{tpu_custom_call.1}
  #allocation0 [shape = 'u32[]', space=smem, size = 0x4, offset = 0x4, fixed_abs, tag = 'smem constant byte address 0x4 - core index']
  #allocation1 [shape = 'u32[144,128]{1,0:T(1,128)}', space=vmem, size = 0x12000, scoped, tag = 'internal scratch']
  #allocation2 [shape = 'bf16[128,1024]{1,0:T(8,128)(2,1)}', space=vmem, size = 0x40000, scoped, tag = 'scratch operand']
  #allocation3 [shape = 'bf16[128,256]{1,0:T(8,128)(2,1)}', space=vmem, size = 0x10000, scoped, tag = 'scratch operand']
  %s0 = inlined_call_operand.vmem [shape: bf16[128,16], index: 0, kind: input, shape index: {}]
  %s1 = inlined_call_operand.vmem [shape: bf16[16,1024], index: 1, kind: input, shape index: {}]
  %s2 = inlined_call_operand.vmem [shape: f32[1,1024], index: 2, kind: input, shape index: {}]
  %s3 = inlined_call_operand.hbm [shape: bf16[256,1024], index: 3, kind: input, shape index: {}]
  %s4 = inlined_call_operand.hbm [shape: bf16[256,128], index: 4, kind: input, shape index: {}]
  %s5 = inlined_call_operand.vmem [shape: f32[1,128], index: 5, kind: input, shape index: {}]
  %s6 = inlined_call_operand.hbm [shape: f32[128,128], index: 6, kind: output, shape index: {}]
  %s7 = sld [smem:[#allocation0]]
  $region42: #{tpu_custom_call.1} parent=0
    _
  %s9 = ssub.s32 1, %s7
  %s10 = scalar_select 0, %s9, %s7
  $region1: #{tpu_custom_call.1} parent=0
    #allocation4 [shape = 'u8[524288]{0}', space=vmem, size = 0x80000, scoped, tag = 'input window, operand 3, single buffered']
    #allocation5 [shape = 's32[1]{0}', space=sflag, size = 0x4, scoped, tag = 'scoped memory for tpu_custom_call.1']
    #allocation6 [shape = 's32[1]{0}', space=sflag, size = 0x4, scoped, tag = 'scoped memory for tpu_custom_call.1']
    #allocation7 [shape = 'u8[65536]{0}', space=vmem, size = 0x10000, scoped, tag = 'input window, operand 4, single buffered']
    #allocation8 [shape = 's32[1]{0}', space=sflag, size = 0x4, scoped, tag = 'scoped memory for tpu_custom_call.1']
    #allocation9 [shape = 'u8[65536]{0}', space=vmem, size = 0x10000, scoped, tag = 'output window, operand 0, single buffered']
    %11 = vsyncpa [#allocation5], 0
    %12 = vsyncpa [#allocation8], 0
    %13 = vsyncpa [#allocation6], 0
    // Predicated region
    $region2: #{tpu_custom_call.1} parent=1 // pred_check
      _
    $region3: #{tpu_custom_call.1} parent=1 // pred_check_branch
      %15 = sbr.rel (0) target = $region5
    $region4: #{tpu_custom_call.1} parent=1 // pred_region
      _
    $region5: #{tpu_custom_call.1} parent=1 // pred_fallthru
      _
    // Predicated region
    $region6: #{tpu_custom_call.1} parent=1 // pred_check
      _
    $region7: #{tpu_custom_call.1} parent=1 // pred_check_branch
      %17 = sbr.rel (0) target = $region9
    $region8: #{tpu_custom_call.1} parent=1 // pred_region
      _
    $region9: #{tpu_custom_call.1} parent=1 // pred_fallthru
      _
    // Predicated region
    $region10: #{tpu_custom_call.1} parent=1 // pred_check
      _
    $region11: #{tpu_custom_call.1} parent=1 // pred_check_branch
      %19 = sbr.rel (0) target = $region13
    $region12: #{tpu_custom_call.1} parent=1 // pred_region
      _
    $region13: #{tpu_custom_call.1} parent=1 // pred_fallthru
      _
    // Predicated region
    $region14: #{tpu_custom_call.1} parent=1 // pred_check
      _
    $region15: #{tpu_custom_call.1} parent=1 // pred_check_branch
      %21 = sbr.rel (0) target = $region17
    $region16: #{tpu_custom_call.1} parent=1 // pred_region
      %s23 = ssub.s32 16384, 16384
      %24 = vsyncadd [#allocation5], %s23
      %s25 = sshll.u32 [#allocation4], 4
      %s26 = int_to_ptr.vmem [resolvable:$true] %s25
      %31 = dma.hbm_to_vmem [thread:$0]  %s3, 16384, %s26, [#allocation5], 512, 512, 32
    $region17: #{tpu_custom_call.1} parent=1 // pred_fallthru
      _
    // Predicated region
    $region18: #{tpu_custom_call.1} parent=1 // pred_check
      _
    $region19: #{tpu_custom_call.1} parent=1 // pred_check_branch
      %33 = sbr.rel (0) target = $region21
    $region20: #{tpu_custom_call.1} parent=1 // pred_region
      %s35 = ssub.s32 2048, 2048
      %36 = vsyncadd [#allocation8], %s35
      %s37 = sshll.u32 [#allocation7], 4
      %s38 = int_to_ptr.vmem [resolvable:$true] %s37
      %43 = dma.hbm_to_vmem [thread:$0]  %s4, 2048, %s38, [#allocation8], 64, 64, 4
    $region21: #{tpu_custom_call.1} parent=1 // pred_fallthru
      _
    // Predicated region
    $region22: #{tpu_custom_call.1} parent=1 // pred_check
      _
    $region23: #{tpu_custom_call.1} parent=1 // pred_check_branch
      %45 = sbr.rel (0) target = $region25
    $region24: #{tpu_custom_call.1} parent=1 // pred_region
      _
    $region25: #{tpu_custom_call.1} parent=1 // pred_fallthru
      _
    // Predicated region
    $region26: #{tpu_custom_call.1} parent=1 // pred_check
      _
    $region27: #{tpu_custom_call.1} parent=1 // pred_check_branch
      %47 = sbr.rel (0) target = $region29
    $region28: #{tpu_custom_call.1} parent=1 // pred_region
      %48 = dma.done [#allocation5], 16384
    $region29: #{tpu_custom_call.1} parent=1 // pred_fallthru
      _
    // Predicated region
    $region30: #{tpu_custom_call.1} parent=1 // pred_check
      _
    $region31: #{tpu_custom_call.1} parent=1 // pred_check_branch
      %50 = sbr.rel (0) target = $region33
    $region32: #{tpu_custom_call.1} parent=1 // pred_region
      %51 = dma.done [#allocation8], 2048
    $region33: #{tpu_custom_call.1} parent=1 // pred_fallthru
      _
    %v53 = vld [vmem:[%s0] sm:$0xf]
    %v54 = vld [vmem:[%s0 + $0x4] sm:$0xf]
    %v55 = vld [vmem:[%s0 + $0x8] sm:$0xf]
    %v56 = vld [vmem:[%s0 + $0xc] sm:$0xf]
    %v57 = vld [vmem:[%s0 + $0x10] sm:$0xf]
    %v58 = vld [vmem:[%s0 + $0x14] sm:$0xf]
    %v59 = vld [vmem:[%s0 + $0x18] sm:$0xf]
    %v60 = vld [vmem:[%s0 + $0x1c] sm:$0xf]
    %v61 = vld [vmem:[%s0 + $0x20] sm:$0xf]
    %v62 = vld [vmem:[%s0 + $0x24] sm:$0xf]
    %v63 = vld [vmem:[%s0 + $0x28] sm:$0xf]
    %v64 = vld [vmem:[%s0 + $0x2c] sm:$0xf]
    %v65 = vld [vmem:[%s0 + $0x30] sm:$0xf]
    %v66 = vld [vmem:[%s0 + $0x34] sm:$0xf]
    %v67 = vld [vmem:[%s0 + $0x38] sm:$0xf]
    %v68 = vld [vmem:[%s0 + $0x3c] sm:$0xf]
    %v69 = vld [vmem:[%s1] sm:$0xff]
    %v70 = vld [vmem:[%s1 + $0x8] sm:$0xff]
    %v71 = vld [vmem:[%s1 + $0x10] sm:$0xff]
    %v72 = vld [vmem:[%s1 + $0x18] sm:$0xff]
    %v73 = vld [vmem:[%s1 + $0x20] sm:$0xff]
    %v74 = vld [vmem:[%s1 + $0x28] sm:$0xff]
    %v75 = vld [vmem:[%s1 + $0x30] sm:$0xff]
    %v76 = vld [vmem:[%s1 + $0x38] sm:$0xff]
    %v77 = vld [vmem:[%s2] sm:$0xff]
    %v79 = vlaneseq
    %v80 = vshrl.u32 %v79, 7
    %v81 = vsub.s32 0, %v80
    %v82 = vrot.slane %v77, %v81
    %v83 = vlaneseq
    %v84 = vshrl.u32 %v83, 7
    %v85 = vsub.s32 1, %v84
    %v86 = vrot.slane %v77, %v85
    %v87 = vlaneseq
    %v88 = vshrl.u32 %v87, 7
    %v89 = vsub.s32 2, %v88
    %v90 = vrot.slane %v77, %v89
    %v91 = vlaneseq
    %v92 = vshrl.u32 %v91, 7
    %v93 = vsub.s32 3, %v92
    %v94 = vrot.slane %v77, %v93
    %v95 = vlaneseq
    %v96 = vshrl.u32 %v95, 7
    %v97 = vsub.s32 4, %v96
    %v98 = vrot.slane %v77, %v97
    %v99 = vlaneseq
    %v100 = vshrl.u32 %v99, 7
    %v101 = vsub.s32 5, %v100
    %v102 = vrot.slane %v77, %v101
    %v103 = vlaneseq
    %v104 = vshrl.u32 %v103, 7
    %v105 = vsub.s32 6, %v104
    %v106 = vrot.slane %v77, %v105
    %v107 = vlaneseq
    %v108 = vshrl.u32 %v107, 7
    %v109 = vsub.s32 7, %v108
    %v110 = vrot.slane %v77, %v109
    %v135 = vunpack.c.l.b16 %v53
    %v136 = vunpack.c.l.b16 %v54
    %v137 = vunpack.c.l.b16 %v55
    %v138 = vunpack.c.l.b16 %v56
    %v139 = vunpack.c.l.b16 %v57
    %v140 = vunpack.c.l.b16 %v58
    %v141 = vunpack.c.l.b16 %v59
    %v142 = vunpack.c.l.b16 %v60
    %v143 = vunpack.c.l.b16 %v61
    %v144 = vunpack.c.l.b16 %v62
    %v145 = vunpack.c.l.b16 %v63
    %v146 = vunpack.c.l.b16 %v64
    %v147 = vunpack.c.l.b16 %v65
    %v148 = vunpack.c.l.b16 %v66
    %v149 = vunpack.c.l.b16 %v67
    %v150 = vunpack.c.l.b16 %v68
    %v151 = vpack.c.b16 %v136, %v135
    %v152 = vpack.c.b16 %v138, %v137
    %v153 = vpack.c.b16 %v140, %v139
    %v154 = vpack.c.b16 %v142, %v141
    %v155 = vpack.c.b16 %v144, %v143
    %v156 = vpack.c.b16 %v146, %v145
    %v157 = vpack.c.b16 %v148, %v147
    %v158 = vpack.c.b16 %v150, %v149
    %v167 = vunpack.c.l.b16 %v69
    %v168 = vunpack.c.h.b16 %v69
    %v169 = vunpack.c.l.b16 %v70
    %v170 = vunpack.c.h.b16 %v70
    %v171 = vunpack.c.l.b16 %v71
    %v172 = vunpack.c.h.b16 %v71
    %v173 = vunpack.c.l.b16 %v72
    %v174 = vunpack.c.h.b16 %v72
    %v175 = vunpack.c.l.b16 %v73
    %v176 = vunpack.c.h.b16 %v73
    %v177 = vunpack.c.l.b16 %v74
    %v178 = vunpack.c.h.b16 %v74
    %v179 = vunpack.c.l.b16 %v75
    %v180 = vunpack.c.h.b16 %v75
    %v181 = vunpack.c.l.b16 %v76
    %v182 = vunpack.c.h.b16 %v76
    %v183 = vpack.c.b16 %v175, %v167
    %v184 = vpack.c.b16 %v176, %v168
    %v185 = vpack.c.b16 %v177, %v169
    %v186 = vpack.c.b16 %v178, %v170
    %v187 = vpack.c.b16 %v179, %v171
    %v188 = vpack.c.b16 %v180, %v172
    %v189 = vpack.c.b16 %v181, %v173
    %v190 = vpack.c.b16 %v182, %v174
    %vm199 = vcmask 130048
    %v201 = vsel %vm199, %v151, 0
    %v204 = vsel %vm199, %v152, 0
    %v207 = vsel %vm199, %v153, 0
    %v210 = vsel %vm199, %v154, 0
    %v213 = vsel %vm199, %v155, 0
    %v216 = vsel %vm199, %v156, 0
    %v219 = vsel %vm199, %v157, 0
    %v222 = vsel %vm199, %v158, 0
    %224 = vmatprep.subr.bf16.mxu0 0
    %225 = vmatpush1.bf16.msra.mxu0 0
    %226 = vmatprep.subr.bf16.mxu0 0
    %227 = vmatpush1.bf16.msra.mxu0 0
    %228 = vmatprep.subr.bf16.mxu0 0
    %229 = vmatpush1.bf16.msra.mxu0 0
    %230 = vmatprep.subr.bf16.mxu0 0
    %231 = vmatpush1.bf16.msra.mxu0 0
    %232 = vmatprep.subr.bf16.mxu0 0
    %233 = vmatpush1.bf16.msra.mxu0 0
    %234 = vmatprep.subr.bf16.mxu0 0
    %235 = vmatpush1.bf16.msra.mxu0 0
    %236 = vmatprep.subr.bf16.mxu0 0
    %237 = vmatpush1.bf16.msra.mxu0 0
    %238 = vmatprep.subr.bf16.mxu0 %v184
    %239 = vmatpush1.bf16.msra.mxu0 %v183
    %240 = vmatprep.subr.bf16.mxu0 0
    %241 = vmatpush2.bf16.msra.mxu0 0
    %242 = vmatprep.subr.bf16.mxu0 0
    %243 = vmatpush2.bf16.msra.mxu0 0
    %244 = vmatprep.subr.bf16.mxu0 0
    %245 = vmatpush2.bf16.msra.mxu0 0
    %246 = vmatprep.subr.bf16.mxu0 0
    %247 = vmatpush2.bf16.msra.mxu0 0
    %248 = vmatprep.subr.bf16.mxu0 0
    %249 = vmatpush2.bf16.msra.mxu0 0
    %250 = vmatprep.subr.bf16.mxu0 0
    %251 = vmatpush2.bf16.msra.mxu0 0
    %252 = vmatprep.subr.bf16.mxu0 0
    %253 = vmatpush2.bf16.msra.mxu0 0
    %254 = vmatprep.subr.bf16.mxu0 0
    %255 = vmatpush2.bf16.msra.mxu0 0
    %256 = vmatprep.mubr.bf16.mxu0 0
    %257 = vmatmul.mubr.bf16.gmra.mxu0 %v201
    %v258 = vpop.f32.mrf.mxu0
    %v259 = vadd.f32 %v82, %v258
    %v260 = vpop.f32.mrf.mxu0
    %v261 = vadd.f32 %v86, %v260
    %v262 = vpop.f32.mrf.mxu0
    %v263 = vadd.f32 %v82, %v262
    %v264 = vpop.f32.mrf.mxu0
    %v265 = vadd.f32 %v86, %v264
    %266 = vmatprep.mubr.bf16.mxu0 0
    %267 = vmatmul.mubr.bf16.gmra.mxu0 %v204
    %v268 = vpop.f32.mrf.mxu0
    %v269 = vadd.f32 %v82, %v268
    %v270 = vpop.f32.mrf.mxu0
    %v271 = vadd.f32 %v86, %v270
    %v272 = vpop.f32.mrf.mxu0
    %v273 = vadd.f32 %v82, %v272
    %v274 = vpop.f32.mrf.mxu0
    %v275 = vadd.f32 %v86, %v274
    %276 = vmatprep.mubr.bf16.mxu0 0
    %277 = vmatmul.mubr.bf16.gmra.mxu0 %v207
    %v278 = vpop.f32.mrf.mxu0
    %v279 = vadd.f32 %v82, %v278
    %v280 = vpop.f32.mrf.mxu0
    %v281 = vadd.f32 %v86, %v280
    %v282 = vpop.f32.mrf.mxu0
    %v283 = vadd.f32 %v82, %v282
    %v284 = vpop.f32.mrf.mxu0
    %v285 = vadd.f32 %v86, %v284
    %286 = vmatprep.mubr.bf16.mxu0 0
    %287 = vmatmul.mubr.bf16.gmra.mxu0 %v210
    %v288 = vpop.f32.mrf.mxu0
    %v289 = vadd.f32 %v82, %v288
    %v290 = vpop.f32.mrf.mxu0
    %v291 = vadd.f32 %v86, %v290
    %v292 = vpop.f32.mrf.mxu0
    %v293 = vadd.f32 %v82, %v292
    %v294 = vpop.f32.mrf.mxu0
    %v295 = vadd.f32 %v86, %v294
    %296 = vmatprep.mubr.bf16.mxu0 0
    %297 = vmatmul.mubr.bf16.gmra.mxu0 %v213
    %v298 = vpop.f32.mrf.mxu0
    %v299 = vadd.f32 %v82, %v298
    %v300 = vpop.f32.mrf.mxu0
    %v301 = vadd.f32 %v86, %v300
    %v302 = vpop.f32.mrf.mxu0
    %v303 = vadd.f32 %v82, %v302
    %v304 = vpop.f32.mrf.mxu0
    %v305 = vadd.f32 %v86, %v304
    %306 = vmatprep.mubr.bf16.mxu0 0
    %307 = vmatmul.mubr.bf16.gmra.mxu0 %v216
    %v308 = vpop.f32.mrf.mxu0
    %v309 = vadd.f32 %v82, %v308
    %v310 = vpop.f32.mrf.mxu0
    %v311 = vadd.f32 %v86, %v310
    %v312 = vpop.f32.mrf.mxu0
    %v313 = vadd.f32 %v82, %v312
    %v314 = vpop.f32.mrf.mxu0
    %v315 = vadd.f32 %v86, %v314
    %316 = vmatprep.mubr.bf16.mxu0 0
    %317 = vmatmul.mubr.bf16.gmra.mxu0 %v219
    %v318 = vpop.f32.mrf.mxu0
    %v319 = vadd.f32 %v82, %v318
    %v320 = vpop.f32.mrf.mxu0
    %v321 = vadd.f32 %v86, %v320
    %v322 = vpop.f32.mrf.mxu0
    %v323 = vadd.f32 %v82, %v322
    %v324 = vpop.f32.mrf.mxu0
    %v325 = vadd.f32 %v86, %v324
    %326 = vmatprep.mubr.bf16.mxu0 0
    %327 = vmatmul.mubr.bf16.gmra.mxu0 %v222
    %v328 = vpop.f32.mrf.mxu0
    %v329 = vadd.f32 %v82, %v328
    %v330 = vpop.f32.mrf.mxu0
    %v331 = vadd.f32 %v86, %v330
    %v332 = vpop.f32.mrf.mxu0
    %v333 = vadd.f32 %v82, %v332
    %v334 = vpop.f32.mrf.mxu0
    %v335 = vadd.f32 %v86, %v334
    %336 = vdwg.mxu0
    %337 = vmatprep.subr.bf16.mxu0 0
    %338 = vmatpush1.bf16.msra.mxu0 0
    %339 = vmatprep.subr.bf16.mxu0 0
    %340 = vmatpush1.bf16.msra.mxu0 0
    %341 = vmatprep.subr.bf16.mxu0 0
    %342 = vmatpush1.bf16.msra.mxu0 0
    %343 = vmatprep.subr.bf16.mxu0 0
    %344 = vmatpush1.bf16.msra.mxu0 0
    %345 = vmatprep.subr.bf16.mxu0 0
    %346 = vmatpush1.bf16.msra.mxu0 0
    %347 = vmatprep.subr.bf16.mxu0 0
    %348 = vmatpush1.bf16.msra.mxu0 0
    %349 = vmatprep.subr.bf16.mxu0 0
    %350 = vmatpush1.bf16.msra.mxu0 0
    %351 = vmatprep.subr.bf16.mxu0 %v186
    %352 = vmatpush1.bf16.msra.mxu0 %v185
    %353 = vmatprep.subr.bf16.mxu0 0
    %354 = vmatpush2.bf16.msra.mxu0 0
    %355 = vmatprep.subr.bf16.mxu0 0
    %356 = vmatpush2.bf16.msra.mxu0 0
    %357 = vmatprep.subr.bf16.mxu0 0
    %358 = vmatpush2.bf16.msra.mxu0 0
    %359 = vmatprep.subr.bf16.mxu0 0
    %360 = vmatpush2.bf16.msra.mxu0 0
    %361 = vmatprep.subr.bf16.mxu0 0
    %362 = vmatpush2.bf16.msra.mxu0 0
    %363 = vmatprep.subr.bf16.mxu0 0
    %364 = vmatpush2.bf16.msra.mxu0 0
    %365 = vmatprep.subr.bf16.mxu0 0
    %366 = vmatpush2.bf16.msra.mxu0 0
    %367 = vmatprep.subr.bf16.mxu0 0
    %368 = vmatpush2.bf16.msra.mxu0 0
    %369 = vmatprep.mubr.bf16.mxu0 0
    %370 = vmatmul.mubr.bf16.gmra.mxu0 %v201
    %v371 = vpop.f32.mrf.mxu0
    %v372 = vadd.f32 %v90, %v371
    %v373 = vpop.f32.mrf.mxu0
    %v374 = vadd.f32 %v94, %v373
    %v375 = vpop.f32.mrf.mxu0
    %v376 = vadd.f32 %v90, %v375
    %v377 = vpop.f32.mrf.mxu0
    %v378 = vadd.f32 %v94, %v377
    %379 = vmatprep.mubr.bf16.mxu0 0
    %380 = vmatmul.mubr.bf16.gmra.mxu0 %v204
    %v381 = vpop.f32.mrf.mxu0
    %v382 = vadd.f32 %v90, %v381
    %v383 = vpop.f32.mrf.mxu0
    %v384 = vadd.f32 %v94, %v383
    %v385 = vpop.f32.mrf.mxu0
    %v386 = vadd.f32 %v90, %v385
    %v387 = vpop.f32.mrf.mxu0
    %v388 = vadd.f32 %v94, %v387
    %389 = vmatprep.mubr.bf16.mxu0 0
    %390 = vmatmul.mubr.bf16.gmra.mxu0 %v207
    %v391 = vpop.f32.mrf.mxu0
    %v392 = vadd.f32 %v90, %v391
    %v393 = vpop.f32.mrf.mxu0
    %v394 = vadd.f32 %v94, %v393
    %v395 = vpop.f32.mrf.mxu0
    %v396 = vadd.f32 %v90, %v395
    %v397 = vpop.f32.mrf.mxu0
    %v398 = vadd.f32 %v94, %v397
    %399 = vmatprep.mubr.bf16.mxu0 0
    %400 = vmatmul.mubr.bf16.gmra.mxu0 %v210
    %v401 = vpop.f32.mrf.mxu0
    %v402 = vadd.f32 %v90, %v401
    %v403 = vpop.f32.mrf.mxu0
    %v404 = vadd.f32 %v94, %v403
    %v405 = vpop.f32.mrf.mxu0
    %v406 = vadd.f32 %v90, %v405
    %v407 = vpop.f32.mrf.mxu0
    %v408 = vadd.f32 %v94, %v407
    %409 = vmatprep.mubr.bf16.mxu0 0
    %410 = vmatmul.mubr.bf16.gmra.mxu0 %v213
    %v411 = vpop.f32.mrf.mxu0
    %v412 = vadd.f32 %v90, %v411
    %v413 = vpop.f32.mrf.mxu0
    %v414 = vadd.f32 %v94, %v413
    %v415 = vpop.f32.mrf.mxu0
    %v416 = vadd.f32 %v90, %v415
    %v417 = vpop.f32.mrf.mxu0
    %v418 = vadd.f32 %v94, %v417
    %419 = vmatprep.mubr.bf16.mxu0 0
    %420 = vmatmul.mubr.bf16.gmra.mxu0 %v216
    %v421 = vpop.f32.mrf.mxu0
    %v422 = vadd.f32 %v90, %v421
    %v423 = vpop.f32.mrf.mxu0
    %v424 = vadd.f32 %v94, %v423
    %v425 = vpop.f32.mrf.mxu0
    %v426 = vadd.f32 %v90, %v425
    %v427 = vpop.f32.mrf.mxu0
    %v428 = vadd.f32 %v94, %v427
    %429 = vmatprep.mubr.bf16.mxu0 0
    %430 = vmatmul.mubr.bf16.gmra.mxu0 %v219
    %v431 = vpop.f32.mrf.mxu0
    %v432 = vadd.f32 %v90, %v431
    %v433 = vpop.f32.mrf.mxu0
    %v434 = vadd.f32 %v94, %v433
    %v435 = vpop.f32.mrf.mxu0
    %v436 = vadd.f32 %v90, %v435
    %v437 = vpop.f32.mrf.mxu0
    %v438 = vadd.f32 %v94, %v437
    %439 = vmatprep.mubr.bf16.mxu0 0
    %440 = vmatmul.mubr.bf16.gmra.mxu0 %v222
    %v441 = vpop.f32.mrf.mxu0
    %v442 = vadd.f32 %v90, %v441
    %v443 = vpop.f32.mrf.mxu0
    %v444 = vadd.f32 %v94, %v443
    %v445 = vpop.f32.mrf.mxu0
    %v446 = vadd.f32 %v90, %v445
    %v447 = vpop.f32.mrf.mxu0
    %v448 = vadd.f32 %v94, %v447
    %449 = vdwg.mxu0
    %450 = vmatprep.subr.bf16.mxu0 0
    %451 = vmatpush1.bf16.msra.mxu0 0
    %452 = vmatprep.subr.bf16.mxu0 0
    %453 = vmatpush1.bf16.msra.mxu0 0
    %454 = vmatprep.subr.bf16.mxu0 0
    %455 = vmatpush1.bf16.msra.mxu0 0
    %456 = vmatprep.subr.bf16.mxu0 0
    %457 = vmatpush1.bf16.msra.mxu0 0
    %458 = vmatprep.subr.bf16.mxu0 0
    %459 = vmatpush1.bf16.msra.mxu0 0
    %460 = vmatprep.subr.bf16.mxu0 0
    %461 = vmatpush1.bf16.msra.mxu0 0
    %462 = vmatprep.subr.bf16.mxu0 0
    %463 = vmatpush1.bf16.msra.mxu0 0
    %464 = vmatprep.subr.bf16.mxu0 %v188
    %465 = vmatpush1.bf16.msra.mxu0 %v187
    %466 = vmatprep.subr.bf16.mxu0 0
    %467 = vmatpush2.bf16.msra.mxu0 0
    %468 = vmatprep.subr.bf16.mxu0 0
    %469 = vmatpush2.bf16.msra.mxu0 0
    %470 = vmatprep.subr.bf16.mxu0 0
    %471 = vmatpush2.bf16.msra.mxu0 0
    %472 = vmatprep.subr.bf16.mxu0 0
    %473 = vmatpush2.bf16.msra.mxu0 0
    %474 = vmatprep.subr.bf16.mxu0 0
    %475 = vmatpush2.bf16.msra.mxu0 0
    %476 = vmatprep.subr.bf16.mxu0 0
    %477 = vmatpush2.bf16.msra.mxu0 0
    %478 = vmatprep.subr.bf16.mxu0 0
    %479 = vmatpush2.bf16.msra.mxu0 0
    %480 = vmatprep.subr.bf16.mxu0 0
    %481 = vmatpush2.bf16.msra.mxu0 0
    %482 = vmatprep.mubr.bf16.mxu0 0
    %483 = vmatmul.mubr.bf16.gmra.mxu0 %v201
    %v484 = vpop.f32.mrf.mxu0
    %v485 = vadd.f32 %v98, %v484
    %v486 = vpop.f32.mrf.mxu0
    %v487 = vadd.f32 %v102, %v486
    %v488 = vpop.f32.mrf.mxu0
    %v489 = vadd.f32 %v98, %v488
    %v490 = vpop.f32.mrf.mxu0
    %v491 = vadd.f32 %v102, %v490
    %492 = vmatprep.mubr.bf16.mxu0 0
    %493 = vmatmul.mubr.bf16.gmra.mxu0 %v204
    %v494 = vpop.f32.mrf.mxu0
    %v495 = vadd.f32 %v98, %v494
    %v496 = vpop.f32.mrf.mxu0
    %v497 = vadd.f32 %v102, %v496
    %v498 = vpop.f32.mrf.mxu0
    %v499 = vadd.f32 %v98, %v498
    %v500 = vpop.f32.mrf.mxu0
    %v501 = vadd.f32 %v102, %v500
    %502 = vmatprep.mubr.bf16.mxu0 0
    %503 = vmatmul.mubr.bf16.gmra.mxu0 %v207
    %v504 = vpop.f32.mrf.mxu0
    %v505 = vadd.f32 %v98, %v504
    %v506 = vpop.f32.mrf.mxu0
    %v507 = vadd.f32 %v102, %v506
    %v508 = vpop.f32.mrf.mxu0
    %v509 = vadd.f32 %v98, %v508
    %v510 = vpop.f32.mrf.mxu0
    %v511 = vadd.f32 %v102, %v510
    %512 = vmatprep.mubr.bf16.mxu0 0
    %513 = vmatmul.mubr.bf16.gmra.mxu0 %v210
    %v514 = vpop.f32.mrf.mxu0
    %v515 = vadd.f32 %v98, %v514
    %v516 = vpop.f32.mrf.mxu0
    %v517 = vadd.f32 %v102, %v516
    %v518 = vpop.f32.mrf.mxu0
    %v519 = vadd.f32 %v98, %v518
    %v520 = vpop.f32.mrf.mxu0
    %v521 = vadd.f32 %v102, %v520
    %522 = vmatprep.mubr.bf16.mxu0 0
    %523 = vmatmul.mubr.bf16.gmra.mxu0 %v213
    %v524 = vpop.f32.mrf.mxu0
    %v525 = vadd.f32 %v98, %v524
    %v526 = vpop.f32.mrf.mxu0
    %v527 = vadd.f32 %v102, %v526
    %v528 = vpop.f32.mrf.mxu0
    %v529 = vadd.f32 %v98, %v528
    %v530 = vpop.f32.mrf.mxu0
    %v531 = vadd.f32 %v102, %v530
    %532 = vmatprep.mubr.bf16.mxu0 0
    %533 = vmatmul.mubr.bf16.gmra.mxu0 %v216
    %v534 = vpop.f32.mrf.mxu0
    %v535 = vadd.f32 %v98, %v534
    %v536 = vpop.f32.mrf.mxu0
    %v537 = vadd.f32 %v102, %v536
    %v538 = vpop.f32.mrf.mxu0
    %v539 = vadd.f32 %v98, %v538
    %v540 = vpop.f32.mrf.mxu0
    %v541 = vadd.f32 %v102, %v540
    %542 = vmatprep.mubr.bf16.mxu0 0
    %543 = vmatmul.mubr.bf16.gmra.mxu0 %v219
    %v544 = vpop.f32.mrf.mxu0
    %v545 = vadd.f32 %v98, %v544
    %v546 = vpop.f32.mrf.mxu0
    %v547 = vadd.f32 %v102, %v546
    %v548 = vpop.f32.mrf.mxu0
    %v549 = vadd.f32 %v98, %v548
    %v550 = vpop.f32.mrf.mxu0
    %v551 = vadd.f32 %v102, %v550
    %552 = vmatprep.mubr.bf16.mxu0 0
    %553 = vmatmul.mubr.bf16.gmra.mxu0 %v222
    %v554 = vpop.f32.mrf.mxu0
    %v555 = vadd.f32 %v98, %v554
    %v556 = vpop.f32.mrf.mxu0
    %v557 = vadd.f32 %v102, %v556
    %v558 = vpop.f32.mrf.mxu0
    %v559 = vadd.f32 %v98, %v558
    %v560 = vpop.f32.mrf.mxu0
    %v561 = vadd.f32 %v102, %v560
    %562 = vdwg.mxu0
    %563 = vmatprep.subr.bf16.mxu0 0
    %564 = vmatpush1.bf16.msra.mxu0 0
    %565 = vmatprep.subr.bf16.mxu0 0
    %566 = vmatpush1.bf16.msra.mxu0 0
    %567 = vmatprep.subr.bf16.mxu0 0
    %568 = vmatpush1.bf16.msra.mxu0 0
    %569 = vmatprep.subr.bf16.mxu0 0
    %570 = vmatpush1.bf16.msra.mxu0 0
    %571 = vmatprep.subr.bf16.mxu0 0
    %572 = vmatpush1.bf16.msra.mxu0 0
    %573 = vmatprep.subr.bf16.mxu0 0
    %574 = vmatpush1.bf16.msra.mxu0 0
    %575 = vmatprep.subr.bf16.mxu0 0
    %576 = vmatpush1.bf16.msra.mxu0 0
    %577 = vmatprep.subr.bf16.mxu0 %v190
    %578 = vmatpush1.bf16.msra.mxu0 %v189
    %579 = vmatprep.subr.bf16.mxu0 0
    %580 = vmatpush2.bf16.msra.mxu0 0
    %581 = vmatprep.subr.bf16.mxu0 0
    %582 = vmatpush2.bf16.msra.mxu0 0
    %583 = vmatprep.subr.bf16.mxu0 0
    %584 = vmatpush2.bf16.msra.mxu0 0
    %585 = vmatprep.subr.bf16.mxu0 0
    %586 = vmatpush2.bf16.msra.mxu0 0
    %587 = vmatprep.subr.bf16.mxu0 0
    %588 = vmatpush2.bf16.msra.mxu0 0
    %589 = vmatprep.subr.bf16.mxu0 0
    %590 = vmatpush2.bf16.msra.mxu0 0
    %591 = vmatprep.subr.bf16.mxu0 0
    %592 = vmatpush2.bf16.msra.mxu0 0
    %593 = vmatprep.subr.bf16.mxu0 0
    %594 = vmatpush2.bf16.msra.mxu0 0
    %595 = vmatprep.mubr.bf16.mxu0 0
    %596 = vmatmul.mubr.bf16.gmra.mxu0 %v201
    %v597 = vpop.f32.mrf.mxu0
    %v598 = vadd.f32 %v106, %v597
    %v599 = vpop.f32.mrf.mxu0
    %v600 = vadd.f32 %v110, %v599
    %v601 = vpop.f32.mrf.mxu0
    %v602 = vadd.f32 %v106, %v601
    %v603 = vpop.f32.mrf.mxu0
    %v604 = vadd.f32 %v110, %v603
    %605 = vmatprep.mubr.bf16.mxu0 0
    %606 = vmatmul.mubr.bf16.gmra.mxu0 %v204
    %v607 = vpop.f32.mrf.mxu0
    %v608 = vadd.f32 %v106, %v607
    %v609 = vpop.f32.mrf.mxu0
    %v610 = vadd.f32 %v110, %v609
    %v611 = vpop.f32.mrf.mxu0
    %v612 = vadd.f32 %v106, %v611
    %v613 = vpop.f32.mrf.mxu0
    %v614 = vadd.f32 %v110, %v613
    %615 = vmatprep.mubr.bf16.mxu0 0
    %616 = vmatmul.mubr.bf16.gmra.mxu0 %v207
    %v617 = vpop.f32.mrf.mxu0
    %v618 = vadd.f32 %v106, %v617
    %v619 = vpop.f32.mrf.mxu0
    %v620 = vadd.f32 %v110, %v619
    %v621 = vpop.f32.mrf.mxu0
    %v622 = vadd.f32 %v106, %v621
    %v623 = vpop.f32.mrf.mxu0
    %v624 = vadd.f32 %v110, %v623
    %625 = vmatprep.mubr.bf16.mxu0 0
    %626 = vmatmul.mubr.bf16.gmra.mxu0 %v210
    %v627 = vpop.f32.mrf.mxu0
    %v628 = vadd.f32 %v106, %v627
    %v629 = vpop.f32.mrf.mxu0
    %v630 = vadd.f32 %v110, %v629
    %v631 = vpop.f32.mrf.mxu0
    %v632 = vadd.f32 %v106, %v631
    %v633 = vpop.f32.mrf.mxu0
    %v634 = vadd.f32 %v110, %v633
    %635 = vmatprep.mubr.bf16.mxu0 0
    %636 = vmatmul.mubr.bf16.gmra.mxu0 %v213
    %v637 = vpop.f32.mrf.mxu0
    %v638 = vadd.f32 %v106, %v637
    %v639 = vpop.f32.mrf.mxu0
    %v640 = vadd.f32 %v110, %v639
    %v641 = vpop.f32.mrf.mxu0
    %v642 = vadd.f32 %v106, %v641
    %v643 = vpop.f32.mrf.mxu0
    %v644 = vadd.f32 %v110, %v643
    %645 = vmatprep.mubr.bf16.mxu0 0
    %646 = vmatmul.mubr.bf16.gmra.mxu0 %v216
    %v647 = vpop.f32.mrf.mxu0
    %v648 = vadd.f32 %v106, %v647
    %v649 = vpop.f32.mrf.mxu0
    %v650 = vadd.f32 %v110, %v649
    %v651 = vpop.f32.mrf.mxu0
    %v652 = vadd.f32 %v106, %v651
    %v653 = vpop.f32.mrf.mxu0
    %v654 = vadd.f32 %v110, %v653
    %655 = vmatprep.mubr.bf16.mxu0 0
    %656 = vmatmul.mubr.bf16.gmra.mxu0 %v219
    %v657 = vpop.f32.mrf.mxu0
    %v658 = vadd.f32 %v106, %v657
    %v659 = vpop.f32.mrf.mxu0
    %v660 = vadd.f32 %v110, %v659
    %v661 = vpop.f32.mrf.mxu0
    %v662 = vadd.f32 %v106, %v661
    %v663 = vpop.f32.mrf.mxu0
    %v664 = vadd.f32 %v110, %v663
    %665 = vmatprep.mubr.bf16.mxu0 0
    %666 = vmatmul.mubr.bf16.gmra.mxu0 %v222
    %v667 = vpop.f32.mrf.mxu0
    %v668 = vadd.f32 %v106, %v667
    %v669 = vpop.f32.mrf.mxu0
    %v670 = vadd.f32 %v110, %v669
    %v671 = vpop.f32.mrf.mxu0
    %v672 = vadd.f32 %v106, %v671
    %v673 = vpop.f32.mrf.mxu0
    %v674 = vadd.f32 %v110, %v673
    %675 = vdwg.mxu0
    %v676 = vpack.c.bf16 %v263, %v259
    %v677 = vpack.c.bf16 %v265, %v261
    %v678 = vpack.c.bf16 %v376, %v372
    %v679 = vpack.c.bf16 %v378, %v374
    %v680 = vpack.c.bf16 %v489, %v485
    %v681 = vpack.c.bf16 %v491, %v487
    %v682 = vpack.c.bf16 %v602, %v598
    %v683 = vpack.c.bf16 %v604, %v600
    %v684 = vpack.c.bf16 %v273, %v269
    %v685 = vpack.c.bf16 %v275, %v271
    %v686 = vpack.c.bf16 %v386, %v382
    %v687 = vpack.c.bf16 %v388, %v384
    %v688 = vpack.c.bf16 %v499, %v495
    %v689 = vpack.c.bf16 %v501, %v497
    %v690 = vpack.c.bf16 %v612, %v608
    %v691 = vpack.c.bf16 %v614, %v610
    %v692 = vpack.c.bf16 %v283, %v279
    %v693 = vpack.c.bf16 %v285, %v281
    %v694 = vpack.c.bf16 %v396, %v392
    %v695 = vpack.c.bf16 %v398, %v394
    %v696 = vpack.c.bf16 %v509, %v505
    %v697 = vpack.c.bf16 %v511, %v507
    %v698 = vpack.c.bf16 %v622, %v618
    %v699 = vpack.c.bf16 %v624, %v620
    %v700 = vpack.c.bf16 %v293, %v289
    %v701 = vpack.c.bf16 %v295, %v291
    %v702 = vpack.c.bf16 %v406, %v402
    %v703 = vpack.c.bf16 %v408, %v404
    %v704 = vpack.c.bf16 %v519, %v515
    %v705 = vpack.c.bf16 %v521, %v517
    %v706 = vpack.c.bf16 %v632, %v628
    %v707 = vpack.c.bf16 %v634, %v630
    %v708 = vpack.c.bf16 %v303, %v299
    %v709 = vpack.c.bf16 %v305, %v301
    %v710 = vpack.c.bf16 %v416, %v412
    %v711 = vpack.c.bf16 %v418, %v414
    %v712 = vpack.c.bf16 %v529, %v525
    %v713 = vpack.c.bf16 %v531, %v527
    %v714 = vpack.c.bf16 %v642, %v638
    %v715 = vpack.c.bf16 %v644, %v640
    %v716 = vpack.c.bf16 %v313, %v309
    %v717 = vpack.c.bf16 %v315, %v311
    %v718 = vpack.c.bf16 %v426, %v422
    %v719 = vpack.c.bf16 %v428, %v424
    %v720 = vpack.c.bf16 %v539, %v535
    %v721 = vpack.c.bf16 %v541, %v537
    %v722 = vpack.c.bf16 %v652, %v648
    %v723 = vpack.c.bf16 %v654, %v650
    %v724 = vpack.c.bf16 %v323, %v319
    %v725 = vpack.c.bf16 %v325, %v321
    %v726 = vpack.c.bf16 %v436, %v432
    %v727 = vpack.c.bf16 %v438, %v434
    %v728 = vpack.c.bf16 %v549, %v545
    %v729 = vpack.c.bf16 %v551, %v547
    %v730 = vpack.c.bf16 %v662, %v658
    %v731 = vpack.c.bf16 %v664, %v660
    %v732 = vpack.c.bf16 %v333, %v329
    %v733 = vpack.c.bf16 %v335, %v331
    %v734 = vpack.c.bf16 %v446, %v442
    %v735 = vpack.c.bf16 %v448, %v444
    %v736 = vpack.c.bf16 %v559, %v555
    %v737 = vpack.c.bf16 %v561, %v557
    %v738 = vpack.c.bf16 %v672, %v668
    %v739 = vpack.c.bf16 %v674, %v670
    %v804 = vunpack.c.l.b16 %v676
    %v805 = vunpack.c.l.b16 %v677
    %v806 = vunpack.c.l.b16 %v678
    %v807 = vunpack.c.l.b16 %v679
    %v808 = vunpack.c.l.b16 %v680
    %v809 = vunpack.c.l.b16 %v681
    %v810 = vunpack.c.l.b16 %v682
    %v811 = vunpack.c.l.b16 %v683
    %v812 = vunpack.c.h.b16 %v676
    %v813 = vunpack.c.h.b16 %v677
    %v814 = vunpack.c.h.b16 %v678
    %v815 = vunpack.c.h.b16 %v679
    %v816 = vunpack.c.h.b16 %v680
    %v817 = vunpack.c.h.b16 %v681
    %v818 = vunpack.c.h.b16 %v682
    %v819 = vunpack.c.h.b16 %v683
    %v820 = vunpack.c.l.b16 %v684
    %v821 = vunpack.c.l.b16 %v685
    %v822 = vunpack.c.l.b16 %v686
    %v823 = vunpack.c.l.b16 %v687
    %v824 = vunpack.c.l.b16 %v688
    %v825 = vunpack.c.l.b16 %v689
    %v826 = vunpack.c.l.b16 %v690
    %v827 = vunpack.c.l.b16 %v691
    %v828 = vunpack.c.h.b16 %v684
    %v829 = vunpack.c.h.b16 %v685
    %v830 = vunpack.c.h.b16 %v686
    %v831 = vunpack.c.h.b16 %v687
    %v832 = vunpack.c.h.b16 %v688
    %v833 = vunpack.c.h.b16 %v689
    %v834 = vunpack.c.h.b16 %v690
    %v835 = vunpack.c.h.b16 %v691
    %v836 = vunpack.c.l.b16 %v692
    %v837 = vunpack.c.l.b16 %v693
    %v838 = vunpack.c.l.b16 %v694
    %v839 = vunpack.c.l.b16 %v695
    %v840 = vunpack.c.l.b16 %v696
    %v841 = vunpack.c.l.b16 %v697
    %v842 = vunpack.c.l.b16 %v698
    %v843 = vunpack.c.l.b16 %v699
    %v844 = vunpack.c.h.b16 %v692
    %v845 = vunpack.c.h.b16 %v693
    %v846 = vunpack.c.h.b16 %v694
    %v847 = vunpack.c.h.b16 %v695
    %v848 = vunpack.c.h.b16 %v696
    %v849 = vunpack.c.h.b16 %v697
    %v850 = vunpack.c.h.b16 %v698
    %v851 = vunpack.c.h.b16 %v699
    %v852 = vunpack.c.l.b16 %v700
    %v853 = vunpack.c.l.b16 %v701
    %v854 = vunpack.c.l.b16 %v702
    %v855 = vunpack.c.l.b16 %v703
    %v856 = vunpack.c.l.b16 %v704
    %v857 = vunpack.c.l.b16 %v705
    %v858 = vunpack.c.l.b16 %v706
    %v859 = vunpack.c.l.b16 %v707
    %v860 = vunpack.c.h.b16 %v700
    %v861 = vunpack.c.h.b16 %v701
    %v862 = vunpack.c.h.b16 %v702
    %v863 = vunpack.c.h.b16 %v703
    %v864 = vunpack.c.h.b16 %v704
    %v865 = vunpack.c.h.b16 %v705
    %v866 = vunpack.c.h.b16 %v706
    %v867 = vunpack.c.h.b16 %v707
    %v868 = vunpack.c.l.b16 %v708
    %v869 = vunpack.c.l.b16 %v709
    %v870 = vunpack.c.l.b16 %v710
    %v871 = vunpack.c.l.b16 %v711
    %v872 = vunpack.c.l.b16 %v712
    %v873 = vunpack.c.l.b16 %v713
    %v874 = vunpack.c.l.b16 %v714
    %v875 = vunpack.c.l.b16 %v715
    %v876 = vunpack.c.h.b16 %v708
    %v877 = vunpack.c.h.b16 %v709
    %v878 = vunpack.c.h.b16 %v710
    %v879 = vunpack.c.h.b16 %v711
    %v880 = vunpack.c.h.b16 %v712
    %v881 = vunpack.c.h.b16 %v713
    %v882 = vunpack.c.h.b16 %v714
    %v883 = vunpack.c.h.b16 %v715
    %v884 = vunpack.c.l.b16 %v716
    %v885 = vunpack.c.l.b16 %v717
    %v886 = vunpack.c.l.b16 %v718
    %v887 = vunpack.c.l.b16 %v719
    %v888 = vunpack.c.l.b16 %v720
    %v889 = vunpack.c.l.b16 %v721
    %v890 = vunpack.c.l.b16 %v722
    %v891 = vunpack.c.l.b16 %v723
    %v892 = vunpack.c.h.b16 %v716
    %v893 = vunpack.c.h.b16 %v717
    %v894 = vunpack.c.h.b16 %v718
    %v895 = vunpack.c.h.b16 %v719
    %v896 = vunpack.c.h.b16 %v720
    %v897 = vunpack.c.h.b16 %v721
    %v898 = vunpack.c.h.b16 %v722
    %v899 = vunpack.c.h.b16 %v723
    %v900 = vunpack.c.l.b16 %v724
    %v901 = vunpack.c.l.b16 %v725
    %v902 = vunpack.c.l.b16 %v726
    %v903 = vunpack.c.l.b16 %v727
    %v904 = vunpack.c.l.b16 %v728
    %v905 = vunpack.c.l.b16 %v729
    %v906 = vunpack.c.l.b16 %v730
    %v907 = vunpack.c.l.b16 %v731
    %v908 = vunpack.c.h.b16 %v724
    %v909 = vunpack.c.h.b16 %v725
    %v910 = vunpack.c.h.b16 %v726
    %v911 = vunpack.c.h.b16 %v727
    %v912 = vunpack.c.h.b16 %v728
    %v913 = vunpack.c.h.b16 %v729
    %v914 = vunpack.c.h.b16 %v730
    %v915 = vunpack.c.h.b16 %v731
    %v916 = vunpack.c.l.b16 %v732
    %v917 = vunpack.c.l.b16 %v733
    %v918 = vunpack.c.l.b16 %v734
    %v919 = vunpack.c.l.b16 %v735
    %v920 = vunpack.c.l.b16 %v736
    %v921 = vunpack.c.l.b16 %v737
    %v922 = vunpack.c.l.b16 %v738
    %v923 = vunpack.c.l.b16 %v739
    %v924 = vunpack.c.h.b16 %v732
    %v925 = vunpack.c.h.b16 %v733
    %v926 = vunpack.c.h.b16 %v734
    %v927 = vunpack.c.h.b16 %v735
    %v928 = vunpack.c.h.b16 %v736
    %v929 = vunpack.c.h.b16 %v737
    %v930 = vunpack.c.h.b16 %v738
    %v931 = vunpack.c.h.b16 %v739
    %v932 = vpack.c.b16 %v805, %v804
    %v933 = vpack.c.b16 %v807, %v806
    %v934 = vpack.c.b16 %v809, %v808
    %v935 = vpack.c.b16 %v811, %v810
    %v936 = vpack.c.b16 %v813, %v812
    %v937 = vpack.c.b16 %v815, %v814
    %v938 = vpack.c.b16 %v817, %v816
    %v939 = vpack.c.b16 %v819, %v818
    %v940 = vpack.c.b16 %v821, %v820
    %v941 = vpack.c.b16 %v823, %v822
    %v942 = vpack.c.b16 %v825, %v824
    %v943 = vpack.c.b16 %v827, %v826
    %v944 = vpack.c.b16 %v829, %v828
    %v945 = vpack.c.b16 %v831, %v830
    %v946 = vpack.c.b16 %v833, %v832
    %v947 = vpack.c.b16 %v835, %v834
    %v948 = vpack.c.b16 %v837, %v836
    %v949 = vpack.c.b16 %v839, %v838
    %v950 = vpack.c.b16 %v841, %v840
    %v951 = vpack.c.b16 %v843, %v842
    %v952 = vpack.c.b16 %v845, %v844
    %v953 = vpack.c.b16 %v847, %v846
    %v954 = vpack.c.b16 %v849, %v848
    %v955 = vpack.c.b16 %v851, %v850
    %v956 = vpack.c.b16 %v853, %v852
    %v957 = vpack.c.b16 %v855, %v854
    %v958 = vpack.c.b16 %v857, %v856
    %v959 = vpack.c.b16 %v859, %v858
    %v960 = vpack.c.b16 %v861, %v860
    %v961 = vpack.c.b16 %v863, %v862
    %v962 = vpack.c.b16 %v865, %v864
    %v963 = vpack.c.b16 %v867, %v866
    %v964 = vpack.c.b16 %v869, %v868
    %v965 = vpack.c.b16 %v871, %v870
    %v966 = vpack.c.b16 %v873, %v872
    %v967 = vpack.c.b16 %v875, %v874
    %v968 = vpack.c.b16 %v877, %v876
    %v969 = vpack.c.b16 %v879, %v878
    %v970 = vpack.c.b16 %v881, %v880
    %v971 = vpack.c.b16 %v883, %v882
    %v972 = vpack.c.b16 %v885, %v884
    %v973 = vpack.c.b16 %v887, %v886
    %v974 = vpack.c.b16 %v889, %v888
    %v975 = vpack.c.b16 %v891, %v890
    %v976 = vpack.c.b16 %v893, %v892
    %v977 = vpack.c.b16 %v895, %v894
    %v978 = vpack.c.b16 %v897, %v896
    %v979 = vpack.c.b16 %v899, %v898
    %v980 = vpack.c.b16 %v901, %v900
    %v981 = vpack.c.b16 %v903, %v902
    %v982 = vpack.c.b16 %v905, %v904
    %v983 = vpack.c.b16 %v907, %v906
    %v984 = vpack.c.b16 %v909, %v908
    %v985 = vpack.c.b16 %v911, %v910
    %v986 = vpack.c.b16 %v913, %v912
    %v987 = vpack.c.b16 %v915, %v914
    %v988 = vpack.c.b16 %v917, %v916
    %v989 = vpack.c.b16 %v919, %v918
    %v990 = vpack.c.b16 %v921, %v920
    %v991 = vpack.c.b16 %v923, %v922
    %v992 = vpack.c.b16 %v925, %v924
    %v993 = vpack.c.b16 %v927, %v926
    %v994 = vpack.c.b16 %v929, %v928
    %v995 = vpack.c.b16 %v931, %v930
    %1060 = vst [vmem:[#allocation2] sm:$0xff] %v932
    %1061 = vst [vmem:[#allocation2 + $0x8] sm:$0xff] %v933
    %1062 = vst [vmem:[#allocation2 + $0x10] sm:$0xff] %v934
    %1063 = vst [vmem:[#allocation2 + $0x18] sm:$0xff] %v935
    %1064 = vst [vmem:[#allocation2 + $0x20] sm:$0xff] %v936
    %1065 = vst [vmem:[#allocation2 + $0x28] sm:$0xff] %v937
    %1066 = vst [vmem:[#allocation2 + $0x30] sm:$0xff] %v938
    %1067 = vst [vmem:[#allocation2 + $0x38] sm:$0xff] %v939
    %1068 = vst [vmem:[#allocation2 + $0x40] sm:$0xff] %v940
    %1069 = vst [vmem:[#allocation2 + $0x48] sm:$0xff] %v941
    %1070 = vst [vmem:[#allocation2 + $0x50] sm:$0xff] %v942
    %1071 = vst [vmem:[#allocation2 + $0x58] sm:$0xff] %v943
    %1072 = vst [vmem:[#allocation2 + $0x60] sm:$0xff] %v944
    %1073 = vst [vmem:[#allocation2 + $0x68] sm:$0xff] %v945
    %1074 = vst [vmem:[#allocation2 + $0x70] sm:$0xff] %v946
    %1075 = vst [vmem:[#allocation2 + $0x78] sm:$0xff] %v947
    %1076 = vst [vmem:[#allocation2 + $0x80] sm:$0xff] %v948
    %1077 = vst [vmem:[#allocation2 + $0x88] sm:$0xff] %v949
    %1078 = vst [vmem:[#allocation2 + $0x90] sm:$0xff] %v950
    %1079 = vst [vmem:[#allocation2 + $0x98] sm:$0xff] %v951
    %1080 = vst [vmem:[#allocation2 + $0xa0] sm:$0xff] %v952
    %1081 = vst [vmem:[#allocation2 + $0xa8] sm:$0xff] %v953
    %1082 = vst [vmem:[#allocation2 + $0xb0] sm:$0xff] %v954
    %1083 = vst [vmem:[#allocation2 + $0xb8] sm:$0xff] %v955
    %1084 = vst [vmem:[#allocation2 + $0xc0] sm:$0xff] %v956
    %1085 = vst [vmem:[#allocation2 + $0xc8] sm:$0xff] %v957
    %1086 = vst [vmem:[#allocation2 + $0xd0] sm:$0xff] %v958
    %1087 = vst [vmem:[#allocation2 + $0xd8] sm:$0xff] %v959
    %1088 = vst [vmem:[#allocation2 + $0xe0] sm:$0xff] %v960
    %1089 = vst [vmem:[#allocation2 + $0xe8] sm:$0xff] %v961
    %1090 = vst [vmem:[#allocation2 + $0xf0] sm:$0xff] %v962
    %1091 = vst [vmem:[#allocation2 + $0xf8] sm:$0xff] %v963
    %1092 = vst [vmem:[#allocation2 + $0x100] sm:$0xff] %v964
    %1093 = vst [vmem:[#allocation2 + $0x108] sm:$0xff] %v965
    %1094 = vst [vmem:[#allocation2 + $0x110] sm:$0xff] %v966
    %1095 = vst [vmem:[#allocation2 + $0x118] sm:$0xff] %v967
    %1096 = vst [vmem:[#allocation2 + $0x120] sm:$0xff] %v968
    %1097 = vst [vmem:[#allocation2 + $0x128] sm:$0xff] %v969
    %1098 = vst [vmem:[#allocation2 + $0x130] sm:$0xff] %v970
    %1099 = vst [vmem:[#allocation2 + $0x138] sm:$0xff] %v971
    %1100 = vst [vmem:[#allocation2 + $0x140] sm:$0xff] %v972
    %1101 = vst [vmem:[#allocation2 + $0x148] sm:$0xff] %v973
    %1102 = vst [vmem:[#allocation2 + $0x150] sm:$0xff] %v974
    %1103 = vst [vmem:[#allocation2 + $0x158] sm:$0xff] %v975
    %1104 = vst [vmem:[#allocation2 + $0x160] sm:$0xff] %v976
    %1105 = vst [vmem:[#allocation2 + $0x168] sm:$0xff] %v977
    %1106 = vst [vmem:[#allocation2 + $0x170] sm:$0xff] %v978
    %1107 = vst [vmem:[#allocation2 + $0x178] sm:$0xff] %v979
    %1108 = vst [vmem:[#allocation2 + $0x180] sm:$0xff] %v980
    %1109 = vst [vmem:[#allocation2 + $0x188] sm:$0xff] %v981
    %1110 = vst [vmem:[#allocation2 + $0x190] sm:$0xff] %v982
    %1111 = vst [vmem:[#allocation2 + $0x198] sm:$0xff] %v983
    %1112 = vst [vmem:[#allocation2 + $0x1a0] sm:$0xff] %v984
    %1113 = vst [vmem:[#allocation2 + $0x1a8] sm:$0xff] %v985
    %1114 = vst [vmem:[#allocation2 + $0x1b0] sm:$0xff] %v986
    %1115 = vst [vmem:[#allocation2 + $0x1b8] sm:$0xff] %v987
    %1116 = vst [vmem:[#allocation2 + $0x1c0] sm:$0xff] %v988
    %1117 = vst [vmem:[#allocation2 + $0x1c8] sm:$0xff] %v989
    %1118 = vst [vmem:[#allocation2 + $0x1d0] sm:$0xff] %v990
    %1119 = vst [vmem:[#allocation2 + $0x1d8] sm:$0xff] %v991
    %1120 = vst [vmem:[#allocation2 + $0x1e0] sm:$0xff] %v992
    %1121 = vst [vmem:[#allocation2 + $0x1e8] sm:$0xff] %v993
    %1122 = vst [vmem:[#allocation2 + $0x1f0] sm:$0xff] %v994
    %1123 = vst [vmem:[#allocation2 + $0x1f8] sm:$0xff] %v995
    %v1124 = vld [vmem:[#allocation4] sm:$0xff]
    %v1125 = vld [vmem:[#allocation4 + $0x8] sm:$0xff]
    %v1126 = vld [vmem:[#allocation4 + $0x10] sm:$0xff]
    %v1127 = vld [vmem:[#allocation4 + $0x18] sm:$0xff]
    %v1128 = vld [vmem:[#allocation4 + $0x20] sm:$0xff]
    %v1129 = vld [vmem:[#allocation4 + $0x28] sm:$0xff]
    %v1130 = vld [vmem:[#allocation4 + $0x30] sm:$0xff]
    %v1131 = vld [vmem:[#allocation4 + $0x38] sm:$0xff]
    %v1132 = vld [vmem:[#allocation4 + $0x40] sm:$0xff]
    %v1133 = vld [vmem:[#allocation4 + $0x48] sm:$0xff]
    %v1134 = vld [vmem:[#allocation4 + $0x50] sm:$0xff]
    %v1135 = vld [vmem:[#allocation4 + $0x58] sm:$0xff]
    %v1136 = vld [vmem:[#allocation4 + $0x60] sm:$0xff]
    %v1137 = vld [vmem:[#allocation4 + $0x68] sm:$0xff]
    %v1138 = vld [vmem:[#allocation4 + $0x70] sm:$0xff]
    %v1139 = vld [vmem:[#allocation4 + $0x78] sm:$0xff]
    %v1140 = vld [vmem:[#allocation4 + $0x80] sm:$0xff]
    %v1141 = vld [vmem:[#allocation4 + $0x88] sm:$0xff]
    %v1142 = vld [vmem:[#allocation4 + $0x90] sm:$0xff]
    %v1143 = vld [vmem:[#allocation4 + $0x98] sm:$0xff]
    %v1144 = vld [vmem:[#allocation4 + $0xa0] sm:$0xff]
    %v1145 = vld [vmem:[#allocation4 + $0xa8] sm:$0xff]
    %v1146 = vld [vmem:[#allocation4 + $0xb0] sm:$0xff]
    %v1147 = vld [vmem:[#allocation4 + $0xb8] sm:$0xff]
    %v1148 = vld [vmem:[#allocation4 + $0xc0] sm:$0xff]
    %v1149 = vld [vmem:[#allocation4 + $0xc8] sm:$0xff]
    %v1150 = vld [vmem:[#allocation4 + $0xd0] sm:$0xff]
    %v1151 = vld [vmem:[#allocation4 + $0xd8] sm:$0xff]
    %v1152 = vld [vmem:[#allocation4 + $0xe0] sm:$0xff]
    %v1153 = vld [vmem:[#allocation4 + $0xe8] sm:$0xff]
    %v1154 = vld [vmem:[#allocation4 + $0xf0] sm:$0xff]
    %v1155 = vld [vmem:[#allocation4 + $0xf8] sm:$0xff]
    %v1156 = vld [vmem:[#allocation4 + $0x100] sm:$0xff]
    %v1157 = vld [vmem:[#allocation4 + $0x108] sm:$0xff]
    %v1158 = vld [vmem:[#allocation4 + $0x110] sm:$0xff]
    %v1159 = vld [vmem:[#allocation4 + $0x118] sm:$0xff]
    %v1160 = vld [vmem:[#allocation4 + $0x120] sm:$0xff]
    %v1161 = vld [vmem:[#allocation4 + $0x128] sm:$0xff]
    %v1162 = vld [vmem:[#allocation4 + $0x130] sm:$0xff]
    %v1163 = vld [vmem:[#allocation4 + $0x138] sm:$0xff]
    %v1164 = vld [vmem:[#allocation4 + $0x140] sm:$0xff]
    %v1165 = vld [vmem:[#allocation4 + $0x148] sm:$0xff]
    %v1166 = vld [vmem:[#allocation4 + $0x150] sm:$0xff]
    %v1167 = vld [vmem:[#allocation4 + $0x158] sm:$0xff]
    %v1168 = vld [vmem:[#allocation4 + $0x160] sm:$0xff]
    %v1169 = vld [vmem:[#allocation4 + $0x168] sm:$0xff]
    %v1170 = vld [vmem:[#allocation4 + $0x170] sm:$0xff]
    %v1171 = vld [vmem:[#allocation4 + $0x178] sm:$0xff]
    %v1172 = vld [vmem:[#allocation4 + $0x180] sm:$0xff]
    %v1173 = vld [vmem:[#allocation4 + $0x188] sm:$0xff]
    %v1174 = vld [vmem:[#allocation4 + $0x190] sm:$0xff]
    %v1175 = vld [vmem:[#allocation4 + $0x198] sm:$0xff]
    %v1176 = vld [vmem:[#allocation4 + $0x1a0] sm:$0xff]
    %v1177 = vld [vmem:[#allocation4 + $0x1a8] sm:$0xff]
    %v1178 = vld [vmem:[#allocation4 + $0x1b0] sm:$0xff]
    %v1179 = vld [vmem:[#allocation4 + $0x1b8] sm:$0xff]
    %v1180 = vld [vmem:[#allocation4 + $0x1c0] sm:$0xff]
    %v1181 = vld [vmem:[#allocation4 + $0x1c8] sm:$0xff]
    %v1182 = vld [vmem:[#allocation4 + $0x1d0] sm:$0xff]
    %v1183 = vld [vmem:[#allocation4 + $0x1d8] sm:$0xff]
    %v1184 = vld [vmem:[#allocation4 + $0x1e0] sm:$0xff]
    %v1185 = vld [vmem:[#allocation4 + $0x1e8] sm:$0xff]
    %v1186 = vld [vmem:[#allocation4 + $0x1f0] sm:$0xff]
    %v1187 = vld [vmem:[#allocation4 + $0x1f8] sm:$0xff]
    %v1188 = vld [vmem:[#allocation4 + $0x200] sm:$0xff]
    %v1189 = vld [vmem:[#allocation4 + $0x208] sm:$0xff]
    %v1190 = vld [vmem:[#allocation4 + $0x210] sm:$0xff]
    %v1191 = vld [vmem:[#allocation4 + $0x218] sm:$0xff]
    %v1192 = vld [vmem:[#allocation4 + $0x220] sm:$0xff]
    %v1193 = vld [vmem:[#allocation4 + $0x228] sm:$0xff]
    %v1194 = vld [vmem:[#allocation4 + $0x230] sm:$0xff]
    %v1195 = vld [vmem:[#allocation4 + $0x238] sm:$0xff]
    %v1196 = vld [vmem:[#allocation4 + $0x240] sm:$0xff]
    %v1197 = vld [vmem:[#allocation4 + $0x248] sm:$0xff]
    %v1198 = vld [vmem:[#allocation4 + $0x250] sm:$0xff]
    %v1199 = vld [vmem:[#allocation4 + $0x258] sm:$0xff]
    %v1200 = vld [vmem:[#allocation4 + $0x260] sm:$0xff]
    %v1201 = vld [vmem:[#allocation4 + $0x268] sm:$0xff]
    %v1202 = vld [vmem:[#allocation4 + $0x270] sm:$0xff]
    %v1203 = vld [vmem:[#allocation4 + $0x278] sm:$0xff]
    %v1204 = vld [vmem:[#allocation4 + $0x280] sm:$0xff]
    %v1205 = vld [vmem:[#allocation4 + $0x288] sm:$0xff]
    %v1206 = vld [vmem:[#allocation4 + $0x290] sm:$0xff]
    %v1207 = vld [vmem:[#allocation4 + $0x298] sm:$0xff]
    %v1208 = vld [vmem:[#allocation4 + $0x2a0] sm:$0xff]
    %v1209 = vld [vmem:[#allocation4 + $0x2a8] sm:$0xff]
    %v1210 = vld [vmem:[#allocation4 + $0x2b0] sm:$0xff]
    %v1211 = vld [vmem:[#allocation4 + $0x2b8] sm:$0xff]
    %v1212 = vld [vmem:[#allocation4 + $0x2c0] sm:$0xff]
    %v1213 = vld [vmem:[#allocation4 + $0x2c8] sm:$0xff]
    %v1214 = vld [vmem:[#allocation4 + $0x2d0] sm:$0xff]
    %v1215 = vld [vmem:[#allocation4 + $0x2d8] sm:$0xff]
    %v1216 = vld [vmem:[#allocation4 + $0x2e0] sm:$0xff]
    %v1217 = vld [vmem:[#allocation4 + $0x2e8] sm:$0xff]
    %v1218 = vld [vmem:[#allocation4 + $0x2f0] sm:$0xff]
    %v1219 = vld [vmem:[#allocation4 + $0x2f8] sm:$0xff]
    %v1220 = vld [vmem:[#allocation4 + $0x300] sm:$0xff]
    %v1221 = vld [vmem:[#allocation4 + $0x308] sm:$0xff]
    %v1222 = vld [vmem:[#allocation4 + $0x310] sm:$0xff]
    %v1223 = vld [vmem:[#allocation4 + $0x318] sm:$0xff]
    %v1224 = vld [vmem:[#allocation4 + $0x320] sm:$0xff]
    %v1225 = vld [vmem:[#allocation4 + $0x328] sm:$0xff]
    %v1226 = vld [vmem:[#allocation4 + $0x330] sm:$0xff]
    %v1227 = vld [vmem:[#allocation4 + $0x338] sm:$0xff]
    %v1228 = vld [vmem:[#allocation4 + $0x340] sm:$0xff]
    %v1229 = vld [vmem:[#allocation4 + $0x348] sm:$0xff]
    %v1230 = vld [vmem:[#allocation4 + $0x350] sm:$0xff]
    %v1231 = vld [vmem:[#allocation4 + $0x358] sm:$0xff]
    %v1232 = vld [vmem:[#allocation4 + $0x360] sm:$0xff]
    %v1233 = vld [vmem:[#allocation4 + $0x368] sm:$0xff]
    %v1234 = vld [vmem:[#allocation4 + $0x370] sm:$0xff]
    %v1235 = vld [vmem:[#allocation4 + $0x378] sm:$0xff]
    %v1236 = vld [vmem:[#allocation4 + $0x380] sm:$0xff]
    %v1237 = vld [vmem:[#allocation4 + $0x388] sm:$0xff]
    %v1238 = vld [vmem:[#allocation4 + $0x390] sm:$0xff]
    %v1239 = vld [vmem:[#allocation4 + $0x398] sm:$0xff]
    %v1240 = vld [vmem:[#allocation4 + $0x3a0] sm:$0xff]
    %v1241 = vld [vmem:[#allocation4 + $0x3a8] sm:$0xff]
    %v1242 = vld [vmem:[#allocation4 + $0x3b0] sm:$0xff]
    %v1243 = vld [vmem:[#allocation4 + $0x3b8] sm:$0xff]
    %v1244 = vld [vmem:[#allocation4 + $0x3c0] sm:$0xff]
    %v1245 = vld [vmem:[#allocation4 + $0x3c8] sm:$0xff]
    %v1246 = vld [vmem:[#allocation4 + $0x3d0] sm:$0xff]
    %v1247 = vld [vmem:[#allocation4 + $0x3d8] sm:$0xff]
    %v1248 = vld [vmem:[#allocation4 + $0x3e0] sm:$0xff]
    %v1249 = vld [vmem:[#allocation4 + $0x3e8] sm:$0xff]
    %v1250 = vld [vmem:[#allocation4 + $0x3f0] sm:$0xff]
    %v1251 = vld [vmem:[#allocation4 + $0x3f8] sm:$0xff]
    %v1380 = vunpack.c.l.b16 %v1124
    %v1381 = vunpack.c.h.b16 %v1124
    %v1382 = vunpack.c.l.b16 %v1125
    %v1383 = vunpack.c.h.b16 %v1125
    %v1384 = vunpack.c.l.b16 %v1126
    %v1385 = vunpack.c.h.b16 %v1126
    %v1386 = vunpack.c.l.b16 %v1127
    %v1387 = vunpack.c.h.b16 %v1127
    %v1388 = vunpack.c.l.b16 %v1128
    %v1389 = vunpack.c.h.b16 %v1128
    %v1390 = vunpack.c.l.b16 %v1129
    %v1391 = vunpack.c.h.b16 %v1129
    %v1392 = vunpack.c.l.b16 %v1130
    %v1393 = vunpack.c.h.b16 %v1130
    %v1394 = vunpack.c.l.b16 %v1131
    %v1395 = vunpack.c.h.b16 %v1131
    %v1396 = vunpack.c.l.b16 %v1132
    %v1397 = vunpack.c.h.b16 %v1132
    %v1398 = vunpack.c.l.b16 %v1133
    %v1399 = vunpack.c.h.b16 %v1133
    %v1400 = vunpack.c.l.b16 %v1134
    %v1401 = vunpack.c.h.b16 %v1134
    %v1402 = vunpack.c.l.b16 %v1135
    %v1403 = vunpack.c.h.b16 %v1135
    %v1404 = vunpack.c.l.b16 %v1136
    %v1405 = vunpack.c.h.b16 %v1136
    %v1406 = vunpack.c.l.b16 %v1137
    %v1407 = vunpack.c.h.b16 %v1137
    %v1408 = vunpack.c.l.b16 %v1138
    %v1409 = vunpack.c.h.b16 %v1138
    %v1410 = vunpack.c.l.b16 %v1139
    %v1411 = vunpack.c.h.b16 %v1139
    %v1412 = vunpack.c.l.b16 %v1140
    %v1413 = vunpack.c.h.b16 %v1140
    %v1414 = vunpack.c.l.b16 %v1141
    %v1415 = vunpack.c.h.b16 %v1141
    %v1416 = vunpack.c.l.b16 %v1142
    %v1417 = vunpack.c.h.b16 %v1142
    %v1418 = vunpack.c.l.b16 %v1143
    %v1419 = vunpack.c.h.b16 %v1143
    %v1420 = vunpack.c.l.b16 %v1144
    %v1421 = vunpack.c.h.b16 %v1144
    %v1422 = vunpack.c.l.b16 %v1145
    %v1423 = vunpack.c.h.b16 %v1145
    %v1424 = vunpack.c.l.b16 %v1146
    %v1425 = vunpack.c.h.b16 %v1146
    %v1426 = vunpack.c.l.b16 %v1147
    %v1427 = vunpack.c.h.b16 %v1147
    %v1428 = vunpack.c.l.b16 %v1148
    %v1429 = vunpack.c.h.b16 %v1148
    %v1430 = vunpack.c.l.b16 %v1149
    %v1431 = vunpack.c.h.b16 %v1149
    %v1432 = vunpack.c.l.b16 %v1150
    %v1433 = vunpack.c.h.b16 %v1150
    %v1434 = vunpack.c.l.b16 %v1151
    %v1435 = vunpack.c.h.b16 %v1151
    %v1436 = vunpack.c.l.b16 %v1152
    %v1437 = vunpack.c.h.b16 %v1152
    %v1438 = vunpack.c.l.b16 %v1153
    %v1439 = vunpack.c.h.b16 %v1153
    %v1440 = vunpack.c.l.b16 %v1154
    %v1441 = vunpack.c.h.b16 %v1154
    %v1442 = vunpack.c.l.b16 %v1155
    %v1443 = vunpack.c.h.b16 %v1155
    %v1444 = vunpack.c.l.b16 %v1156
    %v1445 = vunpack.c.h.b16 %v1156
    %v1446 = vunpack.c.l.b16 %v1157
    %v1447 = vunpack.c.h.b16 %v1157
    %v1448 = vunpack.c.l.b16 %v1158
    %v1449 = vunpack.c.h.b16 %v1158
    %v1450 = vunpack.c.l.b16 %v1159
    %v1451 = vunpack.c.h.b16 %v1159
    %v1452 = vunpack.c.l.b16 %v1160
    %v1453 = vunpack.c.h.b16 %v1160
    %v1454 = vunpack.c.l.b16 %v1161
    %v1455 = vunpack.c.h.b16 %v1161
    %v1456 = vunpack.c.l.b16 %v1162
    %v1457 = vunpack.c.h.b16 %v1162
    %v1458 = vunpack.c.l.b16 %v1163
    %v1459 = vunpack.c.h.b16 %v1163
    %v1460 = vunpack.c.l.b16 %v1164
    %v1461 = vunpack.c.h.b16 %v1164
    %v1462 = vunpack.c.l.b16 %v1165
    %v1463 = vunpack.c.h.b16 %v1165
    %v1464 = vunpack.c.l.b16 %v1166
    %v1465 = vunpack.c.h.b16 %v1166
    %v1466 = vunpack.c.l.b16 %v1167
    %v1467 = vunpack.c.h.b16 %v1167
    %v1468 = vunpack.c.l.b16 %v1168
    %v1469 = vunpack.c.h.b16 %v1168
    %v1470 = vunpack.c.l.b16 %v1169
    %v1471 = vunpack.c.h.b16 %v1169
    %v1472 = vunpack.c.l.b16 %v1170
    %v1473 = vunpack.c.h.b16 %v1170
    %v1474 = vunpack.c.l.b16 %v1171
    %v1475 = vunpack.c.h.b16 %v1171
    %v1476 = vunpack.c.l.b16 %v1172
    %v1477 = vunpack.c.h.b16 %v1172
    %v1478 = vunpack.c.l.b16 %v1173
    %v1479 = vunpack.c.h.b16 %v1173
    %v1480 = vunpack.c.l.b16 %v1174
    %v1481 = vunpack.c.h.b16 %v1174
    %v1482 = vunpack.c.l.b16 %v1175
    %v1483 = vunpack.c.h.b16 %v1175
    %v1484 = vunpack.c.l.b16 %v1176
    %v1485 = vunpack.c.h.b16 %v1176
    %v1486 = vunpack.c.l.b16 %v1177
    %v1487 = vunpack.c.h.b16 %v1177
    %v1488 = vunpack.c.l.b16 %v1178
    %v1489 = vunpack.c.h.b16 %v1178
    %v1490 = vunpack.c.l.b16 %v1179
    %v1491 = vunpack.c.h.b16 %v1179
    %v1492 = vunpack.c.l.b16 %v1180
    %v1493 = vunpack.c.h.b16 %v1180
    %v1494 = vunpack.c.l.b16 %v1181
    %v1495 = vunpack.c.h.b16 %v1181
    %v1496 = vunpack.c.l.b16 %v1182
    %v1497 = vunpack.c.h.b16 %v1182
    %v1498 = vunpack.c.l.b16 %v1183
    %v1499 = vunpack.c.h.b16 %v1183
    %v1500 = vunpack.c.l.b16 %v1184
    %v1501 = vunpack.c.h.b16 %v1184
    %v1502 = vunpack.c.l.b16 %v1185
    %v1503 = vunpack.c.h.b16 %v1185
    %v1504 = vunpack.c.l.b16 %v1186
    %v1505 = vunpack.c.h.b16 %v1186
    %v1506 = vunpack.c.l.b16 %v1187
    %v1507 = vunpack.c.h.b16 %v1187
    %v1508 = vunpack.c.l.b16 %v1188
    %v1509 = vunpack.c.h.b16 %v1188
    %v1510 = vunpack.c.l.b16 %v1189
    %v1511 = vunpack.c.h.b16 %v1189
    %v1512 = vunpack.c.l.b16 %v1190
    %v1513 = vunpack.c.h.b16 %v1190
    %v1514 = vunpack.c.l.b16 %v1191
    %v1515 = vunpack.c.h.b16 %v1191
    %v1516 = vunpack.c.l.b16 %v1192
    %v1517 = vunpack.c.h.b16 %v1192
    %v1518 = vunpack.c.l.b16 %v1193
    %v1519 = vunpack.c.h.b16 %v1193
    %v1520 = vunpack.c.l.b16 %v1194
    %v1521 = vunpack.c.h.b16 %v1194
    %v1522 = vunpack.c.l.b16 %v1195
    %v1523 = vunpack.c.h.b16 %v1195
    %v1524 = vunpack.c.l.b16 %v1196
    %v1525 = vunpack.c.h.b16 %v1196
    %v1526 = vunpack.c.l.b16 %v1197
    %v1527 = vunpack.c.h.b16 %v1197
    %v1528 = vunpack.c.l.b16 %v1198
    %v1529 = vunpack.c.h.b16 %v1198
    %v1530 = vunpack.c.l.b16 %v1199
    %v1531 = vunpack.c.h.b16 %v1199
    %v1532 = vunpack.c.l.b16 %v1200
    %v1533 = vunpack.c.h.b16 %v1200
    %v1534 = vunpack.c.l.b16 %v1201
    %v1535 = vunpack.c.h.b16 %v1201
    %v1536 = vunpack.c.l.b16 %v1202
    %v1537 = vunpack.c.h.b16 %v1202
    %v1538 = vunpack.c.l.b16 %v1203
    %v1539 = vunpack.c.h.b16 %v1203
    %v1540 = vunpack.c.l.b16 %v1204
    %v1541 = vunpack.c.h.b16 %v1204
    %v1542 = vunpack.c.l.b16 %v1205
    %v1543 = vunpack.c.h.b16 %v1205
    %v1544 = vunpack.c.l.b16 %v1206
    %v1545 = vunpack.c.h.b16 %v1206
    %v1546 = vunpack.c.l.b16 %v1207
    %v1547 = vunpack.c.h.b16 %v1207
    %v1548 = vunpack.c.l.b16 %v1208
    %v1549 = vunpack.c.h.b16 %v1208
    %v1550 = vunpack.c.l.b16 %v1209
    %v1551 = vunpack.c.h.b16 %v1209
    %v1552 = vunpack.c.l.b16 %v1210
    %v1553 = vunpack.c.h.b16 %v1210
    %v1554 = vunpack.c.l.b16 %v1211
    %v1555 = vunpack.c.h.b16 %v1211
    %v1556 = vunpack.c.l.b16 %v1212
    %v1557 = vunpack.c.h.b16 %v1212
    %v1558 = vunpack.c.l.b16 %v1213
    %v1559 = vunpack.c.h.b16 %v1213
    %v1560 = vunpack.c.l.b16 %v1214
    %v1561 = vunpack.c.h.b16 %v1214
    %v1562 = vunpack.c.l.b16 %v1215
    %v1563 = vunpack.c.h.b16 %v1215
    %v1564 = vunpack.c.l.b16 %v1216
    %v1565 = vunpack.c.h.b16 %v1216
    %v1566 = vunpack.c.l.b16 %v1217
    %v1567 = vunpack.c.h.b16 %v1217
    %v1568 = vunpack.c.l.b16 %v1218
    %v1569 = vunpack.c.h.b16 %v1218
    %v1570 = vunpack.c.l.b16 %v1219
    %v1571 = vunpack.c.h.b16 %v1219
    %v1572 = vunpack.c.l.b16 %v1220
    %v1573 = vunpack.c.h.b16 %v1220
    %v1574 = vunpack.c.l.b16 %v1221
    %v1575 = vunpack.c.h.b16 %v1221
    %v1576 = vunpack.c.l.b16 %v1222
    %v1577 = vunpack.c.h.b16 %v1222
    %v1578 = vunpack.c.l.b16 %v1223
    %v1579 = vunpack.c.h.b16 %v1223
    %v1580 = vunpack.c.l.b16 %v1224
    %v1581 = vunpack.c.h.b16 %v1224
    %v1582 = vunpack.c.l.b16 %v1225
    %v1583 = vunpack.c.h.b16 %v1225
    %v1584 = vunpack.c.l.b16 %v1226
    %v1585 = vunpack.c.h.b16 %v1226
    %v1586 = vunpack.c.l.b16 %v1227
    %v1587 = vunpack.c.h.b16 %v1227
    %v1588 = vunpack.c.l.b16 %v1228
    %v1589 = vunpack.c.h.b16 %v1228
    %v1590 = vunpack.c.l.b16 %v1229
    %v1591 = vunpack.c.h.b16 %v1229
    %v1592 = vunpack.c.l.b16 %v1230
    %v1593 = vunpack.c.h.b16 %v1230
    %v1594 = vunpack.c.l.b16 %v1231
    %v1595 = vunpack.c.h.b16 %v1231
    %v1596 = vunpack.c.l.b16 %v1232
    %v1597 = vunpack.c.h.b16 %v1232
    %v1598 = vunpack.c.l.b16 %v1233
    %v1599 = vunpack.c.h.b16 %v1233
    %v1600 = vunpack.c.l.b16 %v1234
    %v1601 = vunpack.c.h.b16 %v1234
    %v1602 = vunpack.c.l.b16 %v1235
    %v1603 = vunpack.c.h.b16 %v1235
    %v1604 = vunpack.c.l.b16 %v1236
    %v1605 = vunpack.c.h.b16 %v1236
    %v1606 = vunpack.c.l.b16 %v1237
    %v1607 = vunpack.c.h.b16 %v1237
    %v1608 = vunpack.c.l.b16 %v1238
    %v1609 = vunpack.c.h.b16 %v1238
    %v1610 = vunpack.c.l.b16 %v1239
    %v1611 = vunpack.c.h.b16 %v1239
    %v1612 = vunpack.c.l.b16 %v1240
    %v1613 = vunpack.c.h.b16 %v1240
    %v1614 = vunpack.c.l.b16 %v1241
    %v1615 = vunpack.c.h.b16 %v1241
    %v1616 = vunpack.c.l.b16 %v1242
    %v1617 = vunpack.c.h.b16 %v1242
    %v1618 = vunpack.c.l.b16 %v1243
    %v1619 = vunpack.c.h.b16 %v1243
    %v1620 = vunpack.c.l.b16 %v1244
    %v1621 = vunpack.c.h.b16 %v1244
    %v1622 = vunpack.c.l.b16 %v1245
    %v1623 = vunpack.c.h.b16 %v1245
    %v1624 = vunpack.c.l.b16 %v1246
    %v1625 = vunpack.c.h.b16 %v1246
    %v1626 = vunpack.c.l.b16 %v1247
    %v1627 = vunpack.c.h.b16 %v1247
    %v1628 = vunpack.c.l.b16 %v1248
    %v1629 = vunpack.c.h.b16 %v1248
    %v1630 = vunpack.c.l.b16 %v1249
    %v1631 = vunpack.c.h.b16 %v1249
    %v1632 = vunpack.c.l.b16 %v1250
    %v1633 = vunpack.c.h.b16 %v1250
    %v1634 = vunpack.c.l.b16 %v1251
    %v1635 = vunpack.c.h.b16 %v1251
    %v1636 = vpack.c.b16 %v1388, %v1380
    %v1637 = vpack.c.b16 %v1389, %v1381
    %v1638 = vpack.c.b16 %v1390, %v1382
    %v1639 = vpack.c.b16 %v1391, %v1383
    %v1640 = vpack.c.b16 %v1392, %v1384
    %v1641 = vpack.c.b16 %v1393, %v1385
    %v1642 = vpack.c.b16 %v1394, %v1386
    %v1643 = vpack.c.b16 %v1395, %v1387
    %v1644 = vpack.c.b16 %v1404, %v1396
    %v1645 = vpack.c.b16 %v1405, %v1397
    %v1646 = vpack.c.b16 %v1406, %v1398
    %v1647 = vpack.c.b16 %v1407, %v1399
    %v1648 = vpack.c.b16 %v1408, %v1400
    %v1649 = vpack.c.b16 %v1409, %v1401
    %v1650 = vpack.c.b16 %v1410, %v1402
    %v1651 = vpack.c.b16 %v1411, %v1403
    %v1652 = vpack.c.b16 %v1420, %v1412
    %v1653 = vpack.c.b16 %v1421, %v1413
    %v1654 = vpack.c.b16 %v1422, %v1414
    %v1655 = vpack.c.b16 %v1423, %v1415
    %v1656 = vpack.c.b16 %v1424, %v1416
    %v1657 = vpack.c.b16 %v1425, %v1417
    %v1658 = vpack.c.b16 %v1426, %v1418
    %v1659 = vpack.c.b16 %v1427, %v1419
    %v1660 = vpack.c.b16 %v1436, %v1428
    %v1661 = vpack.c.b16 %v1437, %v1429
    %v1662 = vpack.c.b16 %v1438, %v1430
    %v1663 = vpack.c.b16 %v1439, %v1431
    %v1664 = vpack.c.b16 %v1440, %v1432
    %v1665 = vpack.c.b16 %v1441, %v1433
    %v1666 = vpack.c.b16 %v1442, %v1434
    %v1667 = vpack.c.b16 %v1443, %v1435
    %v1668 = vpack.c.b16 %v1452, %v1444
    %v1669 = vpack.c.b16 %v1453, %v1445
    %v1670 = vpack.c.b16 %v1454, %v1446
    %v1671 = vpack.c.b16 %v1455, %v1447
    %v1672 = vpack.c.b16 %v1456, %v1448
    %v1673 = vpack.c.b16 %v1457, %v1449
    %v1674 = vpack.c.b16 %v1458, %v1450
    %v1675 = vpack.c.b16 %v1459, %v1451
    %v1676 = vpack.c.b16 %v1468, %v1460
    %v1677 = vpack.c.b16 %v1469, %v1461
    %v1678 = vpack.c.b16 %v1470, %v1462
    %v1679 = vpack.c.b16 %v1471, %v1463
    %v1680 = vpack.c.b16 %v1472, %v1464
    %v1681 = vpack.c.b16 %v1473, %v1465
    %v1682 = vpack.c.b16 %v1474, %v1466
    %v1683 = vpack.c.b16 %v1475, %v1467
    %v1684 = vpack.c.b16 %v1484, %v1476
    %v1685 = vpack.c.b16 %v1485, %v1477
    %v1686 = vpack.c.b16 %v1486, %v1478
    %v1687 = vpack.c.b16 %v1487, %v1479
    %v1688 = vpack.c.b16 %v1488, %v1480
    %v1689 = vpack.c.b16 %v1489, %v1481
    %v1690 = vpack.c.b16 %v1490, %v1482
    %v1691 = vpack.c.b16 %v1491, %v1483
    %v1692 = vpack.c.b16 %v1500, %v1492
    %v1693 = vpack.c.b16 %v1501, %v1493
    %v1694 = vpack.c.b16 %v1502, %v1494
    %v1695 = vpack.c.b16 %v1503, %v1495
    %v1696 = vpack.c.b16 %v1504, %v1496
    %v1697 = vpack.c.b16 %v1505, %v1497
    %v1698 = vpack.c.b16 %v1506, %v1498
    %v1699 = vpack.c.b16 %v1507, %v1499
    %v1700 = vpack.c.b16 %v1516, %v1508
    %v1701 = vpack.c.b16 %v1517, %v1509
    %v1702 = vpack.c.b16 %v1518, %v1510
    %v1703 = vpack.c.b16 %v1519, %v1511
    %v1704 = vpack.c.b16 %v1520, %v1512
    %v1705 = vpack.c.b16 %v1521, %v1513
    %v1706 = vpack.c.b16 %v1522, %v1514
    %v1707 = vpack.c.b16 %v1523, %v1515
    %v1708 = vpack.c.b16 %v1532, %v1524
    %v1709 = vpack.c.b16 %v1533, %v1525
    %v1710 = vpack.c.b16 %v1534, %v1526
    %v1711 = vpack.c.b16 %v1535, %v1527
    %v1712 = vpack.c.b16 %v1536, %v1528
    %v1713 = vpack.c.b16 %v1537, %v1529
    %v1714 = vpack.c.b16 %v1538, %v1530
    %v1715 = vpack.c.b16 %v1539, %v1531
    %v1716 = vpack.c.b16 %v1548, %v1540
    %v1717 = vpack.c.b16 %v1549, %v1541
    %v1718 = vpack.c.b16 %v1550, %v1542
    %v1719 = vpack.c.b16 %v1551, %v1543
    %v1720 = vpack.c.b16 %v1552, %v1544
    %v1721 = vpack.c.b16 %v1553, %v1545
    %v1722 = vpack.c.b16 %v1554, %v1546
    %v1723 = vpack.c.b16 %v1555, %v1547
    %v1724 = vpack.c.b16 %v1564, %v1556
    %v1725 = vpack.c.b16 %v1565, %v1557
    %v1726 = vpack.c.b16 %v1566, %v1558
    %v1727 = vpack.c.b16 %v1567, %v1559
    %v1728 = vpack.c.b16 %v1568, %v1560
    %v1729 = vpack.c.b16 %v1569, %v1561
    %v1730 = vpack.c.b16 %v1570, %v1562
    %v1731 = vpack.c.b16 %v1571, %v1563
    %v1732 = vpack.c.b16 %v1580, %v1572
    %v1733 = vpack.c.b16 %v1581, %v1573
    %v1734 = vpack.c.b16 %v1582, %v1574
    %v1735 = vpack.c.b16 %v1583, %v1575
    %v1736 = vpack.c.b16 %v1584, %v1576
    %v1737 = vpack.c.b16 %v1585, %v1577
    %v1738 = vpack.c.b16 %v1586, %v1578
    %v1739 = vpack.c.b16 %v1587, %v1579
    %v1740 = vpack.c.b16 %v1596, %v1588
    %v1741 = vpack.c.b16 %v1597, %v1589
    %v1742 = vpack.c.b16 %v1598, %v1590
    %v1743 = vpack.c.b16 %v1599, %v1591
    %v1744 = vpack.c.b16 %v1600, %v1592
    %v1745 = vpack.c.b16 %v1601, %v1593
    %v1746 = vpack.c.b16 %v1602, %v1594
    %v1747 = vpack.c.b16 %v1603, %v1595
    %v1748 = vpack.c.b16 %v1612, %v1604
    %v1749 = vpack.c.b16 %v1613, %v1605
    %v1750 = vpack.c.b16 %v1614, %v1606
    %v1751 = vpack.c.b16 %v1615, %v1607
    %v1752 = vpack.c.b16 %v1616, %v1608
    %v1753 = vpack.c.b16 %v1617, %v1609
    %v1754 = vpack.c.b16 %v1618, %v1610
    %v1755 = vpack.c.b16 %v1619, %v1611
    %v1756 = vpack.c.b16 %v1628, %v1620
    %v1757 = vpack.c.b16 %v1629, %v1621
    %v1758 = vpack.c.b16 %v1630, %v1622
    %v1759 = vpack.c.b16 %v1631, %v1623
    %v1760 = vpack.c.b16 %v1632, %v1624
    %v1761 = vpack.c.b16 %v1633, %v1625
    %v1762 = vpack.c.b16 %v1634, %v1626
    %v1763 = vpack.c.b16 %v1635, %v1627
    %1892 = vmatprep.subr.bf16.mxu0 %v1693
    %1893 = vmatpush1.bf16.msra.mxu0 %v1692
    %1894 = vmatprep.subr.bf16.mxu0 %v1685
    %1895 = vmatpush1.bf16.msra.mxu0 %v1684
    %1896 = vmatprep.subr.bf16.mxu0 %v1677
    %1897 = vmatpush1.bf16.msra.mxu0 %v1676
    %1898 = vmatprep.subr.bf16.mxu0 %v1669
    %1899 = vmatpush1.bf16.msra.mxu0 %v1668
    %1900 = vmatprep.subr.bf16.mxu0 %v1661
    %1901 = vmatpush1.bf16.msra.mxu0 %v1660
    %1902 = vmatprep.subr.bf16.mxu0 %v1653
    %1903 = vmatpush1.bf16.msra.mxu0 %v1652
    %1904 = vmatprep.subr.bf16.mxu0 %v1645
    %1905 = vmatpush1.bf16.msra.mxu0 %v1644
    %1906 = vmatprep.subr.bf16.mxu0 %v1637
    %1907 = vmatpush1.bf16.msra.mxu0 %v1636
    %1908 = vmatprep.subr.bf16.mxu0 %v1757
    %1909 = vmatpush2.bf16.msra.mxu0 %v1756
    %1910 = vmatprep.subr.bf16.mxu0 %v1749
    %1911 = vmatpush2.bf16.msra.mxu0 %v1748
    %1912 = vmatprep.subr.bf16.mxu0 %v1741
    %1913 = vmatpush2.bf16.msra.mxu0 %v1740
    %1914 = vmatprep.subr.bf16.mxu0 %v1733
    %1915 = vmatpush2.bf16.msra.mxu0 %v1732
    %1916 = vmatprep.subr.bf16.mxu0 %v1725
    %1917 = vmatpush2.bf16.msra.mxu0 %v1724
    %1918 = vmatprep.subr.bf16.mxu0 %v1717
    %1919 = vmatpush2.bf16.msra.mxu0 %v1716
    %1920 = vmatprep.subr.bf16.mxu0 %v1709
    %1921 = vmatpush2.bf16.msra.mxu0 %v1708
    %1922 = vmatprep.subr.bf16.mxu0 %v1701
    %1923 = vmatpush2.bf16.msra.mxu0 %v1700
    %1924 = vmatprep.mubr.bf16.mxu0 0
    %1925 = vmatmul.mubr.bf16.gmra.mxu0 0
    %v1926 = vpop.f32.mrf.mxu0
    %v1927 = vadd.f32 0.0, %v1926
    %v1928 = vpop.f32.mrf.mxu0
    %v1929 = vadd.f32 0.0, %v1928
    %v1930 = vpop.f32.mrf.mxu0
    %v1931 = vadd.f32 0.0, %v1930
    %v1932 = vpop.f32.mrf.mxu0
    %v1933 = vadd.f32 0.0, %v1932
    %1934 = vdwg.mxu0
    %1935 = vmatprep.subr.bf16.mxu0 %v1695
    %1936 = vmatpush1.bf16.msra.mxu0 %v1694
    %1937 = vmatprep.subr.bf16.mxu0 %v1687
    %1938 = vmatpush1.bf16.msra.mxu0 %v1686
    %1939 = vmatprep.subr.bf16.mxu0 %v1679
    %1940 = vmatpush1.bf16.msra.mxu0 %v1678
    %1941 = vmatprep.subr.bf16.mxu0 %v1671
    %1942 = vmatpush1.bf16.msra.mxu0 %v1670
    %1943 = vmatprep.subr.bf16.mxu0 %v1663
    %1944 = vmatpush1.bf16.msra.mxu0 %v1662
    %1945 = vmatprep.subr.bf16.mxu0 %v1655
    %1946 = vmatpush1.bf16.msra.mxu0 %v1654
    %1947 = vmatprep.subr.bf16.mxu0 %v1647
    %1948 = vmatpush1.bf16.msra.mxu0 %v1646
    %1949 = vmatprep.subr.bf16.mxu0 %v1639
    %1950 = vmatpush1.bf16.msra.mxu0 %v1638
    %1951 = vmatprep.subr.bf16.mxu0 %v1759
    %1952 = vmatpush2.bf16.msra.mxu0 %v1758
    %1953 = vmatprep.subr.bf16.mxu0 %v1751
    %1954 = vmatpush2.bf16.msra.mxu0 %v1750
    %1955 = vmatprep.subr.bf16.mxu0 %v1743
    %1956 = vmatpush2.bf16.msra.mxu0 %v1742
    %1957 = vmatprep.subr.bf16.mxu0 %v1735
    %1958 = vmatpush2.bf16.msra.mxu0 %v1734
    %1959 = vmatprep.subr.bf16.mxu0 %v1727
    %1960 = vmatpush2.bf16.msra.mxu0 %v1726
    %1961 = vmatprep.subr.bf16.mxu0 %v1719
    %1962 = vmatpush2.bf16.msra.mxu0 %v1718
    %1963 = vmatprep.subr.bf16.mxu0 %v1711
    %1964 = vmatpush2.bf16.msra.mxu0 %v1710
    %1965 = vmatprep.subr.bf16.mxu0 %v1703
    %1966 = vmatpush2.bf16.msra.mxu0 %v1702
    %1967 = vmatprep.mubr.bf16.mxu0 0
    %1968 = vmatmul.mubr.bf16.gmra.mxu0 0
    %v1969 = vpop.f32.mrf.mxu0
    %v1970 = vadd.f32 0.0, %v1969
    %v1971 = vpop.f32.mrf.mxu0
    %v1972 = vadd.f32 0.0, %v1971
    %v1973 = vpop.f32.mrf.mxu0
    %v1974 = vadd.f32 0.0, %v1973
    %v1975 = vpop.f32.mrf.mxu0
    %v1976 = vadd.f32 0.0, %v1975
    %1977 = vdwg.mxu0
    %1978 = vmatprep.subr.bf16.mxu0 %v1697
    %1979 = vmatpush1.bf16.msra.mxu0 %v1696
    %1980 = vmatprep.subr.bf16.mxu0 %v1689
    %1981 = vmatpush1.bf16.msra.mxu0 %v1688
    %1982 = vmatprep.subr.bf16.mxu0 %v1681
    %1983 = vmatpush1.bf16.msra.mxu0 %v1680
    %1984 = vmatprep.subr.bf16.mxu0 %v1673
    %1985 = vmatpush1.bf16.msra.mxu0 %v1672
    %1986 = vmatprep.subr.bf16.mxu0 %v1665
    %1987 = vmatpush1.bf16.msra.mxu0 %v1664
    %1988 = vmatprep.subr.bf16.mxu0 %v1657
    %1989 = vmatpush1.bf16.msra.mxu0 %v1656
    %1990 = vmatprep.subr.bf16.mxu0 %v1649
    %1991 = vmatpush1.bf16.msra.mxu0 %v1648
    %1992 = vmatprep.subr.bf16.mxu0 %v1641
    %1993 = vmatpush1.bf16.msra.mxu0 %v1640
    %1994 = vmatprep.subr.bf16.mxu0 %v1761
    %1995 = vmatpush2.bf16.msra.mxu0 %v1760
    %1996 = vmatprep.subr.bf16.mxu0 %v1753
    %1997 = vmatpush2.bf16.msra.mxu0 %v1752
    %1998 = vmatprep.subr.bf16.mxu0 %v1745
    %1999 = vmatpush2.bf16.msra.mxu0 %v1744
    %2000 = vmatprep.subr.bf16.mxu0 %v1737
    %2001 = vmatpush2.bf16.msra.mxu0 %v1736
    %2002 = vmatprep.subr.bf16.mxu0 %v1729
    %2003 = vmatpush2.bf16.msra.mxu0 %v1728
    %2004 = vmatprep.subr.bf16.mxu0 %v1721
    %2005 = vmatpush2.bf16.msra.mxu0 %v1720
    %2006 = vmatprep.subr.bf16.mxu0 %v1713
    %2007 = vmatpush2.bf16.msra.mxu0 %v1712
    %2008 = vmatprep.subr.bf16.mxu0 %v1705
    %2009 = vmatpush2.bf16.msra.mxu0 %v1704
    %2010 = vmatprep.mubr.bf16.mxu0 0
    %2011 = vmatmul.mubr.bf16.gmra.mxu0 0
    %v2012 = vpop.f32.mrf.mxu0
    %v2013 = vadd.f32 0.0, %v2012
    %v2014 = vpop.f32.mrf.mxu0
    %v2015 = vadd.f32 0.0, %v2014
    %v2016 = vpop.f32.mrf.mxu0
    %v2017 = vadd.f32 0.0, %v2016
    %v2018 = vpop.f32.mrf.mxu0
    %v2019 = vadd.f32 0.0, %v2018
    %2020 = vdwg.mxu0
    %2021 = vmatprep.subr.bf16.mxu0 %v1699
    %2022 = vmatpush1.bf16.msra.mxu0 %v1698
    %2023 = vmatprep.subr.bf16.mxu0 %v1691
    %2024 = vmatpush1.bf16.msra.mxu0 %v1690
    %2025 = vmatprep.subr.bf16.mxu0 %v1683
    %2026 = vmatpush1.bf16.msra.mxu0 %v1682
    %2027 = vmatprep.subr.bf16.mxu0 %v1675
    %2028 = vmatpush1.bf16.msra.mxu0 %v1674
    %2029 = vmatprep.subr.bf16.mxu0 %v1667
    %2030 = vmatpush1.bf16.msra.mxu0 %v1666
    %2031 = vmatprep.subr.bf16.mxu0 %v1659
    %2032 = vmatpush1.bf16.msra.mxu0 %v1658
    %2033 = vmatprep.subr.bf16.mxu0 %v1651
    %2034 = vmatpush1.bf16.msra.mxu0 %v1650
    %2035 = vmatprep.subr.bf16.mxu0 %v1643
    %2036 = vmatpush1.bf16.msra.mxu0 %v1642
    %2037 = vmatprep.subr.bf16.mxu0 %v1763
    %2038 = vmatpush2.bf16.msra.mxu0 %v1762
    %2039 = vmatprep.subr.bf16.mxu0 %v1755
    %2040 = vmatpush2.bf16.msra.mxu0 %v1754
    %2041 = vmatprep.subr.bf16.mxu0 %v1747
    %2042 = vmatpush2.bf16.msra.mxu0 %v1746
    %2043 = vmatprep.subr.bf16.mxu0 %v1739
    %2044 = vmatpush2.bf16.msra.mxu0 %v1738
    %2045 = vmatprep.subr.bf16.mxu0 %v1731
    %2046 = vmatpush2.bf16.msra.mxu0 %v1730
    %2047 = vmatprep.subr.bf16.mxu0 %v1723
    %2048 = vmatpush2.bf16.msra.mxu0 %v1722
    %2049 = vmatprep.subr.bf16.mxu0 %v1715
    %2050 = vmatpush2.bf16.msra.mxu0 %v1714
    %2051 = vmatprep.subr.bf16.mxu0 %v1707
    %2052 = vmatpush2.bf16.msra.mxu0 %v1706
    %2053 = vmatprep.mubr.bf16.mxu0 0
    %2054 = vmatmul.mubr.bf16.gmra.mxu0 0
    %v2055 = vpop.f32.mrf.mxu0
    %v2056 = vadd.f32 0.0, %v2055
    %v2057 = vpop.f32.mrf.mxu0
    %v2058 = vadd.f32 0.0, %v2057
    %v2059 = vpop.f32.mrf.mxu0
    %v2060 = vadd.f32 0.0, %v2059
    %v2061 = vpop.f32.mrf.mxu0
    %v2062 = vadd.f32 0.0, %v2061
    %2063 = vdwg.mxu0
    %s2064 = smul.u32 0, 8
    %s2065 = smul.addr %s2064, 4
    %s2066 = scalar_lea.vmem [#allocation2], %s2065
    %v2067 = vld [vmem:[%s2066] sm:$0xff]
    %v2068 = vld [vmem:[%s2066 + $0x8] sm:$0xff]
    %v2069 = vld [vmem:[%s2066 + $0x20] sm:$0xff]
    %v2070 = vld [vmem:[%s2066 + $0x28] sm:$0xff]
    %v2071 = vunpack.c.l.bf16 %v2067
    %v2072 = vunpack.c.h.bf16 %v2067
    %v2073 = vunpack.c.l.bf16 %v2068
    %v2074 = vunpack.c.h.bf16 %v2068
    %v2075 = vunpack.c.l.bf16 %v2069
    %v2076 = vunpack.c.h.bf16 %v2069
    %v2077 = vunpack.c.l.bf16 %v2070
    %v2078 = vunpack.c.h.bf16 %v2070
    %v2079 = vadd.f32 %v2071, %v1927
    %v2080 = vadd.f32 %v2072, %v1929
    %v2081 = vadd.f32 %v2073, %v1970
    %v2082 = vadd.f32 %v2074, %v1972
    %v2083 = vadd.f32 %v2075, %v1931
    %v2084 = vadd.f32 %v2076, %v1933
    %v2085 = vadd.f32 %v2077, %v1974
    %v2086 = vadd.f32 %v2078, %v1976
    %s2087 = smul.u32 14, 8
    %s2088 = smul.addr %s2087, 4
    %s2089 = scalar_lea.vmem [#allocation2], %s2088
    %v2090 = vld [vmem:[%s2089 + $0x10] sm:$0xff]
    %v2091 = vld [vmem:[%s2089 + $0x18] sm:$0xff]
    %v2092 = vld [vmem:[%s2089 + $0x30] sm:$0xff]
    %v2093 = vld [vmem:[%s2089 + $0x38] sm:$0xff]
    %v2094 = vunpack.c.l.bf16 %v2090
    %v2095 = vunpack.c.h.bf16 %v2090
    %v2096 = vunpack.c.l.bf16 %v2091
    %v2097 = vunpack.c.h.bf16 %v2091
    %v2098 = vunpack.c.l.bf16 %v2092
    %v2099 = vunpack.c.h.bf16 %v2092
    %v2100 = vunpack.c.l.bf16 %v2093
    %v2101 = vunpack.c.h.bf16 %v2093
    %v2102 = vadd.f32 %v2094, %v2013
    %v2103 = vadd.f32 %v2095, %v2015
    %v2104 = vadd.f32 %v2096, %v2056
    %v2105 = vadd.f32 %v2097, %v2058
    %v2106 = vadd.f32 %v2098, %v2017
    %v2107 = vadd.f32 %v2099, %v2019
    %v2108 = vadd.f32 %v2100, %v2060
    %v2109 = vadd.f32 %v2101, %v2062
    %v2110 = vxor.u32 %v2079, 2147483648
    %v2111 = vxor.u32 %v2083, 2147483648
    %v2112 = vmul.f32 %v2110, 1.442695
    %v2113 = vpow.pop %v2112
    %v2114 = vmul.f32 %v2111, 1.442695
    %v2115 = vpow.pop %v2114
    %v2116 = vadd.f32 %v2113, 1.0
    %v2117 = vadd.f32 %v2115, 1.0
    %v2118 = vrcp.pop %v2116
    %v2119 = vmul.f32 1.0, %v2118
    %v2120 = vrcp.pop %v2117
    %v2121 = vmul.f32 1.0, %v2120
    %v2122 = vxor.u32 %v2080, 2147483648
    %v2123 = vxor.u32 %v2084, 2147483648
    %v2124 = vmul.f32 %v2122, 1.442695
    %v2125 = vpow.pop %v2124
    %v2126 = vmul.f32 %v2123, 1.442695
    %v2127 = vpow.pop %v2126
    %v2128 = vadd.f32 %v2125, 1.0
    %v2129 = vadd.f32 %v2127, 1.0
    %v2130 = vrcp.pop %v2128
    %v2131 = vmul.f32 1.0, %v2130
    %v2132 = vrcp.pop %v2129
    %v2133 = vmul.f32 1.0, %v2132
    %v2134 = vtanh.pop %v2081
    %v2135 = vtanh.pop %v2085
    %v2136 = vxor.u32 %v2082, 2147483648
    %v2137 = vxor.u32 %v2086, 2147483648
    %v2138 = vmul.f32 %v2136, 1.442695
    %v2139 = vpow.pop %v2138
    %v2140 = vmul.f32 %v2137, 1.442695
    %v2141 = vpow.pop %v2140
    %v2142 = vadd.f32 %v2139, 1.0
    %v2143 = vadd.f32 %v2141, 1.0
    %v2144 = vrcp.pop %v2142
    %v2145 = vmul.f32 1.0, %v2144
    %v2146 = vrcp.pop %v2143
    %v2147 = vmul.f32 1.0, %v2146
    %v2148 = vmul.f32 %v2131, 0.0
    %v2149 = vmul.f32 %v2133, 0.0
    %v2150 = vmul.f32 %v2119, %v2134
    %v2151 = vmul.f32 %v2121, %v2135
    %v2152 = vadd.f32 %v2148, %v2150
    %v2153 = vadd.f32 %v2149, %v2151
    %v2154 = vtanh.pop %v2152
    %v2155 = vtanh.pop %v2153
    %v2156 = vmul.f32 %v2145, %v2154
    %v2157 = vmul.f32 %v2147, %v2155
    %v2158 = vxor.u32 %v2102, 2147483648
    %v2159 = vxor.u32 %v2106, 2147483648
    %v2160 = vmul.f32 %v2158, 1.442695
    %v2161 = vpow.pop %v2160
    %v2162 = vmul.f32 %v2159, 1.442695
    %v2163 = vpow.pop %v2162
    %v2164 = vadd.f32 %v2161, 1.0
    %v2165 = vadd.f32 %v2163, 1.0
    %v2166 = vrcp.pop %v2164
    %v2167 = vmul.f32 1.0, %v2166
    %v2168 = vrcp.pop %v2165
    %v2169 = vmul.f32 1.0, %v2168
    %v2170 = vxor.u32 %v2103, 2147483648
    %v2171 = vxor.u32 %v2107, 2147483648
    %v2172 = vmul.f32 %v2170, 1.442695
    %v2173 = vpow.pop %v2172
    %v2174 = vmul.f32 %v2171, 1.442695
    %v2175 = vpow.pop %v2174
    %v2176 = vadd.f32 %v2173, 1.0
    %v2177 = vadd.f32 %v2175, 1.0
    %v2178 = vrcp.pop %v2176
    %v2179 = vmul.f32 1.0, %v2178
    %v2180 = vrcp.pop %v2177
    %v2181 = vmul.f32 1.0, %v2180
    %v2182 = vtanh.pop %v2104
    %v2183 = vtanh.pop %v2108
    %v2184 = vxor.u32 %v2105, 2147483648
    %v2185 = vxor.u32 %v2109, 2147483648
    %v2186 = vmul.f32 %v2184, 1.442695
    %v2187 = vpow.pop %v2186
    %v2188 = vmul.f32 %v2185, 1.442695
    %v2189 = vpow.pop %v2188
    %v2190 = vadd.f32 %v2187, 1.0
    %v2191 = vadd.f32 %v2189, 1.0
    %v2192 = vrcp.pop %v2190
    %v2193 = vmul.f32 1.0, %v2192
    %v2194 = vrcp.pop %v2191
    %v2195 = vmul.f32 1.0, %v2194
    %v2196 = vmul.f32 %v2179, 0.0
    %v2197 = vmul.f32 %v2181, 0.0
    %v2198 = vmul.f32 %v2167, %v2182
    %v2199 = vmul.f32 %v2169, %v2183
    %v2200 = vadd.f32 %v2196, %v2198
    %v2201 = vadd.f32 %v2197, %v2199
    %v2202 = vtanh.pop %v2200
    %v2203 = vtanh.pop %v2201
    %v2204 = vmul.f32 %v2193, %v2202
    %v2205 = vmul.f32 %v2195, %v2203
    %v2206 = vpack.c.bf16 %v2157, %v2156
    %v2208 = vunpack.c.l.b16 %v2206
    %v2209 = vunpack.c.h.b16 %v2206
    %v2210 = vpack.c.b16 %v2208, %v2208
    %v2211 = vpack.c.b16 %v2209, %v2209
    %s2214 = smul.u32 0, 2
    %s2215 = smul.addr %s2214, 4
    %s2216 = scalar_lea.vmem [#allocation3], %s2215
    %2217 = vst [vmem:[%s2216] sm:$0xf] %v2210
    %2218 = vst [vmem:[%s2216 + $0x8] sm:$0xf] %v2211
    %v2219 = vpack.c.bf16 %v2205, %v2204
    %v2221 = vunpack.c.l.b16 %v2219
    %v2222 = vunpack.c.h.b16 %v2219
    %v2223 = vpack.c.b16 %v2221, %v2221
    %v2224 = vpack.c.b16 %v2222, %v2222
    %s2227 = smul.u32 14, 2
    %s2228 = smul.addr %s2227, 4
    %s2229 = scalar_lea.vmem [#allocation3], %s2228
    %2230 = vst [vmem:[%s2229 + $0x4] sm:$0xf] %v2223
    %2231 = vst [vmem:[%s2229 + $0xc] sm:$0xf] %v2224
    %v2232 = vld [vmem:[#allocation4] sm:$0xff]
    %v2233 = vld [vmem:[#allocation4 + $0x8] sm:$0xff]
    %v2234 = vld [vmem:[#allocation4 + $0x10] sm:$0xff]
    %v2235 = vld [vmem:[#allocation4 + $0x18] sm:$0xff]
    %v2236 = vld [vmem:[#allocation4 + $0x20] sm:$0xff]
    %v2237 = vld [vmem:[#allocation4 + $0x28] sm:$0xff]
    %v2238 = vld [vmem:[#allocation4 + $0x30] sm:$0xff]
    %v2239 = vld [vmem:[#allocation4 + $0x38] sm:$0xff]
    %v2240 = vld [vmem:[#allocation4 + $0x40] sm:$0xff]
    %v2241 = vld [vmem:[#allocation4 + $0x48] sm:$0xff]
    %v2242 = vld [vmem:[#allocation4 + $0x50] sm:$0xff]
    %v2243 = vld [vmem:[#allocation4 + $0x58] sm:$0xff]
    %v2244 = vld [vmem:[#allocation4 + $0x60] sm:$0xff]
    %v2245 = vld [vmem:[#allocation4 + $0x68] sm:$0xff]
    %v2246 = vld [vmem:[#allocation4 + $0x70] sm:$0xff]
    %v2247 = vld [vmem:[#allocation4 + $0x78] sm:$0xff]
    %v2248 = vld [vmem:[#allocation4 + $0x80] sm:$0xff]
    %v2249 = vld [vmem:[#allocation4 + $0x88] sm:$0xff]
    %v2250 = vld [vmem:[#allocation4 + $0x90] sm:$0xff]
    %v2251 = vld [vmem:[#allocation4 + $0x98] sm:$0xff]
    %v2252 = vld [vmem:[#allocation4 + $0xa0] sm:$0xff]
    %v2253 = vld [vmem:[#allocation4 + $0xa8] sm:$0xff]
    %v2254 = vld [vmem:[#allocation4 + $0xb0] sm:$0xff]
    %v2255 = vld [vmem:[#allocation4 + $0xb8] sm:$0xff]
    %v2256 = vld [vmem:[#allocation4 + $0xc0] sm:$0xff]
    %v2257 = vld [vmem:[#allocation4 + $0xc8] sm:$0xff]
    %v2258 = vld [vmem:[#allocation4 + $0xd0] sm:$0xff]
    %v2259 = vld [vmem:[#allocation4 + $0xd8] sm:$0xff]
    %v2260 = vld [vmem:[#allocation4 + $0xe0] sm:$0xff]
    %v2261 = vld [vmem:[#allocation4 + $0xe8] sm:$0xff]
    %v2262 = vld [vmem:[#allocation4 + $0xf0] sm:$0xff]
    %v2263 = vld [vmem:[#allocation4 + $0xf8] sm:$0xff]
    %v2264 = vld [vmem:[#allocation4 + $0x100] sm:$0xff]
    %v2265 = vld [vmem:[#allocation4 + $0x108] sm:$0xff]
    %v2266 = vld [vmem:[#allocation4 + $0x110] sm:$0xff]
    %v2267 = vld [vmem:[#allocation4 + $0x118] sm:$0xff]
    %v2268 = vld [vmem:[#allocation4 + $0x120] sm:$0xff]
    %v2269 = vld [vmem:[#allocation4 + $0x128] sm:$0xff]
    %v2270 = vld [vmem:[#allocation4 + $0x130] sm:$0xff]
    %v2271 = vld [vmem:[#allocation4 + $0x138] sm:$0xff]
    %v2272 = vld [vmem:[#allocation4 + $0x140] sm:$0xff]
    %v2273 = vld [vmem:[#allocation4 + $0x148] sm:$0xff]
    %v2274 = vld [vmem:[#allocation4 + $0x150] sm:$0xff]
    %v2275 = vld [vmem:[#allocation4 + $0x158] sm:$0xff]
    %v2276 = vld [vmem:[#allocation4 + $0x160] sm:$0xff]
    %v2277 = vld [vmem:[#allocation4 + $0x168] sm:$0xff]
    %v2278 = vld [vmem:[#allocation4 + $0x170] sm:$0xff]
    %v2279 = vld [vmem:[#allocation4 + $0x178] sm:$0xff]
    %v2280 = vld [vmem:[#allocation4 + $0x180] sm:$0xff]
    %v2281 = vld [vmem:[#allocation4 + $0x188] sm:$0xff]
    %v2282 = vld [vmem:[#allocation4 + $0x190] sm:$0xff]
    %v2283 = vld [vmem:[#allocation4 + $0x198] sm:$0xff]
    %v2284 = vld [vmem:[#allocation4 + $0x1a0] sm:$0xff]
    %v2285 = vld [vmem:[#allocation4 + $0x1a8] sm:$0xff]
    %v2286 = vld [vmem:[#allocation4 + $0x1b0] sm:$0xff]
    %v2287 = vld [vmem:[#allocation4 + $0x1b8] sm:$0xff]
    %v2288 = vld [vmem:[#allocation4 + $0x1c0] sm:$0xff]
    %v2289 = vld [vmem:[#allocation4 + $0x1c8] sm:$0xff]
    %v2290 = vld [vmem:[#allocation4 + $0x1d0] sm:$0xff]
    %v2291 = vld [vmem:[#allocation4 + $0x1d8] sm:$0xff]
    %v2292 = vld [vmem:[#allocation4 + $0x1e0] sm:$0xff]
    %v2293 = vld [vmem:[#allocation4 + $0x1e8] sm:$0xff]
    %v2294 = vld [vmem:[#allocation4 + $0x1f0] sm:$0xff]
    %v2295 = vld [vmem:[#allocation4 + $0x1f8] sm:$0xff]
    %v2296 = vld [vmem:[#allocation4 + $0x200] sm:$0xff]
    %v2297 = vld [vmem:[#allocation4 + $0x208] sm:$0xff]
    %v2298 = vld [vmem:[#allocation4 + $0x210] sm:$0xff]
    %v2299 = vld [vmem:[#allocation4 + $0x218] sm:$0xff]
    %v2300 = vld [vmem:[#allocation4 + $0x220] sm:$0xff]
    %v2301 = vld [vmem:[#allocation4 + $0x228] sm:$0xff]
    %v2302 = vld [vmem:[#allocation4 + $0x230] sm:$0xff]
    %v2303 = vld [vmem:[#allocation4 + $0x238] sm:$0xff]
    %v2304 = vld [vmem:[#allocation4 + $0x240] sm:$0xff]
    %v2305 = vld [vmem:[#allocation4 + $0x248] sm:$0xff]
    %v2306 = vld [vmem:[#allocation4 + $0x250] sm:$0xff]
    %v2307 = vld [vmem:[#allocation4 + $0x258] sm:$0xff]
    %v2308 = vld [vmem:[#allocation4 + $0x260] sm:$0xff]
    %v2309 = vld [vmem:[#allocation4 + $0x268] sm:$0xff]
    %v2310 = vld [vmem:[#allocation4 + $0x270] sm:$0xff]
    %v2311 = vld [vmem:[#allocation4 + $0x278] sm:$0xff]
    %v2312 = vld [vmem:[#allocation4 + $0x280] sm:$0xff]
    %v2313 = vld [vmem:[#allocation4 + $0x288] sm:$0xff]
    %v2314 = vld [vmem:[#allocation4 + $0x290] sm:$0xff]
    %v2315 = vld [vmem:[#allocation4 + $0x298] sm:$0xff]
    %v2316 = vld [vmem:[#allocation4 + $0x2a0] sm:$0xff]
    %v2317 = vld [vmem:[#allocation4 + $0x2a8] sm:$0xff]
    %v2318 = vld [vmem:[#allocation4 + $0x2b0] sm:$0xff]
    %v2319 = vld [vmem:[#allocation4 + $0x2b8] sm:$0xff]
    %v2320 = vld [vmem:[#allocation4 + $0x2c0] sm:$0xff]
    %v2321 = vld [vmem:[#allocation4 + $0x2c8] sm:$0xff]
    %v2322 = vld [vmem:[#allocation4 + $0x2d0] sm:$0xff]
    %v2323 = vld [vmem:[#allocation4 + $0x2d8] sm:$0xff]
    %v2324 = vld [vmem:[#allocation4 + $0x2e0] sm:$0xff]
    %v2325 = vld [vmem:[#allocation4 + $0x2e8] sm:$0xff]
    %v2326 = vld [vmem:[#allocation4 + $0x2f0] sm:$0xff]
    %v2327 = vld [vmem:[#allocation4 + $0x2f8] sm:$0xff]
    %v2328 = vld [vmem:[#allocation4 + $0x300] sm:$0xff]
    %v2329 = vld [vmem:[#allocation4 + $0x308] sm:$0xff]
    %v2330 = vld [vmem:[#allocation4 + $0x310] sm:$0xff]
    %v2331 = vld [vmem:[#allocation4 + $0x318] sm:$0xff]
    %v2332 = vld [vmem:[#allocation4 + $0x320] sm:$0xff]
    %v2333 = vld [vmem:[#allocation4 + $0x328] sm:$0xff]
    %v2334 = vld [vmem:[#allocation4 + $0x330] sm:$0xff]
    %v2335 = vld [vmem:[#allocation4 + $0x338] sm:$0xff]
    %v2336 = vld [vmem:[#allocation4 + $0x340] sm:$0xff]
    %v2337 = vld [vmem:[#allocation4 + $0x348] sm:$0xff]
    %v2338 = vld [vmem:[#allocation4 + $0x350] sm:$0xff]
    %v2339 = vld [vmem:[#allocation4 + $0x358] sm:$0xff]
    %v2340 = vld [vmem:[#allocation4 + $0x360] sm:$0xff]
    %v2341 = vld [vmem:[#allocation4 + $0x368] sm:$0xff]
    %v2342 = vld [vmem:[#allocation4 + $0x370] sm:$0xff]
    %v2343 = vld [vmem:[#allocation4 + $0x378] sm:$0xff]
    %v2344 = vld [vmem:[#allocation4 + $0x380] sm:$0xff]
    %v2345 = vld [vmem:[#allocation4 + $0x388] sm:$0xff]
    %v2346 = vld [vmem:[#allocation4 + $0x390] sm:$0xff]
    %v2347 = vld [vmem:[#allocation4 + $0x398] sm:$0xff]
    %v2348 = vld [vmem:[#allocation4 + $0x3a0] sm:$0xff]
    %v2349 = vld [vmem:[#allocation4 + $0x3a8] sm:$0xff]
    %v2350 = vld [vmem:[#allocation4 + $0x3b0] sm:$0xff]
    %v2351 = vld [vmem:[#allocation4 + $0x3b8] sm:$0xff]
    %v2352 = vld [vmem:[#allocation4 + $0x3c0] sm:$0xff]
    %v2353 = vld [vmem:[#allocation4 + $0x3c8] sm:$0xff]
    %v2354 = vld [vmem:[#allocation4 + $0x3d0] sm:$0xff]
    %v2355 = vld [vmem:[#allocation4 + $0x3d8] sm:$0xff]
    %v2356 = vld [vmem:[#allocation4 + $0x3e0] sm:$0xff]
    %v2357 = vld [vmem:[#allocation4 + $0x3e8] sm:$0xff]
    %v2358 = vld [vmem:[#allocation4 + $0x3f0] sm:$0xff]
    %v2359 = vld [vmem:[#allocation4 + $0x3f8] sm:$0xff]
    %v2488 = vunpack.c.l.b16 %v2232
    %v2489 = vunpack.c.h.b16 %v2232
    %v2490 = vunpack.c.l.b16 %v2233
    %v2491 = vunpack.c.h.b16 %v2233
    %v2492 = vunpack.c.l.b16 %v2234
    %v2493 = vunpack.c.h.b16 %v2234
    %v2494 = vunpack.c.l.b16 %v2235
    %v2495 = vunpack.c.h.b16 %v2235
    %v2496 = vunpack.c.l.b16 %v2236
    %v2497 = vunpack.c.h.b16 %v2236
    %v2498 = vunpack.c.l.b16 %v2237
    %v2499 = vunpack.c.h.b16 %v2237
    %v2500 = vunpack.c.l.b16 %v2238
    %v2501 = vunpack.c.h.b16 %v2238
    %v2502 = vunpack.c.l.b16 %v2239
    %v2503 = vunpack.c.h.b16 %v2239
    %v2504 = vunpack.c.l.b16 %v2240
    %v2505 = vunpack.c.h.b16 %v2240
    %v2506 = vunpack.c.l.b16 %v2241
    %v2507 = vunpack.c.h.b16 %v2241
    %v2508 = vunpack.c.l.b16 %v2242
    %v2509 = vunpack.c.h.b16 %v2242
    %v2510 = vunpack.c.l.b16 %v2243
    %v2511 = vunpack.c.h.b16 %v2243
    %v2512 = vunpack.c.l.b16 %v2244
    %v2513 = vunpack.c.h.b16 %v2244
    %v2514 = vunpack.c.l.b16 %v2245
    %v2515 = vunpack.c.h.b16 %v2245
    %v2516 = vunpack.c.l.b16 %v2246
    %v2517 = vunpack.c.h.b16 %v2246
    %v2518 = vunpack.c.l.b16 %v2247
    %v2519 = vunpack.c.h.b16 %v2247
    %v2520 = vunpack.c.l.b16 %v2248
    %v2521 = vunpack.c.h.b16 %v2248
    %v2522 = vunpack.c.l.b16 %v2249
    %v2523 = vunpack.c.h.b16 %v2249
    %v2524 = vunpack.c.l.b16 %v2250
    %v2525 = vunpack.c.h.b16 %v2250
    %v2526 = vunpack.c.l.b16 %v2251
    %v2527 = vunpack.c.h.b16 %v2251
    %v2528 = vunpack.c.l.b16 %v2252
    %v2529 = vunpack.c.h.b16 %v2252
    %v2530 = vunpack.c.l.b16 %v2253
    %v2531 = vunpack.c.h.b16 %v2253
    %v2532 = vunpack.c.l.b16 %v2254
    %v2533 = vunpack.c.h.b16 %v2254
    %v2534 = vunpack.c.l.b16 %v2255
    %v2535 = vunpack.c.h.b16 %v2255
    %v2536 = vunpack.c.l.b16 %v2256
    %v2537 = vunpack.c.h.b16 %v2256
    %v2538 = vunpack.c.l.b16 %v2257
    %v2539 = vunpack.c.h.b16 %v2257
    %v2540 = vunpack.c.l.b16 %v2258
    %v2541 = vunpack.c.h.b16 %v2258
    %v2542 = vunpack.c.l.b16 %v2259
    %v2543 = vunpack.c.h.b16 %v2259
    %v2544 = vunpack.c.l.b16 %v2260
    %v2545 = vunpack.c.h.b16 %v2260
    %v2546 = vunpack.c.l.b16 %v2261
    %v2547 = vunpack.c.h.b16 %v2261
    %v2548 = vunpack.c.l.b16 %v2262
    %v2549 = vunpack.c.h.b16 %v2262
    %v2550 = vunpack.c.l.b16 %v2263
    %v2551 = vunpack.c.h.b16 %v2263
    %v2552 = vunpack.c.l.b16 %v2264
    %v2553 = vunpack.c.h.b16 %v2264
    %v2554 = vunpack.c.l.b16 %v2265
    %v2555 = vunpack.c.h.b16 %v2265
    %v2556 = vunpack.c.l.b16 %v2266
    %v2557 = vunpack.c.h.b16 %v2266
    %v2558 = vunpack.c.l.b16 %v2267
    %v2559 = vunpack.c.h.b16 %v2267
    %v2560 = vunpack.c.l.b16 %v2268
    %v2561 = vunpack.c.h.b16 %v2268
    %v2562 = vunpack.c.l.b16 %v2269
    %v2563 = vunpack.c.h.b16 %v2269
    %v2564 = vunpack.c.l.b16 %v2270
    %v2565 = vunpack.c.h.b16 %v2270
    %v2566 = vunpack.c.l.b16 %v2271
    %v2567 = vunpack.c.h.b16 %v2271
    %v2568 = vunpack.c.l.b16 %v2272
    %v2569 = vunpack.c.h.b16 %v2272
    %v2570 = vunpack.c.l.b16 %v2273
    %v2571 = vunpack.c.h.b16 %v2273
    %v2572 = vunpack.c.l.b16 %v2274
    %v2573 = vunpack.c.h.b16 %v2274
    %v2574 = vunpack.c.l.b16 %v2275
    %v2575 = vunpack.c.h.b16 %v2275
    %v2576 = vunpack.c.l.b16 %v2276
    %v2577 = vunpack.c.h.b16 %v2276
    %v2578 = vunpack.c.l.b16 %v2277
    %v2579 = vunpack.c.h.b16 %v2277
    %v2580 = vunpack.c.l.b16 %v2278
    %v2581 = vunpack.c.h.b16 %v2278
    %v2582 = vunpack.c.l.b16 %v2279
    %v2583 = vunpack.c.h.b16 %v2279
    %v2584 = vunpack.c.l.b16 %v2280
    %v2585 = vunpack.c.h.b16 %v2280
    %v2586 = vunpack.c.l.b16 %v2281
    %v2587 = vunpack.c.h.b16 %v2281
    %v2588 = vunpack.c.l.b16 %v2282
    %v2589 = vunpack.c.h.b16 %v2282
    %v2590 = vunpack.c.l.b16 %v2283
    %v2591 = vunpack.c.h.b16 %v2283
    %v2592 = vunpack.c.l.b16 %v2284
    %v2593 = vunpack.c.h.b16 %v2284
    %v2594 = vunpack.c.l.b16 %v2285
    %v2595 = vunpack.c.h.b16 %v2285
    %v2596 = vunpack.c.l.b16 %v2286
    %v2597 = vunpack.c.h.b16 %v2286
    %v2598 = vunpack.c.l.b16 %v2287
    %v2599 = vunpack.c.h.b16 %v2287
    %v2600 = vunpack.c.l.b16 %v2288
    %v2601 = vunpack.c.h.b16 %v2288
    %v2602 = vunpack.c.l.b16 %v2289
    %v2603 = vunpack.c.h.b16 %v2289
    %v2604 = vunpack.c.l.b16 %v2290
    %v2605 = vunpack.c.h.b16 %v2290
    %v2606 = vunpack.c.l.b16 %v2291
    %v2607 = vunpack.c.h.b16 %v2291
    %v2608 = vunpack.c.l.b16 %v2292
    %v2609 = vunpack.c.h.b16 %v2292
    %v2610 = vunpack.c.l.b16 %v2293
    %v2611 = vunpack.c.h.b16 %v2293
    %v2612 = vunpack.c.l.b16 %v2294
    %v2613 = vunpack.c.h.b16 %v2294
    %v2614 = vunpack.c.l.b16 %v2295
    %v2615 = vunpack.c.h.b16 %v2295
    %v2616 = vunpack.c.l.b16 %v2296
    %v2617 = vunpack.c.h.b16 %v2296
    %v2618 = vunpack.c.l.b16 %v2297
    %v2619 = vunpack.c.h.b16 %v2297
    %v2620 = vunpack.c.l.b16 %v2298
    %v2621 = vunpack.c.h.b16 %v2298
    %v2622 = vunpack.c.l.b16 %v2299
    %v2623 = vunpack.c.h.b16 %v2299
    %v2624 = vunpack.c.l.b16 %v2300
    %v2625 = vunpack.c.h.b16 %v2300
    %v2626 = vunpack.c.l.b16 %v2301
    %v2627 = vunpack.c.h.b16 %v2301
    %v2628 = vunpack.c.l.b16 %v2302
    %v2629 = vunpack.c.h.b16 %v2302
    %v2630 = vunpack.c.l.b16 %v2303
    %v2631 = vunpack.c.h.b16 %v2303
    %v2632 = vunpack.c.l.b16 %v2304
    %v2633 = vunpack.c.h.b16 %v2304
    %v2634 = vunpack.c.l.b16 %v2305
    %v2635 = vunpack.c.h.b16 %v2305
    %v2636 = vunpack.c.l.b16 %v2306
    %v2637 = vunpack.c.h.b16 %v2306
    %v2638 = vunpack.c.l.b16 %v2307
    %v2639 = vunpack.c.h.b16 %v2307
    %v2640 = vunpack.c.l.b16 %v2308
    %v2641 = vunpack.c.h.b16 %v2308
    %v2642 = vunpack.c.l.b16 %v2309
    %v2643 = vunpack.c.h.b16 %v2309
    %v2644 = vunpack.c.l.b16 %v2310
    %v2645 = vunpack.c.h.b16 %v2310
    %v2646 = vunpack.c.l.b16 %v2311
    %v2647 = vunpack.c.h.b16 %v2311
    %v2648 = vunpack.c.l.b16 %v2312
    %v2649 = vunpack.c.h.b16 %v2312
    %v2650 = vunpack.c.l.b16 %v2313
    %v2651 = vunpack.c.h.b16 %v2313
    %v2652 = vunpack.c.l.b16 %v2314
    %v2653 = vunpack.c.h.b16 %v2314
    %v2654 = vunpack.c.l.b16 %v2315
    %v2655 = vunpack.c.h.b16 %v2315
    %v2656 = vunpack.c.l.b16 %v2316
    %v2657 = vunpack.c.h.b16 %v2316
    %v2658 = vunpack.c.l.b16 %v2317
    %v2659 = vunpack.c.h.b16 %v2317
    %v2660 = vunpack.c.l.b16 %v2318
    %v2661 = vunpack.c.h.b16 %v2318
    %v2662 = vunpack.c.l.b16 %v2319
    %v2663 = vunpack.c.h.b16 %v2319
    %v2664 = vunpack.c.l.b16 %v2320
    %v2665 = vunpack.c.h.b16 %v2320
    %v2666 = vunpack.c.l.b16 %v2321
    %v2667 = vunpack.c.h.b16 %v2321
    %v2668 = vunpack.c.l.b16 %v2322
    %v2669 = vunpack.c.h.b16 %v2322
    %v2670 = vunpack.c.l.b16 %v2323
    %v2671 = vunpack.c.h.b16 %v2323
    %v2672 = vunpack.c.l.b16 %v2324
    %v2673 = vunpack.c.h.b16 %v2324
    %v2674 = vunpack.c.l.b16 %v2325
    %v2675 = vunpack.c.h.b16 %v2325
    %v2676 = vunpack.c.l.b16 %v2326
    %v2677 = vunpack.c.h.b16 %v2326
    %v2678 = vunpack.c.l.b16 %v2327
    %v2679 = vunpack.c.h.b16 %v2327
    %v2680 = vunpack.c.l.b16 %v2328
    %v2681 = vunpack.c.h.b16 %v2328
    %v2682 = vunpack.c.l.b16 %v2329
    %v2683 = vunpack.c.h.b16 %v2329
    %v2684 = vunpack.c.l.b16 %v2330
    %v2685 = vunpack.c.h.b16 %v2330
    %v2686 = vunpack.c.l.b16 %v2331
    %v2687 = vunpack.c.h.b16 %v2331
    %v2688 = vunpack.c.l.b16 %v2332
    %v2689 = vunpack.c.h.b16 %v2332
    %v2690 = vunpack.c.l.b16 %v2333
    %v2691 = vunpack.c.h.b16 %v2333
    %v2692 = vunpack.c.l.b16 %v2334
    %v2693 = vunpack.c.h.b16 %v2334
    %v2694 = vunpack.c.l.b16 %v2335
    %v2695 = vunpack.c.h.b16 %v2335
    %v2696 = vunpack.c.l.b16 %v2336
    %v2697 = vunpack.c.h.b16 %v2336
    %v2698 = vunpack.c.l.b16 %v2337
    %v2699 = vunpack.c.h.b16 %v2337
    %v2700 = vunpack.c.l.b16 %v2338
    %v2701 = vunpack.c.h.b16 %v2338
    %v2702 = vunpack.c.l.b16 %v2339
    %v2703 = vunpack.c.h.b16 %v2339
    %v2704 = vunpack.c.l.b16 %v2340
    %v2705 = vunpack.c.h.b16 %v2340
    %v2706 = vunpack.c.l.b16 %v2341
    %v2707 = vunpack.c.h.b16 %v2341
    %v2708 = vunpack.c.l.b16 %v2342
    %v2709 = vunpack.c.h.b16 %v2342
    %v2710 = vunpack.c.l.b16 %v2343
    %v2711 = vunpack.c.h.b16 %v2343
    %v2712 = vunpack.c.l.b16 %v2344
    %v2713 = vunpack.c.h.b16 %v2344
    %v2714 = vunpack.c.l.b16 %v2345
    %v2715 = vunpack.c.h.b16 %v2345
    %v2716 = vunpack.c.l.b16 %v2346
    %v2717 = vunpack.c.h.b16 %v2346
    %v2718 = vunpack.c.l.b16 %v2347
    %v2719 = vunpack.c.h.b16 %v2347
    %v2720 = vunpack.c.l.b16 %v2348
    %v2721 = vunpack.c.h.b16 %v2348
    %v2722 = vunpack.c.l.b16 %v2349
    %v2723 = vunpack.c.h.b16 %v2349
    %v2724 = vunpack.c.l.b16 %v2350
    %v2725 = vunpack.c.h.b16 %v2350
    %v2726 = vunpack.c.l.b16 %v2351
    %v2727 = vunpack.c.h.b16 %v2351
    %v2728 = vunpack.c.l.b16 %v2352
    %v2729 = vunpack.c.h.b16 %v2352
    %v2730 = vunpack.c.l.b16 %v2353
    %v2731 = vunpack.c.h.b16 %v2353
    %v2732 = vunpack.c.l.b16 %v2354
    %v2733 = vunpack.c.h.b16 %v2354
    %v2734 = vunpack.c.l.b16 %v2355
    %v2735 = vunpack.c.h.b16 %v2355
    %v2736 = vunpack.c.l.b16 %v2356
    %v2737 = vunpack.c.h.b16 %v2356
    %v2738 = vunpack.c.l.b16 %v2357
    %v2739 = vunpack.c.h.b16 %v2357
    %v2740 = vunpack.c.l.b16 %v2358
    %v2741 = vunpack.c.h.b16 %v2358
    %v2742 = vunpack.c.l.b16 %v2359
    %v2743 = vunpack.c.h.b16 %v2359
    %v2744 = vpack.c.b16 %v2496, %v2488
    %v2745 = vpack.c.b16 %v2497, %v2489
    %v2746 = vpack.c.b16 %v2498, %v2490
    %v2747 = vpack.c.b16 %v2499, %v2491
    %v2748 = vpack.c.b16 %v2500, %v2492
    %v2749 = vpack.c.b16 %v2501, %v2493
    %v2750 = vpack.c.b16 %v2502, %v2494
    %v2751 = vpack.c.b16 %v2503, %v2495
    %v2752 = vpack.c.b16 %v2512, %v2504
    %v2753 = vpack.c.b16 %v2513, %v2505
    %v2754 = vpack.c.b16 %v2514, %v2506
    %v2755 = vpack.c.b16 %v2515, %v2507
    %v2756 = vpack.c.b16 %v2516, %v2508
    %v2757 = vpack.c.b16 %v2517, %v2509
    %v2758 = vpack.c.b16 %v2518, %v2510
    %v2759 = vpack.c.b16 %v2519, %v2511
    %v2760 = vpack.c.b16 %v2528, %v2520
    %v2761 = vpack.c.b16 %v2529, %v2521
    %v2762 = vpack.c.b16 %v2530, %v2522
    %v2763 = vpack.c.b16 %v2531, %v2523
    %v2764 = vpack.c.b16 %v2532, %v2524
    %v2765 = vpack.c.b16 %v2533, %v2525
    %v2766 = vpack.c.b16 %v2534, %v2526
    %v2767 = vpack.c.b16 %v2535, %v2527
    %v2768 = vpack.c.b16 %v2544, %v2536
    %v2769 = vpack.c.b16 %v2545, %v2537
    %v2770 = vpack.c.b16 %v2546, %v2538
    %v2771 = vpack.c.b16 %v2547, %v2539
    %v2772 = vpack.c.b16 %v2548, %v2540
    %v2773 = vpack.c.b16 %v2549, %v2541
    %v2774 = vpack.c.b16 %v2550, %v2542
    %v2775 = vpack.c.b16 %v2551, %v2543
    %v2776 = vpack.c.b16 %v2560, %v2552
    %v2777 = vpack.c.b16 %v2561, %v2553
    %v2778 = vpack.c.b16 %v2562, %v2554
    %v2779 = vpack.c.b16 %v2563, %v2555
    %v2780 = vpack.c.b16 %v2564, %v2556
    %v2781 = vpack.c.b16 %v2565, %v2557
    %v2782 = vpack.c.b16 %v2566, %v2558
    %v2783 = vpack.c.b16 %v2567, %v2559
    %v2784 = vpack.c.b16 %v2576, %v2568
    %v2785 = vpack.c.b16 %v2577, %v2569
    %v2786 = vpack.c.b16 %v2578, %v2570
    %v2787 = vpack.c.b16 %v2579, %v2571
    %v2788 = vpack.c.b16 %v2580, %v2572
    %v2789 = vpack.c.b16 %v2581, %v2573
    %v2790 = vpack.c.b16 %v2582, %v2574
    %v2791 = vpack.c.b16 %v2583, %v2575
    %v2792 = vpack.c.b16 %v2592, %v2584
    %v2793 = vpack.c.b16 %v2593, %v2585
    %v2794 = vpack.c.b16 %v2594, %v2586
    %v2795 = vpack.c.b16 %v2595, %v2587
    %v2796 = vpack.c.b16 %v2596, %v2588
    %v2797 = vpack.c.b16 %v2597, %v2589
    %v2798 = vpack.c.b16 %v2598, %v2590
    %v2799 = vpack.c.b16 %v2599, %v2591
    %v2800 = vpack.c.b16 %v2608, %v2600
    %v2801 = vpack.c.b16 %v2609, %v2601
    %v2802 = vpack.c.b16 %v2610, %v2602
    %v2803 = vpack.c.b16 %v2611, %v2603
    %v2804 = vpack.c.b16 %v2612, %v2604
    %v2805 = vpack.c.b16 %v2613, %v2605
    %v2806 = vpack.c.b16 %v2614, %v2606
    %v2807 = vpack.c.b16 %v2615, %v2607
    %v2808 = vpack.c.b16 %v2624, %v2616
    %v2809 = vpack.c.b16 %v2625, %v2617
    %v2810 = vpack.c.b16 %v2626, %v2618
    %v2811 = vpack.c.b16 %v2627, %v2619
    %v2812 = vpack.c.b16 %v2628, %v2620
    %v2813 = vpack.c.b16 %v2629, %v2621
    %v2814 = vpack.c.b16 %v2630, %v2622
    %v2815 = vpack.c.b16 %v2631, %v2623
    %v2816 = vpack.c.b16 %v2640, %v2632
    %v2817 = vpack.c.b16 %v2641, %v2633
    %v2818 = vpack.c.b16 %v2642, %v2634
    %v2819 = vpack.c.b16 %v2643, %v2635
    %v2820 = vpack.c.b16 %v2644, %v2636
    %v2821 = vpack.c.b16 %v2645, %v2637
    %v2822 = vpack.c.b16 %v2646, %v2638
    %v2823 = vpack.c.b16 %v2647, %v2639
    %v2824 = vpack.c.b16 %v2656, %v2648
    %v2825 = vpack.c.b16 %v2657, %v2649
    %v2826 = vpack.c.b16 %v2658, %v2650
    %v2827 = vpack.c.b16 %v2659, %v2651
    %v2828 = vpack.c.b16 %v2660, %v2652
    %v2829 = vpack.c.b16 %v2661, %v2653
    %v2830 = vpack.c.b16 %v2662, %v2654
    %v2831 = vpack.c.b16 %v2663, %v2655
    %v2832 = vpack.c.b16 %v2672, %v2664
    %v2833 = vpack.c.b16 %v2673, %v2665
    %v2834 = vpack.c.b16 %v2674, %v2666
    %v2835 = vpack.c.b16 %v2675, %v2667
    %v2836 = vpack.c.b16 %v2676, %v2668
    %v2837 = vpack.c.b16 %v2677, %v2669
    %v2838 = vpack.c.b16 %v2678, %v2670
    %v2839 = vpack.c.b16 %v2679, %v2671
    %v2840 = vpack.c.b16 %v2688, %v2680
    %v2841 = vpack.c.b16 %v2689, %v2681
    %v2842 = vpack.c.b16 %v2690, %v2682
    %v2843 = vpack.c.b16 %v2691, %v2683
    %v2844 = vpack.c.b16 %v2692, %v2684
    %v2845 = vpack.c.b16 %v2693, %v2685
    %v2846 = vpack.c.b16 %v2694, %v2686
    %v2847 = vpack.c.b16 %v2695, %v2687
    %v2848 = vpack.c.b16 %v2704, %v2696
    %v2849 = vpack.c.b16 %v2705, %v2697
    %v2850 = vpack.c.b16 %v2706, %v2698
    %v2851 = vpack.c.b16 %v2707, %v2699
    %v2852 = vpack.c.b16 %v2708, %v2700
    %v2853 = vpack.c.b16 %v2709, %v2701
    %v2854 = vpack.c.b16 %v2710, %v2702
    %v2855 = vpack.c.b16 %v2711, %v2703
    %v2856 = vpack.c.b16 %v2720, %v2712
    %v2857 = vpack.c.b16 %v2721, %v2713
    %v2858 = vpack.c.b16 %v2722, %v2714
    %v2859 = vpack.c.b16 %v2723, %v2715
    %v2860 = vpack.c.b16 %v2724, %v2716
    %v2861 = vpack.c.b16 %v2725, %v2717
    %v2862 = vpack.c.b16 %v2726, %v2718
    %v2863 = vpack.c.b16 %v2727, %v2719
    %v2864 = vpack.c.b16 %v2736, %v2728
    %v2865 = vpack.c.b16 %v2737, %v2729
    %v2866 = vpack.c.b16 %v2738, %v2730
    %v2867 = vpack.c.b16 %v2739, %v2731
    %v2868 = vpack.c.b16 %v2740, %v2732
    %v2869 = vpack.c.b16 %v2741, %v2733
    %v2870 = vpack.c.b16 %v2742, %v2734
    %v2871 = vpack.c.b16 %v2743, %v2735
    %3000 = vmatprep.subr.bf16.mxu0 %v2801
    %3001 = vmatpush1.bf16.msra.mxu0 %v2800
    %3002 = vmatprep.subr.bf16.mxu0 %v2793
    %3003 = vmatpush1.bf16.msra.mxu0 %v2792
    %3004 = vmatprep.subr.bf16.mxu0 %v2785
    %3005 = vmatpush1.bf16.msra.mxu0 %v2784
    %3006 = vmatprep.subr.bf16.mxu0 %v2777
    %3007 = vmatpush1.bf16.msra.mxu0 %v2776
    %3008 = vmatprep.subr.bf16.mxu0 %v2769
    %3009 = vmatpush1.bf16.msra.mxu0 %v2768
    %3010 = vmatprep.subr.bf16.mxu0 %v2761
    %3011 = vmatpush1.bf16.msra.mxu0 %v2760
    %3012 = vmatprep.subr.bf16.mxu0 %v2753
    %3013 = vmatpush1.bf16.msra.mxu0 %v2752
    %3014 = vmatprep.subr.bf16.mxu0 %v2745
    %3015 = vmatpush1.bf16.msra.mxu0 %v2744
    %3016 = vmatprep.subr.bf16.mxu0 %v2865
    %3017 = vmatpush2.bf16.msra.mxu0 %v2864
    %3018 = vmatprep.subr.bf16.mxu0 %v2857
    %3019 = vmatpush2.bf16.msra.mxu0 %v2856
    %3020 = vmatprep.subr.bf16.mxu0 %v2849
    %3021 = vmatpush2.bf16.msra.mxu0 %v2848
    %3022 = vmatprep.subr.bf16.mxu0 %v2841
    %3023 = vmatpush2.bf16.msra.mxu0 %v2840
    %3024 = vmatprep.subr.bf16.mxu0 %v2833
    %3025 = vmatpush2.bf16.msra.mxu0 %v2832
    %3026 = vmatprep.subr.bf16.mxu0 %v2825
    %3027 = vmatpush2.bf16.msra.mxu0 %v2824
    %3028 = vmatprep.subr.bf16.mxu0 %v2817
    %3029 = vmatpush2.bf16.msra.mxu0 %v2816
    %3030 = vmatprep.subr.bf16.mxu0 %v2809
    %3031 = vmatpush2.bf16.msra.mxu0 %v2808
    %3032 = vmatprep.mubr.bf16.mxu0 %v2219
    %3033 = vmatmul.mubr.bf16.gmra.mxu0 %v2206
    %v3034 = vpop.f32.mrf.mxu0
    %v3035 = vadd.f32 0.0, %v3034
    %v3036 = vpop.f32.mrf.mxu0
    %v3037 = vadd.f32 0.0, %v3036
    %v3038 = vpop.f32.mrf.mxu0
    %v3039 = vadd.f32 0.0, %v3038
    %v3040 = vpop.f32.mrf.mxu0
    %v3041 = vadd.f32 0.0, %v3040
    %3042 = vdwg.mxu0
    %3043 = vmatprep.subr.bf16.mxu0 %v2803
    %3044 = vmatpush1.bf16.msra.mxu0 %v2802
    %3045 = vmatprep.subr.bf16.mxu0 %v2795
    %3046 = vmatpush1.bf16.msra.mxu0 %v2794
    %3047 = vmatprep.subr.bf16.mxu0 %v2787
    %3048 = vmatpush1.bf16.msra.mxu0 %v2786
    %3049 = vmatprep.subr.bf16.mxu0 %v2779
    %3050 = vmatpush1.bf16.msra.mxu0 %v2778
    %3051 = vmatprep.subr.bf16.mxu0 %v2771
    %3052 = vmatpush1.bf16.msra.mxu0 %v2770
    %3053 = vmatprep.subr.bf16.mxu0 %v2763
    %3054 = vmatpush1.bf16.msra.mxu0 %v2762
    %3055 = vmatprep.subr.bf16.mxu0 %v2755
    %3056 = vmatpush1.bf16.msra.mxu0 %v2754
    %3057 = vmatprep.subr.bf16.mxu0 %v2747
    %3058 = vmatpush1.bf16.msra.mxu0 %v2746
    %3059 = vmatprep.subr.bf16.mxu0 %v2867
    %3060 = vmatpush2.bf16.msra.mxu0 %v2866
    %3061 = vmatprep.subr.bf16.mxu0 %v2859
    %3062 = vmatpush2.bf16.msra.mxu0 %v2858
    %3063 = vmatprep.subr.bf16.mxu0 %v2851
    %3064 = vmatpush2.bf16.msra.mxu0 %v2850
    %3065 = vmatprep.subr.bf16.mxu0 %v2843
    %3066 = vmatpush2.bf16.msra.mxu0 %v2842
    %3067 = vmatprep.subr.bf16.mxu0 %v2835
    %3068 = vmatpush2.bf16.msra.mxu0 %v2834
    %3069 = vmatprep.subr.bf16.mxu0 %v2827
    %3070 = vmatpush2.bf16.msra.mxu0 %v2826
    %3071 = vmatprep.subr.bf16.mxu0 %v2819
    %3072 = vmatpush2.bf16.msra.mxu0 %v2818
    %3073 = vmatprep.subr.bf16.mxu0 %v2811
    %3074 = vmatpush2.bf16.msra.mxu0 %v2810
    %3075 = vmatprep.mubr.bf16.mxu0 %v2219
    %3076 = vmatmul.mubr.bf16.gmra.mxu0 %v2206
    %v3077 = vpop.f32.mrf.mxu0
    %v3078 = vadd.f32 0.0, %v3077
    %v3079 = vpop.f32.mrf.mxu0
    %v3080 = vadd.f32 0.0, %v3079
    %v3081 = vpop.f32.mrf.mxu0
    %v3082 = vadd.f32 0.0, %v3081
    %v3083 = vpop.f32.mrf.mxu0
    %v3084 = vadd.f32 0.0, %v3083
    %3085 = vdwg.mxu0
    %3086 = vmatprep.subr.bf16.mxu0 %v2805
    %3087 = vmatpush1.bf16.msra.mxu0 %v2804
    %3088 = vmatprep.subr.bf16.mxu0 %v2797
    %3089 = vmatpush1.bf16.msra.mxu0 %v2796
    %3090 = vmatprep.subr.bf16.mxu0 %v2789
    %3091 = vmatpush1.bf16.msra.mxu0 %v2788
    %3092 = vmatprep.subr.bf16.mxu0 %v2781
    %3093 = vmatpush1.bf16.msra.mxu0 %v2780
    %3094 = vmatprep.subr.bf16.mxu0 %v2773
    %3095 = vmatpush1.bf16.msra.mxu0 %v2772
    %3096 = vmatprep.subr.bf16.mxu0 %v2765
    %3097 = vmatpush1.bf16.msra.mxu0 %v2764
    %3098 = vmatprep.subr.bf16.mxu0 %v2757
    %3099 = vmatpush1.bf16.msra.mxu0 %v2756
    %3100 = vmatprep.subr.bf16.mxu0 %v2749
    %3101 = vmatpush1.bf16.msra.mxu0 %v2748
    %3102 = vmatprep.subr.bf16.mxu0 %v2869
    %3103 = vmatpush2.bf16.msra.mxu0 %v2868
    %3104 = vmatprep.subr.bf16.mxu0 %v2861
    %3105 = vmatpush2.bf16.msra.mxu0 %v2860
    %3106 = vmatprep.subr.bf16.mxu0 %v2853
    %3107 = vmatpush2.bf16.msra.mxu0 %v2852
    %3108 = vmatprep.subr.bf16.mxu0 %v2845
    %3109 = vmatpush2.bf16.msra.mxu0 %v2844
    %3110 = vmatprep.subr.bf16.mxu0 %v2837
    %3111 = vmatpush2.bf16.msra.mxu0 %v2836
    %3112 = vmatprep.subr.bf16.mxu0 %v2829
    %3113 = vmatpush2.bf16.msra.mxu0 %v2828
    %3114 = vmatprep.subr.bf16.mxu0 %v2821
    %3115 = vmatpush2.bf16.msra.mxu0 %v2820
    %3116 = vmatprep.subr.bf16.mxu0 %v2813
    %3117 = vmatpush2.bf16.msra.mxu0 %v2812
    %3118 = vmatprep.mubr.bf16.mxu0 %v2219
    %3119 = vmatmul.mubr.bf16.gmra.mxu0 %v2206
    %v3120 = vpop.f32.mrf.mxu0
    %v3121 = vadd.f32 0.0, %v3120
    %v3122 = vpop.f32.mrf.mxu0
    %v3123 = vadd.f32 0.0, %v3122
    %v3124 = vpop.f32.mrf.mxu0
    %v3125 = vadd.f32 0.0, %v3124
    %v3126 = vpop.f32.mrf.mxu0
    %v3127 = vadd.f32 0.0, %v3126
    %3128 = vdwg.mxu0
    %3129 = vmatprep.subr.bf16.mxu0 %v2807
    %3130 = vmatpush1.bf16.msra.mxu0 %v2806
    %3131 = vmatprep.subr.bf16.mxu0 %v2799
    %3132 = vmatpush1.bf16.msra.mxu0 %v2798
    %3133 = vmatprep.subr.bf16.mxu0 %v2791
    %3134 = vmatpush1.bf16.msra.mxu0 %v2790
    %3135 = vmatprep.subr.bf16.mxu0 %v2783
    %3136 = vmatpush1.bf16.msra.mxu0 %v2782
    %3137 = vmatprep.subr.bf16.mxu0 %v2775
    %3138 = vmatpush1.bf16.msra.mxu0 %v2774
    %3139 = vmatprep.subr.bf16.mxu0 %v2767
    %3140 = vmatpush1.bf16.msra.mxu0 %v2766
    %3141 = vmatprep.subr.bf16.mxu0 %v2759
    %3142 = vmatpush1.bf16.msra.mxu0 %v2758
    %3143 = vmatprep.subr.bf16.mxu0 %v2751
    %3144 = vmatpush1.bf16.msra.mxu0 %v2750
    %3145 = vmatprep.subr.bf16.mxu0 %v2871
    %3146 = vmatpush2.bf16.msra.mxu0 %v2870
    %3147 = vmatprep.subr.bf16.mxu0 %v2863
    %3148 = vmatpush2.bf16.msra.mxu0 %v2862
    %3149 = vmatprep.subr.bf16.mxu0 %v2855
    %3150 = vmatpush2.bf16.msra.mxu0 %v2854
    %3151 = vmatprep.subr.bf16.mxu0 %v2847
    %3152 = vmatpush2.bf16.msra.mxu0 %v2846
    %3153 = vmatprep.subr.bf16.mxu0 %v2839
    %3154 = vmatpush2.bf16.msra.mxu0 %v2838
    %3155 = vmatprep.subr.bf16.mxu0 %v2831
    %3156 = vmatpush2.bf16.msra.mxu0 %v2830
    %3157 = vmatprep.subr.bf16.mxu0 %v2823
    %3158 = vmatpush2.bf16.msra.mxu0 %v2822
    %3159 = vmatprep.subr.bf16.mxu0 %v2815
    %3160 = vmatpush2.bf16.msra.mxu0 %v2814
    %3161 = vmatprep.mubr.bf16.mxu0 %v2219
    %3162 = vmatmul.mubr.bf16.gmra.mxu0 %v2206
    %v3163 = vpop.f32.mrf.mxu0
    %v3164 = vadd.f32 0.0, %v3163
    %v3165 = vpop.f32.mrf.mxu0
    %v3166 = vadd.f32 0.0, %v3165
    %v3167 = vpop.f32.mrf.mxu0
    %v3168 = vadd.f32 0.0, %v3167
    %v3169 = vpop.f32.mrf.mxu0
    %v3170 = vadd.f32 0.0, %v3169
    %3171 = vdwg.mxu0
    %s3172 = smul.u32 2, 8
    %s3173 = smul.addr %s3172, 4
    %s3174 = scalar_lea.vmem [#allocation2], %s3173
    %v3175 = vld [vmem:[%s3174] sm:$0xff]
    %v3176 = vld [vmem:[%s3174 + $0x8] sm:$0xff]
    %v3177 = vld [vmem:[%s3174 + $0x20] sm:$0xff]
    %v3178 = vld [vmem:[%s3174 + $0x28] sm:$0xff]
    %v3179 = vunpack.c.l.bf16 %v3175
    %v3180 = vunpack.c.h.bf16 %v3175
    %v3181 = vunpack.c.l.bf16 %v3176
    %v3182 = vunpack.c.h.bf16 %v3176
    %v3183 = vunpack.c.l.bf16 %v3177
    %v3184 = vunpack.c.h.bf16 %v3177
    %v3185 = vunpack.c.l.bf16 %v3178
    %v3186 = vunpack.c.h.bf16 %v3178
    %v3187 = vadd.f32 %v3179, %v3035
    %v3188 = vadd.f32 %v3180, %v3037
    %v3189 = vadd.f32 %v3181, %v3078
    %v3190 = vadd.f32 %v3182, %v3080
    %v3191 = vadd.f32 %v3183, %v3039
    %v3192 = vadd.f32 %v3184, %v3041
    %v3193 = vadd.f32 %v3185, %v3082
    %v3194 = vadd.f32 %v3186, %v3084
    %s3195 = smul.u32 12, 8
    %s3196 = smul.addr %s3195, 4
    %s3197 = scalar_lea.vmem [#allocation2], %s3196
    %v3198 = vld [vmem:[%s3197 + $0x10] sm:$0xff]
    %v3199 = vld [vmem:[%s3197 + $0x18] sm:$0xff]
    %v3200 = vld [vmem:[%s3197 + $0x30] sm:$0xff]
    %v3201 = vld [vmem:[%s3197 + $0x38] sm:$0xff]
    %v3202 = vunpack.c.l.bf16 %v3198
    %v3203 = vunpack.c.h.bf16 %v3198
    %v3204 = vunpack.c.l.bf16 %v3199
    %v3205 = vunpack.c.h.bf16 %v3199
    %v3206 = vunpack.c.l.bf16 %v3200
    %v3207 = vunpack.c.h.bf16 %v3200
    %v3208 = vunpack.c.l.bf16 %v3201
    %v3209 = vunpack.c.h.bf16 %v3201
    %v3210 = vadd.f32 %v3202, %v3121
    %v3211 = vadd.f32 %v3203, %v3123
    %v3212 = vadd.f32 %v3204, %v3164
    %v3213 = vadd.f32 %v3205, %v3166
    %v3214 = vadd.f32 %v3206, %v3125
    %v3215 = vadd.f32 %v3207, %v3127
    %v3216 = vadd.f32 %v3208, %v3168
    %v3217 = vadd.f32 %v3209, %v3170
    %v3218 = vxor.u32 %v3187, 2147483648
    %v3219 = vxor.u32 %v3191, 2147483648
    %v3220 = vmul.f32 %v3218, 1.442695
    %v3221 = vpow.pop %v3220
    %v3222 = vmul.f32 %v3219, 1.442695
    %v3223 = vpow.pop %v3222
    %v3224 = vadd.f32 %v3221, 1.0
    %v3225 = vadd.f32 %v3223, 1.0
    %v3226 = vrcp.pop %v3224
    %v3227 = vmul.f32 1.0, %v3226
    %v3228 = vrcp.pop %v3225
    %v3229 = vmul.f32 1.0, %v3228
    %v3230 = vxor.u32 %v3188, 2147483648
    %v3231 = vxor.u32 %v3192, 2147483648
    %v3232 = vmul.f32 %v3230, 1.442695
    %v3233 = vpow.pop %v3232
    %v3234 = vmul.f32 %v3231, 1.442695
    %v3235 = vpow.pop %v3234
    %v3236 = vadd.f32 %v3233, 1.0
    %v3237 = vadd.f32 %v3235, 1.0
    %v3238 = vrcp.pop %v3236
    %v3239 = vmul.f32 1.0, %v3238
    %v3240 = vrcp.pop %v3237
    %v3241 = vmul.f32 1.0, %v3240
    %v3242 = vtanh.pop %v3189
    %v3243 = vtanh.pop %v3193
    %v3244 = vxor.u32 %v3190, 2147483648
    %v3245 = vxor.u32 %v3194, 2147483648
    %v3246 = vmul.f32 %v3244, 1.442695
    %v3247 = vpow.pop %v3246
    %v3248 = vmul.f32 %v3245, 1.442695
    %v3249 = vpow.pop %v3248
    %v3250 = vadd.f32 %v3247, 1.0
    %v3251 = vadd.f32 %v3249, 1.0
    %v3252 = vrcp.pop %v3250
    %v3253 = vmul.f32 1.0, %v3252
    %v3254 = vrcp.pop %v3251
    %v3255 = vmul.f32 1.0, %v3254
    %v3256 = vmul.f32 %v3239, %v2152
    %v3257 = vmul.f32 %v3241, %v2153
    %v3258 = vmul.f32 %v3227, %v3242
    %v3259 = vmul.f32 %v3229, %v3243
    %v3260 = vadd.f32 %v3256, %v3258
    %v3261 = vadd.f32 %v3257, %v3259
    %v3262 = vtanh.pop %v3260
    %v3263 = vtanh.pop %v3261
    %v3264 = vmul.f32 %v3253, %v3262
    %v3265 = vmul.f32 %v3255, %v3263
    %v3266 = vxor.u32 %v3210, 2147483648
    %v3267 = vxor.u32 %v3214, 2147483648
    %v3268 = vmul.f32 %v3266, 1.442695
    %v3269 = vpow.pop %v3268
    %v3270 = vmul.f32 %v3267, 1.442695
    %v3271 = vpow.pop %v3270
    %v3272 = vadd.f32 %v3269, 1.0
    %v3273 = vadd.f32 %v3271, 1.0
    %v3274 = vrcp.pop %v3272
    %v3275 = vmul.f32 1.0, %v3274
    %v3276 = vrcp.pop %v3273
    %v3277 = vmul.f32 1.0, %v3276
    %v3278 = vxor.u32 %v3211, 2147483648
    %v3279 = vxor.u32 %v3215, 2147483648
    %v3280 = vmul.f32 %v3278, 1.442695
    %v3281 = vpow.pop %v3280
    %v3282 = vmul.f32 %v3279, 1.442695
    %v3283 = vpow.pop %v3282
    %v3284 = vadd.f32 %v3281, 1.0
    %v3285 = vadd.f32 %v3283, 1.0
    %v3286 = vrcp.pop %v3284
    %v3287 = vmul.f32 1.0, %v3286
    %v3288 = vrcp.pop %v3285
    %v3289 = vmul.f32 1.0, %v3288
    %v3290 = vtanh.pop %v3212
    %v3291 = vtanh.pop %v3216
    %v3292 = vxor.u32 %v3213, 2147483648
    %v3293 = vxor.u32 %v3217, 2147483648
    %v3294 = vmul.f32 %v3292, 1.442695
    %v3295 = vpow.pop %v3294
    %v3296 = vmul.f32 %v3293, 1.442695
    %v3297 = vpow.pop %v3296
    %v3298 = vadd.f32 %v3295, 1.0
    %v3299 = vadd.f32 %v3297, 1.0
    %v3300 = vrcp.pop %v3298
    %v3301 = vmul.f32 1.0, %v3300
    %v3302 = vrcp.pop %v3299
    %v3303 = vmul.f32 1.0, %v3302
    %v3304 = vmul.f32 %v3287, %v2200
    %v3305 = vmul.f32 %v3289, %v2201
    %v3306 = vmul.f32 %v3275, %v3290
    %v3307 = vmul.f32 %v3277, %v3291
    %v3308 = vadd.f32 %v3304, %v3306
    %v3309 = vadd.f32 %v3305, %v3307
    %v3310 = vtanh.pop %v3308
    %v3311 = vtanh.pop %v3309
    %v3312 = vmul.f32 %v3301, %v3310
    %v3313 = vmul.f32 %v3303, %v3311
    %v3314 = vpack.c.bf16 %v3265, %v3264
    %v3316 = vunpack.c.l.b16 %v3314
    %v3317 = vunpack.c.h.b16 %v3314
    %v3318 = vpack.c.b16 %v3316, %v3316
    %v3319 = vpack.c.b16 %v3317, %v3317
    %s3322 = smul.u32 2, 2
    %s3323 = smul.addr %s3322, 4
    %s3324 = scalar_lea.vmem [#allocation3], %s3323
    %3325 = vst [vmem:[%s3324] sm:$0xf] %v3318
    %3326 = vst [vmem:[%s3324 + $0x8] sm:$0xf] %v3319
    %v3327 = vpack.c.bf16 %v3313, %v3312
    %v3329 = vunpack.c.l.b16 %v3327
    %v3330 = vunpack.c.h.b16 %v3327
    %v3331 = vpack.c.b16 %v3329, %v3329
    %v3332 = vpack.c.b16 %v3330, %v3330
    %s3335 = smul.u32 12, 2
    %s3336 = smul.addr %s3335, 4
    %s3337 = scalar_lea.vmem [#allocation3], %s3336
    %3338 = vst [vmem:[%s3337 + $0x4] sm:$0xf] %v3331
    %3339 = vst [vmem:[%s3337 + $0xc] sm:$0xf] %v3332
    %v3340 = vld [vmem:[#allocation4] sm:$0xff]
    %v3341 = vld [vmem:[#allocation4 + $0x8] sm:$0xff]
    %v3342 = vld [vmem:[#allocation4 + $0x10] sm:$0xff]
    %v3343 = vld [vmem:[#allocation4 + $0x18] sm:$0xff]
    %v3344 = vld [vmem:[#allocation4 + $0x20] sm:$0xff]
    %v3345 = vld [vmem:[#allocation4 + $0x28] sm:$0xff]
    %v3346 = vld [vmem:[#allocation4 + $0x30] sm:$0xff]
    %v3347 = vld [vmem:[#allocation4 + $0x38] sm:$0xff]
    %v3348 = vld [vmem:[#allocation4 + $0x40] sm:$0xff]
    %v3349 = vld [vmem:[#allocation4 + $0x48] sm:$0xff]
    %v3350 = vld [vmem:[#allocation4 + $0x50] sm:$0xff]
    %v3351 = vld [vmem:[#allocation4 + $0x58] sm:$0xff]
    %v3352 = vld [vmem:[#allocation4 + $0x60] sm:$0xff]
    %v3353 = vld [vmem:[#allocation4 + $0x68] sm:$0xff]
    %v3354 = vld [vmem:[#allocation4 + $0x70] sm:$0xff]
    %v3355 = vld [vmem:[#allocation4 + $0x78] sm:$0xff]
    %v3356 = vld [vmem:[#allocation4 + $0x80] sm:$0xff]
    %v3357 = vld [vmem:[#allocation4 + $0x88] sm:$0xff]
    %v3358 = vld [vmem:[#allocation4 + $0x90] sm:$0xff]
    %v3359 = vld [vmem:[#allocation4 + $0x98] sm:$0xff]
    %v3360 = vld [vmem:[#allocation4 + $0xa0] sm:$0xff]
    %v3361 = vld [vmem:[#allocation4 + $0xa8] sm:$0xff]
    %v3362 = vld [vmem:[#allocation4 + $0xb0] sm:$0xff]
    %v3363 = vld [vmem:[#allocation4 + $0xb8] sm:$0xff]
    %v3364 = vld [vmem:[#allocation4 + $0xc0] sm:$0xff]
    %v3365 = vld [vmem:[#allocation4 + $0xc8] sm:$0xff]
    %v3366 = vld [vmem:[#allocation4 + $0xd0] sm:$0xff]
    %v3367 = vld [vmem:[#allocation4 + $0xd8] sm:$0xff]
    %v3368 = vld [vmem:[#allocation4 + $0xe0] sm:$0xff]
    %v3369 = vld [vmem:[#allocation4 + $0xe8] sm:$0xff]
    %v3370 = vld [vmem:[#allocation4 + $0xf0] sm:$0xff]
    %v3371 = vld [vmem:[#allocation4 + $0xf8] sm:$0xff]
    %v3372 = vld [vmem:[#allocation4 + $0x100] sm:$0xff]
    %v3373 = vld [vmem:[#allocation4 + $0x108] sm:$0xff]
    %v3374 = vld [vmem:[#allocation4 + $0x110] sm:$0xff]
    %v3375 = vld [vmem:[#allocation4 + $0x118] sm:$0xff]
    %v3376 = vld [vmem:[#allocation4 + $0x120] sm:$0xff]
    %v3377 = vld [vmem:[#allocation4 + $0x128] sm:$0xff]
    %v3378 = vld [vmem:[#allocation4 + $0x130] sm:$0xff]
    %v3379 = vld [vmem:[#allocation4 + $0x138] sm:$0xff]
    %v3380 = vld [vmem:[#allocation4 + $0x140] sm:$0xff]
    %v3381 = vld [vmem:[#allocation4 + $0x148] sm:$0xff]
    %v3382 = vld [vmem:[#allocation4 + $0x150] sm:$0xff]
    %v3383 = vld [vmem:[#allocation4 + $0x158] sm:$0xff]
    %v3384 = vld [vmem:[#allocation4 + $0x160] sm:$0xff]
    %v3385 = vld [vmem:[#allocation4 + $0x168] sm:$0xff]
    %v3386 = vld [vmem:[#allocation4 + $0x170] sm:$0xff]
    %v3387 = vld [vmem:[#allocation4 + $0x178] sm:$0xff]
    %v3388 = vld [vmem:[#allocation4 + $0x180] sm:$0xff]
    %v3389 = vld [vmem:[#allocation4 + $0x188] sm:$0xff]
    %v3390 = vld [vmem:[#allocation4 + $0x190] sm:$0xff]
    %v3391 = vld [vmem:[#allocation4 + $0x198] sm:$0xff]
    %v3392 = vld [vmem:[#allocation4 + $0x1a0] sm:$0xff]
    %v3393 = vld [vmem:[#allocation4 + $0x1a8] sm:$0xff]
    %v3394 = vld [vmem:[#allocation4 + $0x1b0] sm:$0xff]
    %v3395 = vld [vmem:[#allocation4 + $0x1b8] sm:$0xff]
    %v3396 = vld [vmem:[#allocation4 + $0x1c0] sm:$0xff]
    %v3397 = vld [vmem:[#allocation4 + $0x1c8] sm:$0xff]
    %v3398 = vld [vmem:[#allocation4 + $0x1d0] sm:$0xff]
    %v3399 = vld [vmem:[#allocation4 + $0x1d8] sm:$0xff]
    %v3400 = vld [vmem:[#allocation4 + $0x1e0] sm:$0xff]
    %v3401 = vld [vmem:[#allocation4 + $0x1e8] sm:$0xff]
    %v3402 = vld [vmem:[#allocation4 + $0x1f0] sm:$0xff]
    %v3403 = vld [vmem:[#allocation4 + $0x1f8] sm:$0xff]
    %v3404 = vld [vmem:[#allocation4 + $0x200] sm:$0xff]
    %v3405 = vld [vmem:[#allocation4 + $0x208] sm:$0xff]
    %v3406 = vld [vmem:[#allocation4 + $0x210] sm:$0xff]
    %v3407 = vld [vmem:[#allocation4 + $0x218] sm:$0xff]
    %v3408 = vld [vmem:[#allocation4 + $0x220] sm:$0xff]
    %v3409 = vld [vmem:[#allocation4 + $0x228] sm:$0xff]
    %v3410 = vld [vmem:[#allocation4 + $0x230] sm:$0xff]
    %v3411 = vld [vmem:[#allocation4 + $0x238] sm:$0xff]
    %v3412 = vld [vmem:[#allocation4 + $0x240] sm:$0xff]
    %v3413 = vld [vmem:[#allocation4 + $0x248] sm:$0xff]
    %v3414 = vld [vmem:[#allocation4 + $0x250] sm:$0xff]
    %v3415 = vld [vmem:[#allocation4 + $0x258] sm:$0xff]
    %v3416 = vld [vmem:[#allocation4 + $0x260] sm:$0xff]
    %v3417 = vld [vmem:[#allocation4 + $0x268] sm:$0xff]
    %v3418 = vld [vmem:[#allocation4 + $0x270] sm:$0xff]
    %v3419 = vld [vmem:[#allocation4 + $0x278] sm:$0xff]
    %v3420 = vld [vmem:[#allocation4 + $0x280] sm:$0xff]
    %v3421 = vld [vmem:[#allocation4 + $0x288] sm:$0xff]
    %v3422 = vld [vmem:[#allocation4 + $0x290] sm:$0xff]
    %v3423 = vld [vmem:[#allocation4 + $0x298] sm:$0xff]
    %v3424 = vld [vmem:[#allocation4 + $0x2a0] sm:$0xff]
    %v3425 = vld [vmem:[#allocation4 + $0x2a8] sm:$0xff]
    %v3426 = vld [vmem:[#allocation4 + $0x2b0] sm:$0xff]
    %v3427 = vld [vmem:[#allocation4 + $0x2b8] sm:$0xff]
    %v3428 = vld [vmem:[#allocation4 + $0x2c0] sm:$0xff]
    %v3429 = vld [vmem:[#allocation4 + $0x2c8] sm:$0xff]
    %v3430 = vld [vmem:[#allocation4 + $0x2d0] sm:$0xff]
    %v3431 = vld [vmem:[#allocation4 + $0x2d8] sm:$0xff]
    %v3432 = vld [vmem:[#allocation4 + $0x2e0] sm:$0xff]
    %v3433 = vld [vmem:[#allocation4 + $0x2e8] sm:$0xff]
    %v3434 = vld [vmem:[#allocation4 + $0x2f0] sm:$0xff]
    %v3435 = vld [vmem:[#allocation4 + $0x2f8] sm:$0xff]
    %v3436 = vld [vmem:[#allocation4 + $0x300] sm:$0xff]
    %v3437 = vld [vmem:[#allocation4 + $0x308] sm:$0xff]
    %v3438 = vld [vmem:[#allocation4 + $0x310] sm:$0xff]
    %v3439 = vld [vmem:[#allocation4 + $0x318] sm:$0xff]
    %v3440 = vld [vmem:[#allocation4 + $0x320] sm:$0xff]
    %v3441 = vld [vmem:[#allocation4 + $0x328] sm:$0xff]
    %v3442 = vld [vmem:[#allocation4 + $0x330] sm:$0xff]
    %v3443 = vld [vmem:[#allocation4 + $0x338] sm:$0xff]
    %v3444 = vld [vmem:[#allocation4 + $0x340] sm:$0xff]
    %v3445 = vld [vmem:[#allocation4 + $0x348] sm:$0xff]
    %v3446 = vld [vmem:[#allocation4 + $0x350] sm:$0xff]
    %v3447 = vld [vmem:[#allocation4 + $0x358] sm:$0xff]
    %v3448 = vld [vmem:[#allocation4 + $0x360] sm:$0xff]
    %v3449 = vld [vmem:[#allocation4 + $0x368] sm:$0xff]
    %v3450 = vld [vmem:[#allocation4 + $0x370] sm:$0xff]
    %v3451 = vld [vmem:[#allocation4 + $0x378] sm:$0xff]
    %v3452 = vld [vmem:[#allocation4 + $0x380] sm:$0xff]
    %v3453 = vld [vmem:[#allocation4 + $0x388] sm:$0xff]
    %v3454 = vld [vmem:[#allocation4 + $0x390] sm:$0xff]
    %v3455 = vld [vmem:[#allocation4 + $0x398] sm:$0xff]
    %v3456 = vld [vmem:[#allocation4 + $0x3a0] sm:$0xff]
    %v3457 = vld [vmem:[#allocation4 + $0x3a8] sm:$0xff]
    %v3458 = vld [vmem:[#allocation4 + $0x3b0] sm:$0xff]
    %v3459 = vld [vmem:[#allocation4 + $0x3b8] sm:$0xff]
    %v3460 = vld [vmem:[#allocation4 + $0x3c0] sm:$0xff]
    %v3461 = vld [vmem:[#allocation4 + $0x3c8] sm:$0xff]
    %v3462 = vld [vmem:[#allocation4 + $0x3d0] sm:$0xff]
    %v3463 = vld [vmem:[#allocation4 + $0x3d8] sm:$0xff]
    %v3464 = vld [vmem:[#allocation4 + $0x3e0] sm:$0xff]
    %v3465 = vld [vmem:[#allocation4 + $0x3e8] sm:$0xff]
    %v3466 = vld [vmem:[#allocation4 + $0x3f0] sm:$0xff]
    %v3467 = vld [vmem:[#allocation4 + $0x3f8] sm:$0xff]
    %v3596 = vunpack.c.l.b16 %v3340
    %v3597 = vunpack.c.h.b16 %v3340
    %v3598 = vunpack.c.l.b16 %v3341
    %v3599 = vunpack.c.h.b16 %v3341
    %v3600 = vunpack.c.l.b16 %v3342
    %v3601 = vunpack.c.h.b16 %v3342
    %v3602 = vunpack.c.l.b16 %v3343
    %v3603 = vunpack.c.h.b16 %v3343
    %v3604 = vunpack.c.l.b16 %v3344
    %v3605 = vunpack.c.h.b16 %v3344
    %v3606 = vunpack.c.l.b16 %v3345
    %v3607 = vunpack.c.h.b16 %v3345
    %v3608 = vunpack.c.l.b16 %v3346
    %v3609 = vunpack.c.h.b16 %v3346
    %v3610 = vunpack.c.l.b16 %v3347
    %v3611 = vunpack.c.h.b16 %v3347
    %v3612 = vunpack.c.l.b16 %v3348
    %v3613 = vunpack.c.h.b16 %v3348
    %v3614 = vunpack.c.l.b16 %v3349
    %v3615 = vunpack.c.h.b16 %v3349
    %v3616 = vunpack.c.l.b16 %v3350
    %v3617 = vunpack.c.h.b16 %v3350
    %v3618 = vunpack.c.l.b16 %v3351
    %v3619 = vunpack.c.h.b16 %v3351
    %v3620 = vunpack.c.l.b16 %v3352
    %v3621 = vunpack.c.h.b16 %v3352
    %v3622 = vunpack.c.l.b16 %v3353
    %v3623 = vunpack.c.h.b16 %v3353
    %v3624 = vunpack.c.l.b16 %v3354
    %v3625 = vunpack.c.h.b16 %v3354
    %v3626 = vunpack.c.l.b16 %v3355
    %v3627 = vunpack.c.h.b16 %v3355
    %v3628 = vunpack.c.l.b16 %v3356
    %v3629 = vunpack.c.h.b16 %v3356
    %v3630 = vunpack.c.l.b16 %v3357
    %v3631 = vunpack.c.h.b16 %v3357
    %v3632 = vunpack.c.l.b16 %v3358
    %v3633 = vunpack.c.h.b16 %v3358
    %v3634 = vunpack.c.l.b16 %v3359
    %v3635 = vunpack.c.h.b16 %v3359
    %v3636 = vunpack.c.l.b16 %v3360
    %v3637 = vunpack.c.h.b16 %v3360
    %v3638 = vunpack.c.l.b16 %v3361
    %v3639 = vunpack.c.h.b16 %v3361
    %v3640 = vunpack.c.l.b16 %v3362
    %v3641 = vunpack.c.h.b16 %v3362
    %v3642 = vunpack.c.l.b16 %v3363
    %v3643 = vunpack.c.h.b16 %v3363
    %v3644 = vunpack.c.l.b16 %v3364
    %v3645 = vunpack.c.h.b16 %v3364
    %v3646 = vunpack.c.l.b16 %v3365
    %v3647 = vunpack.c.h.b16 %v3365
    %v3648 = vunpack.c.l.b16 %v3366
    %v3649 = vunpack.c.h.b16 %v3366
    %v3650 = vunpack.c.l.b16 %v3367
    %v3651 = vunpack.c.h.b16 %v3367
    %v3652 = vunpack.c.l.b16 %v3368
    %v3653 = vunpack.c.h.b16 %v3368
    %v3654 = vunpack.c.l.b16 %v3369
    %v3655 = vunpack.c.h.b16 %v3369
    %v3656 = vunpack.c.l.b16 %v3370
    %v3657 = vunpack.c.h.b16 %v3370
    %v3658 = vunpack.c.l.b16 %v3371
    %v3659 = vunpack.c.h.b16 %v3371
    %v3660 = vunpack.c.l.b16 %v3372
    %v3661 = vunpack.c.h.b16 %v3372
    %v3662 = vunpack.c.l.b16 %v3373
    %v3663 = vunpack.c.h.b16 %v3373
    %v3664 = vunpack.c.l.b16 %v3374
    %v3665 = vunpack.c.h.b16 %v3374
    %v3666 = vunpack.c.l.b16 %v3375
    %v3667 = vunpack.c.h.b16 %v3375
    %v3668 = vunpack.c.l.b16 %v3376
    %v3669 = vunpack.c.h.b16 %v3376
    %v3670 = vunpack.c.l.b16 %v3377
    %v3671 = vunpack.c.h.b16 %v3377
    %v3672 = vunpack.c.l.b16 %v3378
    %v3673 = vunpack.c.h.b16 %v3378
    %v3674 = vunpack.c.l.b16 %v3379
    %v3675 = vunpack.c.h.b16 %v3379
    %v3676 = vunpack.c.l.b16 %v3380
    %v3677 = vunpack.c.h.b16 %v3380
    %v3678 = vunpack.c.l.b16 %v3381
    %v3679 = vunpack.c.h.b16 %v3381
    %v3680 = vunpack.c.l.b16 %v3382
    %v3681 = vunpack.c.h.b16 %v3382
    %v3682 = vunpack.c.l.b16 %v3383
    %v3683 = vunpack.c.h.b16 %v3383
    %v3684 = vunpack.c.l.b16 %v3384
    %v3685 = vunpack.c.h.b16 %v3384
    %v3686 = vunpack.c.l.b16 %v3385
    %v3687 = vunpack.c.h.b16 %v3385
    %v3688 = vunpack.c.l.b16 %v3386
    %v3689 = vunpack.c.h.b16 %v3386
    %v3690 = vunpack.c.l.b16 %v3387
    %v3691 = vunpack.c.h.b16 %v3387
    %v3692 = vunpack.c.l.b16 %v3388
    %v3693 = vunpack.c.h.b16 %v3388
    %v3694 = vunpack.c.l.b16 %v3389
    %v3695 = vunpack.c.h.b16 %v3389
    %v3696 = vunpack.c.l.b16 %v3390
    %v3697 = vunpack.c.h.b16 %v3390
    %v3698 = vunpack.c.l.b16 %v3391
    %v3699 = vunpack.c.h.b16 %v3391
    %v3700 = vunpack.c.l.b16 %v3392
    %v3701 = vunpack.c.h.b16 %v3392
    %v3702 = vunpack.c.l.b16 %v3393
    %v3703 = vunpack.c.h.b16 %v3393
    %v3704 = vunpack.c.l.b16 %v3394
    %v3705 = vunpack.c.h.b16 %v3394
    %v3706 = vunpack.c.l.b16 %v3395
    %v3707 = vunpack.c.h.b16 %v3395
    %v3708 = vunpack.c.l.b16 %v3396
    %v3709 = vunpack.c.h.b16 %v3396
    %v3710 = vunpack.c.l.b16 %v3397
    %v3711 = vunpack.c.h.b16 %v3397
    %v3712 = vunpack.c.l.b16 %v3398
    %v3713 = vunpack.c.h.b16 %v3398
    %v3714 = vunpack.c.l.b16 %v3399
    %v3715 = vunpack.c.h.b16 %v3399
    %v3716 = vunpack.c.l.b16 %v3400
    %v3717 = vunpack.c.h.b16 %v3400
    %v3718 = vunpack.c.l.b16 %v3401
    %v3719 = vunpack.c.h.b16 %v3401
    %v3720 = vunpack.c.l.b16 %v3402
    %v3721 = vunpack.c.h.b16 %v3402
    %v3722 = vunpack.c.l.b16 %v3403
    %v3723 = vunpack.c.h.b16 %v3403
    %v3724 = vunpack.c.l.b16 %v3404
    %v3725 = vunpack.c.h.b16 %v3404
    %v3726 = vunpack.c.l.b16 %v3405
    %v3727 = vunpack.c.h.b16 %v3405
    %v3728 = vunpack.c.l.b16 %v3406
    %v3729 = vunpack.c.h.b16 %v3406
    %v3730 = vunpack.c.l.b16 %v3407
    %v3731 = vunpack.c.h.b16 %v3407
    %v3732 = vunpack.c.l.b16 %v3408
    %v3733 = vunpack.c.h.b16 %v3408
    %v3734 = vunpack.c.l.b16 %v3409
    %v3735 = vunpack.c.h.b16 %v3409
    %v3736 = vunpack.c.l.b16 %v3410
    %v3737 = vunpack.c.h.b16 %v3410
    %v3738 = vunpack.c.l.b16 %v3411
    %v3739 = vunpack.c.h.b16 %v3411
    %v3740 = vunpack.c.l.b16 %v3412
    %v3741 = vunpack.c.h.b16 %v3412
    %v3742 = vunpack.c.l.b16 %v3413
    %v3743 = vunpack.c.h.b16 %v3413
    %v3744 = vunpack.c.l.b16 %v3414
    %v3745 = vunpack.c.h.b16 %v3414
    %v3746 = vunpack.c.l.b16 %v3415
    %v3747 = vunpack.c.h.b16 %v3415
    %v3748 = vunpack.c.l.b16 %v3416
    %v3749 = vunpack.c.h.b16 %v3416
    %v3750 = vunpack.c.l.b16 %v3417
    %v3751 = vunpack.c.h.b16 %v3417
    %v3752 = vunpack.c.l.b16 %v3418
    %v3753 = vunpack.c.h.b16 %v3418
    %v3754 = vunpack.c.l.b16 %v3419
    %v3755 = vunpack.c.h.b16 %v3419
    %v3756 = vunpack.c.l.b16 %v3420
    %v3757 = vunpack.c.h.b16 %v3420
    %v3758 = vunpack.c.l.b16 %v3421
    %v3759 = vunpack.c.h.b16 %v3421
    %v3760 = vunpack.c.l.b16 %v3422
    %v3761 = vunpack.c.h.b16 %v3422
    %v3762 = vunpack.c.l.b16 %v3423
    %v3763 = vunpack.c.h.b16 %v3423
    %v3764 = vunpack.c.l.b16 %v3424
    %v3765 = vunpack.c.h.b16 %v3424
    %v3766 = vunpack.c.l.b16 %v3425
    %v3767 = vunpack.c.h.b16 %v3425
    %v3768 = vunpack.c.l.b16 %v3426
    %v3769 = vunpack.c.h.b16 %v3426
    %v3770 = vunpack.c.l.b16 %v3427
    %v3771 = vunpack.c.h.b16 %v3427
    %v3772 = vunpack.c.l.b16 %v3428
    %v3773 = vunpack.c.h.b16 %v3428
    %v3774 = vunpack.c.l.b16 %v3429
    %v3775 = vunpack.c.h.b16 %v3429
    %v3776 = vunpack.c.l.b16 %v3430
    %v3777 = vunpack.c.h.b16 %v3430
    %v3778 = vunpack.c.l.b16 %v3431
    %v3779 = vunpack.c.h.b16 %v3431
    %v3780 = vunpack.c.l.b16 %v3432
    %v3781 = vunpack.c.h.b16 %v3432
    %v3782 = vunpack.c.l.b16 %v3433
    %v3783 = vunpack.c.h.b16 %v3433
    %v3784 = vunpack.c.l.b16 %v3434
    %v3785 = vunpack.c.h.b16 %v3434
    %v3786 = vunpack.c.l.b16 %v3435
    %v3787 = vunpack.c.h.b16 %v3435
    %v3788 = vunpack.c.l.b16 %v3436
    %v3789 = vunpack.c.h.b16 %v3436
    %v3790 = vunpack.c.l.b16 %v3437
    %v3791 = vunpack.c.h.b16 %v3437
    %v3792 = vunpack.c.l.b16 %v3438
    %v3793 = vunpack.c.h.b16 %v3438
    %v3794 = vunpack.c.l.b16 %v3439
    %v3795 = vunpack.c.h.b16 %v3439
    %v3796 = vunpack.c.l.b16 %v3440
    %v3797 = vunpack.c.h.b16 %v3440
    %v3798 = vunpack.c.l.b16 %v3441
    %v3799 = vunpack.c.h.b16 %v3441
    %v3800 = vunpack.c.l.b16 %v3442
    %v3801 = vunpack.c.h.b16 %v3442
    %v3802 = vunpack.c.l.b16 %v3443
    %v3803 = vunpack.c.h.b16 %v3443
    %v3804 = vunpack.c.l.b16 %v3444
    %v3805 = vunpack.c.h.b16 %v3444
    %v3806 = vunpack.c.l.b16 %v3445
    %v3807 = vunpack.c.h.b16 %v3445
    %v3808 = vunpack.c.l.b16 %v3446
    %v3809 = vunpack.c.h.b16 %v3446
    %v3810 = vunpack.c.l.b16 %v3447
    %v3811 = vunpack.c.h.b16 %v3447
    %v3812 = vunpack.c.l.b16 %v3448
    %v3813 = vunpack.c.h.b16 %v3448
    %v3814 = vunpack.c.l.b16 %v3449
    %v3815 = vunpack.c.h.b16 %v3449
    %v3816 = vunpack.c.l.b16 %v3450
    %v3817 = vunpack.c.h.b16 %v3450
    %v3818 = vunpack.c.l.b16 %v3451
    %v3819 = vunpack.c.h.b16 %v3451
    %v3820 = vunpack.c.l.b16 %v3452
    %v3821 = vunpack.c.h.b16 %v3452
    %v3822 = vunpack.c.l.b16 %v3453
    %v3823 = vunpack.c.h.b16 %v3453
    %v3824 = vunpack.c.l.b16 %v3454
    %v3825 = vunpack.c.h.b16 %v3454
    %v3826 = vunpack.c.l.b16 %v3455
    %v3827 = vunpack.c.h.b16 %v3455
    %v3828 = vunpack.c.l.b16 %v3456
    %v3829 = vunpack.c.h.b16 %v3456
    %v3830 = vunpack.c.l.b16 %v3457
    %v3831 = vunpack.c.h.b16 %v3457
    %v3832 = vunpack.c.l.b16 %v3458
    %v3833 = vunpack.c.h.b16 %v3458
    %v3834 = vunpack.c.l.b16 %v3459
    %v3835 = vunpack.c.h.b16 %v3459
    %v3836 = vunpack.c.l.b16 %v3460
    %v3837 = vunpack.c.h.b16 %v3460
    %v3838 = vunpack.c.l.b16 %v3461
    %v3839 = vunpack.c.h.b16 %v3461
    %v3840 = vunpack.c.l.b16 %v3462
    %v3841 = vunpack.c.h.b16 %v3462
    %v3842 = vunpack.c.l.b16 %v3463
    %v3843 = vunpack.c.h.b16 %v3463
    %v3844 = vunpack.c.l.b16 %v3464
    %v3845 = vunpack.c.h.b16 %v3464
    %v3846 = vunpack.c.l.b16 %v3465
    %v3847 = vunpack.c.h.b16 %v3465
    %v3848 = vunpack.c.l.b16 %v3466
    %v3849 = vunpack.c.h.b16 %v3466
    %v3850 = vunpack.c.l.b16 %v3467
    %v3851 = vunpack.c.h.b16 %v3467
    %v3852 = vpack.c.b16 %v3604, %v3596
    %v3853 = vpack.c.b16 %v3605, %v3597
    %v3854 = vpack.c.b16 %v3606, %v3598
    %v3855 = vpack.c.b16 %v3607, %v3599
    %v3856 = vpack.c.b16 %v3608, %v3600
    %v3857 = vpack.c.b16 %v3609, %v3601
    %v3858 = vpack.c.b16 %v3610, %v3602
    %v3859 = vpack.c.b16 %v3611, %v3603
    %v3860 = vpack.c.b16 %v3620, %v3612
    %v3861 = vpack.c.b16 %v3621, %v3613
    %v3862 = vpack.c.b16 %v3622, %v3614
    %v3863 = vpack.c.b16 %v3623, %v3615
    %v3864 = vpack.c.b16 %v3624, %v3616
    %v3865 = vpack.c.b16 %v3625, %v3617
    %v3866 = vpack.c.b16 %v3626, %v3618
    %v3867 = vpack.c.b16 %v3627, %v3619
    %v3868 = vpack.c.b16 %v3636, %v3628
    %v3869 = vpack.c.b16 %v3637, %v3629
    %v3870 = vpack.c.b16 %v3638, %v3630
    %v3871 = vpack.c.b16 %v3639, %v3631
    %v3872 = vpack.c.b16 %v3640, %v3632
    %v3873 = vpack.c.b16 %v3641, %v3633
    %v3874 = vpack.c.b16 %v3642, %v3634
    %v3875 = vpack.c.b16 %v3643, %v3635
    %v3876 = vpack.c.b16 %v3652, %v3644
    %v3877 = vpack.c.b16 %v3653, %v3645
    %v3878 = vpack.c.b16 %v3654, %v3646
    %v3879 = vpack.c.b16 %v3655, %v3647
    %v3880 = vpack.c.b16 %v3656, %v3648
    %v3881 = vpack.c.b16 %v3657, %v3649
    %v3882 = vpack.c.b16 %v3658, %v3650
    %v3883 = vpack.c.b16 %v3659, %v3651
    %v3884 = vpack.c.b16 %v3668, %v3660
    %v3885 = vpack.c.b16 %v3669, %v3661
    %v3886 = vpack.c.b16 %v3670, %v3662
    %v3887 = vpack.c.b16 %v3671, %v3663
    %v3888 = vpack.c.b16 %v3672, %v3664
    %v3889 = vpack.c.b16 %v3673, %v3665
    %v3890 = vpack.c.b16 %v3674, %v3666
    %v3891 = vpack.c.b16 %v3675, %v3667
    %v3892 = vpack.c.b16 %v3684, %v3676
    %v3893 = vpack.c.b16 %v3685, %v3677
    %v3894 = vpack.c.b16 %v3686, %v3678
    %v3895 = vpack.c.b16 %v3687, %v3679
    %v3896 = vpack.c.b16 %v3688, %v3680
    %v3897 = vpack.c.b16 %v3689, %v3681
    %v3898 = vpack.c.b16 %v3690, %v3682
    %v3899 = vpack.c.b16 %v3691, %v3683
    %v3900 = vpack.c.b16 %v3700, %v3692
    %v3901 = vpack.c.b16 %v3701, %v3693
    %v3902 = vpack.c.b16 %v3702, %v3694
    %v3903 = vpack.c.b16 %v3703, %v3695
    %v3904 = vpack.c.b16 %v3704, %v3696
    %v3905 = vpack.c.b16 %v3705, %v3697
    %v3906 = vpack.c.b16 %v3706, %v3698
    %v3907 = vpack.c.b16 %v3707, %v3699
    %v3908 = vpack.c.b16 %v3716, %v3708
    %v3909 = vpack.c.b16 %v3717, %v3709
    %v3910 = vpack.c.b16 %v3718, %v3710
    %v3911 = vpack.c.b16 %v3719, %v3711
    %v3912 = vpack.c.b16 %v3720, %v3712
    %v3913 = vpack.c.b16 %v3721, %v3713
    %v3914 = vpack.c.b16 %v3722, %v3714
    %v3915 = vpack.c.b16 %v3723, %v3715
    %v3916 = vpack.c.b16 %v3732, %v3724
    %v3917 = vpack.c.b16 %v3733, %v3725
    %v3918 = vpack.c.b16 %v3734, %v3726
    %v3919 = vpack.c.b16 %v3735, %v3727
    %v3920 = vpack.c.b16 %v3736, %v3728
    %v3921 = vpack.c.b16 %v3737, %v3729
    %v3922 = vpack.c.b16 %v3738, %v3730
    %v3923 = vpack.c.b16 %v3739, %v3731
    %v3924 = vpack.c.b16 %v3748, %v3740
    %v3925 = vpack.c.b16 %v3749, %v3741
    %v3926 = vpack.c.b16 %v3750, %v3742
    %v3927 = vpack.c.b16 %v3751, %v3743
    %v3928 = vpack.c.b16 %v3752, %v3744
    %v3929 = vpack.c.b16 %v3753, %v3745
    %v3930 = vpack.c.b16 %v3754, %v3746
    %v3931 = vpack.c.b16 %v3755, %v3747
    %v3932 = vpack.c.b16 %v3764, %v3756
    %v3933 = vpack.c.b16 %v3765, %v3757
    %v3934 = vpack.c.b16 %v3766, %v3758
    %v3935 = vpack.c.b16 %v3767, %v3759
    %v3936 = vpack.c.b16 %v3768, %v3760
    %v3937 = vpack.c.b16 %v3769, %v3761
    %v3938 = vpack.c.b16 %v3770, %v3762
    %v3939 = vpack.c.b16 %v3771, %v3763
    %v3940 = vpack.c.b16 %v3780, %v3772
    %v3941 = vpack.c.b16 %v3781, %v3773
    %v3942 = vpack.c.b16 %v3782, %v3774
    %v3943 = vpack.c.b16 %v3783, %v3775
    %v3944 = vpack.c.b16 %v3784, %v3776
    %v3945 = vpack.c.b16 %v3785, %v3777
    %v3946 = vpack.c.b16 %v3786, %v3778
    %v3947 = vpack.c.b16 %v3787, %v3779
    %v3948 = vpack.c.b16 %v3796, %v3788
    %v3949 = vpack.c.b16 %v3797, %v3789
    %v3950 = vpack.c.b16 %v3798, %v3790
    %v3951 = vpack.c.b16 %v3799, %v3791
    %v3952 = vpack.c.b16 %v3800, %v3792
    %v3953 = vpack.c.b16 %v3801, %v3793
    %v3954 = vpack.c.b16 %v3802, %v3794
    %v3955 = vpack.c.b16 %v3803, %v3795
    %v3956 = vpack.c.b16 %v3812, %v3804
    %v3957 = vpack.c.b16 %v3813, %v3805
    %v3958 = vpack.c.b16 %v3814, %v3806
    %v3959 = vpack.c.b16 %v3815, %v3807
    %v3960 = vpack.c.b16 %v3816, %v3808
    %v3961 = vpack.c.b16 %v3817, %v3809
    %v3962 = vpack.c.b16 %v3818, %v3810
    %v3963 = vpack.c.b16 %v3819, %v3811
    %v3964 = vpack.c.b16 %v3828, %v3820
    %v3965 = vpack.c.b16 %v3829, %v3821
    %v3966 = vpack.c.b16 %v3830, %v3822
    %v3967 = vpack.c.b16 %v3831, %v3823
    %v3968 = vpack.c.b16 %v3832, %v3824
    %v3969 = vpack.c.b16 %v3833, %v3825
    %v3970 = vpack.c.b16 %v3834, %v3826
    %v3971 = vpack.c.b16 %v3835, %v3827
    %v3972 = vpack.c.b16 %v3844, %v3836
    %v3973 = vpack.c.b16 %v3845, %v3837
    %v3974 = vpack.c.b16 %v3846, %v3838
    %v3975 = vpack.c.b16 %v3847, %v3839
    %v3976 = vpack.c.b16 %v3848, %v3840
    %v3977 = vpack.c.b16 %v3849, %v3841
    %v3978 = vpack.c.b16 %v3850, %v3842
    %v3979 = vpack.c.b16 %v3851, %v3843
    %4108 = vmatprep.subr.bf16.mxu0 %v3909
    %4109 = vmatpush1.bf16.msra.mxu0 %v3908
    %4110 = vmatprep.subr.bf16.mxu0 %v3901
    %4111 = vmatpush1.bf16.msra.mxu0 %v3900
    %4112 = vmatprep.subr.bf16.mxu0 %v3893
    %4113 = vmatpush1.bf16.msra.mxu0 %v3892
    %4114 = vmatprep.subr.bf16.mxu0 %v3885
    %4115 = vmatpush1.bf16.msra.mxu0 %v3884
    %4116 = vmatprep.subr.bf16.mxu0 %v3877
    %4117 = vmatpush1.bf16.msra.mxu0 %v3876
    %4118 = vmatprep.subr.bf16.mxu0 %v3869
    %4119 = vmatpush1.bf16.msra.mxu0 %v3868
    %4120 = vmatprep.subr.bf16.mxu0 %v3861
    %4121 = vmatpush1.bf16.msra.mxu0 %v3860
    %4122 = vmatprep.subr.bf16.mxu0 %v3853
    %4123 = vmatpush1.bf16.msra.mxu0 %v3852
    %4124 = vmatprep.subr.bf16.mxu0 %v3973
    %4125 = vmatpush2.bf16.msra.mxu0 %v3972
    %4126 = vmatprep.subr.bf16.mxu0 %v3965
    %4127 = vmatpush2.bf16.msra.mxu0 %v3964
    %4128 = vmatprep.subr.bf16.mxu0 %v3957
    %4129 = vmatpush2.bf16.msra.mxu0 %v3956
    %4130 = vmatprep.subr.bf16.mxu0 %v3949
    %4131 = vmatpush2.bf16.msra.mxu0 %v3948
    %4132 = vmatprep.subr.bf16.mxu0 %v3941
    %4133 = vmatpush2.bf16.msra.mxu0 %v3940
    %4134 = vmatprep.subr.bf16.mxu0 %v3933
    %4135 = vmatpush2.bf16.msra.mxu0 %v3932
    %4136 = vmatprep.subr.bf16.mxu0 %v3925
    %4137 = vmatpush2.bf16.msra.mxu0 %v3924
    %4138 = vmatprep.subr.bf16.mxu0 %v3917
    %4139 = vmatpush2.bf16.msra.mxu0 %v3916
    %4140 = vmatprep.mubr.bf16.mxu0 %v3327
    %4141 = vmatmul.mubr.bf16.gmra.mxu0 %v3314
    %v4142 = vpop.f32.mrf.mxu0
    %v4143 = vadd.f32 0.0, %v4142
    %v4144 = vpop.f32.mrf.mxu0
    %v4145 = vadd.f32 0.0, %v4144
    %v4146 = vpop.f32.mrf.mxu0
    %v4147 = vadd.f32 0.0, %v4146
    %v4148 = vpop.f32.mrf.mxu0
    %v4149 = vadd.f32 0.0, %v4148
    %4150 = vdwg.mxu0
    %4151 = vmatprep.subr.bf16.mxu0 %v3911
    %4152 = vmatpush1.bf16.msra.mxu0 %v3910
    %4153 = vmatprep.subr.bf16.mxu0 %v3903
    %4154 = vmatpush1.bf16.msra.mxu0 %v3902
    %4155 = vmatprep.subr.bf16.mxu0 %v3895
    %4156 = vmatpush1.bf16.msra.mxu0 %v3894
    %4157 = vmatprep.subr.bf16.mxu0 %v3887
    %4158 = vmatpush1.bf16.msra.mxu0 %v3886
    %4159 = vmatprep.subr.bf16.mxu0 %v3879
    %4160 = vmatpush1.bf16.msra.mxu0 %v3878
    %4161 = vmatprep.subr.bf16.mxu0 %v3871
    %4162 = vmatpush1.bf16.msra.mxu0 %v3870
    %4163 = vmatprep.subr.bf16.mxu0 %v3863
    %4164 = vmatpush1.bf16.msra.mxu0 %v3862
    %4165 = vmatprep.subr.bf16.mxu0 %v3855
    %4166 = vmatpush1.bf16.msra.mxu0 %v3854
    %4167 = vmatprep.subr.bf16.mxu0 %v3975
    %4168 = vmatpush2.bf16.msra.mxu0 %v3974
    %4169 = vmatprep.subr.bf16.mxu0 %v3967
    %4170 = vmatpush2.bf16.msra.mxu0 %v3966
    %4171 = vmatprep.subr.bf16.mxu0 %v3959
    %4172 = vmatpush2.bf16.msra.mxu0 %v3958
    %4173 = vmatprep.subr.bf16.mxu0 %v3951
    %4174 = vmatpush2.bf16.msra.mxu0 %v3950
    %4175 = vmatprep.subr.bf16.mxu0 %v3943
    %4176 = vmatpush2.bf16.msra.mxu0 %v3942
    %4177 = vmatprep.subr.bf16.mxu0 %v3935
    %4178 = vmatpush2.bf16.msra.mxu0 %v3934
    %4179 = vmatprep.subr.bf16.mxu0 %v3927
    %4180 = vmatpush2.bf16.msra.mxu0 %v3926
    %4181 = vmatprep.subr.bf16.mxu0 %v3919
    %4182 = vmatpush2.bf16.msra.mxu0 %v3918
    %4183 = vmatprep.mubr.bf16.mxu0 %v3327
    %4184 = vmatmul.mubr.bf16.gmra.mxu0 %v3314
    %v4185 = vpop.f32.mrf.mxu0
    %v4186 = vadd.f32 0.0, %v4185
    %v4187 = vpop.f32.mrf.mxu0
    %v4188 = vadd.f32 0.0, %v4187
    %v4189 = vpop.f32.mrf.mxu0
    %v4190 = vadd.f32 0.0, %v4189
    %v4191 = vpop.f32.mrf.mxu0
    %v4192 = vadd.f32 0.0, %v4191
    %4193 = vdwg.mxu0
    %4194 = vmatprep.subr.bf16.mxu0 %v3913
    %4195 = vmatpush1.bf16.msra.mxu0 %v3912
    %4196 = vmatprep.subr.bf16.mxu0 %v3905
    %4197 = vmatpush1.bf16.msra.mxu0 %v3904
    %4198 = vmatprep.subr.bf16.mxu0 %v3897
    %4199 = vmatpush1.bf16.msra.mxu0 %v3896
    %4200 = vmatprep.subr.bf16.mxu0 %v3889
    %4201 = vmatpush1.bf16.msra.mxu0 %v3888
    %4202 = vmatprep.subr.bf16.mxu0 %v3881
    %4203 = vmatpush1.bf16.msra.mxu0 %v3880
    %4204 = vmatprep.subr.bf16.mxu0 %v3873
    %4205 = vmatpush1.bf16.msra.mxu0 %v3872
    %4206 = vmatprep.subr.bf16.mxu0 %v3865
    %4207 = vmatpush1.bf16.msra.mxu0 %v3864
    %4208 = vmatprep.subr.bf16.mxu0 %v3857
    %4209 = vmatpush1.bf16.msra.mxu0 %v3856
    %4210 = vmatprep.subr.bf16.mxu0 %v3977
    %4211 = vmatpush2.bf16.msra.mxu0 %v3976
    %4212 = vmatprep.subr.bf16.mxu0 %v3969
    %4213 = vmatpush2.bf16.msra.mxu0 %v3968
    %4214 = vmatprep.subr.bf16.mxu0 %v3961
    %4215 = vmatpush2.bf16.msra.mxu0 %v3960
    %4216 = vmatprep.subr.bf16.mxu0 %v3953
    %4217 = vmatpush2.bf16.msra.mxu0 %v3952
    %4218 = vmatprep.subr.bf16.mxu0 %v3945
    %4219 = vmatpush2.bf16.msra.mxu0 %v3944
    %4220 = vmatprep.subr.bf16.mxu0 %v3937
    %4221 = vmatpush2.bf16.msra.mxu0 %v3936
    %4222 = vmatprep.subr.bf16.mxu0 %v3929
    %4223 = vmatpush2.bf16.msra.mxu0 %v3928
    %4224 = vmatprep.subr.bf16.mxu0 %v3921
    %4225 = vmatpush2.bf16.msra.mxu0 %v3920
    %4226 = vmatprep.mubr.bf16.mxu0 %v3327
    %4227 = vmatmul.mubr.bf16.gmra.mxu0 %v3314
    %v4228 = vpop.f32.mrf.mxu0
    %v4229 = vadd.f32 0.0, %v4228
    %v4230 = vpop.f32.mrf.mxu0
    %v4231 = vadd.f32 0.0, %v4230
    %v4232 = vpop.f32.mrf.mxu0
    %v4233 = vadd.f32 0.0, %v4232
    %v4234 = vpop.f32.mrf.mxu0
    %v4235 = vadd.f32 0.0, %v4234
    %4236 = vdwg.mxu0
    %4237 = vmatprep.subr.bf16.mxu0 %v3915
    %4238 = vmatpush1.bf16.msra.mxu0 %v3914
    %4239 = vmatprep.subr.bf16.mxu0 %v3907
    %4240 = vmatpush1.bf16.msra.mxu0 %v3906
    %4241 = vmatprep.subr.bf16.mxu0 %v3899
    %4242 = vmatpush1.bf16.msra.mxu0 %v3898
    %4243 = vmatprep.subr.bf16.mxu0 %v3891
    %4244 = vmatpush1.bf16.msra.mxu0 %v3890
    %4245 = vmatprep.subr.bf16.mxu0 %v3883
    %4246 = vmatpush1.bf16.msra.mxu0 %v3882
    %4247 = vmatprep.subr.bf16.mxu0 %v3875
    %4248 = vmatpush1.bf16.msra.mxu0 %v3874
    %4249 = vmatprep.subr.bf16.mxu0 %v3867
    %4250 = vmatpush1.bf16.msra.mxu0 %v3866
    %4251 = vmatprep.subr.bf16.mxu0 %v3859
    %4252 = vmatpush1.bf16.msra.mxu0 %v3858
    %4253 = vmatprep.subr.bf16.mxu0 %v3979
    %4254 = vmatpush2.bf16.msra.mxu0 %v3978
    %4255 = vmatprep.subr.bf16.mxu0 %v3971
    %4256 = vmatpush2.bf16.msra.mxu0 %v3970
    %4257 = vmatprep.subr.bf16.mxu0 %v3963
    %4258 = vmatpush2.bf16.msra.mxu0 %v3962
    %4259 = vmatprep.subr.bf16.mxu0 %v3955
    %4260 = vmatpush2.bf16.msra.mxu0 %v3954
    %4261 = vmatprep.subr.bf16.mxu0 %v3947
    %4262 = vmatpush2.bf16.msra.mxu0 %v3946
    %4263 = vmatprep.subr.bf16.mxu0 %v3939
    %4264 = vmatpush2.bf16.msra.mxu0 %v3938
    %4265 = vmatprep.subr.bf16.mxu0 %v3931
    %4266 = vmatpush2.bf16.msra.mxu0 %v3930
    %4267 = vmatprep.subr.bf16.mxu0 %v3923
    %4268 = vmatpush2.bf16.msra.mxu0 %v3922
    %4269 = vmatprep.mubr.bf16.mxu0 %v3327
    %4270 = vmatmul.mubr.bf16.gmra.mxu0 %v3314
    %v4271 = vpop.f32.mrf.mxu0
    %v4272 = vadd.f32 0.0, %v4271
    %v4273 = vpop.f32.mrf.mxu0
    %v4274 = vadd.f32 0.0, %v4273
    %v4275 = vpop.f32.mrf.mxu0
    %v4276 = vadd.f32 0.0, %v4275
    %v4277 = vpop.f32.mrf.mxu0
    %v4278 = vadd.f32 0.0, %v4277
    %4279 = vdwg.mxu0
    %s4280 = smul.u32 4, 8
    %s4281 = smul.addr %s4280, 4
    %s4282 = scalar_lea.vmem [#allocation2], %s4281
    %v4283 = vld [vmem:[%s4282] sm:$0xff]
    %v4284 = vld [vmem:[%s4282 + $0x8] sm:$0xff]
    %v4285 = vld [vmem:[%s4282 + $0x20] sm:$0xff]
    %v4286 = vld [vmem:[%s4282 + $0x28] sm:$0xff]
    %v4287 = vunpack.c.l.bf16 %v4283
    %v4288 = vunpack.c.h.bf16 %v4283
    %v4289 = vunpack.c.l.bf16 %v4284
    %v4290 = vunpack.c.h.bf16 %v4284
    %v4291 = vunpack.c.l.bf16 %v4285
    %v4292 = vunpack.c.h.bf16 %v4285
    %v4293 = vunpack.c.l.bf16 %v4286
    %v4294 = vunpack.c.h.bf16 %v4286
    %v4295 = vadd.f32 %v4287, %v4143
    %v4296 = vadd.f32 %v4288, %v4145
    %v4297 = vadd.f32 %v4289, %v4186
    %v4298 = vadd.f32 %v4290, %v4188
    %v4299 = vadd.f32 %v4291, %v4147
    %v4300 = vadd.f32 %v4292, %v4149
    %v4301 = vadd.f32 %v4293, %v4190
    %v4302 = vadd.f32 %v4294, %v4192
    %s4303 = smul.u32 10, 8
    %s4304 = smul.addr %s4303, 4
    %s4305 = scalar_lea.vmem [#allocation2], %s4304
    %v4306 = vld [vmem:[%s4305 + $0x10] sm:$0xff]
    %v4307 = vld [vmem:[%s4305 + $0x18] sm:$0xff]
    %v4308 = vld [vmem:[%s4305 + $0x30] sm:$0xff]
    %v4309 = vld [vmem:[%s4305 + $0x38] sm:$0xff]
    %v4310 = vunpack.c.l.bf16 %v4306
    %v4311 = vunpack.c.h.bf16 %v4306
    %v4312 = vunpack.c.l.bf16 %v4307
    %v4313 = vunpack.c.h.bf16 %v4307
    %v4314 = vunpack.c.l.bf16 %v4308
    %v4315 = vunpack.c.h.bf16 %v4308
    %v4316 = vunpack.c.l.bf16 %v4309
    %v4317 = vunpack.c.h.bf16 %v4309
    %v4318 = vadd.f32 %v4310, %v4229
    %v4319 = vadd.f32 %v4311, %v4231
    %v4320 = vadd.f32 %v4312, %v4272
    %v4321 = vadd.f32 %v4313, %v4274
    %v4322 = vadd.f32 %v4314, %v4233
    %v4323 = vadd.f32 %v4315, %v4235
    %v4324 = vadd.f32 %v4316, %v4276
    %v4325 = vadd.f32 %v4317, %v4278
    %v4326 = vxor.u32 %v4295, 2147483648
    %v4327 = vxor.u32 %v4299, 2147483648
    %v4328 = vmul.f32 %v4326, 1.442695
    %v4329 = vpow.pop %v4328
    %v4330 = vmul.f32 %v4327, 1.442695
    %v4331 = vpow.pop %v4330
    %v4332 = vadd.f32 %v4329, 1.0
    %v4333 = vadd.f32 %v4331, 1.0
    %v4334 = vrcp.pop %v4332
    %v4335 = vmul.f32 1.0, %v4334
    %v4336 = vrcp.pop %v4333
    %v4337 = vmul.f32 1.0, %v4336
    %v4338 = vxor.u32 %v4296, 2147483648
    %v4339 = vxor.u32 %v4300, 2147483648
    %v4340 = vmul.f32 %v4338, 1.442695
    %v4341 = vpow.pop %v4340
    %v4342 = vmul.f32 %v4339, 1.442695
    %v4343 = vpow.pop %v4342
    %v4344 = vadd.f32 %v4341, 1.0
    %v4345 = vadd.f32 %v4343, 1.0
    %v4346 = vrcp.pop %v4344
    %v4347 = vmul.f32 1.0, %v4346
    %v4348 = vrcp.pop %v4345
    %v4349 = vmul.f32 1.0, %v4348
    %v4350 = vtanh.pop %v4297
    %v4351 = vtanh.pop %v4301
    %v4352 = vxor.u32 %v4298, 2147483648
    %v4353 = vxor.u32 %v4302, 2147483648
    %v4354 = vmul.f32 %v4352, 1.442695
    %v4355 = vpow.pop %v4354
    %v4356 = vmul.f32 %v4353, 1.442695
    %v4357 = vpow.pop %v4356
    %v4358 = vadd.f32 %v4355, 1.0
    %v4359 = vadd.f32 %v4357, 1.0
    %v4360 = vrcp.pop %v4358
    %v4361 = vmul.f32 1.0, %v4360
    %v4362 = vrcp.pop %v4359
    %v4363 = vmul.f32 1.0, %v4362
    %v4364 = vmul.f32 %v4347, %v3260
    %v4365 = vmul.f32 %v4349, %v3261
    %v4366 = vmul.f32 %v4335, %v4350
    %v4367 = vmul.f32 %v4337, %v4351
    %v4368 = vadd.f32 %v4364, %v4366
    %v4369 = vadd.f32 %v4365, %v4367
    %v4370 = vtanh.pop %v4368
    %v4371 = vtanh.pop %v4369
    %v4372 = vmul.f32 %v4361, %v4370
    %v4373 = vmul.f32 %v4363, %v4371
    %v4374 = vxor.u32 %v4318, 2147483648
    %v4375 = vxor.u32 %v4322, 2147483648
    %v4376 = vmul.f32 %v4374, 1.442695
    %v4377 = vpow.pop %v4376
    %v4378 = vmul.f32 %v4375, 1.442695
    %v4379 = vpow.pop %v4378
    %v4380 = vadd.f32 %v4377, 1.0
    %v4381 = vadd.f32 %v4379, 1.0
    %v4382 = vrcp.pop %v4380
    %v4383 = vmul.f32 1.0, %v4382
    %v4384 = vrcp.pop %v4381
    %v4385 = vmul.f32 1.0, %v4384
    %v4386 = vxor.u32 %v4319, 2147483648
    %v4387 = vxor.u32 %v4323, 2147483648
    %v4388 = vmul.f32 %v4386, 1.442695
    %v4389 = vpow.pop %v4388
    %v4390 = vmul.f32 %v4387, 1.442695
    %v4391 = vpow.pop %v4390
    %v4392 = vadd.f32 %v4389, 1.0
    %v4393 = vadd.f32 %v4391, 1.0
    %v4394 = vrcp.pop %v4392
    %v4395 = vmul.f32 1.0, %v4394
    %v4396 = vrcp.pop %v4393
    %v4397 = vmul.f32 1.0, %v4396
    %v4398 = vtanh.pop %v4320
    %v4399 = vtanh.pop %v4324
    %v4400 = vxor.u32 %v4321, 2147483648
    %v4401 = vxor.u32 %v4325, 2147483648
    %v4402 = vmul.f32 %v4400, 1.442695
    %v4403 = vpow.pop %v4402
    %v4404 = vmul.f32 %v4401, 1.442695
    %v4405 = vpow.pop %v4404
    %v4406 = vadd.f32 %v4403, 1.0
    %v4407 = vadd.f32 %v4405, 1.0
    %v4408 = vrcp.pop %v4406
    %v4409 = vmul.f32 1.0, %v4408
    %v4410 = vrcp.pop %v4407
    %v4411 = vmul.f32 1.0, %v4410
    %v4412 = vmul.f32 %v4395, %v3308
    %v4413 = vmul.f32 %v4397, %v3309
    %v4414 = vmul.f32 %v4383, %v4398
    %v4415 = vmul.f32 %v4385, %v4399
    %v4416 = vadd.f32 %v4412, %v4414
    %v4417 = vadd.f32 %v4413, %v4415
    %v4418 = vtanh.pop %v4416
    %v4419 = vtanh.pop %v4417
    %v4420 = vmul.f32 %v4409, %v4418
    %v4421 = vmul.f32 %v4411, %v4419
    %v4422 = vpack.c.bf16 %v4373, %v4372
    %v4424 = vunpack.c.l.b16 %v4422
    %v4425 = vunpack.c.h.b16 %v4422
    %v4426 = vpack.c.b16 %v4424, %v4424
    %v4427 = vpack.c.b16 %v4425, %v4425
    %s4430 = smul.u32 4, 2
    %s4431 = smul.addr %s4430, 4
    %s4432 = scalar_lea.vmem [#allocation3], %s4431
    %4433 = vst [vmem:[%s4432] sm:$0xf] %v4426
    %4434 = vst [vmem:[%s4432 + $0x8] sm:$0xf] %v4427
    %v4435 = vpack.c.bf16 %v4421, %v4420
    %v4437 = vunpack.c.l.b16 %v4435
    %v4438 = vunpack.c.h.b16 %v4435
    %v4439 = vpack.c.b16 %v4437, %v4437
    %v4440 = vpack.c.b16 %v4438, %v4438
    %s4443 = smul.u32 10, 2
    %s4444 = smul.addr %s4443, 4
    %s4445 = scalar_lea.vmem [#allocation3], %s4444
    %4446 = vst [vmem:[%s4445 + $0x4] sm:$0xf] %v4439
    %4447 = vst [vmem:[%s4445 + $0xc] sm:$0xf] %v4440
    %v4448 = vld [vmem:[#allocation4] sm:$0xff]
    %v4449 = vld [vmem:[#allocation4 + $0x8] sm:$0xff]
    %v4450 = vld [vmem:[#allocation4 + $0x10] sm:$0xff]
    %v4451 = vld [vmem:[#allocation4 + $0x18] sm:$0xff]
    %v4452 = vld [vmem:[#allocation4 + $0x20] sm:$0xff]
    %v4453 = vld [vmem:[#allocation4 + $0x28] sm:$0xff]
    %v4454 = vld [vmem:[#allocation4 + $0x30] sm:$0xff]
    %v4455 = vld [vmem:[#allocation4 + $0x38] sm:$0xff]
    %v4456 = vld [vmem:[#allocation4 + $0x40] sm:$0xff]
    %v4457 = vld [vmem:[#allocation4 + $0x48] sm:$0xff]
    %v4458 = vld [vmem:[#allocation4 + $0x50] sm:$0xff]
    %v4459 = vld [vmem:[#allocation4 + $0x58] sm:$0xff]
    %v4460 = vld [vmem:[#allocation4 + $0x60] sm:$0xff]
    %v4461 = vld [vmem:[#allocation4 + $0x68] sm:$0xff]
    %v4462 = vld [vmem:[#allocation4 + $0x70] sm:$0xff]
    %v4463 = vld [vmem:[#allocation4 + $0x78] sm:$0xff]
    %v4464 = vld [vmem:[#allocation4 + $0x80] sm:$0xff]
    %v4465 = vld [vmem:[#allocation4 + $0x88] sm:$0xff]
    %v4466 = vld [vmem:[#allocation4 + $0x90] sm:$0xff]
    %v4467 = vld [vmem:[#allocation4 + $0x98] sm:$0xff]
    %v4468 = vld [vmem:[#allocation4 + $0xa0] sm:$0xff]
    %v4469 = vld [vmem:[#allocation4 + $0xa8] sm:$0xff]
    %v4470 = vld [vmem:[#allocation4 + $0xb0] sm:$0xff]
    %v4471 = vld [vmem:[#allocation4 + $0xb8] sm:$0xff]
    %v4472 = vld [vmem:[#allocation4 + $0xc0] sm:$0xff]
    %v4473 = vld [vmem:[#allocation4 + $0xc8] sm:$0xff]
    %v4474 = vld [vmem:[#allocation4 + $0xd0] sm:$0xff]
    %v4475 = vld [vmem:[#allocation4 + $0xd8] sm:$0xff]
    %v4476 = vld [vmem:[#allocation4 + $0xe0] sm:$0xff]
    %v4477 = vld [vmem:[#allocation4 + $0xe8] sm:$0xff]
    %v4478 = vld [vmem:[#allocation4 + $0xf0] sm:$0xff]
    %v4479 = vld [vmem:[#allocation4 + $0xf8] sm:$0xff]
    %v4480 = vld [vmem:[#allocation4 + $0x100] sm:$0xff]
    %v4481 = vld [vmem:[#allocation4 + $0x108] sm:$0xff]
    %v4482 = vld [vmem:[#allocation4 + $0x110] sm:$0xff]
    %v4483 = vld [vmem:[#allocation4 + $0x118] sm:$0xff]
    %v4484 = vld [vmem:[#allocation4 + $0x120] sm:$0xff]
    %v4485 = vld [vmem:[#allocation4 + $0x128] sm:$0xff]
    %v4486 = vld [vmem:[#allocation4 + $0x130] sm:$0xff]
    %v4487 = vld [vmem:[#allocation4 + $0x138] sm:$0xff]
    %v4488 = vld [vmem:[#allocation4 + $0x140] sm:$0xff]
    %v4489 = vld [vmem:[#allocation4 + $0x148] sm:$0xff]
    %v4490 = vld [vmem:[#allocation4 + $0x150] sm:$0xff]
    %v4491 = vld [vmem:[#allocation4 + $0x158] sm:$0xff]
    %v4492 = vld [vmem:[#allocation4 + $0x160] sm:$0xff]
    %v4493 = vld [vmem:[#allocation4 + $0x168] sm:$0xff]
    %v4494 = vld [vmem:[#allocation4 + $0x170] sm:$0xff]
    %v4495 = vld [vmem:[#allocation4 + $0x178] sm:$0xff]
    %v4496 = vld [vmem:[#allocation4 + $0x180] sm:$0xff]
    %v4497 = vld [vmem:[#allocation4 + $0x188] sm:$0xff]
    %v4498 = vld [vmem:[#allocation4 + $0x190] sm:$0xff]
    %v4499 = vld [vmem:[#allocation4 + $0x198] sm:$0xff]
    %v4500 = vld [vmem:[#allocation4 + $0x1a0] sm:$0xff]
    %v4501 = vld [vmem:[#allocation4 + $0x1a8] sm:$0xff]
    %v4502 = vld [vmem:[#allocation4 + $0x1b0] sm:$0xff]
    %v4503 = vld [vmem:[#allocation4 + $0x1b8] sm:$0xff]
    %v4504 = vld [vmem:[#allocation4 + $0x1c0] sm:$0xff]
    %v4505 = vld [vmem:[#allocation4 + $0x1c8] sm:$0xff]
    %v4506 = vld [vmem:[#allocation4 + $0x1d0] sm:$0xff]
    %v4507 = vld [vmem:[#allocation4 + $0x1d8] sm:$0xff]
    %v4508 = vld [vmem:[#allocation4 + $0x1e0] sm:$0xff]
    %v4509 = vld [vmem:[#allocation4 + $0x1e8] sm:$0xff]
    %v4510 = vld [vmem:[#allocation4 + $0x1f0] sm:$0xff]
    %v4511 = vld [vmem:[#allocation4 + $0x1f8] sm:$0xff]
    %v4512 = vld [vmem:[#allocation4 + $0x200] sm:$0xff]
    %v4513 = vld [vmem:[#allocation4 + $0x208] sm:$0xff]
    %v4514 = vld [vmem:[#allocation4 + $0x210] sm:$0xff]
    %v4515 = vld [vmem:[#allocation4 + $0x218] sm:$0xff]
    %v4516 = vld [vmem:[#allocation4 + $0x220] sm:$0xff]
    %v4517 = vld [vmem:[#allocation4 + $0x228] sm:$0xff]
    %v4518 = vld [vmem:[#allocation4 + $0x230] sm:$0xff]
    %v4519 = vld [vmem:[#allocation4 + $0x238] sm:$0xff]
    %v4520 = vld [vmem:[#allocation4 + $0x240] sm:$0xff]
    %v4521 = vld [vmem:[#allocation4 + $0x248] sm:$0xff]
    %v4522 = vld [vmem:[#allocation4 + $0x250] sm:$0xff]
    %v4523 = vld [vmem:[#allocation4 + $0x258] sm:$0xff]
    %v4524 = vld [vmem:[#allocation4 + $0x260] sm:$0xff]
    %v4525 = vld [vmem:[#allocation4 + $0x268] sm:$0xff]
    %v4526 = vld [vmem:[#allocation4 + $0x270] sm:$0xff]
    %v4527 = vld [vmem:[#allocation4 + $0x278] sm:$0xff]
    %v4528 = vld [vmem:[#allocation4 + $0x280] sm:$0xff]
    %v4529 = vld [vmem:[#allocation4 + $0x288] sm:$0xff]
    %v4530 = vld [vmem:[#allocation4 + $0x290] sm:$0xff]
    %v4531 = vld [vmem:[#allocation4 + $0x298] sm:$0xff]
    %v4532 = vld [vmem:[#allocation4 + $0x2a0] sm:$0xff]
    %v4533 = vld [vmem:[#allocation4 + $0x2a8] sm:$0xff]
    %v4534 = vld [vmem:[#allocation4 + $0x2b0] sm:$0xff]
    %v4535 = vld [vmem:[#allocation4 + $0x2b8] sm:$0xff]
    %v4536 = vld [vmem:[#allocation4 + $0x2c0] sm:$0xff]
    %v4537 = vld [vmem:[#allocation4 + $0x2c8] sm:$0xff]
    %v4538 = vld [vmem:[#allocation4 + $0x2d0] sm:$0xff]
    %v4539 = vld [vmem:[#allocation4 + $0x2d8] sm:$0xff]
    %v4540 = vld [vmem:[#allocation4 + $0x2e0] sm:$0xff]
    %v4541 = vld [vmem:[#allocation4 + $0x2e8] sm:$0xff]
    %v4542 = vld [vmem:[#allocation4 + $0x2f0] sm:$0xff]
    %v4543 = vld [vmem:[#allocation4 + $0x2f8] sm:$0xff]
    %v4544 = vld [vmem:[#allocation4 + $0x300] sm:$0xff]
    %v4545 = vld [vmem:[#allocation4 + $0x308] sm:$0xff]
    %v4546 = vld [vmem:[#allocation4 + $0x310] sm:$0xff]
    %v4547 = vld [vmem:[#allocation4 + $0x318] sm:$0xff]
    %v4548 = vld [vmem:[#allocation4 + $0x320] sm:$0xff]
    %v4549 = vld [vmem:[#allocation4 + $0x328] sm:$0xff]
    %v4550 = vld [vmem:[#allocation4 + $0x330] sm:$0xff]
    %v4551 = vld [vmem:[#allocation4 + $0x338] sm:$0xff]
    %v4552 = vld [vmem:[#allocation4 + $0x340] sm:$0xff]
    %v4553 = vld [vmem:[#allocation4 + $0x348] sm:$0xff]
    %v4554 = vld [vmem:[#allocation4 + $0x350] sm:$0xff]
    %v4555 = vld [vmem:[#allocation4 + $0x358] sm:$0xff]
    %v4556 = vld [vmem:[#allocation4 + $0x360] sm:$0xff]
    %v4557 = vld [vmem:[#allocation4 + $0x368] sm:$0xff]
    %v4558 = vld [vmem:[#allocation4 + $0x370] sm:$0xff]
    %v4559 = vld [vmem:[#allocation4 + $0x378] sm:$0xff]
    %v4560 = vld [vmem:[#allocation4 + $0x380] sm:$0xff]
    %v4561 = vld [vmem:[#allocation4 + $0x388] sm:$0xff]
    %v4562 = vld [vmem:[#allocation4 + $0x390] sm:$0xff]
    %v4563 = vld [vmem:[#allocation4 + $0x398] sm:$0xff]
    %v4564 = vld [vmem:[#allocation4 + $0x3a0] sm:$0xff]
    %v4565 = vld [vmem:[#allocation4 + $0x3a8] sm:$0xff]
    %v4566 = vld [vmem:[#allocation4 + $0x3b0] sm:$0xff]
    %v4567 = vld [vmem:[#allocation4 + $0x3b8] sm:$0xff]
    %v4568 = vld [vmem:[#allocation4 + $0x3c0] sm:$0xff]
    %v4569 = vld [vmem:[#allocation4 + $0x3c8] sm:$0xff]
    %v4570 = vld [vmem:[#allocation4 + $0x3d0] sm:$0xff]
    %v4571 = vld [vmem:[#allocation4 + $0x3d8] sm:$0xff]
    %v4572 = vld [vmem:[#allocation4 + $0x3e0] sm:$0xff]
    %v4573 = vld [vmem:[#allocation4 + $0x3e8] sm:$0xff]
    %v4574 = vld [vmem:[#allocation4 + $0x3f0] sm:$0xff]
    %v4575 = vld [vmem:[#allocation4 + $0x3f8] sm:$0xff]
    %v4704 = vunpack.c.l.b16 %v4448
    %v4705 = vunpack.c.h.b16 %v4448
    %v4706 = vunpack.c.l.b16 %v4449
    %v4707 = vunpack.c.h.b16 %v4449
    %v4708 = vunpack.c.l.b16 %v4450
    %v4709 = vunpack.c.h.b16 %v4450
    %v4710 = vunpack.c.l.b16 %v4451
    %v4711 = vunpack.c.h.b16 %v4451
    %v4712 = vunpack.c.l.b16 %v4452
    %v4713 = vunpack.c.h.b16 %v4452
    %v4714 = vunpack.c.l.b16 %v4453
    %v4715 = vunpack.c.h.b16 %v4453
    %v4716 = vunpack.c.l.b16 %v4454
    %v4717 = vunpack.c.h.b16 %v4454
    %v4718 = vunpack.c.l.b16 %v4455
    %v4719 = vunpack.c.h.b16 %v4455
    %v4720 = vunpack.c.l.b16 %v4456
    %v4721 = vunpack.c.h.b16 %v4456
    %v4722 = vunpack.c.l.b16 %v4457
    %v4723 = vunpack.c.h.b16 %v4457
    %v4724 = vunpack.c.l.b16 %v4458
    %v4725 = vunpack.c.h.b16 %v4458
    %v4726 = vunpack.c.l.b16 %v4459
    %v4727 = vunpack.c.h.b16 %v4459
    %v4728 = vunpack.c.l.b16 %v4460
    %v4729 = vunpack.c.h.b16 %v4460
    %v4730 = vunpack.c.l.b16 %v4461
    %v4731 = vunpack.c.h.b16 %v4461
    %v4732 = vunpack.c.l.b16 %v4462
    %v4733 = vunpack.c.h.b16 %v4462
    %v4734 = vunpack.c.l.b16 %v4463
    %v4735 = vunpack.c.h.b16 %v4463
    %v4736 = vunpack.c.l.b16 %v4464
    %v4737 = vunpack.c.h.b16 %v4464
    %v4738 = vunpack.c.l.b16 %v4465
    %v4739 = vunpack.c.h.b16 %v4465
    %v4740 = vunpack.c.l.b16 %v4466
    %v4741 = vunpack.c.h.b16 %v4466
    %v4742 = vunpack.c.l.b16 %v4467
    %v4743 = vunpack.c.h.b16 %v4467
    %v4744 = vunpack.c.l.b16 %v4468
    %v4745 = vunpack.c.h.b16 %v4468
    %v4746 = vunpack.c.l.b16 %v4469
    %v4747 = vunpack.c.h.b16 %v4469
    %v4748 = vunpack.c.l.b16 %v4470
    %v4749 = vunpack.c.h.b16 %v4470
    %v4750 = vunpack.c.l.b16 %v4471
    %v4751 = vunpack.c.h.b16 %v4471
    %v4752 = vunpack.c.l.b16 %v4472
    %v4753 = vunpack.c.h.b16 %v4472
    %v4754 = vunpack.c.l.b16 %v4473
    %v4755 = vunpack.c.h.b16 %v4473
    %v4756 = vunpack.c.l.b16 %v4474
    %v4757 = vunpack.c.h.b16 %v4474
    %v4758 = vunpack.c.l.b16 %v4475
    %v4759 = vunpack.c.h.b16 %v4475
    %v4760 = vunpack.c.l.b16 %v4476
    %v4761 = vunpack.c.h.b16 %v4476
    %v4762 = vunpack.c.l.b16 %v4477
    %v4763 = vunpack.c.h.b16 %v4477
    %v4764 = vunpack.c.l.b16 %v4478
    %v4765 = vunpack.c.h.b16 %v4478
    %v4766 = vunpack.c.l.b16 %v4479
    %v4767 = vunpack.c.h.b16 %v4479
    %v4768 = vunpack.c.l.b16 %v4480
    %v4769 = vunpack.c.h.b16 %v4480
    %v4770 = vunpack.c.l.b16 %v4481
    %v4771 = vunpack.c.h.b16 %v4481
    %v4772 = vunpack.c.l.b16 %v4482
    %v4773 = vunpack.c.h.b16 %v4482
    %v4774 = vunpack.c.l.b16 %v4483
    %v4775 = vunpack.c.h.b16 %v4483
    %v4776 = vunpack.c.l.b16 %v4484
    %v4777 = vunpack.c.h.b16 %v4484
    %v4778 = vunpack.c.l.b16 %v4485
    %v4779 = vunpack.c.h.b16 %v4485
    %v4780 = vunpack.c.l.b16 %v4486
    %v4781 = vunpack.c.h.b16 %v4486
    %v4782 = vunpack.c.l.b16 %v4487
    %v4783 = vunpack.c.h.b16 %v4487
    %v4784 = vunpack.c.l.b16 %v4488
    %v4785 = vunpack.c.h.b16 %v4488
    %v4786 = vunpack.c.l.b16 %v4489
    %v4787 = vunpack.c.h.b16 %v4489
    %v4788 = vunpack.c.l.b16 %v4490
    %v4789 = vunpack.c.h.b16 %v4490
    %v4790 = vunpack.c.l.b16 %v4491
    %v4791 = vunpack.c.h.b16 %v4491
    %v4792 = vunpack.c.l.b16 %v4492
    %v4793 = vunpack.c.h.b16 %v4492
    %v4794 = vunpack.c.l.b16 %v4493
    %v4795 = vunpack.c.h.b16 %v4493
    %v4796 = vunpack.c.l.b16 %v4494
    %v4797 = vunpack.c.h.b16 %v4494
    %v4798 = vunpack.c.l.b16 %v4495
    %v4799 = vunpack.c.h.b16 %v4495
    %v4800 = vunpack.c.l.b16 %v4496
    %v4801 = vunpack.c.h.b16 %v4496
    %v4802 = vunpack.c.l.b16 %v4497
    %v4803 = vunpack.c.h.b16 %v4497
    %v4804 = vunpack.c.l.b16 %v4498
    %v4805 = vunpack.c.h.b16 %v4498
    %v4806 = vunpack.c.l.b16 %v4499
    %v4807 = vunpack.c.h.b16 %v4499
    %v4808 = vunpack.c.l.b16 %v4500
    %v4809 = vunpack.c.h.b16 %v4500
    %v4810 = vunpack.c.l.b16 %v4501
    %v4811 = vunpack.c.h.b16 %v4501
    %v4812 = vunpack.c.l.b16 %v4502
    %v4813 = vunpack.c.h.b16 %v4502
    %v4814 = vunpack.c.l.b16 %v4503
    %v4815 = vunpack.c.h.b16 %v4503
    %v4816 = vunpack.c.l.b16 %v4504
    %v4817 = vunpack.c.h.b16 %v4504
    %v4818 = vunpack.c.l.b16 %v4505
    %v4819 = vunpack.c.h.b16 %v4505
    %v4820 = vunpack.c.l.b16 %v4506
    %v4821 = vunpack.c.h.b16 %v4506
    %v4822 = vunpack.c.l.b16 %v4507
    %v4823 = vunpack.c.h.b16 %v4507
    %v4824 = vunpack.c.l.b16 %v4508
    %v4825 = vunpack.c.h.b16 %v4508
    %v4826 = vunpack.c.l.b16 %v4509
    %v4827 = vunpack.c.h.b16 %v4509
    %v4828 = vunpack.c.l.b16 %v4510
    %v4829 = vunpack.c.h.b16 %v4510
    %v4830 = vunpack.c.l.b16 %v4511
    %v4831 = vunpack.c.h.b16 %v4511
    %v4832 = vunpack.c.l.b16 %v4512
    %v4833 = vunpack.c.h.b16 %v4512
    %v4834 = vunpack.c.l.b16 %v4513
    %v4835 = vunpack.c.h.b16 %v4513
    %v4836 = vunpack.c.l.b16 %v4514
    %v4837 = vunpack.c.h.b16 %v4514
    %v4838 = vunpack.c.l.b16 %v4515
    %v4839 = vunpack.c.h.b16 %v4515
    %v4840 = vunpack.c.l.b16 %v4516
    %v4841 = vunpack.c.h.b16 %v4516
    %v4842 = vunpack.c.l.b16 %v4517
    %v4843 = vunpack.c.h.b16 %v4517
    %v4844 = vunpack.c.l.b16 %v4518
    %v4845 = vunpack.c.h.b16 %v4518
    %v4846 = vunpack.c.l.b16 %v4519
    %v4847 = vunpack.c.h.b16 %v4519
    %v4848 = vunpack.c.l.b16 %v4520
    %v4849 = vunpack.c.h.b16 %v4520
    %v4850 = vunpack.c.l.b16 %v4521
    %v4851 = vunpack.c.h.b16 %v4521
    %v4852 = vunpack.c.l.b16 %v4522
    %v4853 = vunpack.c.h.b16 %v4522
    %v4854 = vunpack.c.l.b16 %v4523
    %v4855 = vunpack.c.h.b16 %v4523
    %v4856 = vunpack.c.l.b16 %v4524
    %v4857 = vunpack.c.h.b16 %v4524
    %v4858 = vunpack.c.l.b16 %v4525
    %v4859 = vunpack.c.h.b16 %v4525
    %v4860 = vunpack.c.l.b16 %v4526
    %v4861 = vunpack.c.h.b16 %v4526
    %v4862 = vunpack.c.l.b16 %v4527
    %v4863 = vunpack.c.h.b16 %v4527
    %v4864 = vunpack.c.l.b16 %v4528
    %v4865 = vunpack.c.h.b16 %v4528
    %v4866 = vunpack.c.l.b16 %v4529
    %v4867 = vunpack.c.h.b16 %v4529
    %v4868 = vunpack.c.l.b16 %v4530
    %v4869 = vunpack.c.h.b16 %v4530
    %v4870 = vunpack.c.l.b16 %v4531
    %v4871 = vunpack.c.h.b16 %v4531
    %v4872 = vunpack.c.l.b16 %v4532
    %v4873 = vunpack.c.h.b16 %v4532
    %v4874 = vunpack.c.l.b16 %v4533
    %v4875 = vunpack.c.h.b16 %v4533
    %v4876 = vunpack.c.l.b16 %v4534
    %v4877 = vunpack.c.h.b16 %v4534
    %v4878 = vunpack.c.l.b16 %v4535
    %v4879 = vunpack.c.h.b16 %v4535
    %v4880 = vunpack.c.l.b16 %v4536
    %v4881 = vunpack.c.h.b16 %v4536
    %v4882 = vunpack.c.l.b16 %v4537
    %v4883 = vunpack.c.h.b16 %v4537
    %v4884 = vunpack.c.l.b16 %v4538
    %v4885 = vunpack.c.h.b16 %v4538
    %v4886 = vunpack.c.l.b16 %v4539
    %v4887 = vunpack.c.h.b16 %v4539
    %v4888 = vunpack.c.l.b16 %v4540
    %v4889 = vunpack.c.h.b16 %v4540
    %v4890 = vunpack.c.l.b16 %v4541
    %v4891 = vunpack.c.h.b16 %v4541
    %v4892 = vunpack.c.l.b16 %v4542
    %v4893 = vunpack.c.h.b16 %v4542
    %v4894 = vunpack.c.l.b16 %v4543
    %v4895 = vunpack.c.h.b16 %v4543
    %v4896 = vunpack.c.l.b16 %v4544
    %v4897 = vunpack.c.h.b16 %v4544
    %v4898 = vunpack.c.l.b16 %v4545
    %v4899 = vunpack.c.h.b16 %v4545
    %v4900 = vunpack.c.l.b16 %v4546
    %v4901 = vunpack.c.h.b16 %v4546
    %v4902 = vunpack.c.l.b16 %v4547
    %v4903 = vunpack.c.h.b16 %v4547
    %v4904 = vunpack.c.l.b16 %v4548
    %v4905 = vunpack.c.h.b16 %v4548
    %v4906 = vunpack.c.l.b16 %v4549
    %v4907 = vunpack.c.h.b16 %v4549
    %v4908 = vunpack.c.l.b16 %v4550
    %v4909 = vunpack.c.h.b16 %v4550
    %v4910 = vunpack.c.l.b16 %v4551
    %v4911 = vunpack.c.h.b16 %v4551
    %v4912 = vunpack.c.l.b16 %v4552
    %v4913 = vunpack.c.h.b16 %v4552
    %v4914 = vunpack.c.l.b16 %v4553
    %v4915 = vunpack.c.h.b16 %v4553
    %v4916 = vunpack.c.l.b16 %v4554
    %v4917 = vunpack.c.h.b16 %v4554
    %v4918 = vunpack.c.l.b16 %v4555
    %v4919 = vunpack.c.h.b16 %v4555
    %v4920 = vunpack.c.l.b16 %v4556
    %v4921 = vunpack.c.h.b16 %v4556
    %v4922 = vunpack.c.l.b16 %v4557
    %v4923 = vunpack.c.h.b16 %v4557
    %v4924 = vunpack.c.l.b16 %v4558
    %v4925 = vunpack.c.h.b16 %v4558
    %v4926 = vunpack.c.l.b16 %v4559
    %v4927 = vunpack.c.h.b16 %v4559
    %v4928 = vunpack.c.l.b16 %v4560
    %v4929 = vunpack.c.h.b16 %v4560
    %v4930 = vunpack.c.l.b16 %v4561
    %v4931 = vunpack.c.h.b16 %v4561
    %v4932 = vunpack.c.l.b16 %v4562
    %v4933 = vunpack.c.h.b16 %v4562
    %v4934 = vunpack.c.l.b16 %v4563
    %v4935 = vunpack.c.h.b16 %v4563
    %v4936 = vunpack.c.l.b16 %v4564
    %v4937 = vunpack.c.h.b16 %v4564
    %v4938 = vunpack.c.l.b16 %v4565
    %v4939 = vunpack.c.h.b16 %v4565
    %v4940 = vunpack.c.l.b16 %v4566
    %v4941 = vunpack.c.h.b16 %v4566
    %v4942 = vunpack.c.l.b16 %v4567
    %v4943 = vunpack.c.h.b16 %v4567
    %v4944 = vunpack.c.l.b16 %v4568
    %v4945 = vunpack.c.h.b16 %v4568
    %v4946 = vunpack.c.l.b16 %v4569
    %v4947 = vunpack.c.h.b16 %v4569
    %v4948 = vunpack.c.l.b16 %v4570
    %v4949 = vunpack.c.h.b16 %v4570
    %v4950 = vunpack.c.l.b16 %v4571
    %v4951 = vunpack.c.h.b16 %v4571
    %v4952 = vunpack.c.l.b16 %v4572
    %v4953 = vunpack.c.h.b16 %v4572
    %v4954 = vunpack.c.l.b16 %v4573
    %v4955 = vunpack.c.h.b16 %v4573
    %v4956 = vunpack.c.l.b16 %v4574
    %v4957 = vunpack.c.h.b16 %v4574
    %v4958 = vunpack.c.l.b16 %v4575
    %v4959 = vunpack.c.h.b16 %v4575
    %v4960 = vpack.c.b16 %v4712, %v4704
    %v4961 = vpack.c.b16 %v4713, %v4705
    %v4962 = vpack.c.b16 %v4714, %v4706
    %v4963 = vpack.c.b16 %v4715, %v4707
    %v4964 = vpack.c.b16 %v4716, %v4708
    %v4965 = vpack.c.b16 %v4717, %v4709
    %v4966 = vpack.c.b16 %v4718, %v4710
    %v4967 = vpack.c.b16 %v4719, %v4711
    %v4968 = vpack.c.b16 %v4728, %v4720
    %v4969 = vpack.c.b16 %v4729, %v4721
    %v4970 = vpack.c.b16 %v4730, %v4722
    %v4971 = vpack.c.b16 %v4731, %v4723
    %v4972 = vpack.c.b16 %v4732, %v4724
    %v4973 = vpack.c.b16 %v4733, %v4725
    %v4974 = vpack.c.b16 %v4734, %v4726
    %v4975 = vpack.c.b16 %v4735, %v4727
    %v4976 = vpack.c.b16 %v4744, %v4736
    %v4977 = vpack.c.b16 %v4745, %v4737
    %v4978 = vpack.c.b16 %v4746, %v4738
    %v4979 = vpack.c.b16 %v4747, %v4739
    %v4980 = vpack.c.b16 %v4748, %v4740
    %v4981 = vpack.c.b16 %v4749, %v4741
    %v4982 = vpack.c.b16 %v4750, %v4742
    %v4983 = vpack.c.b16 %v4751, %v4743
    %v4984 = vpack.c.b16 %v4760, %v4752
    %v4985 = vpack.c.b16 %v4761, %v4753
    %v4986 = vpack.c.b16 %v4762, %v4754
    %v4987 = vpack.c.b16 %v4763, %v4755
    %v4988 = vpack.c.b16 %v4764, %v4756
    %v4989 = vpack.c.b16 %v4765, %v4757
    %v4990 = vpack.c.b16 %v4766, %v4758
    %v4991 = vpack.c.b16 %v4767, %v4759
    %v4992 = vpack.c.b16 %v4776, %v4768
    %v4993 = vpack.c.b16 %v4777, %v4769
    %v4994 = vpack.c.b16 %v4778, %v4770
    %v4995 = vpack.c.b16 %v4779, %v4771
    %v4996 = vpack.c.b16 %v4780, %v4772
    %v4997 = vpack.c.b16 %v4781, %v4773
    %v4998 = vpack.c.b16 %v4782, %v4774
    %v4999 = vpack.c.b16 %v4783, %v4775
    %v5000 = vpack.c.b16 %v4792, %v4784
    %v5001 = vpack.c.b16 %v4793, %v4785
    %v5002 = vpack.c.b16 %v4794, %v4786
    %v5003 = vpack.c.b16 %v4795, %v4787
    %v5004 = vpack.c.b16 %v4796, %v4788
    %v5005 = vpack.c.b16 %v4797, %v4789
    %v5006 = vpack.c.b16 %v4798, %v4790
    %v5007 = vpack.c.b16 %v4799, %v4791
    %v5008 = vpack.c.b16 %v4808, %v4800
    %v5009 = vpack.c.b16 %v4809, %v4801
    %v5010 = vpack.c.b16 %v4810, %v4802
    %v5011 = vpack.c.b16 %v4811, %v4803
    %v5012 = vpack.c.b16 %v4812, %v4804
    %v5013 = vpack.c.b16 %v4813, %v4805
    %v5014 = vpack.c.b16 %v4814, %v4806
    %v5015 = vpack.c.b16 %v4815, %v4807
    %v5016 = vpack.c.b16 %v4824, %v4816
    %v5017 = vpack.c.b16 %v4825, %v4817
    %v5018 = vpack.c.b16 %v4826, %v4818
    %v5019 = vpack.c.b16 %v4827, %v4819
    %v5020 = vpack.c.b16 %v4828, %v4820
    %v5021 = vpack.c.b16 %v4829, %v4821
    %v5022 = vpack.c.b16 %v4830, %v4822
    %v5023 = vpack.c.b16 %v4831, %v4823
    %v5024 = vpack.c.b16 %v4840, %v4832
    %v5025 = vpack.c.b16 %v4841, %v4833
    %v5026 = vpack.c.b16 %v4842, %v4834
    %v5027 = vpack.c.b16 %v4843, %v4835
    %v5028 = vpack.c.b16 %v4844, %v4836
    %v5029 = vpack.c.b16 %v4845, %v4837
    %v5030 = vpack.c.b16 %v4846, %v4838
    %v5031 = vpack.c.b16 %v4847, %v4839
    %v5032 = vpack.c.b16 %v4856, %v4848
    %v5033 = vpack.c.b16 %v4857, %v4849
    %v5034 = vpack.c.b16 %v4858, %v4850
    %v5035 = vpack.c.b16 %v4859, %v4851
    %v5036 = vpack.c.b16 %v4860, %v4852
    %v5037 = vpack.c.b16 %v4861, %v4853
    %v5038 = vpack.c.b16 %v4862, %v4854
    %v5039 = vpack.c.b16 %v4863, %v4855
    %v5040 = vpack.c.b16 %v4872, %v4864
    %v5041 = vpack.c.b16 %v4873, %v4865
    %v5042 = vpack.c.b16 %v4874, %v4866
    %v5043 = vpack.c.b16 %v4875, %v4867
    %v5044 = vpack.c.b16 %v4876, %v4868
    %v5045 = vpack.c.b16 %v4877, %v4869
    %v5046 = vpack.c.b16 %v4878, %v4870
    %v5047 = vpack.c.b16 %v4879, %v4871
    %v5048 = vpack.c.b16 %v4888, %v4880
    %v5049 = vpack.c.b16 %v4889, %v4881
    %v5050 = vpack.c.b16 %v4890, %v4882
    %v5051 = vpack.c.b16 %v4891, %v4883
    %v5052 = vpack.c.b16 %v4892, %v4884
    %v5053 = vpack.c.b16 %v4893, %v4885
    %v5054 = vpack.c.b16 %v4894, %v4886
    %v5055 = vpack.c.b16 %v4895, %v4887
    %v5056 = vpack.c.b16 %v4904, %v4896
    %v5057 = vpack.c.b16 %v4905, %v4897
    %v5058 = vpack.c.b16 %v4906, %v4898
    %v5059 = vpack.c.b16 %v4907, %v4899
    %v5060 = vpack.c.b16 %v4908, %v4900
    %v5061 = vpack.c.b16 %v4909, %v4901
    %v5062 = vpack.c.b16 %v4910, %v4902
    %v5063 = vpack.c.b16 %v4911, %v4903
    %v5064 = vpack.c.b16 %v4920, %v4912
    %v5065 = vpack.c.b16 %v4921, %v4913
    %v5066 = vpack.c.b16 %v4922, %v4914
    %v5067 = vpack.c.b16 %v4923, %v4915
    %v5068 = vpack.c.b16 %v4924, %v4916
    %v5069 = vpack.c.b16 %v4925, %v4917
    %v5070 = vpack.c.b16 %v4926, %v4918
    %v5071 = vpack.c.b16 %v4927, %v4919
    %v5072 = vpack.c.b16 %v4936, %v4928
    %v5073 = vpack.c.b16 %v4937, %v4929
    %v5074 = vpack.c.b16 %v4938, %v4930
    %v5075 = vpack.c.b16 %v4939, %v4931
    %v5076 = vpack.c.b16 %v4940, %v4932
    %v5077 = vpack.c.b16 %v4941, %v4933
    %v5078 = vpack.c.b16 %v4942, %v4934
    %v5079 = vpack.c.b16 %v4943, %v4935
    %v5080 = vpack.c.b16 %v4952, %v4944
    %v5081 = vpack.c.b16 %v4953, %v4945
    %v5082 = vpack.c.b16 %v4954, %v4946
    %v5083 = vpack.c.b16 %v4955, %v4947
    %v5084 = vpack.c.b16 %v4956, %v4948
    %v5085 = vpack.c.b16 %v4957, %v4949
    %v5086 = vpack.c.b16 %v4958, %v4950
    %v5087 = vpack.c.b16 %v4959, %v4951
    %5216 = vmatprep.subr.bf16.mxu0 %v5017
    %5217 = vmatpush1.bf16.msra.mxu0 %v5016
    %5218 = vmatprep.subr.bf16.mxu0 %v5009
    %5219 = vmatpush1.bf16.msra.mxu0 %v5008
    %5220 = vmatprep.subr.bf16.mxu0 %v5001
    %5221 = vmatpush1.bf16.msra.mxu0 %v5000
    %5222 = vmatprep.subr.bf16.mxu0 %v4993
    %5223 = vmatpush1.bf16.msra.mxu0 %v4992
    %5224 = vmatprep.subr.bf16.mxu0 %v4985
    %5225 = vmatpush1.bf16.msra.mxu0 %v4984
    %5226 = vmatprep.subr.bf16.mxu0 %v4977
    %5227 = vmatpush1.bf16.msra.mxu0 %v4976
    %5228 = vmatprep.subr.bf16.mxu0 %v4969
    %5229 = vmatpush1.bf16.msra.mxu0 %v4968
    %5230 = vmatprep.subr.bf16.mxu0 %v4961
    %5231 = vmatpush1.bf16.msra.mxu0 %v4960
    %5232 = vmatprep.subr.bf16.mxu0 %v5081
    %5233 = vmatpush2.bf16.msra.mxu0 %v5080
    %5234 = vmatprep.subr.bf16.mxu0 %v5073
    %5235 = vmatpush2.bf16.msra.mxu0 %v5072
    %5236 = vmatprep.subr.bf16.mxu0 %v5065
    %5237 = vmatpush2.bf16.msra.mxu0 %v5064
    %5238 = vmatprep.subr.bf16.mxu0 %v5057
    %5239 = vmatpush2.bf16.msra.mxu0 %v5056
    %5240 = vmatprep.subr.bf16.mxu0 %v5049
    %5241 = vmatpush2.bf16.msra.mxu0 %v5048
    %5242 = vmatprep.subr.bf16.mxu0 %v5041
    %5243 = vmatpush2.bf16.msra.mxu0 %v5040
    %5244 = vmatprep.subr.bf16.mxu0 %v5033
    %5245 = vmatpush2.bf16.msra.mxu0 %v5032
    %5246 = vmatprep.subr.bf16.mxu0 %v5025
    %5247 = vmatpush2.bf16.msra.mxu0 %v5024
    %5248 = vmatprep.mubr.bf16.mxu0 %v4435
    %5249 = vmatmul.mubr.bf16.gmra.mxu0 %v4422
    %v5250 = vpop.f32.mrf.mxu0
    %v5251 = vadd.f32 0.0, %v5250
    %v5252 = vpop.f32.mrf.mxu0
    %v5253 = vadd.f32 0.0, %v5252
    %v5254 = vpop.f32.mrf.mxu0
    %v5255 = vadd.f32 0.0, %v5254
    %v5256 = vpop.f32.mrf.mxu0
    %v5257 = vadd.f32 0.0, %v5256
    %5258 = vdwg.mxu0
    %5259 = vmatprep.subr.bf16.mxu0 %v5019
    %5260 = vmatpush1.bf16.msra.mxu0 %v5018
    %5261 = vmatprep.subr.bf16.mxu0 %v5011
    %5262 = vmatpush1.bf16.msra.mxu0 %v5010
    %5263 = vmatprep.subr.bf16.mxu0 %v5003
    %5264 = vmatpush1.bf16.msra.mxu0 %v5002
    %5265 = vmatprep.subr.bf16.mxu0 %v4995
    %5266 = vmatpush1.bf16.msra.mxu0 %v4994
    %5267 = vmatprep.subr.bf16.mxu0 %v4987
    %5268 = vmatpush1.bf16.msra.mxu0 %v4986
    %5269 = vmatprep.subr.bf16.mxu0 %v4979
    %5270 = vmatpush1.bf16.msra.mxu0 %v4978
    %5271 = vmatprep.subr.bf16.mxu0 %v4971
    %5272 = vmatpush1.bf16.msra.mxu0 %v4970
    %5273 = vmatprep.subr.bf16.mxu0 %v4963
    %5274 = vmatpush1.bf16.msra.mxu0 %v4962
    %5275 = vmatprep.subr.bf16.mxu0 %v5083
    %5276 = vmatpush2.bf16.msra.mxu0 %v5082
    %5277 = vmatprep.subr.bf16.mxu0 %v5075
    %5278 = vmatpush2.bf16.msra.mxu0 %v5074
    %5279 = vmatprep.subr.bf16.mxu0 %v5067
    %5280 = vmatpush2.bf16.msra.mxu0 %v5066
    %5281 = vmatprep.subr.bf16.mxu0 %v5059
    %5282 = vmatpush2.bf16.msra.mxu0 %v5058
    %5283 = vmatprep.subr.bf16.mxu0 %v5051
    %5284 = vmatpush2.bf16.msra.mxu0 %v5050
    %5285 = vmatprep.subr.bf16.mxu0 %v5043
    %5286 = vmatpush2.bf16.msra.mxu0 %v5042
    %5287 = vmatprep.subr.bf16.mxu0 %v5035
    %5288 = vmatpush2.bf16.msra.mxu0 %v5034
    %5289 = vmatprep.subr.bf16.mxu0 %v5027
    %5290 = vmatpush2.bf16.msra.mxu0 %v5026
    %5291 = vmatprep.mubr.bf16.mxu0 %v4435
    %5292 = vmatmul.mubr.bf16.gmra.mxu0 %v4422
    %v5293 = vpop.f32.mrf.mxu0
    %v5294 = vadd.f32 0.0, %v5293
    %v5295 = vpop.f32.mrf.mxu0
    %v5296 = vadd.f32 0.0, %v5295
    %v5297 = vpop.f32.mrf.mxu0
    %v5298 = vadd.f32 0.0, %v5297
    %v5299 = vpop.f32.mrf.mxu0
    %v5300 = vadd.f32 0.0, %v5299
    %5301 = vdwg.mxu0
    %5302 = vmatprep.subr.bf16.mxu0 %v5021
    %5303 = vmatpush1.bf16.msra.mxu0 %v5020
    %5304 = vmatprep.subr.bf16.mxu0 %v5013
    %5305 = vmatpush1.bf16.msra.mxu0 %v5012
    %5306 = vmatprep.subr.bf16.mxu0 %v5005
    %5307 = vmatpush1.bf16.msra.mxu0 %v5004
    %5308 = vmatprep.subr.bf16.mxu0 %v4997
    %5309 = vmatpush1.bf16.msra.mxu0 %v4996
    %5310 = vmatprep.subr.bf16.mxu0 %v4989
    %5311 = vmatpush1.bf16.msra.mxu0 %v4988
    %5312 = vmatprep.subr.bf16.mxu0 %v4981
    %5313 = vmatpush1.bf16.msra.mxu0 %v4980
    %5314 = vmatprep.subr.bf16.mxu0 %v4973
    %5315 = vmatpush1.bf16.msra.mxu0 %v4972
    %5316 = vmatprep.subr.bf16.mxu0 %v4965
    %5317 = vmatpush1.bf16.msra.mxu0 %v4964
    %5318 = vmatprep.subr.bf16.mxu0 %v5085
    %5319 = vmatpush2.bf16.msra.mxu0 %v5084
    %5320 = vmatprep.subr.bf16.mxu0 %v5077
    %5321 = vmatpush2.bf16.msra.mxu0 %v5076
    %5322 = vmatprep.subr.bf16.mxu0 %v5069
    %5323 = vmatpush2.bf16.msra.mxu0 %v5068
    %5324 = vmatprep.subr.bf16.mxu0 %v5061
    %5325 = vmatpush2.bf16.msra.mxu0 %v5060
    %5326 = vmatprep.subr.bf16.mxu0 %v5053
    %5327 = vmatpush2.bf16.msra.mxu0 %v5052
    %5328 = vmatprep.subr.bf16.mxu0 %v5045
    %5329 = vmatpush2.bf16.msra.mxu0 %v5044
    %5330 = vmatprep.subr.bf16.mxu0 %v5037
    %5331 = vmatpush2.bf16.msra.mxu0 %v5036
    %5332 = vmatprep.subr.bf16.mxu0 %v5029
    %5333 = vmatpush2.bf16.msra.mxu0 %v5028
    %5334 = vmatprep.mubr.bf16.mxu0 %v4435
    %5335 = vmatmul.mubr.bf16.gmra.mxu0 %v4422
    %v5336 = vpop.f32.mrf.mxu0
    %v5337 = vadd.f32 0.0, %v5336
    %v5338 = vpop.f32.mrf.mxu0
    %v5339 = vadd.f32 0.0, %v5338
    %v5340 = vpop.f32.mrf.mxu0
    %v5341 = vadd.f32 0.0, %v5340
    %v5342 = vpop.f32.mrf.mxu0
    %v5343 = vadd.f32 0.0, %v5342
    %5344 = vdwg.mxu0
    %5345 = vmatprep.subr.bf16.mxu0 %v5023
    %5346 = vmatpush1.bf16.msra.mxu0 %v5022
    %5347 = vmatprep.subr.bf16.mxu0 %v5015
    %5348 = vmatpush1.bf16.msra.mxu0 %v5014
    %5349 = vmatprep.subr.bf16.mxu0 %v5007
    %5350 = vmatpush1.bf16.msra.mxu0 %v5006
    %5351 = vmatprep.subr.bf16.mxu0 %v4999
    %5352 = vmatpush1.bf16.msra.mxu0 %v4998
    %5353 = vmatprep.subr.bf16.mxu0 %v4991
    %5354 = vmatpush1.bf16.msra.mxu0 %v4990
    %5355 = vmatprep.subr.bf16.mxu0 %v4983
    %5356 = vmatpush1.bf16.msra.mxu0 %v4982
    %5357 = vmatprep.subr.bf16.mxu0 %v4975
    %5358 = vmatpush1.bf16.msra.mxu0 %v4974
    %5359 = vmatprep.subr.bf16.mxu0 %v4967
    %5360 = vmatpush1.bf16.msra.mxu0 %v4966
    %5361 = vmatprep.subr.bf16.mxu0 %v5087
    %5362 = vmatpush2.bf16.msra.mxu0 %v5086
    %5363 = vmatprep.subr.bf16.mxu0 %v5079
    %5364 = vmatpush2.bf16.msra.mxu0 %v5078
    %5365 = vmatprep.subr.bf16.mxu0 %v5071
    %5366 = vmatpush2.bf16.msra.mxu0 %v5070
    %5367 = vmatprep.subr.bf16.mxu0 %v5063
    %5368 = vmatpush2.bf16.msra.mxu0 %v5062
    %5369 = vmatprep.subr.bf16.mxu0 %v5055
    %5370 = vmatpush2.bf16.msra.mxu0 %v5054
    %5371 = vmatprep.subr.bf16.mxu0 %v5047
    %5372 = vmatpush2.bf16.msra.mxu0 %v5046
    %5373 = vmatprep.subr.bf16.mxu0 %v5039
    %5374 = vmatpush2.bf16.msra.mxu0 %v5038
    %5375 = vmatprep.subr.bf16.mxu0 %v5031
    %5376 = vmatpush2.bf16.msra.mxu0 %v5030
    %5377 = vmatprep.mubr.bf16.mxu0 %v4435
    %5378 = vmatmul.mubr.bf16.gmra.mxu0 %v4422
    %v5379 = vpop.f32.mrf.mxu0
    %v5380 = vadd.f32 0.0, %v5379
    %v5381 = vpop.f32.mrf.mxu0
    %v5382 = vadd.f32 0.0, %v5381
    %v5383 = vpop.f32.mrf.mxu0
    %v5384 = vadd.f32 0.0, %v5383
    %v5385 = vpop.f32.mrf.mxu0
    %v5386 = vadd.f32 0.0, %v5385
    %5387 = vdwg.mxu0
    %s5388 = smul.u32 6, 8
    %s5389 = smul.addr %s5388, 4
    %s5390 = scalar_lea.vmem [#allocation2], %s5389
    %v5391 = vld [vmem:[%s5390] sm:$0xff]
    %v5392 = vld [vmem:[%s5390 + $0x8] sm:$0xff]
    %v5393 = vld [vmem:[%s5390 + $0x20] sm:$0xff]
    %v5394 = vld [vmem:[%s5390 + $0x28] sm:$0xff]
    %v5395 = vunpack.c.l.bf16 %v5391
    %v5396 = vunpack.c.h.bf16 %v5391
    %v5397 = vunpack.c.l.bf16 %v5392
    %v5398 = vunpack.c.h.bf16 %v5392
    %v5399 = vunpack.c.l.bf16 %v5393
    %v5400 = vunpack.c.h.bf16 %v5393
    %v5401 = vunpack.c.l.bf16 %v5394
    %v5402 = vunpack.c.h.bf16 %v5394
    %v5403 = vadd.f32 %v5395, %v5251
    %v5404 = vadd.f32 %v5396, %v5253
    %v5405 = vadd.f32 %v5397, %v5294
    %v5406 = vadd.f32 %v5398, %v5296
    %v5407 = vadd.f32 %v5399, %v5255
    %v5408 = vadd.f32 %v5400, %v5257
    %v5409 = vadd.f32 %v5401, %v5298
    %v5410 = vadd.f32 %v5402, %v5300
    %s5411 = smul.u32 8, 8
    %s5412 = smul.addr %s5411, 4
    %s5413 = scalar_lea.vmem [#allocation2], %s5412
    %v5414 = vld [vmem:[%s5413 + $0x10] sm:$0xff]
    %v5415 = vld [vmem:[%s5413 + $0x18] sm:$0xff]
    %v5416 = vld [vmem:[%s5413 + $0x30] sm:$0xff]
    %v5417 = vld [vmem:[%s5413 + $0x38] sm:$0xff]
    %v5418 = vunpack.c.l.bf16 %v5414
    %v5419 = vunpack.c.h.bf16 %v5414
    %v5420 = vunpack.c.l.bf16 %v5415
    %v5421 = vunpack.c.h.bf16 %v5415
    %v5422 = vunpack.c.l.bf16 %v5416
    %v5423 = vunpack.c.h.bf16 %v5416
    %v5424 = vunpack.c.l.bf16 %v5417
    %v5425 = vunpack.c.h.bf16 %v5417
    %v5426 = vadd.f32 %v5418, %v5337
    %v5427 = vadd.f32 %v5419, %v5339
    %v5428 = vadd.f32 %v5420, %v5380
    %v5429 = vadd.f32 %v5421, %v5382
    %v5430 = vadd.f32 %v5422, %v5341
    %v5431 = vadd.f32 %v5423, %v5343
    %v5432 = vadd.f32 %v5424, %v5384
    %v5433 = vadd.f32 %v5425, %v5386
    %v5434 = vxor.u32 %v5403, 2147483648
    %v5435 = vxor.u32 %v5407, 2147483648
    %v5436 = vmul.f32 %v5434, 1.442695
    %v5437 = vpow.pop %v5436
    %v5438 = vmul.f32 %v5435, 1.442695
    %v5439 = vpow.pop %v5438
    %v5440 = vadd.f32 %v5437, 1.0
    %v5441 = vadd.f32 %v5439, 1.0
    %v5442 = vrcp.pop %v5440
    %v5443 = vmul.f32 1.0, %v5442
    %v5444 = vrcp.pop %v5441
    %v5445 = vmul.f32 1.0, %v5444
    %v5446 = vxor.u32 %v5404, 2147483648
    %v5447 = vxor.u32 %v5408, 2147483648
    %v5448 = vmul.f32 %v5446, 1.442695
    %v5449 = vpow.pop %v5448
    %v5450 = vmul.f32 %v5447, 1.442695
    %v5451 = vpow.pop %v5450
    %v5452 = vadd.f32 %v5449, 1.0
    %v5453 = vadd.f32 %v5451, 1.0
    %v5454 = vrcp.pop %v5452
    %v5455 = vmul.f32 1.0, %v5454
    %v5456 = vrcp.pop %v5453
    %v5457 = vmul.f32 1.0, %v5456
    %v5458 = vtanh.pop %v5405
    %v5459 = vtanh.pop %v5409
    %v5460 = vxor.u32 %v5406, 2147483648
    %v5461 = vxor.u32 %v5410, 2147483648
    %v5462 = vmul.f32 %v5460, 1.442695
    %v5463 = vpow.pop %v5462
    %v5464 = vmul.f32 %v5461, 1.442695
    %v5465 = vpow.pop %v5464
    %v5466 = vadd.f32 %v5463, 1.0
    %v5467 = vadd.f32 %v5465, 1.0
    %v5468 = vrcp.pop %v5466
    %v5469 = vmul.f32 1.0, %v5468
    %v5470 = vrcp.pop %v5467
    %v5471 = vmul.f32 1.0, %v5470
    %v5472 = vmul.f32 %v5455, %v4368
    %v5473 = vmul.f32 %v5457, %v4369
    %v5474 = vmul.f32 %v5443, %v5458
    %v5475 = vmul.f32 %v5445, %v5459
    %v5476 = vadd.f32 %v5472, %v5474
    %v5477 = vadd.f32 %v5473, %v5475
    %v5478 = vtanh.pop %v5476
    %v5479 = vtanh.pop %v5477
    %v5480 = vmul.f32 %v5469, %v5478
    %v5481 = vmul.f32 %v5471, %v5479
    %v5482 = vxor.u32 %v5426, 2147483648
    %v5483 = vxor.u32 %v5430, 2147483648
    %v5484 = vmul.f32 %v5482, 1.442695
    %v5485 = vpow.pop %v5484
    %v5486 = vmul.f32 %v5483, 1.442695
    %v5487 = vpow.pop %v5486
    %v5488 = vadd.f32 %v5485, 1.0
    %v5489 = vadd.f32 %v5487, 1.0
    %v5490 = vrcp.pop %v5488
    %v5491 = vmul.f32 1.0, %v5490
    %v5492 = vrcp.pop %v5489
    %v5493 = vmul.f32 1.0, %v5492
    %v5494 = vxor.u32 %v5427, 2147483648
    %v5495 = vxor.u32 %v5431, 2147483648
    %v5496 = vmul.f32 %v5494, 1.442695
    %v5497 = vpow.pop %v5496
    %v5498 = vmul.f32 %v5495, 1.442695
    %v5499 = vpow.pop %v5498
    %v5500 = vadd.f32 %v5497, 1.0
    %v5501 = vadd.f32 %v5499, 1.0
    %v5502 = vrcp.pop %v5500
    %v5503 = vmul.f32 1.0, %v5502
    %v5504 = vrcp.pop %v5501
    %v5505 = vmul.f32 1.0, %v5504
    %v5506 = vtanh.pop %v5428
    %v5507 = vtanh.pop %v5432
    %v5508 = vxor.u32 %v5429, 2147483648
    %v5509 = vxor.u32 %v5433, 2147483648
    %v5510 = vmul.f32 %v5508, 1.442695
    %v5511 = vpow.pop %v5510
    %v5512 = vmul.f32 %v5509, 1.442695
    %v5513 = vpow.pop %v5512
    %v5514 = vadd.f32 %v5511, 1.0
    %v5515 = vadd.f32 %v5513, 1.0
    %v5516 = vrcp.pop %v5514
    %v5517 = vmul.f32 1.0, %v5516
    %v5518 = vrcp.pop %v5515
    %v5519 = vmul.f32 1.0, %v5518
    %v5520 = vmul.f32 %v5503, %v4416
    %v5521 = vmul.f32 %v5505, %v4417
    %v5522 = vmul.f32 %v5491, %v5506
    %v5523 = vmul.f32 %v5493, %v5507
    %v5524 = vadd.f32 %v5520, %v5522
    %v5525 = vadd.f32 %v5521, %v5523
    %v5526 = vtanh.pop %v5524
    %v5527 = vtanh.pop %v5525
    %v5528 = vmul.f32 %v5517, %v5526
    %v5529 = vmul.f32 %v5519, %v5527
    %v5530 = vpack.c.bf16 %v5481, %v5480
    %v5532 = vunpack.c.l.b16 %v5530
    %v5533 = vunpack.c.h.b16 %v5530
    %v5534 = vpack.c.b16 %v5532, %v5532
    %v5535 = vpack.c.b16 %v5533, %v5533
    %s5538 = smul.u32 6, 2
    %s5539 = smul.addr %s5538, 4
    %s5540 = scalar_lea.vmem [#allocation3], %s5539
    %5541 = vst [vmem:[%s5540] sm:$0xf] %v5534
    %5542 = vst [vmem:[%s5540 + $0x8] sm:$0xf] %v5535
    %v5543 = vpack.c.bf16 %v5529, %v5528
    %v5545 = vunpack.c.l.b16 %v5543
    %v5546 = vunpack.c.h.b16 %v5543
    %v5547 = vpack.c.b16 %v5545, %v5545
    %v5548 = vpack.c.b16 %v5546, %v5546
    %s5551 = smul.u32 8, 2
    %s5552 = smul.addr %s5551, 4
    %s5553 = scalar_lea.vmem [#allocation3], %s5552
    %5554 = vst [vmem:[%s5553 + $0x4] sm:$0xf] %v5547
    %5555 = vst [vmem:[%s5553 + $0xc] sm:$0xf] %v5548
    %v5556 = vld [vmem:[#allocation4] sm:$0xff]
    %v5557 = vld [vmem:[#allocation4 + $0x8] sm:$0xff]
    %v5558 = vld [vmem:[#allocation4 + $0x10] sm:$0xff]
    %v5559 = vld [vmem:[#allocation4 + $0x18] sm:$0xff]
    %v5560 = vld [vmem:[#allocation4 + $0x20] sm:$0xff]
    %v5561 = vld [vmem:[#allocation4 + $0x28] sm:$0xff]
    %v5562 = vld [vmem:[#allocation4 + $0x30] sm:$0xff]
    %v5563 = vld [vmem:[#allocation4 + $0x38] sm:$0xff]
    %v5564 = vld [vmem:[#allocation4 + $0x40] sm:$0xff]
    %v5565 = vld [vmem:[#allocation4 + $0x48] sm:$0xff]
    %v5566 = vld [vmem:[#allocation4 + $0x50] sm:$0xff]
    %v5567 = vld [vmem:[#allocation4 + $0x58] sm:$0xff]
    %v5568 = vld [vmem:[#allocation4 + $0x60] sm:$0xff]
    %v5569 = vld [vmem:[#allocation4 + $0x68] sm:$0xff]
    %v5570 = vld [vmem:[#allocation4 + $0x70] sm:$0xff]
    %v5571 = vld [vmem:[#allocation4 + $0x78] sm:$0xff]
    %v5572 = vld [vmem:[#allocation4 + $0x80] sm:$0xff]
    %v5573 = vld [vmem:[#allocation4 + $0x88] sm:$0xff]
    %v5574 = vld [vmem:[#allocation4 + $0x90] sm:$0xff]
    %v5575 = vld [vmem:[#allocation4 + $0x98] sm:$0xff]
    %v5576 = vld [vmem:[#allocation4 + $0xa0] sm:$0xff]
    %v5577 = vld [vmem:[#allocation4 + $0xa8] sm:$0xff]
    %v5578 = vld [vmem:[#allocation4 + $0xb0] sm:$0xff]
    %v5579 = vld [vmem:[#allocation4 + $0xb8] sm:$0xff]
    %v5580 = vld [vmem:[#allocation4 + $0xc0] sm:$0xff]
    %v5581 = vld [vmem:[#allocation4 + $0xc8] sm:$0xff]
    %v5582 = vld [vmem:[#allocation4 + $0xd0] sm:$0xff]
    %v5583 = vld [vmem:[#allocation4 + $0xd8] sm:$0xff]
    %v5584 = vld [vmem:[#allocation4 + $0xe0] sm:$0xff]
    %v5585 = vld [vmem:[#allocation4 + $0xe8] sm:$0xff]
    %v5586 = vld [vmem:[#allocation4 + $0xf0] sm:$0xff]
    %v5587 = vld [vmem:[#allocation4 + $0xf8] sm:$0xff]
    %v5588 = vld [vmem:[#allocation4 + $0x100] sm:$0xff]
    %v5589 = vld [vmem:[#allocation4 + $0x108] sm:$0xff]
    %v5590 = vld [vmem:[#allocation4 + $0x110] sm:$0xff]
    %v5591 = vld [vmem:[#allocation4 + $0x118] sm:$0xff]
    %v5592 = vld [vmem:[#allocation4 + $0x120] sm:$0xff]
    %v5593 = vld [vmem:[#allocation4 + $0x128] sm:$0xff]
    %v5594 = vld [vmem:[#allocation4 + $0x130] sm:$0xff]
    %v5595 = vld [vmem:[#allocation4 + $0x138] sm:$0xff]
    %v5596 = vld [vmem:[#allocation4 + $0x140] sm:$0xff]
    %v5597 = vld [vmem:[#allocation4 + $0x148] sm:$0xff]
    %v5598 = vld [vmem:[#allocation4 + $0x150] sm:$0xff]
    %v5599 = vld [vmem:[#allocation4 + $0x158] sm:$0xff]
    %v5600 = vld [vmem:[#allocation4 + $0x160] sm:$0xff]
    %v5601 = vld [vmem:[#allocation4 + $0x168] sm:$0xff]
    %v5602 = vld [vmem:[#allocation4 + $0x170] sm:$0xff]
    %v5603 = vld [vmem:[#allocation4 + $0x178] sm:$0xff]
    %v5604 = vld [vmem:[#allocation4 + $0x180] sm:$0xff]
    %v5605 = vld [vmem:[#allocation4 + $0x188] sm:$0xff]
    %v5606 = vld [vmem:[#allocation4 + $0x190] sm:$0xff]
    %v5607 = vld [vmem:[#allocation4 + $0x198] sm:$0xff]
    %v5608 = vld [vmem:[#allocation4 + $0x1a0] sm:$0xff]
    %v5609 = vld [vmem:[#allocation4 + $0x1a8] sm:$0xff]
    %v5610 = vld [vmem:[#allocation4 + $0x1b0] sm:$0xff]
    %v5611 = vld [vmem:[#allocation4 + $0x1b8] sm:$0xff]
    %v5612 = vld [vmem:[#allocation4 + $0x1c0] sm:$0xff]
    %v5613 = vld [vmem:[#allocation4 + $0x1c8] sm:$0xff]
    %v5614 = vld [vmem:[#allocation4 + $0x1d0] sm:$0xff]
    %v5615 = vld [vmem:[#allocation4 + $0x1d8] sm:$0xff]
    %v5616 = vld [vmem:[#allocation4 + $0x1e0] sm:$0xff]
    %v5617 = vld [vmem:[#allocation4 + $0x1e8] sm:$0xff]
    %v5618 = vld [vmem:[#allocation4 + $0x1f0] sm:$0xff]
    %v5619 = vld [vmem:[#allocation4 + $0x1f8] sm:$0xff]
    %v5620 = vld [vmem:[#allocation4 + $0x200] sm:$0xff]
    %v5621 = vld [vmem:[#allocation4 + $0x208] sm:$0xff]
    %v5622 = vld [vmem:[#allocation4 + $0x210] sm:$0xff]
    %v5623 = vld [vmem:[#allocation4 + $0x218] sm:$0xff]
    %v5624 = vld [vmem:[#allocation4 + $0x220] sm:$0xff]
    %v5625 = vld [vmem:[#allocation4 + $0x228] sm:$0xff]
    %v5626 = vld [vmem:[#allocation4 + $0x230] sm:$0xff]
    %v5627 = vld [vmem:[#allocation4 + $0x238] sm:$0xff]
    %v5628 = vld [vmem:[#allocation4 + $0x240] sm:$0xff]
    %v5629 = vld [vmem:[#allocation4 + $0x248] sm:$0xff]
    %v5630 = vld [vmem:[#allocation4 + $0x250] sm:$0xff]
    %v5631 = vld [vmem:[#allocation4 + $0x258] sm:$0xff]
    %v5632 = vld [vmem:[#allocation4 + $0x260] sm:$0xff]
    %v5633 = vld [vmem:[#allocation4 + $0x268] sm:$0xff]
    %v5634 = vld [vmem:[#allocation4 + $0x270] sm:$0xff]
    %v5635 = vld [vmem:[#allocation4 + $0x278] sm:$0xff]
    %v5636 = vld [vmem:[#allocation4 + $0x280] sm:$0xff]
    %v5637 = vld [vmem:[#allocation4 + $0x288] sm:$0xff]
    %v5638 = vld [vmem:[#allocation4 + $0x290] sm:$0xff]
    %v5639 = vld [vmem:[#allocation4 + $0x298] sm:$0xff]
    %v5640 = vld [vmem:[#allocation4 + $0x2a0] sm:$0xff]
    %v5641 = vld [vmem:[#allocation4 + $0x2a8] sm:$0xff]
    %v5642 = vld [vmem:[#allocation4 + $0x2b0] sm:$0xff]
    %v5643 = vld [vmem:[#allocation4 + $0x2b8] sm:$0xff]
    %v5644 = vld [vmem:[#allocation4 + $0x2c0] sm:$0xff]
    %v5645 = vld [vmem:[#allocation4 + $0x2c8] sm:$0xff]
    %v5646 = vld [vmem:[#allocation4 + $0x2d0] sm:$0xff]
    %v5647 = vld [vmem:[#allocation4 + $0x2d8] sm:$0xff]
    %v5648 = vld [vmem:[#allocation4 + $0x2e0] sm:$0xff]
    %v5649 = vld [vmem:[#allocation4 + $0x2e8] sm:$0xff]
    %v5650 = vld [vmem:[#allocation4 + $0x2f0] sm:$0xff]
    %v5651 = vld [vmem:[#allocation4 + $0x2f8] sm:$0xff]
    %v5652 = vld [vmem:[#allocation4 + $0x300] sm:$0xff]
    %v5653 = vld [vmem:[#allocation4 + $0x308] sm:$0xff]
    %v5654 = vld [vmem:[#allocation4 + $0x310] sm:$0xff]
    %v5655 = vld [vmem:[#allocation4 + $0x318] sm:$0xff]
    %v5656 = vld [vmem:[#allocation4 + $0x320] sm:$0xff]
    %v5657 = vld [vmem:[#allocation4 + $0x328] sm:$0xff]
    %v5658 = vld [vmem:[#allocation4 + $0x330] sm:$0xff]
    %v5659 = vld [vmem:[#allocation4 + $0x338] sm:$0xff]
    %v5660 = vld [vmem:[#allocation4 + $0x340] sm:$0xff]
    %v5661 = vld [vmem:[#allocation4 + $0x348] sm:$0xff]
    %v5662 = vld [vmem:[#allocation4 + $0x350] sm:$0xff]
    %v5663 = vld [vmem:[#allocation4 + $0x358] sm:$0xff]
    %v5664 = vld [vmem:[#allocation4 + $0x360] sm:$0xff]
    %v5665 = vld [vmem:[#allocation4 + $0x368] sm:$0xff]
    %v5666 = vld [vmem:[#allocation4 + $0x370] sm:$0xff]
    %v5667 = vld [vmem:[#allocation4 + $0x378] sm:$0xff]
    %v5668 = vld [vmem:[#allocation4 + $0x380] sm:$0xff]
    %v5669 = vld [vmem:[#allocation4 + $0x388] sm:$0xff]
    %v5670 = vld [vmem:[#allocation4 + $0x390] sm:$0xff]
    %v5671 = vld [vmem:[#allocation4 + $0x398] sm:$0xff]
    %v5672 = vld [vmem:[#allocation4 + $0x3a0] sm:$0xff]
    %v5673 = vld [vmem:[#allocation4 + $0x3a8] sm:$0xff]
    %v5674 = vld [vmem:[#allocation4 + $0x3b0] sm:$0xff]
    %v5675 = vld [vmem:[#allocation4 + $0x3b8] sm:$0xff]
    %v5676 = vld [vmem:[#allocation4 + $0x3c0] sm:$0xff]
    %v5677 = vld [vmem:[#allocation4 + $0x3c8] sm:$0xff]
    %v5678 = vld [vmem:[#allocation4 + $0x3d0] sm:$0xff]
    %v5679 = vld [vmem:[#allocation4 + $0x3d8] sm:$0xff]
    %v5680 = vld [vmem:[#allocation4 + $0x3e0] sm:$0xff]
    %v5681 = vld [vmem:[#allocation4 + $0x3e8] sm:$0xff]
    %v5682 = vld [vmem:[#allocation4 + $0x3f0] sm:$0xff]
    %v5683 = vld [vmem:[#allocation4 + $0x3f8] sm:$0xff]
    %v5812 = vunpack.c.l.b16 %v5556
    %v5813 = vunpack.c.h.b16 %v5556
    %v5814 = vunpack.c.l.b16 %v5557
    %v5815 = vunpack.c.h.b16 %v5557
    %v5816 = vunpack.c.l.b16 %v5558
    %v5817 = vunpack.c.h.b16 %v5558
    %v5818 = vunpack.c.l.b16 %v5559
    %v5819 = vunpack.c.h.b16 %v5559
    %v5820 = vunpack.c.l.b16 %v5560
    %v5821 = vunpack.c.h.b16 %v5560
    %v5822 = vunpack.c.l.b16 %v5561
    %v5823 = vunpack.c.h.b16 %v5561
    %v5824 = vunpack.c.l.b16 %v5562
    %v5825 = vunpack.c.h.b16 %v5562
    %v5826 = vunpack.c.l.b16 %v5563
    %v5827 = vunpack.c.h.b16 %v5563
    %v5828 = vunpack.c.l.b16 %v5564
    %v5829 = vunpack.c.h.b16 %v5564
    %v5830 = vunpack.c.l.b16 %v5565
    %v5831 = vunpack.c.h.b16 %v5565
    %v5832 = vunpack.c.l.b16 %v5566
    %v5833 = vunpack.c.h.b16 %v5566
    %v5834 = vunpack.c.l.b16 %v5567
    %v5835 = vunpack.c.h.b16 %v5567
    %v5836 = vunpack.c.l.b16 %v5568
    %v5837 = vunpack.c.h.b16 %v5568
    %v5838 = vunpack.c.l.b16 %v5569
    %v5839 = vunpack.c.h.b16 %v5569
    %v5840 = vunpack.c.l.b16 %v5570
    %v5841 = vunpack.c.h.b16 %v5570
    %v5842 = vunpack.c.l.b16 %v5571
    %v5843 = vunpack.c.h.b16 %v5571
    %v5844 = vunpack.c.l.b16 %v5572
    %v5845 = vunpack.c.h.b16 %v5572
    %v5846 = vunpack.c.l.b16 %v5573
    %v5847 = vunpack.c.h.b16 %v5573
    %v5848 = vunpack.c.l.b16 %v5574
    %v5849 = vunpack.c.h.b16 %v5574
    %v5850 = vunpack.c.l.b16 %v5575
    %v5851 = vunpack.c.h.b16 %v5575
    %v5852 = vunpack.c.l.b16 %v5576
    %v5853 = vunpack.c.h.b16 %v5576
    %v5854 = vunpack.c.l.b16 %v5577
    %v5855 = vunpack.c.h.b16 %v5577
    %v5856 = vunpack.c.l.b16 %v5578
    %v5857 = vunpack.c.h.b16 %v5578
    %v5858 = vunpack.c.l.b16 %v5579
    %v5859 = vunpack.c.h.b16 %v5579
    %v5860 = vunpack.c.l.b16 %v5580
    %v5861 = vunpack.c.h.b16 %v5580
    %v5862 = vunpack.c.l.b16 %v5581
    %v5863 = vunpack.c.h.b16 %v5581
    %v5864 = vunpack.c.l.b16 %v5582
    %v5865 = vunpack.c.h.b16 %v5582
    %v5866 = vunpack.c.l.b16 %v5583
    %v5867 = vunpack.c.h.b16 %v5583
    %v5868 = vunpack.c.l.b16 %v5584
    %v5869 = vunpack.c.h.b16 %v5584
    %v5870 = vunpack.c.l.b16 %v5585
    %v5871 = vunpack.c.h.b16 %v5585
    %v5872 = vunpack.c.l.b16 %v5586
    %v5873 = vunpack.c.h.b16 %v5586
    %v5874 = vunpack.c.l.b16 %v5587
    %v5875 = vunpack.c.h.b16 %v5587
    %v5876 = vunpack.c.l.b16 %v5588
    %v5877 = vunpack.c.h.b16 %v5588
    %v5878 = vunpack.c.l.b16 %v5589
    %v5879 = vunpack.c.h.b16 %v5589
    %v5880 = vunpack.c.l.b16 %v5590
    %v5881 = vunpack.c.h.b16 %v5590
    %v5882 = vunpack.c.l.b16 %v5591
    %v5883 = vunpack.c.h.b16 %v5591
    %v5884 = vunpack.c.l.b16 %v5592
    %v5885 = vunpack.c.h.b16 %v5592
    %v5886 = vunpack.c.l.b16 %v5593
    %v5887 = vunpack.c.h.b16 %v5593
    %v5888 = vunpack.c.l.b16 %v5594
    %v5889 = vunpack.c.h.b16 %v5594
    %v5890 = vunpack.c.l.b16 %v5595
    %v5891 = vunpack.c.h.b16 %v5595
    %v5892 = vunpack.c.l.b16 %v5596
    %v5893 = vunpack.c.h.b16 %v5596
    %v5894 = vunpack.c.l.b16 %v5597
    %v5895 = vunpack.c.h.b16 %v5597
    %v5896 = vunpack.c.l.b16 %v5598
    %v5897 = vunpack.c.h.b16 %v5598
    %v5898 = vunpack.c.l.b16 %v5599
    %v5899 = vunpack.c.h.b16 %v5599
    %v5900 = vunpack.c.l.b16 %v5600
    %v5901 = vunpack.c.h.b16 %v5600
    %v5902 = vunpack.c.l.b16 %v5601
    %v5903 = vunpack.c.h.b16 %v5601
    %v5904 = vunpack.c.l.b16 %v5602
    %v5905 = vunpack.c.h.b16 %v5602
    %v5906 = vunpack.c.l.b16 %v5603
    %v5907 = vunpack.c.h.b16 %v5603
    %v5908 = vunpack.c.l.b16 %v5604
    %v5909 = vunpack.c.h.b16 %v5604
    %v5910 = vunpack.c.l.b16 %v5605
    %v5911 = vunpack.c.h.b16 %v5605
    %v5912 = vunpack.c.l.b16 %v5606
    %v5913 = vunpack.c.h.b16 %v5606
    %v5914 = vunpack.c.l.b16 %v5607
    %v5915 = vunpack.c.h.b16 %v5607
    %v5916 = vunpack.c.l.b16 %v5608
    %v5917 = vunpack.c.h.b16 %v5608
    %v5918 = vunpack.c.l.b16 %v5609
    %v5919 = vunpack.c.h.b16 %v5609
    %v5920 = vunpack.c.l.b16 %v5610
    %v5921 = vunpack.c.h.b16 %v5610
    %v5922 = vunpack.c.l.b16 %v5611
    %v5923 = vunpack.c.h.b16 %v5611
    %v5924 = vunpack.c.l.b16 %v5612
    %v5925 = vunpack.c.h.b16 %v5612
    %v5926 = vunpack.c.l.b16 %v5613
    %v5927 = vunpack.c.h.b16 %v5613
    %v5928 = vunpack.c.l.b16 %v5614
    %v5929 = vunpack.c.h.b16 %v5614
    %v5930 = vunpack.c.l.b16 %v5615
    %v5931 = vunpack.c.h.b16 %v5615
    %v5932 = vunpack.c.l.b16 %v5616
    %v5933 = vunpack.c.h.b16 %v5616
    %v5934 = vunpack.c.l.b16 %v5617
    %v5935 = vunpack.c.h.b16 %v5617
    %v5936 = vunpack.c.l.b16 %v5618
    %v5937 = vunpack.c.h.b16 %v5618
    %v5938 = vunpack.c.l.b16 %v5619
    %v5939 = vunpack.c.h.b16 %v5619
    %v5940 = vunpack.c.l.b16 %v5620
    %v5941 = vunpack.c.h.b16 %v5620
    %v5942 = vunpack.c.l.b16 %v5621
    %v5943 = vunpack.c.h.b16 %v5621
    %v5944 = vunpack.c.l.b16 %v5622
    %v5945 = vunpack.c.h.b16 %v5622
    %v5946 = vunpack.c.l.b16 %v5623
    %v5947 = vunpack.c.h.b16 %v5623
    %v5948 = vunpack.c.l.b16 %v5624
    %v5949 = vunpack.c.h.b16 %v5624
    %v5950 = vunpack.c.l.b16 %v5625
    %v5951 = vunpack.c.h.b16 %v5625
    %v5952 = vunpack.c.l.b16 %v5626
    %v5953 = vunpack.c.h.b16 %v5626
    %v5954 = vunpack.c.l.b16 %v5627
    %v5955 = vunpack.c.h.b16 %v5627
    %v5956 = vunpack.c.l.b16 %v5628
    %v5957 = vunpack.c.h.b16 %v5628
    %v5958 = vunpack.c.l.b16 %v5629
    %v5959 = vunpack.c.h.b16 %v5629
    %v5960 = vunpack.c.l.b16 %v5630
    %v5961 = vunpack.c.h.b16 %v5630
    %v5962 = vunpack.c.l.b16 %v5631
    %v5963 = vunpack.c.h.b16 %v5631
    %v5964 = vunpack.c.l.b16 %v5632
    %v5965 = vunpack.c.h.b16 %v5632
    %v5966 = vunpack.c.l.b16 %v5633
    %v5967 = vunpack.c.h.b16 %v5633
    %v5968 = vunpack.c.l.b16 %v5634
    %v5969 = vunpack.c.h.b16 %v5634
    %v5970 = vunpack.c.l.b16 %v5635
    %v5971 = vunpack.c.h.b16 %v5635
    %v5972 = vunpack.c.l.b16 %v5636
    %v5973 = vunpack.c.h.b16 %v5636
    %v5974 = vunpack.c.l.b16 %v5637
    %v5975 = vunpack.c.h.b16 %v5637
    %v5976 = vunpack.c.l.b16 %v5638
    %v5977 = vunpack.c.h.b16 %v5638
    %v5978 = vunpack.c.l.b16 %v5639
    %v5979 = vunpack.c.h.b16 %v5639
    %v5980 = vunpack.c.l.b16 %v5640
    %v5981 = vunpack.c.h.b16 %v5640
    %v5982 = vunpack.c.l.b16 %v5641
    %v5983 = vunpack.c.h.b16 %v5641
    %v5984 = vunpack.c.l.b16 %v5642
    %v5985 = vunpack.c.h.b16 %v5642
    %v5986 = vunpack.c.l.b16 %v5643
    %v5987 = vunpack.c.h.b16 %v5643
    %v5988 = vunpack.c.l.b16 %v5644
    %v5989 = vunpack.c.h.b16 %v5644
    %v5990 = vunpack.c.l.b16 %v5645
    %v5991 = vunpack.c.h.b16 %v5645
    %v5992 = vunpack.c.l.b16 %v5646
    %v5993 = vunpack.c.h.b16 %v5646
    %v5994 = vunpack.c.l.b16 %v5647
    %v5995 = vunpack.c.h.b16 %v5647
    %v5996 = vunpack.c.l.b16 %v5648
    %v5997 = vunpack.c.h.b16 %v5648
    %v5998 = vunpack.c.l.b16 %v5649
    %v5999 = vunpack.c.h.b16 %v5649
    %v6000 = vunpack.c.l.b16 %v5650
    %v6001 = vunpack.c.h.b16 %v5650
    %v6002 = vunpack.c.l.b16 %v5651
    %v6003 = vunpack.c.h.b16 %v5651
    %v6004 = vunpack.c.l.b16 %v5652
    %v6005 = vunpack.c.h.b16 %v5652
    %v6006 = vunpack.c.l.b16 %v5653
    %v6007 = vunpack.c.h.b16 %v5653
    %v6008 = vunpack.c.l.b16 %v5654
    %v6009 = vunpack.c.h.b16 %v5654
    %v6010 = vunpack.c.l.b16 %v5655
    %v6011 = vunpack.c.h.b16 %v5655
    %v6012 = vunpack.c.l.b16 %v5656
    %v6013 = vunpack.c.h.b16 %v5656
    %v6014 = vunpack.c.l.b16 %v5657
    %v6015 = vunpack.c.h.b16 %v5657
    %v6016 = vunpack.c.l.b16 %v5658
    %v6017 = vunpack.c.h.b16 %v5658
    %v6018 = vunpack.c.l.b16 %v5659
    %v6019 = vunpack.c.h.b16 %v5659
    %v6020 = vunpack.c.l.b16 %v5660
    %v6021 = vunpack.c.h.b16 %v5660
    %v6022 = vunpack.c.l.b16 %v5661
    %v6023 = vunpack.c.h.b16 %v5661
    %v6024 = vunpack.c.l.b16 %v5662
    %v6025 = vunpack.c.h.b16 %v5662
    %v6026 = vunpack.c.l.b16 %v5663
    %v6027 = vunpack.c.h.b16 %v5663
    %v6028 = vunpack.c.l.b16 %v5664
    %v6029 = vunpack.c.h.b16 %v5664
    %v6030 = vunpack.c.l.b16 %v5665
    %v6031 = vunpack.c.h.b16 %v5665
    %v6032 = vunpack.c.l.b16 %v5666
    %v6033 = vunpack.c.h.b16 %v5666
    %v6034 = vunpack.c.l.b16 %v5667
    %v6035 = vunpack.c.h.b16 %v5667
    %v6036 = vunpack.c.l.b16 %v5668
    %v6037 = vunpack.c.h.b16 %v5668
    %v6038 = vunpack.c.l.b16 %v5669
    %v6039 = vunpack.c.h.b16 %v5669
    %v6040 = vunpack.c.l.b16 %v5670
    %v6041 = vunpack.c.h.b16 %v5670
    %v6042 = vunpack.c.l.b16 %v5671
    %v6043 = vunpack.c.h.b16 %v5671
    %v6044 = vunpack.c.l.b16 %v5672
    %v6045 = vunpack.c.h.b16 %v5672
    %v6046 = vunpack.c.l.b16 %v5673
    %v6047 = vunpack.c.h.b16 %v5673
    %v6048 = vunpack.c.l.b16 %v5674
    %v6049 = vunpack.c.h.b16 %v5674
    %v6050 = vunpack.c.l.b16 %v5675
    %v6051 = vunpack.c.h.b16 %v5675
    %v6052 = vunpack.c.l.b16 %v5676
    %v6053 = vunpack.c.h.b16 %v5676
    %v6054 = vunpack.c.l.b16 %v5677
    %v6055 = vunpack.c.h.b16 %v5677
    %v6056 = vunpack.c.l.b16 %v5678
    %v6057 = vunpack.c.h.b16 %v5678
    %v6058 = vunpack.c.l.b16 %v5679
    %v6059 = vunpack.c.h.b16 %v5679
    %v6060 = vunpack.c.l.b16 %v5680
    %v6061 = vunpack.c.h.b16 %v5680
    %v6062 = vunpack.c.l.b16 %v5681
    %v6063 = vunpack.c.h.b16 %v5681
    %v6064 = vunpack.c.l.b16 %v5682
    %v6065 = vunpack.c.h.b16 %v5682
    %v6066 = vunpack.c.l.b16 %v5683
    %v6067 = vunpack.c.h.b16 %v5683
    %v6068 = vpack.c.b16 %v5820, %v5812
    %v6069 = vpack.c.b16 %v5821, %v5813
    %v6070 = vpack.c.b16 %v5822, %v5814
    %v6071 = vpack.c.b16 %v5823, %v5815
    %v6072 = vpack.c.b16 %v5824, %v5816
    %v6073 = vpack.c.b16 %v5825, %v5817
    %v6074 = vpack.c.b16 %v5826, %v5818
    %v6075 = vpack.c.b16 %v5827, %v5819
    %v6076 = vpack.c.b16 %v5836, %v5828
    %v6077 = vpack.c.b16 %v5837, %v5829
    %v6078 = vpack.c.b16 %v5838, %v5830
    %v6079 = vpack.c.b16 %v5839, %v5831
    %v6080 = vpack.c.b16 %v5840, %v5832
    %v6081 = vpack.c.b16 %v5841, %v5833
    %v6082 = vpack.c.b16 %v5842, %v5834
    %v6083 = vpack.c.b16 %v5843, %v5835
    %v6084 = vpack.c.b16 %v5852, %v5844
    %v6085 = vpack.c.b16 %v5853, %v5845
    %v6086 = vpack.c.b16 %v5854, %v5846
    %v6087 = vpack.c.b16 %v5855, %v5847
    %v6088 = vpack.c.b16 %v5856, %v5848
    %v6089 = vpack.c.b16 %v5857, %v5849
    %v6090 = vpack.c.b16 %v5858, %v5850
    %v6091 = vpack.c.b16 %v5859, %v5851
    %v6092 = vpack.c.b16 %v5868, %v5860
    %v6093 = vpack.c.b16 %v5869, %v5861
    %v6094 = vpack.c.b16 %v5870, %v5862
    %v6095 = vpack.c.b16 %v5871, %v5863
    %v6096 = vpack.c.b16 %v5872, %v5864
    %v6097 = vpack.c.b16 %v5873, %v5865
    %v6098 = vpack.c.b16 %v5874, %v5866
    %v6099 = vpack.c.b16 %v5875, %v5867
    %v6100 = vpack.c.b16 %v5884, %v5876
    %v6101 = vpack.c.b16 %v5885, %v5877
    %v6102 = vpack.c.b16 %v5886, %v5878
    %v6103 = vpack.c.b16 %v5887, %v5879
    %v6104 = vpack.c.b16 %v5888, %v5880
    %v6105 = vpack.c.b16 %v5889, %v5881
    %v6106 = vpack.c.b16 %v5890, %v5882
    %v6107 = vpack.c.b16 %v5891, %v5883
    %v6108 = vpack.c.b16 %v5900, %v5892
    %v6109 = vpack.c.b16 %v5901, %v5893
    %v6110 = vpack.c.b16 %v5902, %v5894
    %v6111 = vpack.c.b16 %v5903, %v5895
    %v6112 = vpack.c.b16 %v5904, %v5896
    %v6113 = vpack.c.b16 %v5905, %v5897
    %v6114 = vpack.c.b16 %v5906, %v5898
    %v6115 = vpack.c.b16 %v5907, %v5899
    %v6116 = vpack.c.b16 %v5916, %v5908
    %v6117 = vpack.c.b16 %v5917, %v5909
    %v6118 = vpack.c.b16 %v5918, %v5910
    %v6119 = vpack.c.b16 %v5919, %v5911
    %v6120 = vpack.c.b16 %v5920, %v5912
    %v6121 = vpack.c.b16 %v5921, %v5913
    %v6122 = vpack.c.b16 %v5922, %v5914
    %v6123 = vpack.c.b16 %v5923, %v5915
    %v6124 = vpack.c.b16 %v5932, %v5924
    %v6125 = vpack.c.b16 %v5933, %v5925
    %v6126 = vpack.c.b16 %v5934, %v5926
    %v6127 = vpack.c.b16 %v5935, %v5927
    %v6128 = vpack.c.b16 %v5936, %v5928
    %v6129 = vpack.c.b16 %v5937, %v5929
    %v6130 = vpack.c.b16 %v5938, %v5930
    %v6131 = vpack.c.b16 %v5939, %v5931
    %v6132 = vpack.c.b16 %v5948, %v5940
    %v6133 = vpack.c.b16 %v5949, %v5941
    %v6134 = vpack.c.b16 %v5950, %v5942
    %v6135 = vpack.c.b16 %v5951, %v5943
    %v6136 = vpack.c.b16 %v5952, %v5944
    %v6137 = vpack.c.b16 %v5953, %v5945
    %v6138 = vpack.c.b16 %v5954, %v5946
    %v6139 = vpack.c.b16 %v5955, %v5947
    %v6140 = vpack.c.b16 %v5964, %v5956
    %v6141 = vpack.c.b16 %v5965, %v5957
    %v6142 = vpack.c.b16 %v5966, %v5958
    %v6143 = vpack.c.b16 %v5967, %v5959
    %v6144 = vpack.c.b16 %v5968, %v5960
    %v6145 = vpack.c.b16 %v5969, %v5961
    %v6146 = vpack.c.b16 %v5970, %v5962
    %v6147 = vpack.c.b16 %v5971, %v5963
    %v6148 = vpack.c.b16 %v5980, %v5972
    %v6149 = vpack.c.b16 %v5981, %v5973
    %v6150 = vpack.c.b16 %v5982, %v5974
    %v6151 = vpack.c.b16 %v5983, %v5975
    %v6152 = vpack.c.b16 %v5984, %v5976
    %v6153 = vpack.c.b16 %v5985, %v5977
    %v6154 = vpack.c.b16 %v5986, %v5978
    %v6155 = vpack.c.b16 %v5987, %v5979
    %v6156 = vpack.c.b16 %v5996, %v5988
    %v6157 = vpack.c.b16 %v5997, %v5989
    %v6158 = vpack.c.b16 %v5998, %v5990
    %v6159 = vpack.c.b16 %v5999, %v5991
    %v6160 = vpack.c.b16 %v6000, %v5992
    %v6161 = vpack.c.b16 %v6001, %v5993
    %v6162 = vpack.c.b16 %v6002, %v5994
    %v6163 = vpack.c.b16 %v6003, %v5995
    %v6164 = vpack.c.b16 %v6012, %v6004
    %v6165 = vpack.c.b16 %v6013, %v6005
    %v6166 = vpack.c.b16 %v6014, %v6006
    %v6167 = vpack.c.b16 %v6015, %v6007
    %v6168 = vpack.c.b16 %v6016, %v6008
    %v6169 = vpack.c.b16 %v6017, %v6009
    %v6170 = vpack.c.b16 %v6018, %v6010
    %v6171 = vpack.c.b16 %v6019, %v6011
    %v6172 = vpack.c.b16 %v6028, %v6020
    %v6173 = vpack.c.b16 %v6029, %v6021
    %v6174 = vpack.c.b16 %v6030, %v6022
    %v6175 = vpack.c.b16 %v6031, %v6023
    %v6176 = vpack.c.b16 %v6032, %v6024
    %v6177 = vpack.c.b16 %v6033, %v6025
    %v6178 = vpack.c.b16 %v6034, %v6026
    %v6179 = vpack.c.b16 %v6035, %v6027
    %v6180 = vpack.c.b16 %v6044, %v6036
    %v6181 = vpack.c.b16 %v6045, %v6037
    %v6182 = vpack.c.b16 %v6046, %v6038
    %v6183 = vpack.c.b16 %v6047, %v6039
    %v6184 = vpack.c.b16 %v6048, %v6040
    %v6185 = vpack.c.b16 %v6049, %v6041
    %v6186 = vpack.c.b16 %v6050, %v6042
    %v6187 = vpack.c.b16 %v6051, %v6043
    %v6188 = vpack.c.b16 %v6060, %v6052
    %v6189 = vpack.c.b16 %v6061, %v6053
    %v6190 = vpack.c.b16 %v6062, %v6054
    %v6191 = vpack.c.b16 %v6063, %v6055
    %v6192 = vpack.c.b16 %v6064, %v6056
    %v6193 = vpack.c.b16 %v6065, %v6057
    %v6194 = vpack.c.b16 %v6066, %v6058
    %v6195 = vpack.c.b16 %v6067, %v6059
    %6324 = vmatprep.subr.bf16.mxu0 %v6125
    %6325 = vmatpush1.bf16.msra.mxu0 %v6124
    %6326 = vmatprep.subr.bf16.mxu0 %v6117
    %6327 = vmatpush1.bf16.msra.mxu0 %v6116
    %6328 = vmatprep.subr.bf16.mxu0 %v6109
    %6329 = vmatpush1.bf16.msra.mxu0 %v6108
    %6330 = vmatprep.subr.bf16.mxu0 %v6101
    %6331 = vmatpush1.bf16.msra.mxu0 %v6100
    %6332 = vmatprep.subr.bf16.mxu0 %v6093
    %6333 = vmatpush1.bf16.msra.mxu0 %v6092
    %6334 = vmatprep.subr.bf16.mxu0 %v6085
    %6335 = vmatpush1.bf16.msra.mxu0 %v6084
    %6336 = vmatprep.subr.bf16.mxu0 %v6077
    %6337 = vmatpush1.bf16.msra.mxu0 %v6076
    %6338 = vmatprep.subr.bf16.mxu0 %v6069
    %6339 = vmatpush1.bf16.msra.mxu0 %v6068
    %6340 = vmatprep.subr.bf16.mxu0 %v6189
    %6341 = vmatpush2.bf16.msra.mxu0 %v6188
    %6342 = vmatprep.subr.bf16.mxu0 %v6181
    %6343 = vmatpush2.bf16.msra.mxu0 %v6180
    %6344 = vmatprep.subr.bf16.mxu0 %v6173
    %6345 = vmatpush2.bf16.msra.mxu0 %v6172
    %6346 = vmatprep.subr.bf16.mxu0 %v6165
    %6347 = vmatpush2.bf16.msra.mxu0 %v6164
    %6348 = vmatprep.subr.bf16.mxu0 %v6157
    %6349 = vmatpush2.bf16.msra.mxu0 %v6156
    %6350 = vmatprep.subr.bf16.mxu0 %v6149
    %6351 = vmatpush2.bf16.msra.mxu0 %v6148
    %6352 = vmatprep.subr.bf16.mxu0 %v6141
    %6353 = vmatpush2.bf16.msra.mxu0 %v6140
    %6354 = vmatprep.subr.bf16.mxu0 %v6133
    %6355 = vmatpush2.bf16.msra.mxu0 %v6132
    %6356 = vmatprep.mubr.bf16.mxu0 %v5543
    %6357 = vmatmul.mubr.bf16.gmra.mxu0 %v5530
    %v6358 = vpop.f32.mrf.mxu0
    %v6359 = vadd.f32 0.0, %v6358
    %v6360 = vpop.f32.mrf.mxu0
    %v6361 = vadd.f32 0.0, %v6360
    %v6362 = vpop.f32.mrf.mxu0
    %v6363 = vadd.f32 0.0, %v6362
    %v6364 = vpop.f32.mrf.mxu0
    %v6365 = vadd.f32 0.0, %v6364
    %6366 = vdwg.mxu0
    %6367 = vmatprep.subr.bf16.mxu0 %v6127
    %6368 = vmatpush1.bf16.msra.mxu0 %v6126
    %6369 = vmatprep.subr.bf16.mxu0 %v6119
    %6370 = vmatpush1.bf16.msra.mxu0 %v6118
    %6371 = vmatprep.subr.bf16.mxu0 %v6111
    %6372 = vmatpush1.bf16.msra.mxu0 %v6110
    %6373 = vmatprep.subr.bf16.mxu0 %v6103
    %6374 = vmatpush1.bf16.msra.mxu0 %v6102
    %6375 = vmatprep.subr.bf16.mxu0 %v6095
    %6376 = vmatpush1.bf16.msra.mxu0 %v6094
    %6377 = vmatprep.subr.bf16.mxu0 %v6087
    %6378 = vmatpush1.bf16.msra.mxu0 %v6086
    %6379 = vmatprep.subr.bf16.mxu0 %v6079
    %6380 = vmatpush1.bf16.msra.mxu0 %v6078
    %6381 = vmatprep.subr.bf16.mxu0 %v6071
    %6382 = vmatpush1.bf16.msra.mxu0 %v6070
    %6383 = vmatprep.subr.bf16.mxu0 %v6191
    %6384 = vmatpush2.bf16.msra.mxu0 %v6190
    %6385 = vmatprep.subr.bf16.mxu0 %v6183
    %6386 = vmatpush2.bf16.msra.mxu0 %v6182
    %6387 = vmatprep.subr.bf16.mxu0 %v6175
    %6388 = vmatpush2.bf16.msra.mxu0 %v6174
    %6389 = vmatprep.subr.bf16.mxu0 %v6167
    %6390 = vmatpush2.bf16.msra.mxu0 %v6166
    %6391 = vmatprep.subr.bf16.mxu0 %v6159
    %6392 = vmatpush2.bf16.msra.mxu0 %v6158
    %6393 = vmatprep.subr.bf16.mxu0 %v6151
    %6394 = vmatpush2.bf16.msra.mxu0 %v6150
    %6395 = vmatprep.subr.bf16.mxu0 %v6143
    %6396 = vmatpush2.bf16.msra.mxu0 %v6142
    %6397 = vmatprep.subr.bf16.mxu0 %v6135
    %6398 = vmatpush2.bf16.msra.mxu0 %v6134
    %6399 = vmatprep.mubr.bf16.mxu0 %v5543
    %6400 = vmatmul.mubr.bf16.gmra.mxu0 %v5530
    %v6401 = vpop.f32.mrf.mxu0
    %v6402 = vadd.f32 0.0, %v6401
    %v6403 = vpop.f32.mrf.mxu0
    %v6404 = vadd.f32 0.0, %v6403
    %v6405 = vpop.f32.mrf.mxu0
    %v6406 = vadd.f32 0.0, %v6405
    %v6407 = vpop.f32.mrf.mxu0
    %v6408 = vadd.f32 0.0, %v6407
    %6409 = vdwg.mxu0
    %6410 = vmatprep.subr.bf16.mxu0 %v6129
    %6411 = vmatpush1.bf16.msra.mxu0 %v6128
    %6412 = vmatprep.subr.bf16.mxu0 %v6121
    %6413 = vmatpush1.bf16.msra.mxu0 %v6120
    %6414 = vmatprep.subr.bf16.mxu0 %v6113
    %6415 = vmatpush1.bf16.msra.mxu0 %v6112
    %6416 = vmatprep.subr.bf16.mxu0 %v6105
    %6417 = vmatpush1.bf16.msra.mxu0 %v6104
    %6418 = vmatprep.subr.bf16.mxu0 %v6097
    %6419 = vmatpush1.bf16.msra.mxu0 %v6096
    %6420 = vmatprep.subr.bf16.mxu0 %v6089
    %6421 = vmatpush1.bf16.msra.mxu0 %v6088
    %6422 = vmatprep.subr.bf16.mxu0 %v6081
    %6423 = vmatpush1.bf16.msra.mxu0 %v6080
    %6424 = vmatprep.subr.bf16.mxu0 %v6073
    %6425 = vmatpush1.bf16.msra.mxu0 %v6072
    %6426 = vmatprep.subr.bf16.mxu0 %v6193
    %6427 = vmatpush2.bf16.msra.mxu0 %v6192
    %6428 = vmatprep.subr.bf16.mxu0 %v6185
    %6429 = vmatpush2.bf16.msra.mxu0 %v6184
    %6430 = vmatprep.subr.bf16.mxu0 %v6177
    %6431 = vmatpush2.bf16.msra.mxu0 %v6176
    %6432 = vmatprep.subr.bf16.mxu0 %v6169
    %6433 = vmatpush2.bf16.msra.mxu0 %v6168
    %6434 = vmatprep.subr.bf16.mxu0 %v6161
    %6435 = vmatpush2.bf16.msra.mxu0 %v6160
    %6436 = vmatprep.subr.bf16.mxu0 %v6153
    %6437 = vmatpush2.bf16.msra.mxu0 %v6152
    %6438 = vmatprep.subr.bf16.mxu0 %v6145
    %6439 = vmatpush2.bf16.msra.mxu0 %v6144
    %6440 = vmatprep.subr.bf16.mxu0 %v6137
    %6441 = vmatpush2.bf16.msra.mxu0 %v6136
    %6442 = vmatprep.mubr.bf16.mxu0 %v5543
    %6443 = vmatmul.mubr.bf16.gmra.mxu0 %v5530
    %v6444 = vpop.f32.mrf.mxu0
    %v6445 = vadd.f32 0.0, %v6444
    %v6446 = vpop.f32.mrf.mxu0
    %v6447 = vadd.f32 0.0, %v6446
    %v6448 = vpop.f32.mrf.mxu0
    %v6449 = vadd.f32 0.0, %v6448
    %v6450 = vpop.f32.mrf.mxu0
    %v6451 = vadd.f32 0.0, %v6450
    %6452 = vdwg.mxu0
    %6453 = vmatprep.subr.bf16.mxu0 %v6131
    %6454 = vmatpush1.bf16.msra.mxu0 %v6130
    %6455 = vmatprep.subr.bf16.mxu0 %v6123
    %6456 = vmatpush1.bf16.msra.mxu0 %v6122
    %6457 = vmatprep.subr.bf16.mxu0 %v6115
    %6458 = vmatpush1.bf16.msra.mxu0 %v6114
    %6459 = vmatprep.subr.bf16.mxu0 %v6107
    %6460 = vmatpush1.bf16.msra.mxu0 %v6106
    %6461 = vmatprep.subr.bf16.mxu0 %v6099
    %6462 = vmatpush1.bf16.msra.mxu0 %v6098
    %6463 = vmatprep.subr.bf16.mxu0 %v6091
    %6464 = vmatpush1.bf16.msra.mxu0 %v6090
    %6465 = vmatprep.subr.bf16.mxu0 %v6083
    %6466 = vmatpush1.bf16.msra.mxu0 %v6082
    %6467 = vmatprep.subr.bf16.mxu0 %v6075
    %6468 = vmatpush1.bf16.msra.mxu0 %v6074
    %6469 = vmatprep.subr.bf16.mxu0 %v6195
    %6470 = vmatpush2.bf16.msra.mxu0 %v6194
    %6471 = vmatprep.subr.bf16.mxu0 %v6187
    %6472 = vmatpush2.bf16.msra.mxu0 %v6186
    %6473 = vmatprep.subr.bf16.mxu0 %v6179
    %6474 = vmatpush2.bf16.msra.mxu0 %v6178
    %6475 = vmatprep.subr.bf16.mxu0 %v6171
    %6476 = vmatpush2.bf16.msra.mxu0 %v6170
    %6477 = vmatprep.subr.bf16.mxu0 %v6163
    %6478 = vmatpush2.bf16.msra.mxu0 %v6162
    %6479 = vmatprep.subr.bf16.mxu0 %v6155
    %6480 = vmatpush2.bf16.msra.mxu0 %v6154
    %6481 = vmatprep.subr.bf16.mxu0 %v6147
    %6482 = vmatpush2.bf16.msra.mxu0 %v6146
    %6483 = vmatprep.subr.bf16.mxu0 %v6139
    %6484 = vmatpush2.bf16.msra.mxu0 %v6138
    %6485 = vmatprep.mubr.bf16.mxu0 %v5543
    %6486 = vmatmul.mubr.bf16.gmra.mxu0 %v5530
    %v6487 = vpop.f32.mrf.mxu0
    %v6488 = vadd.f32 0.0, %v6487
    %v6489 = vpop.f32.mrf.mxu0
    %v6490 = vadd.f32 0.0, %v6489
    %v6491 = vpop.f32.mrf.mxu0
    %v6492 = vadd.f32 0.0, %v6491
    %v6493 = vpop.f32.mrf.mxu0
    %v6494 = vadd.f32 0.0, %v6493
    %6495 = vdwg.mxu0
    %v6496 = vld [vmem:[%s5413] sm:$0xff]
    %v6497 = vld [vmem:[%s5413 + $0x8] sm:$0xff]
    %v6498 = vld [vmem:[%s5413 + $0x20] sm:$0xff]
    %v6499 = vld [vmem:[%s5413 + $0x28] sm:$0xff]
    %v6500 = vunpack.c.l.bf16 %v6496
    %v6501 = vunpack.c.h.bf16 %v6496
    %v6502 = vunpack.c.l.bf16 %v6497
    %v6503 = vunpack.c.h.bf16 %v6497
    %v6504 = vunpack.c.l.bf16 %v6498
    %v6505 = vunpack.c.h.bf16 %v6498
    %v6506 = vunpack.c.l.bf16 %v6499
    %v6507 = vunpack.c.h.bf16 %v6499
    %v6508 = vadd.f32 %v6500, %v6359
    %v6509 = vadd.f32 %v6501, %v6361
    %v6510 = vadd.f32 %v6502, %v6402
    %v6511 = vadd.f32 %v6503, %v6404
    %v6512 = vadd.f32 %v6504, %v6363
    %v6513 = vadd.f32 %v6505, %v6365
    %v6514 = vadd.f32 %v6506, %v6406
    %v6515 = vadd.f32 %v6507, %v6408
    %v6516 = vld [vmem:[%s5390 + $0x10] sm:$0xff]
    %v6517 = vld [vmem:[%s5390 + $0x18] sm:$0xff]
    %v6518 = vld [vmem:[%s5390 + $0x30] sm:$0xff]
    %v6519 = vld [vmem:[%s5390 + $0x38] sm:$0xff]
    %v6520 = vunpack.c.l.bf16 %v6516
    %v6521 = vunpack.c.h.bf16 %v6516
    %v6522 = vunpack.c.l.bf16 %v6517
    %v6523 = vunpack.c.h.bf16 %v6517
    %v6524 = vunpack.c.l.bf16 %v6518
    %v6525 = vunpack.c.h.bf16 %v6518
    %v6526 = vunpack.c.l.bf16 %v6519
    %v6527 = vunpack.c.h.bf16 %v6519
    %v6528 = vadd.f32 %v6520, %v6445
    %v6529 = vadd.f32 %v6521, %v6447
    %v6530 = vadd.f32 %v6522, %v6488
    %v6531 = vadd.f32 %v6523, %v6490
    %v6532 = vadd.f32 %v6524, %v6449
    %v6533 = vadd.f32 %v6525, %v6451
    %v6534 = vadd.f32 %v6526, %v6492
    %v6535 = vadd.f32 %v6527, %v6494
    %v6536 = vxor.u32 %v6508, 2147483648
    %v6537 = vxor.u32 %v6512, 2147483648
    %v6538 = vmul.f32 %v6536, 1.442695
    %v6539 = vpow.pop %v6538
    %v6540 = vmul.f32 %v6537, 1.442695
    %v6541 = vpow.pop %v6540
    %v6542 = vadd.f32 %v6539, 1.0
    %v6543 = vadd.f32 %v6541, 1.0
    %v6544 = vrcp.pop %v6542
    %v6545 = vmul.f32 1.0, %v6544
    %v6546 = vrcp.pop %v6543
    %v6547 = vmul.f32 1.0, %v6546
    %v6548 = vxor.u32 %v6509, 2147483648
    %v6549 = vxor.u32 %v6513, 2147483648
    %v6550 = vmul.f32 %v6548, 1.442695
    %v6551 = vpow.pop %v6550
    %v6552 = vmul.f32 %v6549, 1.442695
    %v6553 = vpow.pop %v6552
    %v6554 = vadd.f32 %v6551, 1.0
    %v6555 = vadd.f32 %v6553, 1.0
    %v6556 = vrcp.pop %v6554
    %v6557 = vmul.f32 1.0, %v6556
    %v6558 = vrcp.pop %v6555
    %v6559 = vmul.f32 1.0, %v6558
    %v6560 = vtanh.pop %v6510
    %v6561 = vtanh.pop %v6514
    %v6562 = vxor.u32 %v6511, 2147483648
    %v6563 = vxor.u32 %v6515, 2147483648
    %v6564 = vmul.f32 %v6562, 1.442695
    %v6565 = vpow.pop %v6564
    %v6566 = vmul.f32 %v6563, 1.442695
    %v6567 = vpow.pop %v6566
    %v6568 = vadd.f32 %v6565, 1.0
    %v6569 = vadd.f32 %v6567, 1.0
    %v6570 = vrcp.pop %v6568
    %v6571 = vmul.f32 1.0, %v6570
    %v6572 = vrcp.pop %v6569
    %v6573 = vmul.f32 1.0, %v6572
    %v6574 = vmul.f32 %v6557, %v5476
    %v6575 = vmul.f32 %v6559, %v5477
    %v6576 = vmul.f32 %v6545, %v6560
    %v6577 = vmul.f32 %v6547, %v6561
    %v6578 = vadd.f32 %v6574, %v6576
    %v6579 = vadd.f32 %v6575, %v6577
    %v6580 = vtanh.pop %v6578
    %v6581 = vtanh.pop %v6579
    %v6582 = vmul.f32 %v6571, %v6580
    %v6583 = vmul.f32 %v6573, %v6581
    %v6584 = vxor.u32 %v6528, 2147483648
    %v6585 = vxor.u32 %v6532, 2147483648
    %v6586 = vmul.f32 %v6584, 1.442695
    %v6587 = vpow.pop %v6586
    %v6588 = vmul.f32 %v6585, 1.442695
    %v6589 = vpow.pop %v6588
    %v6590 = vadd.f32 %v6587, 1.0
    %v6591 = vadd.f32 %v6589, 1.0
    %v6592 = vrcp.pop %v6590
    %v6593 = vmul.f32 1.0, %v6592
    %v6594 = vrcp.pop %v6591
    %v6595 = vmul.f32 1.0, %v6594
    %v6596 = vxor.u32 %v6529, 2147483648
    %v6597 = vxor.u32 %v6533, 2147483648
    %v6598 = vmul.f32 %v6596, 1.442695
    %v6599 = vpow.pop %v6598
    %v6600 = vmul.f32 %v6597, 1.442695
    %v6601 = vpow.pop %v6600
    %v6602 = vadd.f32 %v6599, 1.0
    %v6603 = vadd.f32 %v6601, 1.0
    %v6604 = vrcp.pop %v6602
    %v6605 = vmul.f32 1.0, %v6604
    %v6606 = vrcp.pop %v6603
    %v6607 = vmul.f32 1.0, %v6606
    %v6608 = vtanh.pop %v6530
    %v6609 = vtanh.pop %v6534
    %v6610 = vxor.u32 %v6531, 2147483648
    %v6611 = vxor.u32 %v6535, 2147483648
    %v6612 = vmul.f32 %v6610, 1.442695
    %v6613 = vpow.pop %v6612
    %v6614 = vmul.f32 %v6611, 1.442695
    %v6615 = vpow.pop %v6614
    %v6616 = vadd.f32 %v6613, 1.0
    %v6617 = vadd.f32 %v6615, 1.0
    %v6618 = vrcp.pop %v6616
    %v6619 = vmul.f32 1.0, %v6618
    %v6620 = vrcp.pop %v6617
    %v6621 = vmul.f32 1.0, %v6620
    %v6622 = vmul.f32 %v6605, %v5524
    %v6623 = vmul.f32 %v6607, %v5525
    %v6624 = vmul.f32 %v6593, %v6608
    %v6625 = vmul.f32 %v6595, %v6609
    %v6626 = vadd.f32 %v6622, %v6624
    %v6627 = vadd.f32 %v6623, %v6625
    %v6628 = vtanh.pop %v6626
    %v6629 = vtanh.pop %v6627
    %v6630 = vmul.f32 %v6619, %v6628
    %v6631 = vmul.f32 %v6621, %v6629
    %v6632 = vpack.c.bf16 %v6583, %v6582
    %v6634 = vunpack.c.l.b16 %v6632
    %v6635 = vunpack.c.h.b16 %v6632
    %v6636 = vpack.c.b16 %v6634, %v6634
    %v6637 = vpack.c.b16 %v6635, %v6635
    %6640 = vst [vmem:[%s5553] sm:$0xf] %v6636
    %6641 = vst [vmem:[%s5553 + $0x8] sm:$0xf] %v6637
    %v6642 = vpack.c.bf16 %v6631, %v6630
    %v6644 = vunpack.c.l.b16 %v6642
    %v6645 = vunpack.c.h.b16 %v6642
    %v6646 = vpack.c.b16 %v6644, %v6644
    %v6647 = vpack.c.b16 %v6645, %v6645
    %6650 = vst [vmem:[%s5540 + $0x4] sm:$0xf] %v6646
    %6651 = vst [vmem:[%s5540 + $0xc] sm:$0xf] %v6647
    %v6652 = vld [vmem:[#allocation4] sm:$0xff]
    %v6653 = vld [vmem:[#allocation4 + $0x8] sm:$0xff]
    %v6654 = vld [vmem:[#allocation4 + $0x10] sm:$0xff]
    %v6655 = vld [vmem:[#allocation4 + $0x18] sm:$0xff]
    %v6656 = vld [vmem:[#allocation4 + $0x20] sm:$0xff]
    %v6657 = vld [vmem:[#allocation4 + $0x28] sm:$0xff]
    %v6658 = vld [vmem:[#allocation4 + $0x30] sm:$0xff]
    %v6659 = vld [vmem:[#allocation4 + $0x38] sm:$0xff]
    %v6660 = vld [vmem:[#allocation4 + $0x40] sm:$0xff]
    %v6661 = vld [vmem:[#allocation4 + $0x48] sm:$0xff]
    %v6662 = vld [vmem:[#allocation4 + $0x50] sm:$0xff]
    %v6663 = vld [vmem:[#allocation4 + $0x58] sm:$0xff]
    %v6664 = vld [vmem:[#allocation4 + $0x60] sm:$0xff]
    %v6665 = vld [vmem:[#allocation4 + $0x68] sm:$0xff]
    %v6666 = vld [vmem:[#allocation4 + $0x70] sm:$0xff]
    %v6667 = vld [vmem:[#allocation4 + $0x78] sm:$0xff]
    %v6668 = vld [vmem:[#allocation4 + $0x80] sm:$0xff]
    %v6669 = vld [vmem:[#allocation4 + $0x88] sm:$0xff]
    %v6670 = vld [vmem:[#allocation4 + $0x90] sm:$0xff]
    %v6671 = vld [vmem:[#allocation4 + $0x98] sm:$0xff]
    %v6672 = vld [vmem:[#allocation4 + $0xa0] sm:$0xff]
    %v6673 = vld [vmem:[#allocation4 + $0xa8] sm:$0xff]
    %v6674 = vld [vmem:[#allocation4 + $0xb0] sm:$0xff]
    %v6675 = vld [vmem:[#allocation4 + $0xb8] sm:$0xff]
    %v6676 = vld [vmem:[#allocation4 + $0xc0] sm:$0xff]
    %v6677 = vld [vmem:[#allocation4 + $0xc8] sm:$0xff]
    %v6678 = vld [vmem:[#allocation4 + $0xd0] sm:$0xff]
    %v6679 = vld [vmem:[#allocation4 + $0xd8] sm:$0xff]
    %v6680 = vld [vmem:[#allocation4 + $0xe0] sm:$0xff]
    %v6681 = vld [vmem:[#allocation4 + $0xe8] sm:$0xff]
    %v6682 = vld [vmem:[#allocation4 + $0xf0] sm:$0xff]
    %v6683 = vld [vmem:[#allocation4 + $0xf8] sm:$0xff]
    %v6684 = vld [vmem:[#allocation4 + $0x100] sm:$0xff]
    %v6685 = vld [vmem:[#allocation4 + $0x108] sm:$0xff]
    %v6686 = vld [vmem:[#allocation4 + $0x110] sm:$0xff]
    %v6687 = vld [vmem:[#allocation4 + $0x118] sm:$0xff]
    %v6688 = vld [vmem:[#allocation4 + $0x120] sm:$0xff]
    %v6689 = vld [vmem:[#allocation4 + $0x128] sm:$0xff]
    %v6690 = vld [vmem:[#allocation4 + $0x130] sm:$0xff]
    %v6691 = vld [vmem:[#allocation4 + $0x138] sm:$0xff]
    %v6692 = vld [vmem:[#allocation4 + $0x140] sm:$0xff]
    %v6693 = vld [vmem:[#allocation4 + $0x148] sm:$0xff]
    %v6694 = vld [vmem:[#allocation4 + $0x150] sm:$0xff]
    %v6695 = vld [vmem:[#allocation4 + $0x158] sm:$0xff]
    %v6696 = vld [vmem:[#allocation4 + $0x160] sm:$0xff]
    %v6697 = vld [vmem:[#allocation4 + $0x168] sm:$0xff]
    %v6698 = vld [vmem:[#allocation4 + $0x170] sm:$0xff]
    %v6699 = vld [vmem:[#allocation4 + $0x178] sm:$0xff]
    %v6700 = vld [vmem:[#allocation4 + $0x180] sm:$0xff]
    %v6701 = vld [vmem:[#allocation4 + $0x188] sm:$0xff]
    %v6702 = vld [vmem:[#allocation4 + $0x190] sm:$0xff]
    %v6703 = vld [vmem:[#allocation4 + $0x198] sm:$0xff]
    %v6704 = vld [vmem:[#allocation4 + $0x1a0] sm:$0xff]
    %v6705 = vld [vmem:[#allocation4 + $0x1a8] sm:$0xff]
    %v6706 = vld [vmem:[#allocation4 + $0x1b0] sm:$0xff]
    %v6707 = vld [vmem:[#allocation4 + $0x1b8] sm:$0xff]
    %v6708 = vld [vmem:[#allocation4 + $0x1c0] sm:$0xff]
    %v6709 = vld [vmem:[#allocation4 + $0x1c8] sm:$0xff]
    %v6710 = vld [vmem:[#allocation4 + $0x1d0] sm:$0xff]
    %v6711 = vld [vmem:[#allocation4 + $0x1d8] sm:$0xff]
    %v6712 = vld [vmem:[#allocation4 + $0x1e0] sm:$0xff]
    %v6713 = vld [vmem:[#allocation4 + $0x1e8] sm:$0xff]
    %v6714 = vld [vmem:[#allocation4 + $0x1f0] sm:$0xff]
    %v6715 = vld [vmem:[#allocation4 + $0x1f8] sm:$0xff]
    %v6716 = vld [vmem:[#allocation4 + $0x200] sm:$0xff]
    %v6717 = vld [vmem:[#allocation4 + $0x208] sm:$0xff]
    %v6718 = vld [vmem:[#allocation4 + $0x210] sm:$0xff]
    %v6719 = vld [vmem:[#allocation4 + $0x218] sm:$0xff]
    %v6720 = vld [vmem:[#allocation4 + $0x220] sm:$0xff]
    %v6721 = vld [vmem:[#allocation4 + $0x228] sm:$0xff]
    %v6722 = vld [vmem:[#allocation4 + $0x230] sm:$0xff]
    %v6723 = vld [vmem:[#allocation4 + $0x238] sm:$0xff]
    %v6724 = vld [vmem:[#allocation4 + $0x240] sm:$0xff]
    %v6725 = vld [vmem:[#allocation4 + $0x248] sm:$0xff]
    %v6726 = vld [vmem:[#allocation4 + $0x250] sm:$0xff]
    %v6727 = vld [vmem:[#allocation4 + $0x258] sm:$0xff]
    %v6728 = vld [vmem:[#allocation4 + $0x260] sm:$0xff]
    %v6729 = vld [vmem:[#allocation4 + $0x268] sm:$0xff]
    %v6730 = vld [vmem:[#allocation4 + $0x270] sm:$0xff]
    %v6731 = vld [vmem:[#allocation4 + $0x278] sm:$0xff]
    %v6732 = vld [vmem:[#allocation4 + $0x280] sm:$0xff]
    %v6733 = vld [vmem:[#allocation4 + $0x288] sm:$0xff]
    %v6734 = vld [vmem:[#allocation4 + $0x290] sm:$0xff]
    %v6735 = vld [vmem:[#allocation4 + $0x298] sm:$0xff]
    %v6736 = vld [vmem:[#allocation4 + $0x2a0] sm:$0xff]
    %v6737 = vld [vmem:[#allocation4 + $0x2a8] sm:$0xff]
    %v6738 = vld [vmem:[#allocation4 + $0x2b0] sm:$0xff]
    %v6739 = vld [vmem:[#allocation4 + $0x2b8] sm:$0xff]
    %v6740 = vld [vmem:[#allocation4 + $0x2c0] sm:$0xff]
    %v6741 = vld [vmem:[#allocation4 + $0x2c8] sm:$0xff]
    %v6742 = vld [vmem:[#allocation4 + $0x2d0] sm:$0xff]
    %v6743 = vld [vmem:[#allocation4 + $0x2d8] sm:$0xff]
    %v6744 = vld [vmem:[#allocation4 + $0x2e0] sm:$0xff]
    %v6745 = vld [vmem:[#allocation4 + $0x2e8] sm:$0xff]
    %v6746 = vld [vmem:[#allocation4 + $0x2f0] sm:$0xff]
    %v6747 = vld [vmem:[#allocation4 + $0x2f8] sm:$0xff]
    %v6748 = vld [vmem:[#allocation4 + $0x300] sm:$0xff]
    %v6749 = vld [vmem:[#allocation4 + $0x308] sm:$0xff]
    %v6750 = vld [vmem:[#allocation4 + $0x310] sm:$0xff]
    %v6751 = vld [vmem:[#allocation4 + $0x318] sm:$0xff]
    %v6752 = vld [vmem:[#allocation4 + $0x320] sm:$0xff]
    %v6753 = vld [vmem:[#allocation4 + $0x328] sm:$0xff]
    %v6754 = vld [vmem:[#allocation4 + $0x330] sm:$0xff]
    %v6755 = vld [vmem:[#allocation4 + $0x338] sm:$0xff]
    %v6756 = vld [vmem:[#allocation4 + $0x340] sm:$0xff]
    %v6757 = vld [vmem:[#allocation4 + $0x348] sm:$0xff]
    %v6758 = vld [vmem:[#allocation4 + $0x350] sm:$0xff]
    %v6759 = vld [vmem:[#allocation4 + $0x358] sm:$0xff]
    %v6760 = vld [vmem:[#allocation4 + $0x360] sm:$0xff]
    %v6761 = vld [vmem:[#allocation4 + $0x368] sm:$0xff]
    %v6762 = vld [vmem:[#allocation4 + $0x370] sm:$0xff]
    %v6763 = vld [vmem:[#allocation4 + $0x378] sm:$0xff]
    %v6764 = vld [vmem:[#allocation4 + $0x380] sm:$0xff]
    %v6765 = vld [vmem:[#allocation4 + $0x388] sm:$0xff]
    %v6766 = vld [vmem:[#allocation4 + $0x390] sm:$0xff]
    %v6767 = vld [vmem:[#allocation4 + $0x398] sm:$0xff]
    %v6768 = vld [vmem:[#allocation4 + $0x3a0] sm:$0xff]
    %v6769 = vld [vmem:[#allocation4 + $0x3a8] sm:$0xff]
    %v6770 = vld [vmem:[#allocation4 + $0x3b0] sm:$0xff]
    %v6771 = vld [vmem:[#allocation4 + $0x3b8] sm:$0xff]
    %v6772 = vld [vmem:[#allocation4 + $0x3c0] sm:$0xff]
    %v6773 = vld [vmem:[#allocation4 + $0x3c8] sm:$0xff]
    %v6774 = vld [vmem:[#allocation4 + $0x3d0] sm:$0xff]
    %v6775 = vld [vmem:[#allocation4 + $0x3d8] sm:$0xff]
    %v6776 = vld [vmem:[#allocation4 + $0x3e0] sm:$0xff]
    %v6777 = vld [vmem:[#allocation4 + $0x3e8] sm:$0xff]
    %v6778 = vld [vmem:[#allocation4 + $0x3f0] sm:$0xff]
    %v6779 = vld [vmem:[#allocation4 + $0x3f8] sm:$0xff]
    %v6908 = vunpack.c.l.b16 %v6652
    %v6909 = vunpack.c.h.b16 %v6652
    %v6910 = vunpack.c.l.b16 %v6653
    %v6911 = vunpack.c.h.b16 %v6653
    %v6912 = vunpack.c.l.b16 %v6654
    %v6913 = vunpack.c.h.b16 %v6654
    %v6914 = vunpack.c.l.b16 %v6655
    %v6915 = vunpack.c.h.b16 %v6655
    %v6916 = vunpack.c.l.b16 %v6656
    %v6917 = vunpack.c.h.b16 %v6656
    %v6918 = vunpack.c.l.b16 %v6657
    %v6919 = vunpack.c.h.b16 %v6657
    %v6920 = vunpack.c.l.b16 %v6658
    %v6921 = vunpack.c.h.b16 %v6658
    %v6922 = vunpack.c.l.b16 %v6659
    %v6923 = vunpack.c.h.b16 %v6659
    %v6924 = vunpack.c.l.b16 %v6660
    %v6925 = vunpack.c.h.b16 %v6660
    %v6926 = vunpack.c.l.b16 %v6661
    %v6927 = vunpack.c.h.b16 %v6661
    %v6928 = vunpack.c.l.b16 %v6662
    %v6929 = vunpack.c.h.b16 %v6662
    %v6930 = vunpack.c.l.b16 %v6663
    %v6931 = vunpack.c.h.b16 %v6663
    %v6932 = vunpack.c.l.b16 %v6664
    %v6933 = vunpack.c.h.b16 %v6664
    %v6934 = vunpack.c.l.b16 %v6665
    %v6935 = vunpack.c.h.b16 %v6665
    %v6936 = vunpack.c.l.b16 %v6666
    %v6937 = vunpack.c.h.b16 %v6666
    %v6938 = vunpack.c.l.b16 %v6667
    %v6939 = vunpack.c.h.b16 %v6667
    %v6940 = vunpack.c.l.b16 %v6668
    %v6941 = vunpack.c.h.b16 %v6668
    %v6942 = vunpack.c.l.b16 %v6669
    %v6943 = vunpack.c.h.b16 %v6669
    %v6944 = vunpack.c.l.b16 %v6670
    %v6945 = vunpack.c.h.b16 %v6670
    %v6946 = vunpack.c.l.b16 %v6671
    %v6947 = vunpack.c.h.b16 %v6671
    %v6948 = vunpack.c.l.b16 %v6672
    %v6949 = vunpack.c.h.b16 %v6672
    %v6950 = vunpack.c.l.b16 %v6673
    %v6951 = vunpack.c.h.b16 %v6673
    %v6952 = vunpack.c.l.b16 %v6674
    %v6953 = vunpack.c.h.b16 %v6674
    %v6954 = vunpack.c.l.b16 %v6675
    %v6955 = vunpack.c.h.b16 %v6675
    %v6956 = vunpack.c.l.b16 %v6676
    %v6957 = vunpack.c.h.b16 %v6676
    %v6958 = vunpack.c.l.b16 %v6677
    %v6959 = vunpack.c.h.b16 %v6677
    %v6960 = vunpack.c.l.b16 %v6678
    %v6961 = vunpack.c.h.b16 %v6678
    %v6962 = vunpack.c.l.b16 %v6679
    %v6963 = vunpack.c.h.b16 %v6679
    %v6964 = vunpack.c.l.b16 %v6680
    %v6965 = vunpack.c.h.b16 %v6680
    %v6966 = vunpack.c.l.b16 %v6681
    %v6967 = vunpack.c.h.b16 %v6681
    %v6968 = vunpack.c.l.b16 %v6682
    %v6969 = vunpack.c.h.b16 %v6682
    %v6970 = vunpack.c.l.b16 %v6683
    %v6971 = vunpack.c.h.b16 %v6683
    %v6972 = vunpack.c.l.b16 %v6684
    %v6973 = vunpack.c.h.b16 %v6684
    %v6974 = vunpack.c.l.b16 %v6685
    %v6975 = vunpack.c.h.b16 %v6685
    %v6976 = vunpack.c.l.b16 %v6686
    %v6977 = vunpack.c.h.b16 %v6686
    %v6978 = vunpack.c.l.b16 %v6687
    %v6979 = vunpack.c.h.b16 %v6687
    %v6980 = vunpack.c.l.b16 %v6688
    %v6981 = vunpack.c.h.b16 %v6688
    %v6982 = vunpack.c.l.b16 %v6689
    %v6983 = vunpack.c.h.b16 %v6689
    %v6984 = vunpack.c.l.b16 %v6690
    %v6985 = vunpack.c.h.b16 %v6690
    %v6986 = vunpack.c.l.b16 %v6691
    %v6987 = vunpack.c.h.b16 %v6691
    %v6988 = vunpack.c.l.b16 %v6692
    %v6989 = vunpack.c.h.b16 %v6692
    %v6990 = vunpack.c.l.b16 %v6693
    %v6991 = vunpack.c.h.b16 %v6693
    %v6992 = vunpack.c.l.b16 %v6694
    %v6993 = vunpack.c.h.b16 %v6694
    %v6994 = vunpack.c.l.b16 %v6695
    %v6995 = vunpack.c.h.b16 %v6695
    %v6996 = vunpack.c.l.b16 %v6696
    %v6997 = vunpack.c.h.b16 %v6696
    %v6998 = vunpack.c.l.b16 %v6697
    %v6999 = vunpack.c.h.b16 %v6697
    %v7000 = vunpack.c.l.b16 %v6698
    %v7001 = vunpack.c.h.b16 %v6698
    %v7002 = vunpack.c.l.b16 %v6699
    %v7003 = vunpack.c.h.b16 %v6699
    %v7004 = vunpack.c.l.b16 %v6700
    %v7005 = vunpack.c.h.b16 %v6700
    %v7006 = vunpack.c.l.b16 %v6701
    %v7007 = vunpack.c.h.b16 %v6701
    %v7008 = vunpack.c.l.b16 %v6702
    %v7009 = vunpack.c.h.b16 %v6702
    %v7010 = vunpack.c.l.b16 %v6703
    %v7011 = vunpack.c.h.b16 %v6703
    %v7012 = vunpack.c.l.b16 %v6704
    %v7013 = vunpack.c.h.b16 %v6704
    %v7014 = vunpack.c.l.b16 %v6705
    %v7015 = vunpack.c.h.b16 %v6705
    %v7016 = vunpack.c.l.b16 %v6706
    %v7017 = vunpack.c.h.b16 %v6706
    %v7018 = vunpack.c.l.b16 %v6707
    %v7019 = vunpack.c.h.b16 %v6707
    %v7020 = vunpack.c.l.b16 %v6708
    %v7021 = vunpack.c.h.b16 %v6708
    %v7022 = vunpack.c.l.b16 %v6709
    %v7023 = vunpack.c.h.b16 %v6709
    %v7024 = vunpack.c.l.b16 %v6710
    %v7025 = vunpack.c.h.b16 %v6710
    %v7026 = vunpack.c.l.b16 %v6711
    %v7027 = vunpack.c.h.b16 %v6711
    %v7028 = vunpack.c.l.b16 %v6712
    %v7029 = vunpack.c.h.b16 %v6712
    %v7030 = vunpack.c.l.b16 %v6713
    %v7031 = vunpack.c.h.b16 %v6713
    %v7032 = vunpack.c.l.b16 %v6714
    %v7033 = vunpack.c.h.b16 %v6714
    %v7034 = vunpack.c.l.b16 %v6715
    %v7035 = vunpack.c.h.b16 %v6715
    %v7036 = vunpack.c.l.b16 %v6716
    %v7037 = vunpack.c.h.b16 %v6716
    %v7038 = vunpack.c.l.b16 %v6717
    %v7039 = vunpack.c.h.b16 %v6717
    %v7040 = vunpack.c.l.b16 %v6718
    %v7041 = vunpack.c.h.b16 %v6718
    %v7042 = vunpack.c.l.b16 %v6719
    %v7043 = vunpack.c.h.b16 %v6719
    %v7044 = vunpack.c.l.b16 %v6720
    %v7045 = vunpack.c.h.b16 %v6720
    %v7046 = vunpack.c.l.b16 %v6721
    %v7047 = vunpack.c.h.b16 %v6721
    %v7048 = vunpack.c.l.b16 %v6722
    %v7049 = vunpack.c.h.b16 %v6722
    %v7050 = vunpack.c.l.b16 %v6723
    %v7051 = vunpack.c.h.b16 %v6723
    %v7052 = vunpack.c.l.b16 %v6724
    %v7053 = vunpack.c.h.b16 %v6724
    %v7054 = vunpack.c.l.b16 %v6725
    %v7055 = vunpack.c.h.b16 %v6725
    %v7056 = vunpack.c.l.b16 %v6726
    %v7057 = vunpack.c.h.b16 %v6726
    %v7058 = vunpack.c.l.b16 %v6727
    %v7059 = vunpack.c.h.b16 %v6727
    %v7060 = vunpack.c.l.b16 %v6728
    %v7061 = vunpack.c.h.b16 %v6728
    %v7062 = vunpack.c.l.b16 %v6729
    %v7063 = vunpack.c.h.b16 %v6729
    %v7064 = vunpack.c.l.b16 %v6730
    %v7065 = vunpack.c.h.b16 %v6730
    %v7066 = vunpack.c.l.b16 %v6731
    %v7067 = vunpack.c.h.b16 %v6731
    %v7068 = vunpack.c.l.b16 %v6732
    %v7069 = vunpack.c.h.b16 %v6732
    %v7070 = vunpack.c.l.b16 %v6733
    %v7071 = vunpack.c.h.b16 %v6733
    %v7072 = vunpack.c.l.b16 %v6734
    %v7073 = vunpack.c.h.b16 %v6734
    %v7074 = vunpack.c.l.b16 %v6735
    %v7075 = vunpack.c.h.b16 %v6735
    %v7076 = vunpack.c.l.b16 %v6736
    %v7077 = vunpack.c.h.b16 %v6736
    %v7078 = vunpack.c.l.b16 %v6737
    %v7079 = vunpack.c.h.b16 %v6737
    %v7080 = vunpack.c.l.b16 %v6738
    %v7081 = vunpack.c.h.b16 %v6738
    %v7082 = vunpack.c.l.b16 %v6739
    %v7083 = vunpack.c.h.b16 %v6739
    %v7084 = vunpack.c.l.b16 %v6740
    %v7085 = vunpack.c.h.b16 %v6740
    %v7086 = vunpack.c.l.b16 %v6741
    %v7087 = vunpack.c.h.b16 %v6741
    %v7088 = vunpack.c.l.b16 %v6742
    %v7089 = vunpack.c.h.b16 %v6742
    %v7090 = vunpack.c.l.b16 %v6743
    %v7091 = vunpack.c.h.b16 %v6743
    %v7092 = vunpack.c.l.b16 %v6744
    %v7093 = vunpack.c.h.b16 %v6744
    %v7094 = vunpack.c.l.b16 %v6745
    %v7095 = vunpack.c.h.b16 %v6745
    %v7096 = vunpack.c.l.b16 %v6746
    %v7097 = vunpack.c.h.b16 %v6746
    %v7098 = vunpack.c.l.b16 %v6747
    %v7099 = vunpack.c.h.b16 %v6747
    %v7100 = vunpack.c.l.b16 %v6748
    %v7101 = vunpack.c.h.b16 %v6748
    %v7102 = vunpack.c.l.b16 %v6749
    %v7103 = vunpack.c.h.b16 %v6749
    %v7104 = vunpack.c.l.b16 %v6750
    %v7105 = vunpack.c.h.b16 %v6750
    %v7106 = vunpack.c.l.b16 %v6751
    %v7107 = vunpack.c.h.b16 %v6751
    %v7108 = vunpack.c.l.b16 %v6752
    %v7109 = vunpack.c.h.b16 %v6752
    %v7110 = vunpack.c.l.b16 %v6753
    %v7111 = vunpack.c.h.b16 %v6753
    %v7112 = vunpack.c.l.b16 %v6754
    %v7113 = vunpack.c.h.b16 %v6754
    %v7114 = vunpack.c.l.b16 %v6755
    %v7115 = vunpack.c.h.b16 %v6755
    %v7116 = vunpack.c.l.b16 %v6756
    %v7117 = vunpack.c.h.b16 %v6756
    %v7118 = vunpack.c.l.b16 %v6757
    %v7119 = vunpack.c.h.b16 %v6757
    %v7120 = vunpack.c.l.b16 %v6758
    %v7121 = vunpack.c.h.b16 %v6758
    %v7122 = vunpack.c.l.b16 %v6759
    %v7123 = vunpack.c.h.b16 %v6759
    %v7124 = vunpack.c.l.b16 %v6760
    %v7125 = vunpack.c.h.b16 %v6760
    %v7126 = vunpack.c.l.b16 %v6761
    %v7127 = vunpack.c.h.b16 %v6761
    %v7128 = vunpack.c.l.b16 %v6762
    %v7129 = vunpack.c.h.b16 %v6762
    %v7130 = vunpack.c.l.b16 %v6763
    %v7131 = vunpack.c.h.b16 %v6763
    %v7132 = vunpack.c.l.b16 %v6764
    %v7133 = vunpack.c.h.b16 %v6764
    %v7134 = vunpack.c.l.b16 %v6765
    %v7135 = vunpack.c.h.b16 %v6765
    %v7136 = vunpack.c.l.b16 %v6766
    %v7137 = vunpack.c.h.b16 %v6766
    %v7138 = vunpack.c.l.b16 %v6767
    %v7139 = vunpack.c.h.b16 %v6767
    %v7140 = vunpack.c.l.b16 %v6768
    %v7141 = vunpack.c.h.b16 %v6768
    %v7142 = vunpack.c.l.b16 %v6769
    %v7143 = vunpack.c.h.b16 %v6769
    %v7144 = vunpack.c.l.b16 %v6770
    %v7145 = vunpack.c.h.b16 %v6770
    %v7146 = vunpack.c.l.b16 %v6771
    %v7147 = vunpack.c.h.b16 %v6771
    %v7148 = vunpack.c.l.b16 %v6772
    %v7149 = vunpack.c.h.b16 %v6772
    %v7150 = vunpack.c.l.b16 %v6773
    %v7151 = vunpack.c.h.b16 %v6773
    %v7152 = vunpack.c.l.b16 %v6774
    %v7153 = vunpack.c.h.b16 %v6774
    %v7154 = vunpack.c.l.b16 %v6775
    %v7155 = vunpack.c.h.b16 %v6775
    %v7156 = vunpack.c.l.b16 %v6776
    %v7157 = vunpack.c.h.b16 %v6776
    %v7158 = vunpack.c.l.b16 %v6777
    %v7159 = vunpack.c.h.b16 %v6777
    %v7160 = vunpack.c.l.b16 %v6778
    %v7161 = vunpack.c.h.b16 %v6778
    %v7162 = vunpack.c.l.b16 %v6779
    %v7163 = vunpack.c.h.b16 %v6779
    %v7164 = vpack.c.b16 %v6916, %v6908
    %v7165 = vpack.c.b16 %v6917, %v6909
    %v7166 = vpack.c.b16 %v6918, %v6910
    %v7167 = vpack.c.b16 %v6919, %v6911
    %v7168 = vpack.c.b16 %v6920, %v6912
    %v7169 = vpack.c.b16 %v6921, %v6913
    %v7170 = vpack.c.b16 %v6922, %v6914
    %v7171 = vpack.c.b16 %v6923, %v6915
    %v7172 = vpack.c.b16 %v6932, %v6924
    %v7173 = vpack.c.b16 %v6933, %v6925
    %v7174 = vpack.c.b16 %v6934, %v6926
    %v7175 = vpack.c.b16 %v6935, %v6927
    %v7176 = vpack.c.b16 %v6936, %v6928
    %v7177 = vpack.c.b16 %v6937, %v6929
    %v7178 = vpack.c.b16 %v6938, %v6930
    %v7179 = vpack.c.b16 %v6939, %v6931
    %v7180 = vpack.c.b16 %v6948, %v6940
    %v7181 = vpack.c.b16 %v6949, %v6941
    %v7182 = vpack.c.b16 %v6950, %v6942
    %v7183 = vpack.c.b16 %v6951, %v6943
    %v7184 = vpack.c.b16 %v6952, %v6944
    %v7185 = vpack.c.b16 %v6953, %v6945
    %v7186 = vpack.c.b16 %v6954, %v6946
    %v7187 = vpack.c.b16 %v6955, %v6947
    %v7188 = vpack.c.b16 %v6964, %v6956
    %v7189 = vpack.c.b16 %v6965, %v6957
    %v7190 = vpack.c.b16 %v6966, %v6958
    %v7191 = vpack.c.b16 %v6967, %v6959
    %v7192 = vpack.c.b16 %v6968, %v6960
    %v7193 = vpack.c.b16 %v6969, %v6961
    %v7194 = vpack.c.b16 %v6970, %v6962
    %v7195 = vpack.c.b16 %v6971, %v6963
    %v7196 = vpack.c.b16 %v6980, %v6972
    %v7197 = vpack.c.b16 %v6981, %v6973
    %v7198 = vpack.c.b16 %v6982, %v6974
    %v7199 = vpack.c.b16 %v6983, %v6975
    %v7200 = vpack.c.b16 %v6984, %v6976
    %v7201 = vpack.c.b16 %v6985, %v6977
    %v7202 = vpack.c.b16 %v6986, %v6978
    %v7203 = vpack.c.b16 %v6987, %v6979
    %v7204 = vpack.c.b16 %v6996, %v6988
    %v7205 = vpack.c.b16 %v6997, %v6989
    %v7206 = vpack.c.b16 %v6998, %v6990
    %v7207 = vpack.c.b16 %v6999, %v6991
    %v7208 = vpack.c.b16 %v7000, %v6992
    %v7209 = vpack.c.b16 %v7001, %v6993
    %v7210 = vpack.c.b16 %v7002, %v6994
    %v7211 = vpack.c.b16 %v7003, %v6995
    %v7212 = vpack.c.b16 %v7012, %v7004
    %v7213 = vpack.c.b16 %v7013, %v7005
    %v7214 = vpack.c.b16 %v7014, %v7006
    %v7215 = vpack.c.b16 %v7015, %v7007
    %v7216 = vpack.c.b16 %v7016, %v7008
    %v7217 = vpack.c.b16 %v7017, %v7009
    %v7218 = vpack.c.b16 %v7018, %v7010
    %v7219 = vpack.c.b16 %v7019, %v7011
    %v7220 = vpack.c.b16 %v7028, %v7020
    %v7221 = vpack.c.b16 %v7029, %v7021
    %v7222 = vpack.c.b16 %v7030, %v7022
    %v7223 = vpack.c.b16 %v7031, %v7023
    %v7224 = vpack.c.b16 %v7032, %v7024
    %v7225 = vpack.c.b16 %v7033, %v7025
    %v7226 = vpack.c.b16 %v7034, %v7026
    %v7227 = vpack.c.b16 %v7035, %v7027
    %v7228 = vpack.c.b16 %v7044, %v7036
    %v7229 = vpack.c.b16 %v7045, %v7037
    %v7230 = vpack.c.b16 %v7046, %v7038
    %v7231 = vpack.c.b16 %v7047, %v7039
    %v7232 = vpack.c.b16 %v7048, %v7040
    %v7233 = vpack.c.b16 %v7049, %v7041
    %v7234 = vpack.c.b16 %v7050, %v7042
    %v7235 = vpack.c.b16 %v7051, %v7043
    %v7236 = vpack.c.b16 %v7060, %v7052
    %v7237 = vpack.c.b16 %v7061, %v7053
    %v7238 = vpack.c.b16 %v7062, %v7054
    %v7239 = vpack.c.b16 %v7063, %v7055
    %v7240 = vpack.c.b16 %v7064, %v7056
    %v7241 = vpack.c.b16 %v7065, %v7057
    %v7242 = vpack.c.b16 %v7066, %v7058
    %v7243 = vpack.c.b16 %v7067, %v7059
    %v7244 = vpack.c.b16 %v7076, %v7068
    %v7245 = vpack.c.b16 %v7077, %v7069
    %v7246 = vpack.c.b16 %v7078, %v7070
    %v7247 = vpack.c.b16 %v7079, %v7071
    %v7248 = vpack.c.b16 %v7080, %v7072
    %v7249 = vpack.c.b16 %v7081, %v7073
    %v7250 = vpack.c.b16 %v7082, %v7074
    %v7251 = vpack.c.b16 %v7083, %v7075
    %v7252 = vpack.c.b16 %v7092, %v7084
    %v7253 = vpack.c.b16 %v7093, %v7085
    %v7254 = vpack.c.b16 %v7094, %v7086
    %v7255 = vpack.c.b16 %v7095, %v7087
    %v7256 = vpack.c.b16 %v7096, %v7088
    %v7257 = vpack.c.b16 %v7097, %v7089
    %v7258 = vpack.c.b16 %v7098, %v7090
    %v7259 = vpack.c.b16 %v7099, %v7091
    %v7260 = vpack.c.b16 %v7108, %v7100
    %v7261 = vpack.c.b16 %v7109, %v7101
    %v7262 = vpack.c.b16 %v7110, %v7102
    %v7263 = vpack.c.b16 %v7111, %v7103
    %v7264 = vpack.c.b16 %v7112, %v7104
    %v7265 = vpack.c.b16 %v7113, %v7105
    %v7266 = vpack.c.b16 %v7114, %v7106
    %v7267 = vpack.c.b16 %v7115, %v7107
    %v7268 = vpack.c.b16 %v7124, %v7116
    %v7269 = vpack.c.b16 %v7125, %v7117
    %v7270 = vpack.c.b16 %v7126, %v7118
    %v7271 = vpack.c.b16 %v7127, %v7119
    %v7272 = vpack.c.b16 %v7128, %v7120
    %v7273 = vpack.c.b16 %v7129, %v7121
    %v7274 = vpack.c.b16 %v7130, %v7122
    %v7275 = vpack.c.b16 %v7131, %v7123
    %v7276 = vpack.c.b16 %v7140, %v7132
    %v7277 = vpack.c.b16 %v7141, %v7133
    %v7278 = vpack.c.b16 %v7142, %v7134
    %v7279 = vpack.c.b16 %v7143, %v7135
    %v7280 = vpack.c.b16 %v7144, %v7136
    %v7281 = vpack.c.b16 %v7145, %v7137
    %v7282 = vpack.c.b16 %v7146, %v7138
    %v7283 = vpack.c.b16 %v7147, %v7139
    %v7284 = vpack.c.b16 %v7156, %v7148
    %v7285 = vpack.c.b16 %v7157, %v7149
    %v7286 = vpack.c.b16 %v7158, %v7150
    %v7287 = vpack.c.b16 %v7159, %v7151
    %v7288 = vpack.c.b16 %v7160, %v7152
    %v7289 = vpack.c.b16 %v7161, %v7153
    %v7290 = vpack.c.b16 %v7162, %v7154
    %v7291 = vpack.c.b16 %v7163, %v7155
    %7420 = vmatprep.subr.bf16.mxu0 %v7221
    %7421 = vmatpush1.bf16.msra.mxu0 %v7220
    %7422 = vmatprep.subr.bf16.mxu0 %v7213
    %7423 = vmatpush1.bf16.msra.mxu0 %v7212
    %7424 = vmatprep.subr.bf16.mxu0 %v7205
    %7425 = vmatpush1.bf16.msra.mxu0 %v7204
    %7426 = vmatprep.subr.bf16.mxu0 %v7197
    %7427 = vmatpush1.bf16.msra.mxu0 %v7196
    %7428 = vmatprep.subr.bf16.mxu0 %v7189
    %7429 = vmatpush1.bf16.msra.mxu0 %v7188
    %7430 = vmatprep.subr.bf16.mxu0 %v7181
    %7431 = vmatpush1.bf16.msra.mxu0 %v7180
    %7432 = vmatprep.subr.bf16.mxu0 %v7173
    %7433 = vmatpush1.bf16.msra.mxu0 %v7172
    %7434 = vmatprep.subr.bf16.mxu0 %v7165
    %7435 = vmatpush1.bf16.msra.mxu0 %v7164
    %7436 = vmatprep.subr.bf16.mxu0 %v7285
    %7437 = vmatpush2.bf16.msra.mxu0 %v7284
    %7438 = vmatprep.subr.bf16.mxu0 %v7277
    %7439 = vmatpush2.bf16.msra.mxu0 %v7276
    %7440 = vmatprep.subr.bf16.mxu0 %v7269
    %7441 = vmatpush2.bf16.msra.mxu0 %v7268
    %7442 = vmatprep.subr.bf16.mxu0 %v7261
    %7443 = vmatpush2.bf16.msra.mxu0 %v7260
    %7444 = vmatprep.subr.bf16.mxu0 %v7253
    %7445 = vmatpush2.bf16.msra.mxu0 %v7252
    %7446 = vmatprep.subr.bf16.mxu0 %v7245
    %7447 = vmatpush2.bf16.msra.mxu0 %v7244
    %7448 = vmatprep.subr.bf16.mxu0 %v7237
    %7449 = vmatpush2.bf16.msra.mxu0 %v7236
    %7450 = vmatprep.subr.bf16.mxu0 %v7229
    %7451 = vmatpush2.bf16.msra.mxu0 %v7228
    %7452 = vmatprep.mubr.bf16.mxu0 %v6642
    %7453 = vmatmul.mubr.bf16.gmra.mxu0 %v6632
    %v7454 = vpop.f32.mrf.mxu0
    %v7455 = vadd.f32 0.0, %v7454
    %v7456 = vpop.f32.mrf.mxu0
    %v7457 = vadd.f32 0.0, %v7456
    %v7458 = vpop.f32.mrf.mxu0
    %v7459 = vadd.f32 0.0, %v7458
    %v7460 = vpop.f32.mrf.mxu0
    %v7461 = vadd.f32 0.0, %v7460
    %7462 = vdwg.mxu0
    %7463 = vmatprep.subr.bf16.mxu0 %v7223
    %7464 = vmatpush1.bf16.msra.mxu0 %v7222
    %7465 = vmatprep.subr.bf16.mxu0 %v7215
    %7466 = vmatpush1.bf16.msra.mxu0 %v7214
    %7467 = vmatprep.subr.bf16.mxu0 %v7207
    %7468 = vmatpush1.bf16.msra.mxu0 %v7206
    %7469 = vmatprep.subr.bf16.mxu0 %v7199
    %7470 = vmatpush1.bf16.msra.mxu0 %v7198
    %7471 = vmatprep.subr.bf16.mxu0 %v7191
    %7472 = vmatpush1.bf16.msra.mxu0 %v7190
    %7473 = vmatprep.subr.bf16.mxu0 %v7183
    %7474 = vmatpush1.bf16.msra.mxu0 %v7182
    %7475 = vmatprep.subr.bf16.mxu0 %v7175
    %7476 = vmatpush1.bf16.msra.mxu0 %v7174
    %7477 = vmatprep.subr.bf16.mxu0 %v7167
    %7478 = vmatpush1.bf16.msra.mxu0 %v7166
    %7479 = vmatprep.subr.bf16.mxu0 %v7287
    %7480 = vmatpush2.bf16.msra.mxu0 %v7286
    %7481 = vmatprep.subr.bf16.mxu0 %v7279
    %7482 = vmatpush2.bf16.msra.mxu0 %v7278
    %7483 = vmatprep.subr.bf16.mxu0 %v7271
    %7484 = vmatpush2.bf16.msra.mxu0 %v7270
    %7485 = vmatprep.subr.bf16.mxu0 %v7263
    %7486 = vmatpush2.bf16.msra.mxu0 %v7262
    %7487 = vmatprep.subr.bf16.mxu0 %v7255
    %7488 = vmatpush2.bf16.msra.mxu0 %v7254
    %7489 = vmatprep.subr.bf16.mxu0 %v7247
    %7490 = vmatpush2.bf16.msra.mxu0 %v7246
    %7491 = vmatprep.subr.bf16.mxu0 %v7239
    %7492 = vmatpush2.bf16.msra.mxu0 %v7238
    %7493 = vmatprep.subr.bf16.mxu0 %v7231
    %7494 = vmatpush2.bf16.msra.mxu0 %v7230
    %7495 = vmatprep.mubr.bf16.mxu0 %v6642
    %7496 = vmatmul.mubr.bf16.gmra.mxu0 %v6632
    %v7497 = vpop.f32.mrf.mxu0
    %v7498 = vadd.f32 0.0, %v7497
    %v7499 = vpop.f32.mrf.mxu0
    %v7500 = vadd.f32 0.0, %v7499
    %v7501 = vpop.f32.mrf.mxu0
    %v7502 = vadd.f32 0.0, %v7501
    %v7503 = vpop.f32.mrf.mxu0
    %v7504 = vadd.f32 0.0, %v7503
    %7505 = vdwg.mxu0
    %7506 = vmatprep.subr.bf16.mxu0 %v7225
    %7507 = vmatpush1.bf16.msra.mxu0 %v7224
    %7508 = vmatprep.subr.bf16.mxu0 %v7217
    %7509 = vmatpush1.bf16.msra.mxu0 %v7216
    %7510 = vmatprep.subr.bf16.mxu0 %v7209
    %7511 = vmatpush1.bf16.msra.mxu0 %v7208
    %7512 = vmatprep.subr.bf16.mxu0 %v7201
    %7513 = vmatpush1.bf16.msra.mxu0 %v7200
    %7514 = vmatprep.subr.bf16.mxu0 %v7193
    %7515 = vmatpush1.bf16.msra.mxu0 %v7192
    %7516 = vmatprep.subr.bf16.mxu0 %v7185
    %7517 = vmatpush1.bf16.msra.mxu0 %v7184
    %7518 = vmatprep.subr.bf16.mxu0 %v7177
    %7519 = vmatpush1.bf16.msra.mxu0 %v7176
    %7520 = vmatprep.subr.bf16.mxu0 %v7169
    %7521 = vmatpush1.bf16.msra.mxu0 %v7168
    %7522 = vmatprep.subr.bf16.mxu0 %v7289
    %7523 = vmatpush2.bf16.msra.mxu0 %v7288
    %7524 = vmatprep.subr.bf16.mxu0 %v7281
    %7525 = vmatpush2.bf16.msra.mxu0 %v7280
    %7526 = vmatprep.subr.bf16.mxu0 %v7273
    %7527 = vmatpush2.bf16.msra.mxu0 %v7272
    %7528 = vmatprep.subr.bf16.mxu0 %v7265
    %7529 = vmatpush2.bf16.msra.mxu0 %v7264
    %7530 = vmatprep.subr.bf16.mxu0 %v7257
    %7531 = vmatpush2.bf16.msra.mxu0 %v7256
    %7532 = vmatprep.subr.bf16.mxu0 %v7249
    %7533 = vmatpush2.bf16.msra.mxu0 %v7248
    %7534 = vmatprep.subr.bf16.mxu0 %v7241
    %7535 = vmatpush2.bf16.msra.mxu0 %v7240
    %7536 = vmatprep.subr.bf16.mxu0 %v7233
    %7537 = vmatpush2.bf16.msra.mxu0 %v7232
    %7538 = vmatprep.mubr.bf16.mxu0 %v6642
    %7539 = vmatmul.mubr.bf16.gmra.mxu0 %v6632
    %v7540 = vpop.f32.mrf.mxu0
    %v7541 = vadd.f32 0.0, %v7540
    %v7542 = vpop.f32.mrf.mxu0
    %v7543 = vadd.f32 0.0, %v7542
    %v7544 = vpop.f32.mrf.mxu0
    %v7545 = vadd.f32 0.0, %v7544
    %v7546 = vpop.f32.mrf.mxu0
    %v7547 = vadd.f32 0.0, %v7546
    %7548 = vdwg.mxu0
    %7549 = vmatprep.subr.bf16.mxu0 %v7227
    %7550 = vmatpush1.bf16.msra.mxu0 %v7226
    %7551 = vmatprep.subr.bf16.mxu0 %v7219
    %7552 = vmatpush1.bf16.msra.mxu0 %v7218
    %7553 = vmatprep.subr.bf16.mxu0 %v7211
    %7554 = vmatpush1.bf16.msra.mxu0 %v7210
    %7555 = vmatprep.subr.bf16.mxu0 %v7203
    %7556 = vmatpush1.bf16.msra.mxu0 %v7202
    %7557 = vmatprep.subr.bf16.mxu0 %v7195
    %7558 = vmatpush1.bf16.msra.mxu0 %v7194
    %7559 = vmatprep.subr.bf16.mxu0 %v7187
    %7560 = vmatpush1.bf16.msra.mxu0 %v7186
    %7561 = vmatprep.subr.bf16.mxu0 %v7179
    %7562 = vmatpush1.bf16.msra.mxu0 %v7178
    %7563 = vmatprep.subr.bf16.mxu0 %v7171
    %7564 = vmatpush1.bf16.msra.mxu0 %v7170
    %7565 = vmatprep.subr.bf16.mxu0 %v7291
    %7566 = vmatpush2.bf16.msra.mxu0 %v7290
    %7567 = vmatprep.subr.bf16.mxu0 %v7283
    %7568 = vmatpush2.bf16.msra.mxu0 %v7282
    %7569 = vmatprep.subr.bf16.mxu0 %v7275
    %7570 = vmatpush2.bf16.msra.mxu0 %v7274
    %7571 = vmatprep.subr.bf16.mxu0 %v7267
    %7572 = vmatpush2.bf16.msra.mxu0 %v7266
    %7573 = vmatprep.subr.bf16.mxu0 %v7259
    %7574 = vmatpush2.bf16.msra.mxu0 %v7258
    %7575 = vmatprep.subr.bf16.mxu0 %v7251
    %7576 = vmatpush2.bf16.msra.mxu0 %v7250
    %7577 = vmatprep.subr.bf16.mxu0 %v7243
    %7578 = vmatpush2.bf16.msra.mxu0 %v7242
    %7579 = vmatprep.subr.bf16.mxu0 %v7235
    %7580 = vmatpush2.bf16.msra.mxu0 %v7234
    %7581 = vmatprep.mubr.bf16.mxu0 %v6642
    %7582 = vmatmul.mubr.bf16.gmra.mxu0 %v6632
    %v7583 = vpop.f32.mrf.mxu0
    %v7584 = vadd.f32 0.0, %v7583
    %v7585 = vpop.f32.mrf.mxu0
    %v7586 = vadd.f32 0.0, %v7585
    %v7587 = vpop.f32.mrf.mxu0
    %v7588 = vadd.f32 0.0, %v7587
    %v7589 = vpop.f32.mrf.mxu0
    %v7590 = vadd.f32 0.0, %v7589
    %7591 = vdwg.mxu0
    %v7592 = vld [vmem:[%s4305] sm:$0xff]
    %v7593 = vld [vmem:[%s4305 + $0x8] sm:$0xff]
    %v7594 = vld [vmem:[%s4305 + $0x20] sm:$0xff]
    %v7595 = vld [vmem:[%s4305 + $0x28] sm:$0xff]
    %v7596 = vunpack.c.l.bf16 %v7592
    %v7597 = vunpack.c.h.bf16 %v7592
    %v7598 = vunpack.c.l.bf16 %v7593
    %v7599 = vunpack.c.h.bf16 %v7593
    %v7600 = vunpack.c.l.bf16 %v7594
    %v7601 = vunpack.c.h.bf16 %v7594
    %v7602 = vunpack.c.l.bf16 %v7595
    %v7603 = vunpack.c.h.bf16 %v7595
    %v7604 = vadd.f32 %v7596, %v7455
    %v7605 = vadd.f32 %v7597, %v7457
    %v7606 = vadd.f32 %v7598, %v7498
    %v7607 = vadd.f32 %v7599, %v7500
    %v7608 = vadd.f32 %v7600, %v7459
    %v7609 = vadd.f32 %v7601, %v7461
    %v7610 = vadd.f32 %v7602, %v7502
    %v7611 = vadd.f32 %v7603, %v7504
    %v7612 = vld [vmem:[%s4282 + $0x10] sm:$0xff]
    %v7613 = vld [vmem:[%s4282 + $0x18] sm:$0xff]
    %v7614 = vld [vmem:[%s4282 + $0x30] sm:$0xff]
    %v7615 = vld [vmem:[%s4282 + $0x38] sm:$0xff]
    %v7616 = vunpack.c.l.bf16 %v7612
    %v7617 = vunpack.c.h.bf16 %v7612
    %v7618 = vunpack.c.l.bf16 %v7613
    %v7619 = vunpack.c.h.bf16 %v7613
    %v7620 = vunpack.c.l.bf16 %v7614
    %v7621 = vunpack.c.h.bf16 %v7614
    %v7622 = vunpack.c.l.bf16 %v7615
    %v7623 = vunpack.c.h.bf16 %v7615
    %v7624 = vadd.f32 %v7616, %v7541
    %v7625 = vadd.f32 %v7617, %v7543
    %v7626 = vadd.f32 %v7618, %v7584
    %v7627 = vadd.f32 %v7619, %v7586
    %v7628 = vadd.f32 %v7620, %v7545
    %v7629 = vadd.f32 %v7621, %v7547
    %v7630 = vadd.f32 %v7622, %v7588
    %v7631 = vadd.f32 %v7623, %v7590
    %v7632 = vxor.u32 %v7604, 2147483648
    %v7633 = vxor.u32 %v7608, 2147483648
    %v7634 = vmul.f32 %v7632, 1.442695
    %v7635 = vpow.pop %v7634
    %v7636 = vmul.f32 %v7633, 1.442695
    %v7637 = vpow.pop %v7636
    %v7638 = vadd.f32 %v7635, 1.0
    %v7639 = vadd.f32 %v7637, 1.0
    %v7640 = vrcp.pop %v7638
    %v7641 = vmul.f32 1.0, %v7640
    %v7642 = vrcp.pop %v7639
    %v7643 = vmul.f32 1.0, %v7642
    %v7644 = vxor.u32 %v7605, 2147483648
    %v7645 = vxor.u32 %v7609, 2147483648
    %v7646 = vmul.f32 %v7644, 1.442695
    %v7647 = vpow.pop %v7646
    %v7648 = vmul.f32 %v7645, 1.442695
    %v7649 = vpow.pop %v7648
    %v7650 = vadd.f32 %v7647, 1.0
    %v7651 = vadd.f32 %v7649, 1.0
    %v7652 = vrcp.pop %v7650
    %v7653 = vmul.f32 1.0, %v7652
    %v7654 = vrcp.pop %v7651
    %v7655 = vmul.f32 1.0, %v7654
    %v7656 = vtanh.pop %v7606
    %v7657 = vtanh.pop %v7610
    %v7658 = vxor.u32 %v7607, 2147483648
    %v7659 = vxor.u32 %v7611, 2147483648
    %v7660 = vmul.f32 %v7658, 1.442695
    %v7661 = vpow.pop %v7660
    %v7662 = vmul.f32 %v7659, 1.442695
    %v7663 = vpow.pop %v7662
    %v7664 = vadd.f32 %v7661, 1.0
    %v7665 = vadd.f32 %v7663, 1.0
    %v7666 = vrcp.pop %v7664
    %v7667 = vmul.f32 1.0, %v7666
    %v7668 = vrcp.pop %v7665
    %v7669 = vmul.f32 1.0, %v7668
    %v7670 = vmul.f32 %v7653, %v6578
    %v7671 = vmul.f32 %v7655, %v6579
    %v7672 = vmul.f32 %v7641, %v7656
    %v7673 = vmul.f32 %v7643, %v7657
    %v7674 = vadd.f32 %v7670, %v7672
    %v7675 = vadd.f32 %v7671, %v7673
    %v7676 = vtanh.pop %v7674
    %v7677 = vtanh.pop %v7675
    %v7678 = vmul.f32 %v7667, %v7676
    %v7679 = vmul.f32 %v7669, %v7677
    %v7680 = vxor.u32 %v7624, 2147483648
    %v7681 = vxor.u32 %v7628, 2147483648
    %v7682 = vmul.f32 %v7680, 1.442695
    %v7683 = vpow.pop %v7682
    %v7684 = vmul.f32 %v7681, 1.442695
    %v7685 = vpow.pop %v7684
    %v7686 = vadd.f32 %v7683, 1.0
    %v7687 = vadd.f32 %v7685, 1.0
    %v7688 = vrcp.pop %v7686
    %v7689 = vmul.f32 1.0, %v7688
    %v7690 = vrcp.pop %v7687
    %v7691 = vmul.f32 1.0, %v7690
    %v7692 = vxor.u32 %v7625, 2147483648
    %v7693 = vxor.u32 %v7629, 2147483648
    %v7694 = vmul.f32 %v7692, 1.442695
    %v7695 = vpow.pop %v7694
    %v7696 = vmul.f32 %v7693, 1.442695
    %v7697 = vpow.pop %v7696
    %v7698 = vadd.f32 %v7695, 1.0
    %v7699 = vadd.f32 %v7697, 1.0
    %v7700 = vrcp.pop %v7698
    %v7701 = vmul.f32 1.0, %v7700
    %v7702 = vrcp.pop %v7699
    %v7703 = vmul.f32 1.0, %v7702
    %v7704 = vtanh.pop %v7626
    %v7705 = vtanh.pop %v7630
    %v7706 = vxor.u32 %v7627, 2147483648
    %v7707 = vxor.u32 %v7631, 2147483648
    %v7708 = vmul.f32 %v7706, 1.442695
    %v7709 = vpow.pop %v7708
    %v7710 = vmul.f32 %v7707, 1.442695
    %v7711 = vpow.pop %v7710
    %v7712 = vadd.f32 %v7709, 1.0
    %v7713 = vadd.f32 %v7711, 1.0
    %v7714 = vrcp.pop %v7712
    %v7715 = vmul.f32 1.0, %v7714
    %v7716 = vrcp.pop %v7713
    %v7717 = vmul.f32 1.0, %v7716
    %v7718 = vmul.f32 %v7701, %v6626
    %v7719 = vmul.f32 %v7703, %v6627
    %v7720 = vmul.f32 %v7689, %v7704
    %v7721 = vmul.f32 %v7691, %v7705
    %v7722 = vadd.f32 %v7718, %v7720
    %v7723 = vadd.f32 %v7719, %v7721
    %v7724 = vtanh.pop %v7722
    %v7725 = vtanh.pop %v7723
    %v7726 = vmul.f32 %v7715, %v7724
    %v7727 = vmul.f32 %v7717, %v7725
    %v7728 = vpack.c.bf16 %v7679, %v7678
    %v7730 = vunpack.c.l.b16 %v7728
    %v7731 = vunpack.c.h.b16 %v7728
    %v7732 = vpack.c.b16 %v7730, %v7730
    %v7733 = vpack.c.b16 %v7731, %v7731
    %7736 = vst [vmem:[%s4445] sm:$0xf] %v7732
    %7737 = vst [vmem:[%s4445 + $0x8] sm:$0xf] %v7733
    %v7738 = vpack.c.bf16 %v7727, %v7726
    %v7740 = vunpack.c.l.b16 %v7738
    %v7741 = vunpack.c.h.b16 %v7738
    %v7742 = vpack.c.b16 %v7740, %v7740
    %v7743 = vpack.c.b16 %v7741, %v7741
    %7746 = vst [vmem:[%s4432 + $0x4] sm:$0xf] %v7742
    %7747 = vst [vmem:[%s4432 + $0xc] sm:$0xf] %v7743
    %v7748 = vld [vmem:[#allocation4] sm:$0xff]
    %v7749 = vld [vmem:[#allocation4 + $0x8] sm:$0xff]
    %v7750 = vld [vmem:[#allocation4 + $0x10] sm:$0xff]
    %v7751 = vld [vmem:[#allocation4 + $0x18] sm:$0xff]
    %v7752 = vld [vmem:[#allocation4 + $0x20] sm:$0xff]
    %v7753 = vld [vmem:[#allocation4 + $0x28] sm:$0xff]
    %v7754 = vld [vmem:[#allocation4 + $0x30] sm:$0xff]
    %v7755 = vld [vmem:[#allocation4 + $0x38] sm:$0xff]
    %v7756 = vld [vmem:[#allocation4 + $0x40] sm:$0xff]
    %v7757 = vld [vmem:[#allocation4 + $0x48] sm:$0xff]
    %v7758 = vld [vmem:[#allocation4 + $0x50] sm:$0xff]
    %v7759 = vld [vmem:[#allocation4 + $0x58] sm:$0xff]
    %v7760 = vld [vmem:[#allocation4 + $0x60] sm:$0xff]
    %v7761 = vld [vmem:[#allocation4 + $0x68] sm:$0xff]
    %v7762 = vld [vmem:[#allocation4 + $0x70] sm:$0xff]
    %v7763 = vld [vmem:[#allocation4 + $0x78] sm:$0xff]
    %v7764 = vld [vmem:[#allocation4 + $0x80] sm:$0xff]
    %v7765 = vld [vmem:[#allocation4 + $0x88] sm:$0xff]
    %v7766 = vld [vmem:[#allocation4 + $0x90] sm:$0xff]
    %v7767 = vld [vmem:[#allocation4 + $0x98] sm:$0xff]
    %v7768 = vld [vmem:[#allocation4 + $0xa0] sm:$0xff]
    %v7769 = vld [vmem:[#allocation4 + $0xa8] sm:$0xff]
    %v7770 = vld [vmem:[#allocation4 + $0xb0] sm:$0xff]
    %v7771 = vld [vmem:[#allocation4 + $0xb8] sm:$0xff]
    %v7772 = vld [vmem:[#allocation4 + $0xc0] sm:$0xff]
    %v7773 = vld [vmem:[#allocation4 + $0xc8] sm:$0xff]
    %v7774 = vld [vmem:[#allocation4 + $0xd0] sm:$0xff]
    %v7775 = vld [vmem:[#allocation4 + $0xd8] sm:$0xff]
    %v7776 = vld [vmem:[#allocation4 + $0xe0] sm:$0xff]
    %v7777 = vld [vmem:[#allocation4 + $0xe8] sm:$0xff]
    %v7778 = vld [vmem:[#allocation4 + $0xf0] sm:$0xff]
    %v7779 = vld [vmem:[#allocation4 + $0xf8] sm:$0xff]
    %v7780 = vld [vmem:[#allocation4 + $0x100] sm:$0xff]
    %v7781 = vld [vmem:[#allocation4 + $0x108] sm:$0xff]
    %v7782 = vld [vmem:[#allocation4 + $0x110] sm:$0xff]
    %v7783 = vld [vmem:[#allocation4 + $0x118] sm:$0xff]
    %v7784 = vld [vmem:[#allocation4 + $0x120] sm:$0xff]
    %v7785 = vld [vmem:[#allocation4 + $0x128] sm:$0xff]
    %v7786 = vld [vmem:[#allocation4 + $0x130] sm:$0xff]
    %v7787 = vld [vmem:[#allocation4 + $0x138] sm:$0xff]
    %v7788 = vld [vmem:[#allocation4 + $0x140] sm:$0xff]
    %v7789 = vld [vmem:[#allocation4 + $0x148] sm:$0xff]
    %v7790 = vld [vmem:[#allocation4 + $0x150] sm:$0xff]
    %v7791 = vld [vmem:[#allocation4 + $0x158] sm:$0xff]
    %v7792 = vld [vmem:[#allocation4 + $0x160] sm:$0xff]
    %v7793 = vld [vmem:[#allocation4 + $0x168] sm:$0xff]
    %v7794 = vld [vmem:[#allocation4 + $0x170] sm:$0xff]
    %v7795 = vld [vmem:[#allocation4 + $0x178] sm:$0xff]
    %v7796 = vld [vmem:[#allocation4 + $0x180] sm:$0xff]
    %v7797 = vld [vmem:[#allocation4 + $0x188] sm:$0xff]
    %v7798 = vld [vmem:[#allocation4 + $0x190] sm:$0xff]
    %v7799 = vld [vmem:[#allocation4 + $0x198] sm:$0xff]
    %v7800 = vld [vmem:[#allocation4 + $0x1a0] sm:$0xff]
    %v7801 = vld [vmem:[#allocation4 + $0x1a8] sm:$0xff]
    %v7802 = vld [vmem:[#allocation4 + $0x1b0] sm:$0xff]
    %v7803 = vld [vmem:[#allocation4 + $0x1b8] sm:$0xff]
    %v7804 = vld [vmem:[#allocation4 + $0x1c0] sm:$0xff]
    %v7805 = vld [vmem:[#allocation4 + $0x1c8] sm:$0xff]
    %v7806 = vld [vmem:[#allocation4 + $0x1d0] sm:$0xff]
    %v7807 = vld [vmem:[#allocation4 + $0x1d8] sm:$0xff]
    %v7808 = vld [vmem:[#allocation4 + $0x1e0] sm:$0xff]
    %v7809 = vld [vmem:[#allocation4 + $0x1e8] sm:$0xff]
    %v7810 = vld [vmem:[#allocation4 + $0x1f0] sm:$0xff]
    %v7811 = vld [vmem:[#allocation4 + $0x1f8] sm:$0xff]
    %v7812 = vld [vmem:[#allocation4 + $0x200] sm:$0xff]
    %v7813 = vld [vmem:[#allocation4 + $0x208] sm:$0xff]
    %v7814 = vld [vmem:[#allocation4 + $0x210] sm:$0xff]
    %v7815 = vld [vmem:[#allocation4 + $0x218] sm:$0xff]
    %v7816 = vld [vmem:[#allocation4 + $0x220] sm:$0xff]
    %v7817 = vld [vmem:[#allocation4 + $0x228] sm:$0xff]
    %v7818 = vld [vmem:[#allocation4 + $0x230] sm:$0xff]
    %v7819 = vld [vmem:[#allocation4 + $0x238] sm:$0xff]
    %v7820 = vld [vmem:[#allocation4 + $0x240] sm:$0xff]
    %v7821 = vld [vmem:[#allocation4 + $0x248] sm:$0xff]
    %v7822 = vld [vmem:[#allocation4 + $0x250] sm:$0xff]
    %v7823 = vld [vmem:[#allocation4 + $0x258] sm:$0xff]
    %v7824 = vld [vmem:[#allocation4 + $0x260] sm:$0xff]
    %v7825 = vld [vmem:[#allocation4 + $0x268] sm:$0xff]
    %v7826 = vld [vmem:[#allocation4 + $0x270] sm:$0xff]
    %v7827 = vld [vmem:[#allocation4 + $0x278] sm:$0xff]
    %v7828 = vld [vmem:[#allocation4 + $0x280] sm:$0xff]
    %v7829 = vld [vmem:[#allocation4 + $0x288] sm:$0xff]
    %v7830 = vld [vmem:[#allocation4 + $0x290] sm:$0xff]
    %v7831 = vld [vmem:[#allocation4 + $0x298] sm:$0xff]
    %v7832 = vld [vmem:[#allocation4 + $0x2a0] sm:$0xff]
    %v7833 = vld [vmem:[#allocation4 + $0x2a8] sm:$0xff]
    %v7834 = vld [vmem:[#allocation4 + $0x2b0] sm:$0xff]
    %v7835 = vld [vmem:[#allocation4 + $0x2b8] sm:$0xff]
    %v7836 = vld [vmem:[#allocation4 + $0x2c0] sm:$0xff]
    %v7837 = vld [vmem:[#allocation4 + $0x2c8] sm:$0xff]
    %v7838 = vld [vmem:[#allocation4 + $0x2d0] sm:$0xff]
    %v7839 = vld [vmem:[#allocation4 + $0x2d8] sm:$0xff]
    %v7840 = vld [vmem:[#allocation4 + $0x2e0] sm:$0xff]
    %v7841 = vld [vmem:[#allocation4 + $0x2e8] sm:$0xff]
    %v7842 = vld [vmem:[#allocation4 + $0x2f0] sm:$0xff]
    %v7843 = vld [vmem:[#allocation4 + $0x2f8] sm:$0xff]
    %v7844 = vld [vmem:[#allocation4 + $0x300] sm:$0xff]
    %v7845 = vld [vmem:[#allocation4 + $0x308] sm:$0xff]
    %v7846 = vld [vmem:[#allocation4 + $0x310] sm:$0xff]
    %v7847 = vld [vmem:[#allocation4 + $0x318] sm:$0xff]
    %v7848 = vld [vmem:[#allocation4 + $0x320] sm:$0xff]
    %v7849 = vld [vmem:[#allocation4 + $0x328] sm:$0xff]
    %v7850 = vld [vmem:[#allocation4 + $0x330] sm:$0xff]
    %v7851 = vld [vmem:[#allocation4 + $0x338] sm:$0xff]
    %v7852 = vld [vmem:[#allocation4 + $0x340] sm:$0xff]
    %v7853 = vld [vmem:[#allocation4 + $0x348] sm:$0xff]
    %v7854 = vld [vmem:[#allocation4 + $0x350] sm:$0xff]
    %v7855 = vld [vmem:[#allocation4 + $0x358] sm:$0xff]
    %v7856 = vld [vmem:[#allocation4 + $0x360] sm:$0xff]
    %v7857 = vld [vmem:[#allocation4 + $0x368] sm:$0xff]
    %v7858 = vld [vmem:[#allocation4 + $0x370] sm:$0xff]
    %v7859 = vld [vmem:[#allocation4 + $0x378] sm:$0xff]
    %v7860 = vld [vmem:[#allocation4 + $0x380] sm:$0xff]
    %v7861 = vld [vmem:[#allocation4 + $0x388] sm:$0xff]
    %v7862 = vld [vmem:[#allocation4 + $0x390] sm:$0xff]
    %v7863 = vld [vmem:[#allocation4 + $0x398] sm:$0xff]
    %v7864 = vld [vmem:[#allocation4 + $0x3a0] sm:$0xff]
    %v7865 = vld [vmem:[#allocation4 + $0x3a8] sm:$0xff]
    %v7866 = vld [vmem:[#allocation4 + $0x3b0] sm:$0xff]
    %v7867 = vld [vmem:[#allocation4 + $0x3b8] sm:$0xff]
    %v7868 = vld [vmem:[#allocation4 + $0x3c0] sm:$0xff]
    %v7869 = vld [vmem:[#allocation4 + $0x3c8] sm:$0xff]
    %v7870 = vld [vmem:[#allocation4 + $0x3d0] sm:$0xff]
    %v7871 = vld [vmem:[#allocation4 + $0x3d8] sm:$0xff]
    %v7872 = vld [vmem:[#allocation4 + $0x3e0] sm:$0xff]
    %v7873 = vld [vmem:[#allocation4 + $0x3e8] sm:$0xff]
    %v7874 = vld [vmem:[#allocation4 + $0x3f0] sm:$0xff]
    %v7875 = vld [vmem:[#allocation4 + $0x3f8] sm:$0xff]
    %v8004 = vunpack.c.l.b16 %v7748
    %v8005 = vunpack.c.h.b16 %v7748
    %v8006 = vunpack.c.l.b16 %v7749
    %v8007 = vunpack.c.h.b16 %v7749
    %v8008 = vunpack.c.l.b16 %v7750
    %v8009 = vunpack.c.h.b16 %v7750
    %v8010 = vunpack.c.l.b16 %v7751
    %v8011 = vunpack.c.h.b16 %v7751
    %v8012 = vunpack.c.l.b16 %v7752
    %v8013 = vunpack.c.h.b16 %v7752
    %v8014 = vunpack.c.l.b16 %v7753
    %v8015 = vunpack.c.h.b16 %v7753
    %v8016 = vunpack.c.l.b16 %v7754
    %v8017 = vunpack.c.h.b16 %v7754
    %v8018 = vunpack.c.l.b16 %v7755
    %v8019 = vunpack.c.h.b16 %v7755
    %v8020 = vunpack.c.l.b16 %v7756
    %v8021 = vunpack.c.h.b16 %v7756
    %v8022 = vunpack.c.l.b16 %v7757
    %v8023 = vunpack.c.h.b16 %v7757
    %v8024 = vunpack.c.l.b16 %v7758
    %v8025 = vunpack.c.h.b16 %v7758
    %v8026 = vunpack.c.l.b16 %v7759
    %v8027 = vunpack.c.h.b16 %v7759
    %v8028 = vunpack.c.l.b16 %v7760
    %v8029 = vunpack.c.h.b16 %v7760
    %v8030 = vunpack.c.l.b16 %v7761
    %v8031 = vunpack.c.h.b16 %v7761
    %v8032 = vunpack.c.l.b16 %v7762
    %v8033 = vunpack.c.h.b16 %v7762
    %v8034 = vunpack.c.l.b16 %v7763
    %v8035 = vunpack.c.h.b16 %v7763
    %v8036 = vunpack.c.l.b16 %v7764
    %v8037 = vunpack.c.h.b16 %v7764
    %v8038 = vunpack.c.l.b16 %v7765
    %v8039 = vunpack.c.h.b16 %v7765
    %v8040 = vunpack.c.l.b16 %v7766
    %v8041 = vunpack.c.h.b16 %v7766
    %v8042 = vunpack.c.l.b16 %v7767
    %v8043 = vunpack.c.h.b16 %v7767
    %v8044 = vunpack.c.l.b16 %v7768
    %v8045 = vunpack.c.h.b16 %v7768
    %v8046 = vunpack.c.l.b16 %v7769
    %v8047 = vunpack.c.h.b16 %v7769
    %v8048 = vunpack.c.l.b16 %v7770
    %v8049 = vunpack.c.h.b16 %v7770
    %v8050 = vunpack.c.l.b16 %v7771
    %v8051 = vunpack.c.h.b16 %v7771
    %v8052 = vunpack.c.l.b16 %v7772
    %v8053 = vunpack.c.h.b16 %v7772
    %v8054 = vunpack.c.l.b16 %v7773
    %v8055 = vunpack.c.h.b16 %v7773
    %v8056 = vunpack.c.l.b16 %v7774
    %v8057 = vunpack.c.h.b16 %v7774
    %v8058 = vunpack.c.l.b16 %v7775
    %v8059 = vunpack.c.h.b16 %v7775
    %v8060 = vunpack.c.l.b16 %v7776
    %v8061 = vunpack.c.h.b16 %v7776
    %v8062 = vunpack.c.l.b16 %v7777
    %v8063 = vunpack.c.h.b16 %v7777
    %v8064 = vunpack.c.l.b16 %v7778
    %v8065 = vunpack.c.h.b16 %v7778
    %v8066 = vunpack.c.l.b16 %v7779
    %v8067 = vunpack.c.h.b16 %v7779
    %v8068 = vunpack.c.l.b16 %v7780
    %v8069 = vunpack.c.h.b16 %v7780
    %v8070 = vunpack.c.l.b16 %v7781
    %v8071 = vunpack.c.h.b16 %v7781
    %v8072 = vunpack.c.l.b16 %v7782
    %v8073 = vunpack.c.h.b16 %v7782
    %v8074 = vunpack.c.l.b16 %v7783
    %v8075 = vunpack.c.h.b16 %v7783
    %v8076 = vunpack.c.l.b16 %v7784
    %v8077 = vunpack.c.h.b16 %v7784
    %v8078 = vunpack.c.l.b16 %v7785
    %v8079 = vunpack.c.h.b16 %v7785
    %v8080 = vunpack.c.l.b16 %v7786
    %v8081 = vunpack.c.h.b16 %v7786
    %v8082 = vunpack.c.l.b16 %v7787
    %v8083 = vunpack.c.h.b16 %v7787
    %v8084 = vunpack.c.l.b16 %v7788
    %v8085 = vunpack.c.h.b16 %v7788
    %v8086 = vunpack.c.l.b16 %v7789
    %v8087 = vunpack.c.h.b16 %v7789
    %v8088 = vunpack.c.l.b16 %v7790
    %v8089 = vunpack.c.h.b16 %v7790
    %v8090 = vunpack.c.l.b16 %v7791
    %v8091 = vunpack.c.h.b16 %v7791
    %v8092 = vunpack.c.l.b16 %v7792
    %v8093 = vunpack.c.h.b16 %v7792
    %v8094 = vunpack.c.l.b16 %v7793
    %v8095 = vunpack.c.h.b16 %v7793
    %v8096 = vunpack.c.l.b16 %v7794
    %v8097 = vunpack.c.h.b16 %v7794
    %v8098 = vunpack.c.l.b16 %v7795
    %v8099 = vunpack.c.h.b16 %v7795
    %v8100 = vunpack.c.l.b16 %v7796
    %v8101 = vunpack.c.h.b16 %v7796
    %v8102 = vunpack.c.l.b16 %v7797
    %v8103 = vunpack.c.h.b16 %v7797
    %v8104 = vunpack.c.l.b16 %v7798
    %v8105 = vunpack.c.h.b16 %v7798
    %v8106 = vunpack.c.l.b16 %v7799
    %v8107 = vunpack.c.h.b16 %v7799
    %v8108 = vunpack.c.l.b16 %v7800
    %v8109 = vunpack.c.h.b16 %v7800
    %v8110 = vunpack.c.l.b16 %v7801
    %v8111 = vunpack.c.h.b16 %v7801
    %v8112 = vunpack.c.l.b16 %v7802
    %v8113 = vunpack.c.h.b16 %v7802
    %v8114 = vunpack.c.l.b16 %v7803
    %v8115 = vunpack.c.h.b16 %v7803
    %v8116 = vunpack.c.l.b16 %v7804
    %v8117 = vunpack.c.h.b16 %v7804
    %v8118 = vunpack.c.l.b16 %v7805
    %v8119 = vunpack.c.h.b16 %v7805
    %v8120 = vunpack.c.l.b16 %v7806
    %v8121 = vunpack.c.h.b16 %v7806
    %v8122 = vunpack.c.l.b16 %v7807
    %v8123 = vunpack.c.h.b16 %v7807
    %v8124 = vunpack.c.l.b16 %v7808
    %v8125 = vunpack.c.h.b16 %v7808
    %v8126 = vunpack.c.l.b16 %v7809
    %v8127 = vunpack.c.h.b16 %v7809
    %v8128 = vunpack.c.l.b16 %v7810
    %v8129 = vunpack.c.h.b16 %v7810
    %v8130 = vunpack.c.l.b16 %v7811
    %v8131 = vunpack.c.h.b16 %v7811
    %v8132 = vunpack.c.l.b16 %v7812
    %v8133 = vunpack.c.h.b16 %v7812
    %v8134 = vunpack.c.l.b16 %v7813
    %v8135 = vunpack.c.h.b16 %v7813
    %v8136 = vunpack.c.l.b16 %v7814
    %v8137 = vunpack.c.h.b16 %v7814
    %v8138 = vunpack.c.l.b16 %v7815
    %v8139 = vunpack.c.h.b16 %v7815
    %v8140 = vunpack.c.l.b16 %v7816
    %v8141 = vunpack.c.h.b16 %v7816
    %v8142 = vunpack.c.l.b16 %v7817
    %v8143 = vunpack.c.h.b16 %v7817
    %v8144 = vunpack.c.l.b16 %v7818
    %v8145 = vunpack.c.h.b16 %v7818
    %v8146 = vunpack.c.l.b16 %v7819
    %v8147 = vunpack.c.h.b16 %v7819
    %v8148 = vunpack.c.l.b16 %v7820
    %v8149 = vunpack.c.h.b16 %v7820
    %v8150 = vunpack.c.l.b16 %v7821
    %v8151 = vunpack.c.h.b16 %v7821
    %v8152 = vunpack.c.l.b16 %v7822
    %v8153 = vunpack.c.h.b16 %v7822
    %v8154 = vunpack.c.l.b16 %v7823
    %v8155 = vunpack.c.h.b16 %v7823
    %v8156 = vunpack.c.l.b16 %v7824
    %v8157 = vunpack.c.h.b16 %v7824
    %v8158 = vunpack.c.l.b16 %v7825
    %v8159 = vunpack.c.h.b16 %v7825
    %v8160 = vunpack.c.l.b16 %v7826
    %v8161 = vunpack.c.h.b16 %v7826
    %v8162 = vunpack.c.l.b16 %v7827
    %v8163 = vunpack.c.h.b16 %v7827
    %v8164 = vunpack.c.l.b16 %v7828
    %v8165 = vunpack.c.h.b16 %v7828
    %v8166 = vunpack.c.l.b16 %v7829
    %v8167 = vunpack.c.h.b16 %v7829
    %v8168 = vunpack.c.l.b16 %v7830
    %v8169 = vunpack.c.h.b16 %v7830
    %v8170 = vunpack.c.l.b16 %v7831
    %v8171 = vunpack.c.h.b16 %v7831
    %v8172 = vunpack.c.l.b16 %v7832
    %v8173 = vunpack.c.h.b16 %v7832
    %v8174 = vunpack.c.l.b16 %v7833
    %v8175 = vunpack.c.h.b16 %v7833
    %v8176 = vunpack.c.l.b16 %v7834
    %v8177 = vunpack.c.h.b16 %v7834
    %v8178 = vunpack.c.l.b16 %v7835
    %v8179 = vunpack.c.h.b16 %v7835
    %v8180 = vunpack.c.l.b16 %v7836
    %v8181 = vunpack.c.h.b16 %v7836
    %v8182 = vunpack.c.l.b16 %v7837
    %v8183 = vunpack.c.h.b16 %v7837
    %v8184 = vunpack.c.l.b16 %v7838
    %v8185 = vunpack.c.h.b16 %v7838
    %v8186 = vunpack.c.l.b16 %v7839
    %v8187 = vunpack.c.h.b16 %v7839
    %v8188 = vunpack.c.l.b16 %v7840
    %v8189 = vunpack.c.h.b16 %v7840
    %v8190 = vunpack.c.l.b16 %v7841
    %v8191 = vunpack.c.h.b16 %v7841
    %v8192 = vunpack.c.l.b16 %v7842
    %v8193 = vunpack.c.h.b16 %v7842
    %v8194 = vunpack.c.l.b16 %v7843
    %v8195 = vunpack.c.h.b16 %v7843
    %v8196 = vunpack.c.l.b16 %v7844
    %v8197 = vunpack.c.h.b16 %v7844
    %v8198 = vunpack.c.l.b16 %v7845
    %v8199 = vunpack.c.h.b16 %v7845
    %v8200 = vunpack.c.l.b16 %v7846
    %v8201 = vunpack.c.h.b16 %v7846
    %v8202 = vunpack.c.l.b16 %v7847
    %v8203 = vunpack.c.h.b16 %v7847
    %v8204 = vunpack.c.l.b16 %v7848
    %v8205 = vunpack.c.h.b16 %v7848
    %v8206 = vunpack.c.l.b16 %v7849
    %v8207 = vunpack.c.h.b16 %v7849
    %v8208 = vunpack.c.l.b16 %v7850
    %v8209 = vunpack.c.h.b16 %v7850
    %v8210 = vunpack.c.l.b16 %v7851
    %v8211 = vunpack.c.h.b16 %v7851
    %v8212 = vunpack.c.l.b16 %v7852
    %v8213 = vunpack.c.h.b16 %v7852
    %v8214 = vunpack.c.l.b16 %v7853
    %v8215 = vunpack.c.h.b16 %v7853
    %v8216 = vunpack.c.l.b16 %v7854
    %v8217 = vunpack.c.h.b16 %v7854
    %v8218 = vunpack.c.l.b16 %v7855
    %v8219 = vunpack.c.h.b16 %v7855
    %v8220 = vunpack.c.l.b16 %v7856
    %v8221 = vunpack.c.h.b16 %v7856
    %v8222 = vunpack.c.l.b16 %v7857
    %v8223 = vunpack.c.h.b16 %v7857
    %v8224 = vunpack.c.l.b16 %v7858
    %v8225 = vunpack.c.h.b16 %v7858
    %v8226 = vunpack.c.l.b16 %v7859
    %v8227 = vunpack.c.h.b16 %v7859
    %v8228 = vunpack.c.l.b16 %v7860
    %v8229 = vunpack.c.h.b16 %v7860
    %v8230 = vunpack.c.l.b16 %v7861
    %v8231 = vunpack.c.h.b16 %v7861
    %v8232 = vunpack.c.l.b16 %v7862
    %v8233 = vunpack.c.h.b16 %v7862
    %v8234 = vunpack.c.l.b16 %v7863
    %v8235 = vunpack.c.h.b16 %v7863
    %v8236 = vunpack.c.l.b16 %v7864
    %v8237 = vunpack.c.h.b16 %v7864
    %v8238 = vunpack.c.l.b16 %v7865
    %v8239 = vunpack.c.h.b16 %v7865
    %v8240 = vunpack.c.l.b16 %v7866
    %v8241 = vunpack.c.h.b16 %v7866
    %v8242 = vunpack.c.l.b16 %v7867
    %v8243 = vunpack.c.h.b16 %v7867
    %v8244 = vunpack.c.l.b16 %v7868
    %v8245 = vunpack.c.h.b16 %v7868
    %v8246 = vunpack.c.l.b16 %v7869
    %v8247 = vunpack.c.h.b16 %v7869
    %v8248 = vunpack.c.l.b16 %v7870
    %v8249 = vunpack.c.h.b16 %v7870
    %v8250 = vunpack.c.l.b16 %v7871
    %v8251 = vunpack.c.h.b16 %v7871
    %v8252 = vunpack.c.l.b16 %v7872
    %v8253 = vunpack.c.h.b16 %v7872
    %v8254 = vunpack.c.l.b16 %v7873
    %v8255 = vunpack.c.h.b16 %v7873
    %v8256 = vunpack.c.l.b16 %v7874
    %v8257 = vunpack.c.h.b16 %v7874
    %v8258 = vunpack.c.l.b16 %v7875
    %v8259 = vunpack.c.h.b16 %v7875
    %v8260 = vpack.c.b16 %v8012, %v8004
    %v8261 = vpack.c.b16 %v8013, %v8005
    %v8262 = vpack.c.b16 %v8014, %v8006
    %v8263 = vpack.c.b16 %v8015, %v8007
    %v8264 = vpack.c.b16 %v8016, %v8008
    %v8265 = vpack.c.b16 %v8017, %v8009
    %v8266 = vpack.c.b16 %v8018, %v8010
    %v8267 = vpack.c.b16 %v8019, %v8011
    %v8268 = vpack.c.b16 %v8028, %v8020
    %v8269 = vpack.c.b16 %v8029, %v8021
    %v8270 = vpack.c.b16 %v8030, %v8022
    %v8271 = vpack.c.b16 %v8031, %v8023
    %v8272 = vpack.c.b16 %v8032, %v8024
    %v8273 = vpack.c.b16 %v8033, %v8025
    %v8274 = vpack.c.b16 %v8034, %v8026
    %v8275 = vpack.c.b16 %v8035, %v8027
    %v8276 = vpack.c.b16 %v8044, %v8036
    %v8277 = vpack.c.b16 %v8045, %v8037
    %v8278 = vpack.c.b16 %v8046, %v8038
    %v8279 = vpack.c.b16 %v8047, %v8039
    %v8280 = vpack.c.b16 %v8048, %v8040
    %v8281 = vpack.c.b16 %v8049, %v8041
    %v8282 = vpack.c.b16 %v8050, %v8042
    %v8283 = vpack.c.b16 %v8051, %v8043
    %v8284 = vpack.c.b16 %v8060, %v8052
    %v8285 = vpack.c.b16 %v8061, %v8053
    %v8286 = vpack.c.b16 %v8062, %v8054
    %v8287 = vpack.c.b16 %v8063, %v8055
    %v8288 = vpack.c.b16 %v8064, %v8056
    %v8289 = vpack.c.b16 %v8065, %v8057
    %v8290 = vpack.c.b16 %v8066, %v8058
    %v8291 = vpack.c.b16 %v8067, %v8059
    %v8292 = vpack.c.b16 %v8076, %v8068
    %v8293 = vpack.c.b16 %v8077, %v8069
    %v8294 = vpack.c.b16 %v8078, %v8070
    %v8295 = vpack.c.b16 %v8079, %v8071
    %v8296 = vpack.c.b16 %v8080, %v8072
    %v8297 = vpack.c.b16 %v8081, %v8073
    %v8298 = vpack.c.b16 %v8082, %v8074
    %v8299 = vpack.c.b16 %v8083, %v8075
    %v8300 = vpack.c.b16 %v8092, %v8084
    %v8301 = vpack.c.b16 %v8093, %v8085
    %v8302 = vpack.c.b16 %v8094, %v8086
    %v8303 = vpack.c.b16 %v8095, %v8087
    %v8304 = vpack.c.b16 %v8096, %v8088
    %v8305 = vpack.c.b16 %v8097, %v8089
    %v8306 = vpack.c.b16 %v8098, %v8090
    %v8307 = vpack.c.b16 %v8099, %v8091
    %v8308 = vpack.c.b16 %v8108, %v8100
    %v8309 = vpack.c.b16 %v8109, %v8101
    %v8310 = vpack.c.b16 %v8110, %v8102
    %v8311 = vpack.c.b16 %v8111, %v8103
    %v8312 = vpack.c.b16 %v8112, %v8104
    %v8313 = vpack.c.b16 %v8113, %v8105
    %v8314 = vpack.c.b16 %v8114, %v8106
    %v8315 = vpack.c.b16 %v8115, %v8107
    %v8316 = vpack.c.b16 %v8124, %v8116
    %v8317 = vpack.c.b16 %v8125, %v8117
    %v8318 = vpack.c.b16 %v8126, %v8118
    %v8319 = vpack.c.b16 %v8127, %v8119
    %v8320 = vpack.c.b16 %v8128, %v8120
    %v8321 = vpack.c.b16 %v8129, %v8121
    %v8322 = vpack.c.b16 %v8130, %v8122
    %v8323 = vpack.c.b16 %v8131, %v8123
    %v8324 = vpack.c.b16 %v8140, %v8132
    %v8325 = vpack.c.b16 %v8141, %v8133
    %v8326 = vpack.c.b16 %v8142, %v8134
    %v8327 = vpack.c.b16 %v8143, %v8135
    %v8328 = vpack.c.b16 %v8144, %v8136
    %v8329 = vpack.c.b16 %v8145, %v8137
    %v8330 = vpack.c.b16 %v8146, %v8138
    %v8331 = vpack.c.b16 %v8147, %v8139
    %v8332 = vpack.c.b16 %v8156, %v8148
    %v8333 = vpack.c.b16 %v8157, %v8149
    %v8334 = vpack.c.b16 %v8158, %v8150
    %v8335 = vpack.c.b16 %v8159, %v8151
    %v8336 = vpack.c.b16 %v8160, %v8152
    %v8337 = vpack.c.b16 %v8161, %v8153
    %v8338 = vpack.c.b16 %v8162, %v8154
    %v8339 = vpack.c.b16 %v8163, %v8155
    %v8340 = vpack.c.b16 %v8172, %v8164
    %v8341 = vpack.c.b16 %v8173, %v8165
    %v8342 = vpack.c.b16 %v8174, %v8166
    %v8343 = vpack.c.b16 %v8175, %v8167
    %v8344 = vpack.c.b16 %v8176, %v8168
    %v8345 = vpack.c.b16 %v8177, %v8169
    %v8346 = vpack.c.b16 %v8178, %v8170
    %v8347 = vpack.c.b16 %v8179, %v8171
    %v8348 = vpack.c.b16 %v8188, %v8180
    %v8349 = vpack.c.b16 %v8189, %v8181
    %v8350 = vpack.c.b16 %v8190, %v8182
    %v8351 = vpack.c.b16 %v8191, %v8183
    %v8352 = vpack.c.b16 %v8192, %v8184
    %v8353 = vpack.c.b16 %v8193, %v8185
    %v8354 = vpack.c.b16 %v8194, %v8186
    %v8355 = vpack.c.b16 %v8195, %v8187
    %v8356 = vpack.c.b16 %v8204, %v8196
    %v8357 = vpack.c.b16 %v8205, %v8197
    %v8358 = vpack.c.b16 %v8206, %v8198
    %v8359 = vpack.c.b16 %v8207, %v8199
    %v8360 = vpack.c.b16 %v8208, %v8200
    %v8361 = vpack.c.b16 %v8209, %v8201
    %v8362 = vpack.c.b16 %v8210, %v8202
    %v8363 = vpack.c.b16 %v8211, %v8203
    %v8364 = vpack.c.b16 %v8220, %v8212
    %v8365 = vpack.c.b16 %v8221, %v8213
    %v8366 = vpack.c.b16 %v8222, %v8214
    %v8367 = vpack.c.b16 %v8223, %v8215
    %v8368 = vpack.c.b16 %v8224, %v8216
    %v8369 = vpack.c.b16 %v8225, %v8217
    %v8370 = vpack.c.b16 %v8226, %v8218
    %v8371 = vpack.c.b16 %v8227, %v8219
    %v8372 = vpack.c.b16 %v8236, %v8228
    %v8373 = vpack.c.b16 %v8237, %v8229
    %v8374 = vpack.c.b16 %v8238, %v8230
    %v8375 = vpack.c.b16 %v8239, %v8231
    %v8376 = vpack.c.b16 %v8240, %v8232
    %v8377 = vpack.c.b16 %v8241, %v8233
    %v8378 = vpack.c.b16 %v8242, %v8234
    %v8379 = vpack.c.b16 %v8243, %v8235
    %v8380 = vpack.c.b16 %v8252, %v8244
    %v8381 = vpack.c.b16 %v8253, %v8245
    %v8382 = vpack.c.b16 %v8254, %v8246
    %v8383 = vpack.c.b16 %v8255, %v8247
    %v8384 = vpack.c.b16 %v8256, %v8248
    %v8385 = vpack.c.b16 %v8257, %v8249
    %v8386 = vpack.c.b16 %v8258, %v8250
    %v8387 = vpack.c.b16 %v8259, %v8251
    %8516 = vmatprep.subr.bf16.mxu0 %v8317
    %8517 = vmatpush1.bf16.msra.mxu0 %v8316
    %8518 = vmatprep.subr.bf16.mxu0 %v8309
    %8519 = vmatpush1.bf16.msra.mxu0 %v8308
    %8520 = vmatprep.subr.bf16.mxu0 %v8301
    %8521 = vmatpush1.bf16.msra.mxu0 %v8300
    %8522 = vmatprep.subr.bf16.mxu0 %v8293
    %8523 = vmatpush1.bf16.msra.mxu0 %v8292
    %8524 = vmatprep.subr.bf16.mxu0 %v8285
    %8525 = vmatpush1.bf16.msra.mxu0 %v8284
    %8526 = vmatprep.subr.bf16.mxu0 %v8277
    %8527 = vmatpush1.bf16.msra.mxu0 %v8276
    %8528 = vmatprep.subr.bf16.mxu0 %v8269
    %8529 = vmatpush1.bf16.msra.mxu0 %v8268
    %8530 = vmatprep.subr.bf16.mxu0 %v8261
    %8531 = vmatpush1.bf16.msra.mxu0 %v8260
    %8532 = vmatprep.subr.bf16.mxu0 %v8381
    %8533 = vmatpush2.bf16.msra.mxu0 %v8380
    %8534 = vmatprep.subr.bf16.mxu0 %v8373
    %8535 = vmatpush2.bf16.msra.mxu0 %v8372
    %8536 = vmatprep.subr.bf16.mxu0 %v8365
    %8537 = vmatpush2.bf16.msra.mxu0 %v8364
    %8538 = vmatprep.subr.bf16.mxu0 %v8357
    %8539 = vmatpush2.bf16.msra.mxu0 %v8356
    %8540 = vmatprep.subr.bf16.mxu0 %v8349
    %8541 = vmatpush2.bf16.msra.mxu0 %v8348
    %8542 = vmatprep.subr.bf16.mxu0 %v8341
    %8543 = vmatpush2.bf16.msra.mxu0 %v8340
    %8544 = vmatprep.subr.bf16.mxu0 %v8333
    %8545 = vmatpush2.bf16.msra.mxu0 %v8332
    %8546 = vmatprep.subr.bf16.mxu0 %v8325
    %8547 = vmatpush2.bf16.msra.mxu0 %v8324
    %8548 = vmatprep.mubr.bf16.mxu0 %v7738
    %8549 = vmatmul.mubr.bf16.gmra.mxu0 %v7728
    %v8550 = vpop.f32.mrf.mxu0
    %v8551 = vadd.f32 0.0, %v8550
    %v8552 = vpop.f32.mrf.mxu0
    %v8553 = vadd.f32 0.0, %v8552
    %v8554 = vpop.f32.mrf.mxu0
    %v8555 = vadd.f32 0.0, %v8554
    %v8556 = vpop.f32.mrf.mxu0
    %v8557 = vadd.f32 0.0, %v8556
    %8558 = vdwg.mxu0
    %8559 = vmatprep.subr.bf16.mxu0 %v8319
    %8560 = vmatpush1.bf16.msra.mxu0 %v8318
    %8561 = vmatprep.subr.bf16.mxu0 %v8311
    %8562 = vmatpush1.bf16.msra.mxu0 %v8310
    %8563 = vmatprep.subr.bf16.mxu0 %v8303
    %8564 = vmatpush1.bf16.msra.mxu0 %v8302
    %8565 = vmatprep.subr.bf16.mxu0 %v8295
    %8566 = vmatpush1.bf16.msra.mxu0 %v8294
    %8567 = vmatprep.subr.bf16.mxu0 %v8287
    %8568 = vmatpush1.bf16.msra.mxu0 %v8286
    %8569 = vmatprep.subr.bf16.mxu0 %v8279
    %8570 = vmatpush1.bf16.msra.mxu0 %v8278
    %8571 = vmatprep.subr.bf16.mxu0 %v8271
    %8572 = vmatpush1.bf16.msra.mxu0 %v8270
    %8573 = vmatprep.subr.bf16.mxu0 %v8263
    %8574 = vmatpush1.bf16.msra.mxu0 %v8262
    %8575 = vmatprep.subr.bf16.mxu0 %v8383
    %8576 = vmatpush2.bf16.msra.mxu0 %v8382
    %8577 = vmatprep.subr.bf16.mxu0 %v8375
    %8578 = vmatpush2.bf16.msra.mxu0 %v8374
    %8579 = vmatprep.subr.bf16.mxu0 %v8367
    %8580 = vmatpush2.bf16.msra.mxu0 %v8366
    %8581 = vmatprep.subr.bf16.mxu0 %v8359
    %8582 = vmatpush2.bf16.msra.mxu0 %v8358
    %8583 = vmatprep.subr.bf16.mxu0 %v8351
    %8584 = vmatpush2.bf16.msra.mxu0 %v8350
    %8585 = vmatprep.subr.bf16.mxu0 %v8343
    %8586 = vmatpush2.bf16.msra.mxu0 %v8342
    %8587 = vmatprep.subr.bf16.mxu0 %v8335
    %8588 = vmatpush2.bf16.msra.mxu0 %v8334
    %8589 = vmatprep.subr.bf16.mxu0 %v8327
    %8590 = vmatpush2.bf16.msra.mxu0 %v8326
    %8591 = vmatprep.mubr.bf16.mxu0 %v7738
    %8592 = vmatmul.mubr.bf16.gmra.mxu0 %v7728
    %v8593 = vpop.f32.mrf.mxu0
    %v8594 = vadd.f32 0.0, %v8593
    %v8595 = vpop.f32.mrf.mxu0
    %v8596 = vadd.f32 0.0, %v8595
    %v8597 = vpop.f32.mrf.mxu0
    %v8598 = vadd.f32 0.0, %v8597
    %v8599 = vpop.f32.mrf.mxu0
    %v8600 = vadd.f32 0.0, %v8599
    %8601 = vdwg.mxu0
    %8602 = vmatprep.subr.bf16.mxu0 %v8321
    %8603 = vmatpush1.bf16.msra.mxu0 %v8320
    %8604 = vmatprep.subr.bf16.mxu0 %v8313
    %8605 = vmatpush1.bf16.msra.mxu0 %v8312
    %8606 = vmatprep.subr.bf16.mxu0 %v8305
    %8607 = vmatpush1.bf16.msra.mxu0 %v8304
    %8608 = vmatprep.subr.bf16.mxu0 %v8297
    %8609 = vmatpush1.bf16.msra.mxu0 %v8296
    %8610 = vmatprep.subr.bf16.mxu0 %v8289
    %8611 = vmatpush1.bf16.msra.mxu0 %v8288
    %8612 = vmatprep.subr.bf16.mxu0 %v8281
    %8613 = vmatpush1.bf16.msra.mxu0 %v8280
    %8614 = vmatprep.subr.bf16.mxu0 %v8273
    %8615 = vmatpush1.bf16.msra.mxu0 %v8272
    %8616 = vmatprep.subr.bf16.mxu0 %v8265
    %8617 = vmatpush1.bf16.msra.mxu0 %v8264
    %8618 = vmatprep.subr.bf16.mxu0 %v8385
    %8619 = vmatpush2.bf16.msra.mxu0 %v8384
    %8620 = vmatprep.subr.bf16.mxu0 %v8377
    %8621 = vmatpush2.bf16.msra.mxu0 %v8376
    %8622 = vmatprep.subr.bf16.mxu0 %v8369
    %8623 = vmatpush2.bf16.msra.mxu0 %v8368
    %8624 = vmatprep.subr.bf16.mxu0 %v8361
    %8625 = vmatpush2.bf16.msra.mxu0 %v8360
    %8626 = vmatprep.subr.bf16.mxu0 %v8353
    %8627 = vmatpush2.bf16.msra.mxu0 %v8352
    %8628 = vmatprep.subr.bf16.mxu0 %v8345
    %8629 = vmatpush2.bf16.msra.mxu0 %v8344
    %8630 = vmatprep.subr.bf16.mxu0 %v8337
    %8631 = vmatpush2.bf16.msra.mxu0 %v8336
    %8632 = vmatprep.subr.bf16.mxu0 %v8329
    %8633 = vmatpush2.bf16.msra.mxu0 %v8328
    %8634 = vmatprep.mubr.bf16.mxu0 %v7738
    %8635 = vmatmul.mubr.bf16.gmra.mxu0 %v7728
    %v8636 = vpop.f32.mrf.mxu0
    %v8637 = vadd.f32 0.0, %v8636
    %v8638 = vpop.f32.mrf.mxu0
    %v8639 = vadd.f32 0.0, %v8638
    %v8640 = vpop.f32.mrf.mxu0
    %v8641 = vadd.f32 0.0, %v8640
    %v8642 = vpop.f32.mrf.mxu0
    %v8643 = vadd.f32 0.0, %v8642
    %8644 = vdwg.mxu0
    %8645 = vmatprep.subr.bf16.mxu0 %v8323
    %8646 = vmatpush1.bf16.msra.mxu0 %v8322
    %8647 = vmatprep.subr.bf16.mxu0 %v8315
    %8648 = vmatpush1.bf16.msra.mxu0 %v8314
    %8649 = vmatprep.subr.bf16.mxu0 %v8307
    %8650 = vmatpush1.bf16.msra.mxu0 %v8306
    %8651 = vmatprep.subr.bf16.mxu0 %v8299
    %8652 = vmatpush1.bf16.msra.mxu0 %v8298
    %8653 = vmatprep.subr.bf16.mxu0 %v8291
    %8654 = vmatpush1.bf16.msra.mxu0 %v8290
    %8655 = vmatprep.subr.bf16.mxu0 %v8283
    %8656 = vmatpush1.bf16.msra.mxu0 %v8282
    %8657 = vmatprep.subr.bf16.mxu0 %v8275
    %8658 = vmatpush1.bf16.msra.mxu0 %v8274
    %8659 = vmatprep.subr.bf16.mxu0 %v8267
    %8660 = vmatpush1.bf16.msra.mxu0 %v8266
    %8661 = vmatprep.subr.bf16.mxu0 %v8387
    %8662 = vmatpush2.bf16.msra.mxu0 %v8386
    %8663 = vmatprep.subr.bf16.mxu0 %v8379
    %8664 = vmatpush2.bf16.msra.mxu0 %v8378
    %8665 = vmatprep.subr.bf16.mxu0 %v8371
    %8666 = vmatpush2.bf16.msra.mxu0 %v8370
    %8667 = vmatprep.subr.bf16.mxu0 %v8363
    %8668 = vmatpush2.bf16.msra.mxu0 %v8362
    %8669 = vmatprep.subr.bf16.mxu0 %v8355
    %8670 = vmatpush2.bf16.msra.mxu0 %v8354
    %8671 = vmatprep.subr.bf16.mxu0 %v8347
    %8672 = vmatpush2.bf16.msra.mxu0 %v8346
    %8673 = vmatprep.subr.bf16.mxu0 %v8339
    %8674 = vmatpush2.bf16.msra.mxu0 %v8338
    %8675 = vmatprep.subr.bf16.mxu0 %v8331
    %8676 = vmatpush2.bf16.msra.mxu0 %v8330
    %8677 = vmatprep.mubr.bf16.mxu0 %v7738
    %8678 = vmatmul.mubr.bf16.gmra.mxu0 %v7728
    %v8679 = vpop.f32.mrf.mxu0
    %v8680 = vadd.f32 0.0, %v8679
    %v8681 = vpop.f32.mrf.mxu0
    %v8682 = vadd.f32 0.0, %v8681
    %v8683 = vpop.f32.mrf.mxu0
    %v8684 = vadd.f32 0.0, %v8683
    %v8685 = vpop.f32.mrf.mxu0
    %v8686 = vadd.f32 0.0, %v8685
    %8687 = vdwg.mxu0
    %v8688 = vld [vmem:[%s3197] sm:$0xff]
    %v8689 = vld [vmem:[%s3197 + $0x8] sm:$0xff]
    %v8690 = vld [vmem:[%s3197 + $0x20] sm:$0xff]
    %v8691 = vld [vmem:[%s3197 + $0x28] sm:$0xff]
    %v8692 = vunpack.c.l.bf16 %v8688
    %v8693 = vunpack.c.h.bf16 %v8688
    %v8694 = vunpack.c.l.bf16 %v8689
    %v8695 = vunpack.c.h.bf16 %v8689
    %v8696 = vunpack.c.l.bf16 %v8690
    %v8697 = vunpack.c.h.bf16 %v8690
    %v8698 = vunpack.c.l.bf16 %v8691
    %v8699 = vunpack.c.h.bf16 %v8691
    %v8700 = vadd.f32 %v8692, %v8551
    %v8701 = vadd.f32 %v8693, %v8553
    %v8702 = vadd.f32 %v8694, %v8594
    %v8703 = vadd.f32 %v8695, %v8596
    %v8704 = vadd.f32 %v8696, %v8555
    %v8705 = vadd.f32 %v8697, %v8557
    %v8706 = vadd.f32 %v8698, %v8598
    %v8707 = vadd.f32 %v8699, %v8600
    %v8708 = vld [vmem:[%s3174 + $0x10] sm:$0xff]
    %v8709 = vld [vmem:[%s3174 + $0x18] sm:$0xff]
    %v8710 = vld [vmem:[%s3174 + $0x30] sm:$0xff]
    %v8711 = vld [vmem:[%s3174 + $0x38] sm:$0xff]
    %v8712 = vunpack.c.l.bf16 %v8708
    %v8713 = vunpack.c.h.bf16 %v8708
    %v8714 = vunpack.c.l.bf16 %v8709
    %v8715 = vunpack.c.h.bf16 %v8709
    %v8716 = vunpack.c.l.bf16 %v8710
    %v8717 = vunpack.c.h.bf16 %v8710
    %v8718 = vunpack.c.l.bf16 %v8711
    %v8719 = vunpack.c.h.bf16 %v8711
    %v8720 = vadd.f32 %v8712, %v8637
    %v8721 = vadd.f32 %v8713, %v8639
    %v8722 = vadd.f32 %v8714, %v8680
    %v8723 = vadd.f32 %v8715, %v8682
    %v8724 = vadd.f32 %v8716, %v8641
    %v8725 = vadd.f32 %v8717, %v8643
    %v8726 = vadd.f32 %v8718, %v8684
    %v8727 = vadd.f32 %v8719, %v8686
    %v8728 = vxor.u32 %v8700, 2147483648
    %v8729 = vxor.u32 %v8704, 2147483648
    %v8730 = vmul.f32 %v8728, 1.442695
    %v8731 = vpow.pop %v8730
    %v8732 = vmul.f32 %v8729, 1.442695
    %v8733 = vpow.pop %v8732
    %v8734 = vadd.f32 %v8731, 1.0
    %v8735 = vadd.f32 %v8733, 1.0
    %v8736 = vrcp.pop %v8734
    %v8737 = vmul.f32 1.0, %v8736
    %v8738 = vrcp.pop %v8735
    %v8739 = vmul.f32 1.0, %v8738
    %v8740 = vxor.u32 %v8701, 2147483648
    %v8741 = vxor.u32 %v8705, 2147483648
    %v8742 = vmul.f32 %v8740, 1.442695
    %v8743 = vpow.pop %v8742
    %v8744 = vmul.f32 %v8741, 1.442695
    %v8745 = vpow.pop %v8744
    %v8746 = vadd.f32 %v8743, 1.0
    %v8747 = vadd.f32 %v8745, 1.0
    %v8748 = vrcp.pop %v8746
    %v8749 = vmul.f32 1.0, %v8748
    %v8750 = vrcp.pop %v8747
    %v8751 = vmul.f32 1.0, %v8750
    %v8752 = vtanh.pop %v8702
    %v8753 = vtanh.pop %v8706
    %v8754 = vxor.u32 %v8703, 2147483648
    %v8755 = vxor.u32 %v8707, 2147483648
    %v8756 = vmul.f32 %v8754, 1.442695
    %v8757 = vpow.pop %v8756
    %v8758 = vmul.f32 %v8755, 1.442695
    %v8759 = vpow.pop %v8758
    %v8760 = vadd.f32 %v8757, 1.0
    %v8761 = vadd.f32 %v8759, 1.0
    %v8762 = vrcp.pop %v8760
    %v8763 = vmul.f32 1.0, %v8762
    %v8764 = vrcp.pop %v8761
    %v8765 = vmul.f32 1.0, %v8764
    %v8766 = vmul.f32 %v8749, %v7674
    %v8767 = vmul.f32 %v8751, %v7675
    %v8768 = vmul.f32 %v8737, %v8752
    %v8769 = vmul.f32 %v8739, %v8753
    %v8770 = vadd.f32 %v8766, %v8768
    %v8771 = vadd.f32 %v8767, %v8769
    %v8772 = vtanh.pop %v8770
    %v8773 = vtanh.pop %v8771
    %v8774 = vmul.f32 %v8763, %v8772
    %v8775 = vmul.f32 %v8765, %v8773
    %v8776 = vxor.u32 %v8720, 2147483648
    %v8777 = vxor.u32 %v8724, 2147483648
    %v8778 = vmul.f32 %v8776, 1.442695
    %v8779 = vpow.pop %v8778
    %v8780 = vmul.f32 %v8777, 1.442695
    %v8781 = vpow.pop %v8780
    %v8782 = vadd.f32 %v8779, 1.0
    %v8783 = vadd.f32 %v8781, 1.0
    %v8784 = vrcp.pop %v8782
    %v8785 = vmul.f32 1.0, %v8784
    %v8786 = vrcp.pop %v8783
    %v8787 = vmul.f32 1.0, %v8786
    %v8788 = vxor.u32 %v8721, 2147483648
    %v8789 = vxor.u32 %v8725, 2147483648
    %v8790 = vmul.f32 %v8788, 1.442695
    %v8791 = vpow.pop %v8790
    %v8792 = vmul.f32 %v8789, 1.442695
    %v8793 = vpow.pop %v8792
    %v8794 = vadd.f32 %v8791, 1.0
    %v8795 = vadd.f32 %v8793, 1.0
    %v8796 = vrcp.pop %v8794
    %v8797 = vmul.f32 1.0, %v8796
    %v8798 = vrcp.pop %v8795
    %v8799 = vmul.f32 1.0, %v8798
    %v8800 = vtanh.pop %v8722
    %v8801 = vtanh.pop %v8726
    %v8802 = vxor.u32 %v8723, 2147483648
    %v8803 = vxor.u32 %v8727, 2147483648
    %v8804 = vmul.f32 %v8802, 1.442695
    %v8805 = vpow.pop %v8804
    %v8806 = vmul.f32 %v8803, 1.442695
    %v8807 = vpow.pop %v8806
    %v8808 = vadd.f32 %v8805, 1.0
    %v8809 = vadd.f32 %v8807, 1.0
    %v8810 = vrcp.pop %v8808
    %v8811 = vmul.f32 1.0, %v8810
    %v8812 = vrcp.pop %v8809
    %v8813 = vmul.f32 1.0, %v8812
    %v8814 = vmul.f32 %v8797, %v7722
    %v8815 = vmul.f32 %v8799, %v7723
    %v8816 = vmul.f32 %v8785, %v8800
    %v8817 = vmul.f32 %v8787, %v8801
    %v8818 = vadd.f32 %v8814, %v8816
    %v8819 = vadd.f32 %v8815, %v8817
    %v8820 = vtanh.pop %v8818
    %v8821 = vtanh.pop %v8819
    %v8822 = vmul.f32 %v8811, %v8820
    %v8823 = vmul.f32 %v8813, %v8821
    %v8824 = vpack.c.bf16 %v8775, %v8774
    %v8826 = vunpack.c.l.b16 %v8824
    %v8827 = vunpack.c.h.b16 %v8824
    %v8828 = vpack.c.b16 %v8826, %v8826
    %v8829 = vpack.c.b16 %v8827, %v8827
    %8832 = vst [vmem:[%s3337] sm:$0xf] %v8828
    %8833 = vst [vmem:[%s3337 + $0x8] sm:$0xf] %v8829
    %v8834 = vpack.c.bf16 %v8823, %v8822
    %v8836 = vunpack.c.l.b16 %v8834
    %v8837 = vunpack.c.h.b16 %v8834
    %v8838 = vpack.c.b16 %v8836, %v8836
    %v8839 = vpack.c.b16 %v8837, %v8837
    %8842 = vst [vmem:[%s3324 + $0x4] sm:$0xf] %v8838
    %8843 = vst [vmem:[%s3324 + $0xc] sm:$0xf] %v8839
    %v8844 = vld [vmem:[#allocation4] sm:$0xff]
    %v8845 = vld [vmem:[#allocation4 + $0x8] sm:$0xff]
    %v8846 = vld [vmem:[#allocation4 + $0x10] sm:$0xff]
    %v8847 = vld [vmem:[#allocation4 + $0x18] sm:$0xff]
    %v8848 = vld [vmem:[#allocation4 + $0x20] sm:$0xff]
    %v8849 = vld [vmem:[#allocation4 + $0x28] sm:$0xff]
    %v8850 = vld [vmem:[#allocation4 + $0x30] sm:$0xff]
    %v8851 = vld [vmem:[#allocation4 + $0x38] sm:$0xff]
    %v8852 = vld [vmem:[#allocation4 + $0x40] sm:$0xff]
    %v8853 = vld [vmem:[#allocation4 + $0x48] sm:$0xff]
    %v8854 = vld [vmem:[#allocation4 + $0x50] sm:$0xff]
    %v8855 = vld [vmem:[#allocation4 + $0x58] sm:$0xff]
    %v8856 = vld [vmem:[#allocation4 + $0x60] sm:$0xff]
    %v8857 = vld [vmem:[#allocation4 + $0x68] sm:$0xff]
    %v8858 = vld [vmem:[#allocation4 + $0x70] sm:$0xff]
    %v8859 = vld [vmem:[#allocation4 + $0x78] sm:$0xff]
    %v8860 = vld [vmem:[#allocation4 + $0x80] sm:$0xff]
    %v8861 = vld [vmem:[#allocation4 + $0x88] sm:$0xff]
    %v8862 = vld [vmem:[#allocation4 + $0x90] sm:$0xff]
    %v8863 = vld [vmem:[#allocation4 + $0x98] sm:$0xff]
    %v8864 = vld [vmem:[#allocation4 + $0xa0] sm:$0xff]
    %v8865 = vld [vmem:[#allocation4 + $0xa8] sm:$0xff]
    %v8866 = vld [vmem:[#allocation4 + $0xb0] sm:$0xff]
    %v8867 = vld [vmem:[#allocation4 + $0xb8] sm:$0xff]
    %v8868 = vld [vmem:[#allocation4 + $0xc0] sm:$0xff]
    %v8869 = vld [vmem:[#allocation4 + $0xc8] sm:$0xff]
    %v8870 = vld [vmem:[#allocation4 + $0xd0] sm:$0xff]
    %v8871 = vld [vmem:[#allocation4 + $0xd8] sm:$0xff]
    %v8872 = vld [vmem:[#allocation4 + $0xe0] sm:$0xff]
    %v8873 = vld [vmem:[#allocation4 + $0xe8] sm:$0xff]
    %v8874 = vld [vmem:[#allocation4 + $0xf0] sm:$0xff]
    %v8875 = vld [vmem:[#allocation4 + $0xf8] sm:$0xff]
    %v8876 = vld [vmem:[#allocation4 + $0x100] sm:$0xff]
    %v8877 = vld [vmem:[#allocation4 + $0x108] sm:$0xff]
    %v8878 = vld [vmem:[#allocation4 + $0x110] sm:$0xff]
    %v8879 = vld [vmem:[#allocation4 + $0x118] sm:$0xff]
    %v8880 = vld [vmem:[#allocation4 + $0x120] sm:$0xff]
    %v8881 = vld [vmem:[#allocation4 + $0x128] sm:$0xff]
    %v8882 = vld [vmem:[#allocation4 + $0x130] sm:$0xff]
    %v8883 = vld [vmem:[#allocation4 + $0x138] sm:$0xff]
    %v8884 = vld [vmem:[#allocation4 + $0x140] sm:$0xff]
    %v8885 = vld [vmem:[#allocation4 + $0x148] sm:$0xff]
    %v8886 = vld [vmem:[#allocation4 + $0x150] sm:$0xff]
    %v8887 = vld [vmem:[#allocation4 + $0x158] sm:$0xff]
    %v8888 = vld [vmem:[#allocation4 + $0x160] sm:$0xff]
    %v8889 = vld [vmem:[#allocation4 + $0x168] sm:$0xff]
    %v8890 = vld [vmem:[#allocation4 + $0x170] sm:$0xff]
    %v8891 = vld [vmem:[#allocation4 + $0x178] sm:$0xff]
    %v8892 = vld [vmem:[#allocation4 + $0x180] sm:$0xff]
    %v8893 = vld [vmem:[#allocation4 + $0x188] sm:$0xff]
    %v8894 = vld [vmem:[#allocation4 + $0x190] sm:$0xff]
    %v8895 = vld [vmem:[#allocation4 + $0x198] sm:$0xff]
    %v8896 = vld [vmem:[#allocation4 + $0x1a0] sm:$0xff]
    %v8897 = vld [vmem:[#allocation4 + $0x1a8] sm:$0xff]
    %v8898 = vld [vmem:[#allocation4 + $0x1b0] sm:$0xff]
    %v8899 = vld [vmem:[#allocation4 + $0x1b8] sm:$0xff]
    %v8900 = vld [vmem:[#allocation4 + $0x1c0] sm:$0xff]
    %v8901 = vld [vmem:[#allocation4 + $0x1c8] sm:$0xff]
    %v8902 = vld [vmem:[#allocation4 + $0x1d0] sm:$0xff]
    %v8903 = vld [vmem:[#allocation4 + $0x1d8] sm:$0xff]
    %v8904 = vld [vmem:[#allocation4 + $0x1e0] sm:$0xff]
    %v8905 = vld [vmem:[#allocation4 + $0x1e8] sm:$0xff]
    %v8906 = vld [vmem:[#allocation4 + $0x1f0] sm:$0xff]
    %v8907 = vld [vmem:[#allocation4 + $0x1f8] sm:$0xff]
    %v8908 = vld [vmem:[#allocation4 + $0x200] sm:$0xff]
    %v8909 = vld [vmem:[#allocation4 + $0x208] sm:$0xff]
    %v8910 = vld [vmem:[#allocation4 + $0x210] sm:$0xff]
    %v8911 = vld [vmem:[#allocation4 + $0x218] sm:$0xff]
    %v8912 = vld [vmem:[#allocation4 + $0x220] sm:$0xff]
    %v8913 = vld [vmem:[#allocation4 + $0x228] sm:$0xff]
    %v8914 = vld [vmem:[#allocation4 + $0x230] sm:$0xff]
    %v8915 = vld [vmem:[#allocation4 + $0x238] sm:$0xff]
    %v8916 = vld [vmem:[#allocation4 + $0x240] sm:$0xff]
    %v8917 = vld [vmem:[#allocation4 + $0x248] sm:$0xff]
    %v8918 = vld [vmem:[#allocation4 + $0x250] sm:$0xff]
    %v8919 = vld [vmem:[#allocation4 + $0x258] sm:$0xff]
    %v8920 = vld [vmem:[#allocation4 + $0x260] sm:$0xff]
    %v8921 = vld [vmem:[#allocation4 + $0x268] sm:$0xff]
    %v8922 = vld [vmem:[#allocation4 + $0x270] sm:$0xff]
    %v8923 = vld [vmem:[#allocation4 + $0x278] sm:$0xff]
    %v8924 = vld [vmem:[#allocation4 + $0x280] sm:$0xff]
    %v8925 = vld [vmem:[#allocation4 + $0x288] sm:$0xff]
    %v8926 = vld [vmem:[#allocation4 + $0x290] sm:$0xff]
    %v8927 = vld [vmem:[#allocation4 + $0x298] sm:$0xff]
    %v8928 = vld [vmem:[#allocation4 + $0x2a0] sm:$0xff]
    %v8929 = vld [vmem:[#allocation4 + $0x2a8] sm:$0xff]
    %v8930 = vld [vmem:[#allocation4 + $0x2b0] sm:$0xff]
    %v8931 = vld [vmem:[#allocation4 + $0x2b8] sm:$0xff]
    %v8932 = vld [vmem:[#allocation4 + $0x2c0] sm:$0xff]
    %v8933 = vld [vmem:[#allocation4 + $0x2c8] sm:$0xff]
    %v8934 = vld [vmem:[#allocation4 + $0x2d0] sm:$0xff]
    %v8935 = vld [vmem:[#allocation4 + $0x2d8] sm:$0xff]
    %v8936 = vld [vmem:[#allocation4 + $0x2e0] sm:$0xff]
    %v8937 = vld [vmem:[#allocation4 + $0x2e8] sm:$0xff]
    %v8938 = vld [vmem:[#allocation4 + $0x2f0] sm:$0xff]
    %v8939 = vld [vmem:[#allocation4 + $0x2f8] sm:$0xff]
    %v8940 = vld [vmem:[#allocation4 + $0x300] sm:$0xff]
    %v8941 = vld [vmem:[#allocation4 + $0x308] sm:$0xff]
    %v8942 = vld [vmem:[#allocation4 + $0x310] sm:$0xff]
    %v8943 = vld [vmem:[#allocation4 + $0x318] sm:$0xff]
    %v8944 = vld [vmem:[#allocation4 + $0x320] sm:$0xff]
    %v8945 = vld [vmem:[#allocation4 + $0x328] sm:$0xff]
    %v8946 = vld [vmem:[#allocation4 + $0x330] sm:$0xff]
    %v8947 = vld [vmem:[#allocation4 + $0x338] sm:$0xff]
    %v8948 = vld [vmem:[#allocation4 + $0x340] sm:$0xff]
    %v8949 = vld [vmem:[#allocation4 + $0x348] sm:$0xff]
    %v8950 = vld [vmem:[#allocation4 + $0x350] sm:$0xff]
    %v8951 = vld [vmem:[#allocation4 + $0x358] sm:$0xff]
    %v8952 = vld [vmem:[#allocation4 + $0x360] sm:$0xff]
    %v8953 = vld [vmem:[#allocation4 + $0x368] sm:$0xff]
    %v8954 = vld [vmem:[#allocation4 + $0x370] sm:$0xff]
    %v8955 = vld [vmem:[#allocation4 + $0x378] sm:$0xff]
    %v8956 = vld [vmem:[#allocation4 + $0x380] sm:$0xff]
    %v8957 = vld [vmem:[#allocation4 + $0x388] sm:$0xff]
    %v8958 = vld [vmem:[#allocation4 + $0x390] sm:$0xff]
    %v8959 = vld [vmem:[#allocation4 + $0x398] sm:$0xff]
    %v8960 = vld [vmem:[#allocation4 + $0x3a0] sm:$0xff]
    %v8961 = vld [vmem:[#allocation4 + $0x3a8] sm:$0xff]
    %v8962 = vld [vmem:[#allocation4 + $0x3b0] sm:$0xff]
    %v8963 = vld [vmem:[#allocation4 + $0x3b8] sm:$0xff]
    %v8964 = vld [vmem:[#allocation4 + $0x3c0] sm:$0xff]
    %v8965 = vld [vmem:[#allocation4 + $0x3c8] sm:$0xff]
    %v8966 = vld [vmem:[#allocation4 + $0x3d0] sm:$0xff]
    %v8967 = vld [vmem:[#allocation4 + $0x3d8] sm:$0xff]
    %v8968 = vld [vmem:[#allocation4 + $0x3e0] sm:$0xff]
    %v8969 = vld [vmem:[#allocation4 + $0x3e8] sm:$0xff]
    %v8970 = vld [vmem:[#allocation4 + $0x3f0] sm:$0xff]
    %v8971 = vld [vmem:[#allocation4 + $0x3f8] sm:$0xff]
    %v9100 = vunpack.c.l.b16 %v8844
    %v9101 = vunpack.c.h.b16 %v8844
    %v9102 = vunpack.c.l.b16 %v8845
    %v9103 = vunpack.c.h.b16 %v8845
    %v9104 = vunpack.c.l.b16 %v8846
    %v9105 = vunpack.c.h.b16 %v8846
    %v9106 = vunpack.c.l.b16 %v8847
    %v9107 = vunpack.c.h.b16 %v8847
    %v9108 = vunpack.c.l.b16 %v8848
    %v9109 = vunpack.c.h.b16 %v8848
    %v9110 = vunpack.c.l.b16 %v8849
    %v9111 = vunpack.c.h.b16 %v8849
    %v9112 = vunpack.c.l.b16 %v8850
    %v9113 = vunpack.c.h.b16 %v8850
    %v9114 = vunpack.c.l.b16 %v8851
    %v9115 = vunpack.c.h.b16 %v8851
    %v9116 = vunpack.c.l.b16 %v8852
    %v9117 = vunpack.c.h.b16 %v8852
    %v9118 = vunpack.c.l.b16 %v8853
    %v9119 = vunpack.c.h.b16 %v8853
    %v9120 = vunpack.c.l.b16 %v8854
    %v9121 = vunpack.c.h.b16 %v8854
    %v9122 = vunpack.c.l.b16 %v8855
    %v9123 = vunpack.c.h.b16 %v8855
    %v9124 = vunpack.c.l.b16 %v8856
    %v9125 = vunpack.c.h.b16 %v8856
    %v9126 = vunpack.c.l.b16 %v8857
    %v9127 = vunpack.c.h.b16 %v8857
    %v9128 = vunpack.c.l.b16 %v8858
    %v9129 = vunpack.c.h.b16 %v8858
    %v9130 = vunpack.c.l.b16 %v8859
    %v9131 = vunpack.c.h.b16 %v8859
    %v9132 = vunpack.c.l.b16 %v8860
    %v9133 = vunpack.c.h.b16 %v8860
    %v9134 = vunpack.c.l.b16 %v8861
    %v9135 = vunpack.c.h.b16 %v8861
    %v9136 = vunpack.c.l.b16 %v8862
    %v9137 = vunpack.c.h.b16 %v8862
    %v9138 = vunpack.c.l.b16 %v8863
    %v9139 = vunpack.c.h.b16 %v8863
    %v9140 = vunpack.c.l.b16 %v8864
    %v9141 = vunpack.c.h.b16 %v8864
    %v9142 = vunpack.c.l.b16 %v8865
    %v9143 = vunpack.c.h.b16 %v8865
    %v9144 = vunpack.c.l.b16 %v8866
    %v9145 = vunpack.c.h.b16 %v8866
    %v9146 = vunpack.c.l.b16 %v8867
    %v9147 = vunpack.c.h.b16 %v8867
    %v9148 = vunpack.c.l.b16 %v8868
    %v9149 = vunpack.c.h.b16 %v8868
    %v9150 = vunpack.c.l.b16 %v8869
    %v9151 = vunpack.c.h.b16 %v8869
    %v9152 = vunpack.c.l.b16 %v8870
    %v9153 = vunpack.c.h.b16 %v8870
    %v9154 = vunpack.c.l.b16 %v8871
    %v9155 = vunpack.c.h.b16 %v8871
    %v9156 = vunpack.c.l.b16 %v8872
    %v9157 = vunpack.c.h.b16 %v8872
    %v9158 = vunpack.c.l.b16 %v8873
    %v9159 = vunpack.c.h.b16 %v8873
    %v9160 = vunpack.c.l.b16 %v8874
    %v9161 = vunpack.c.h.b16 %v8874
    %v9162 = vunpack.c.l.b16 %v8875
    %v9163 = vunpack.c.h.b16 %v8875
    %v9164 = vunpack.c.l.b16 %v8876
    %v9165 = vunpack.c.h.b16 %v8876
    %v9166 = vunpack.c.l.b16 %v8877
    %v9167 = vunpack.c.h.b16 %v8877
    %v9168 = vunpack.c.l.b16 %v8878
    %v9169 = vunpack.c.h.b16 %v8878
    %v9170 = vunpack.c.l.b16 %v8879
    %v9171 = vunpack.c.h.b16 %v8879
    %v9172 = vunpack.c.l.b16 %v8880
    %v9173 = vunpack.c.h.b16 %v8880
    %v9174 = vunpack.c.l.b16 %v8881
    %v9175 = vunpack.c.h.b16 %v8881
    %v9176 = vunpack.c.l.b16 %v8882
    %v9177 = vunpack.c.h.b16 %v8882
    %v9178 = vunpack.c.l.b16 %v8883
    %v9179 = vunpack.c.h.b16 %v8883
    %v9180 = vunpack.c.l.b16 %v8884
    %v9181 = vunpack.c.h.b16 %v8884
    %v9182 = vunpack.c.l.b16 %v8885
    %v9183 = vunpack.c.h.b16 %v8885
    %v9184 = vunpack.c.l.b16 %v8886
    %v9185 = vunpack.c.h.b16 %v8886
    %v9186 = vunpack.c.l.b16 %v8887
    %v9187 = vunpack.c.h.b16 %v8887
    %v9188 = vunpack.c.l.b16 %v8888
    %v9189 = vunpack.c.h.b16 %v8888
    %v9190 = vunpack.c.l.b16 %v8889
    %v9191 = vunpack.c.h.b16 %v8889
    %v9192 = vunpack.c.l.b16 %v8890
    %v9193 = vunpack.c.h.b16 %v8890
    %v9194 = vunpack.c.l.b16 %v8891
    %v9195 = vunpack.c.h.b16 %v8891
    %v9196 = vunpack.c.l.b16 %v8892
    %v9197 = vunpack.c.h.b16 %v8892
    %v9198 = vunpack.c.l.b16 %v8893
    %v9199 = vunpack.c.h.b16 %v8893
    %v9200 = vunpack.c.l.b16 %v8894
    %v9201 = vunpack.c.h.b16 %v8894
    %v9202 = vunpack.c.l.b16 %v8895
    %v9203 = vunpack.c.h.b16 %v8895
    %v9204 = vunpack.c.l.b16 %v8896
    %v9205 = vunpack.c.h.b16 %v8896
    %v9206 = vunpack.c.l.b16 %v8897
    %v9207 = vunpack.c.h.b16 %v8897
    %v9208 = vunpack.c.l.b16 %v8898
    %v9209 = vunpack.c.h.b16 %v8898
    %v9210 = vunpack.c.l.b16 %v8899
    %v9211 = vunpack.c.h.b16 %v8899
    %v9212 = vunpack.c.l.b16 %v8900
    %v9213 = vunpack.c.h.b16 %v8900
    %v9214 = vunpack.c.l.b16 %v8901
    %v9215 = vunpack.c.h.b16 %v8901
    %v9216 = vunpack.c.l.b16 %v8902
    %v9217 = vunpack.c.h.b16 %v8902
    %v9218 = vunpack.c.l.b16 %v8903
    %v9219 = vunpack.c.h.b16 %v8903
    %v9220 = vunpack.c.l.b16 %v8904
    %v9221 = vunpack.c.h.b16 %v8904
    %v9222 = vunpack.c.l.b16 %v8905
    %v9223 = vunpack.c.h.b16 %v8905
    %v9224 = vunpack.c.l.b16 %v8906
    %v9225 = vunpack.c.h.b16 %v8906
    %v9226 = vunpack.c.l.b16 %v8907
    %v9227 = vunpack.c.h.b16 %v8907
    %v9228 = vunpack.c.l.b16 %v8908
    %v9229 = vunpack.c.h.b16 %v8908
    %v9230 = vunpack.c.l.b16 %v8909
    %v9231 = vunpack.c.h.b16 %v8909
    %v9232 = vunpack.c.l.b16 %v8910
    %v9233 = vunpack.c.h.b16 %v8910
    %v9234 = vunpack.c.l.b16 %v8911
    %v9235 = vunpack.c.h.b16 %v8911
    %v9236 = vunpack.c.l.b16 %v8912
    %v9237 = vunpack.c.h.b16 %v8912
    %v9238 = vunpack.c.l.b16 %v8913
    %v9239 = vunpack.c.h.b16 %v8913
    %v9240 = vunpack.c.l.b16 %v8914
    %v9241 = vunpack.c.h.b16 %v8914
    %v9242 = vunpack.c.l.b16 %v8915
    %v9243 = vunpack.c.h.b16 %v8915
    %v9244 = vunpack.c.l.b16 %v8916
    %v9245 = vunpack.c.h.b16 %v8916
    %v9246 = vunpack.c.l.b16 %v8917
    %v9247 = vunpack.c.h.b16 %v8917
    %v9248 = vunpack.c.l.b16 %v8918
    %v9249 = vunpack.c.h.b16 %v8918
    %v9250 = vunpack.c.l.b16 %v8919
    %v9251 = vunpack.c.h.b16 %v8919
    %v9252 = vunpack.c.l.b16 %v8920
    %v9253 = vunpack.c.h.b16 %v8920
    %v9254 = vunpack.c.l.b16 %v8921
    %v9255 = vunpack.c.h.b16 %v8921
    %v9256 = vunpack.c.l.b16 %v8922
    %v9257 = vunpack.c.h.b16 %v8922
    %v9258 = vunpack.c.l.b16 %v8923
    %v9259 = vunpack.c.h.b16 %v8923
    %v9260 = vunpack.c.l.b16 %v8924
    %v9261 = vunpack.c.h.b16 %v8924
    %v9262 = vunpack.c.l.b16 %v8925
    %v9263 = vunpack.c.h.b16 %v8925
    %v9264 = vunpack.c.l.b16 %v8926
    %v9265 = vunpack.c.h.b16 %v8926
    %v9266 = vunpack.c.l.b16 %v8927
    %v9267 = vunpack.c.h.b16 %v8927
    %v9268 = vunpack.c.l.b16 %v8928
    %v9269 = vunpack.c.h.b16 %v8928
    %v9270 = vunpack.c.l.b16 %v8929
    %v9271 = vunpack.c.h.b16 %v8929
    %v9272 = vunpack.c.l.b16 %v8930
    %v9273 = vunpack.c.h.b16 %v8930
    %v9274 = vunpack.c.l.b16 %v8931
    %v9275 = vunpack.c.h.b16 %v8931
    %v9276 = vunpack.c.l.b16 %v8932
    %v9277 = vunpack.c.h.b16 %v8932
    %v9278 = vunpack.c.l.b16 %v8933
    %v9279 = vunpack.c.h.b16 %v8933
    %v9280 = vunpack.c.l.b16 %v8934
    %v9281 = vunpack.c.h.b16 %v8934
    %v9282 = vunpack.c.l.b16 %v8935
    %v9283 = vunpack.c.h.b16 %v8935
    %v9284 = vunpack.c.l.b16 %v8936
    %v9285 = vunpack.c.h.b16 %v8936
    %v9286 = vunpack.c.l.b16 %v8937
    %v9287 = vunpack.c.h.b16 %v8937
    %v9288 = vunpack.c.l.b16 %v8938
    %v9289 = vunpack.c.h.b16 %v8938
    %v9290 = vunpack.c.l.b16 %v8939
    %v9291 = vunpack.c.h.b16 %v8939
    %v9292 = vunpack.c.l.b16 %v8940
    %v9293 = vunpack.c.h.b16 %v8940
    %v9294 = vunpack.c.l.b16 %v8941
    %v9295 = vunpack.c.h.b16 %v8941
    %v9296 = vunpack.c.l.b16 %v8942
    %v9297 = vunpack.c.h.b16 %v8942
    %v9298 = vunpack.c.l.b16 %v8943
    %v9299 = vunpack.c.h.b16 %v8943
    %v9300 = vunpack.c.l.b16 %v8944
    %v9301 = vunpack.c.h.b16 %v8944
    %v9302 = vunpack.c.l.b16 %v8945
    %v9303 = vunpack.c.h.b16 %v8945
    %v9304 = vunpack.c.l.b16 %v8946
    %v9305 = vunpack.c.h.b16 %v8946
    %v9306 = vunpack.c.l.b16 %v8947
    %v9307 = vunpack.c.h.b16 %v8947
    %v9308 = vunpack.c.l.b16 %v8948
    %v9309 = vunpack.c.h.b16 %v8948
    %v9310 = vunpack.c.l.b16 %v8949
    %v9311 = vunpack.c.h.b16 %v8949
    %v9312 = vunpack.c.l.b16 %v8950
    %v9313 = vunpack.c.h.b16 %v8950
    %v9314 = vunpack.c.l.b16 %v8951
    %v9315 = vunpack.c.h.b16 %v8951
    %v9316 = vunpack.c.l.b16 %v8952
    %v9317 = vunpack.c.h.b16 %v8952
    %v9318 = vunpack.c.l.b16 %v8953
    %v9319 = vunpack.c.h.b16 %v8953
    %v9320 = vunpack.c.l.b16 %v8954
    %v9321 = vunpack.c.h.b16 %v8954
    %v9322 = vunpack.c.l.b16 %v8955
    %v9323 = vunpack.c.h.b16 %v8955
    %v9324 = vunpack.c.l.b16 %v8956
    %v9325 = vunpack.c.h.b16 %v8956
    %v9326 = vunpack.c.l.b16 %v8957
    %v9327 = vunpack.c.h.b16 %v8957
    %v9328 = vunpack.c.l.b16 %v8958
    %v9329 = vunpack.c.h.b16 %v8958
    %v9330 = vunpack.c.l.b16 %v8959
    %v9331 = vunpack.c.h.b16 %v8959
    %v9332 = vunpack.c.l.b16 %v8960
    %v9333 = vunpack.c.h.b16 %v8960
    %v9334 = vunpack.c.l.b16 %v8961
    %v9335 = vunpack.c.h.b16 %v8961
    %v9336 = vunpack.c.l.b16 %v8962
    %v9337 = vunpack.c.h.b16 %v8962
    %v9338 = vunpack.c.l.b16 %v8963
    %v9339 = vunpack.c.h.b16 %v8963
    %v9340 = vunpack.c.l.b16 %v8964
    %v9341 = vunpack.c.h.b16 %v8964
    %v9342 = vunpack.c.l.b16 %v8965
    %v9343 = vunpack.c.h.b16 %v8965
    %v9344 = vunpack.c.l.b16 %v8966
    %v9345 = vunpack.c.h.b16 %v8966
    %v9346 = vunpack.c.l.b16 %v8967
    %v9347 = vunpack.c.h.b16 %v8967
    %v9348 = vunpack.c.l.b16 %v8968
    %v9349 = vunpack.c.h.b16 %v8968
    %v9350 = vunpack.c.l.b16 %v8969
    %v9351 = vunpack.c.h.b16 %v8969
    %v9352 = vunpack.c.l.b16 %v8970
    %v9353 = vunpack.c.h.b16 %v8970
    %v9354 = vunpack.c.l.b16 %v8971
    %v9355 = vunpack.c.h.b16 %v8971
    %v9356 = vpack.c.b16 %v9108, %v9100
    %v9357 = vpack.c.b16 %v9109, %v9101
    %v9358 = vpack.c.b16 %v9110, %v9102
    %v9359 = vpack.c.b16 %v9111, %v9103
    %v9360 = vpack.c.b16 %v9112, %v9104
    %v9361 = vpack.c.b16 %v9113, %v9105
    %v9362 = vpack.c.b16 %v9114, %v9106
    %v9363 = vpack.c.b16 %v9115, %v9107
    %v9364 = vpack.c.b16 %v9124, %v9116
    %v9365 = vpack.c.b16 %v9125, %v9117
    %v9366 = vpack.c.b16 %v9126, %v9118
    %v9367 = vpack.c.b16 %v9127, %v9119
    %v9368 = vpack.c.b16 %v9128, %v9120
    %v9369 = vpack.c.b16 %v9129, %v9121
    %v9370 = vpack.c.b16 %v9130, %v9122
    %v9371 = vpack.c.b16 %v9131, %v9123
    %v9372 = vpack.c.b16 %v9140, %v9132
    %v9373 = vpack.c.b16 %v9141, %v9133
    %v9374 = vpack.c.b16 %v9142, %v9134
    %v9375 = vpack.c.b16 %v9143, %v9135
    %v9376 = vpack.c.b16 %v9144, %v9136
    %v9377 = vpack.c.b16 %v9145, %v9137
    %v9378 = vpack.c.b16 %v9146, %v9138
    %v9379 = vpack.c.b16 %v9147, %v9139
    %v9380 = vpack.c.b16 %v9156, %v9148
    %v9381 = vpack.c.b16 %v9157, %v9149
    %v9382 = vpack.c.b16 %v9158, %v9150
    %v9383 = vpack.c.b16 %v9159, %v9151
    %v9384 = vpack.c.b16 %v9160, %v9152
    %v9385 = vpack.c.b16 %v9161, %v9153
    %v9386 = vpack.c.b16 %v9162, %v9154
    %v9387 = vpack.c.b16 %v9163, %v9155
    %v9388 = vpack.c.b16 %v9172, %v9164
    %v9389 = vpack.c.b16 %v9173, %v9165
    %v9390 = vpack.c.b16 %v9174, %v9166
    %v9391 = vpack.c.b16 %v9175, %v9167
    %v9392 = vpack.c.b16 %v9176, %v9168
    %v9393 = vpack.c.b16 %v9177, %v9169
    %v9394 = vpack.c.b16 %v9178, %v9170
    %v9395 = vpack.c.b16 %v9179, %v9171
    %v9396 = vpack.c.b16 %v9188, %v9180
    %v9397 = vpack.c.b16 %v9189, %v9181
    %v9398 = vpack.c.b16 %v9190, %v9182
    %v9399 = vpack.c.b16 %v9191, %v9183
    %v9400 = vpack.c.b16 %v9192, %v9184
    %v9401 = vpack.c.b16 %v9193, %v9185
    %v9402 = vpack.c.b16 %v9194, %v9186
    %v9403 = vpack.c.b16 %v9195, %v9187
    %v9404 = vpack.c.b16 %v9204, %v9196
    %v9405 = vpack.c.b16 %v9205, %v9197
    %v9406 = vpack.c.b16 %v9206, %v9198
    %v9407 = vpack.c.b16 %v9207, %v9199
    %v9408 = vpack.c.b16 %v9208, %v9200
    %v9409 = vpack.c.b16 %v9209, %v9201
    %v9410 = vpack.c.b16 %v9210, %v9202
    %v9411 = vpack.c.b16 %v9211, %v9203
    %v9412 = vpack.c.b16 %v9220, %v9212
    %v9413 = vpack.c.b16 %v9221, %v9213
    %v9414 = vpack.c.b16 %v9222, %v9214
    %v9415 = vpack.c.b16 %v9223, %v9215
    %v9416 = vpack.c.b16 %v9224, %v9216
    %v9417 = vpack.c.b16 %v9225, %v9217
    %v9418 = vpack.c.b16 %v9226, %v9218
    %v9419 = vpack.c.b16 %v9227, %v9219
    %v9420 = vpack.c.b16 %v9236, %v9228
    %v9421 = vpack.c.b16 %v9237, %v9229
    %v9422 = vpack.c.b16 %v9238, %v9230
    %v9423 = vpack.c.b16 %v9239, %v9231
    %v9424 = vpack.c.b16 %v9240, %v9232
    %v9425 = vpack.c.b16 %v9241, %v9233
    %v9426 = vpack.c.b16 %v9242, %v9234
    %v9427 = vpack.c.b16 %v9243, %v9235
    %v9428 = vpack.c.b16 %v9252, %v9244
    %v9429 = vpack.c.b16 %v9253, %v9245
    %v9430 = vpack.c.b16 %v9254, %v9246
    %v9431 = vpack.c.b16 %v9255, %v9247
    %v9432 = vpack.c.b16 %v9256, %v9248
    %v9433 = vpack.c.b16 %v9257, %v9249
    %v9434 = vpack.c.b16 %v9258, %v9250
    %v9435 = vpack.c.b16 %v9259, %v9251
    %v9436 = vpack.c.b16 %v9268, %v9260
    %v9437 = vpack.c.b16 %v9269, %v9261
    %v9438 = vpack.c.b16 %v9270, %v9262
    %v9439 = vpack.c.b16 %v9271, %v9263
    %v9440 = vpack.c.b16 %v9272, %v9264
    %v9441 = vpack.c.b16 %v9273, %v9265
    %v9442 = vpack.c.b16 %v9274, %v9266
    %v9443 = vpack.c.b16 %v9275, %v9267
    %v9444 = vpack.c.b16 %v9284, %v9276
    %v9445 = vpack.c.b16 %v9285, %v9277
    %v9446 = vpack.c.b16 %v9286, %v9278
    %v9447 = vpack.c.b16 %v9287, %v9279
    %v9448 = vpack.c.b16 %v9288, %v9280
    %v9449 = vpack.c.b16 %v9289, %v9281
    %v9450 = vpack.c.b16 %v9290, %v9282
    %v9451 = vpack.c.b16 %v9291, %v9283
    %v9452 = vpack.c.b16 %v9300, %v9292
    %v9453 = vpack.c.b16 %v9301, %v9293
    %v9454 = vpack.c.b16 %v9302, %v9294
    %v9455 = vpack.c.b16 %v9303, %v9295
    %v9456 = vpack.c.b16 %v9304, %v9296
    %v9457 = vpack.c.b16 %v9305, %v9297
    %v9458 = vpack.c.b16 %v9306, %v9298
    %v9459 = vpack.c.b16 %v9307, %v9299
    %v9460 = vpack.c.b16 %v9316, %v9308
    %v9461 = vpack.c.b16 %v9317, %v9309
    %v9462 = vpack.c.b16 %v9318, %v9310
    %v9463 = vpack.c.b16 %v9319, %v9311
    %v9464 = vpack.c.b16 %v9320, %v9312
    %v9465 = vpack.c.b16 %v9321, %v9313
    %v9466 = vpack.c.b16 %v9322, %v9314
    %v9467 = vpack.c.b16 %v9323, %v9315
    %v9468 = vpack.c.b16 %v9332, %v9324
    %v9469 = vpack.c.b16 %v9333, %v9325
    %v9470 = vpack.c.b16 %v9334, %v9326
    %v9471 = vpack.c.b16 %v9335, %v9327
    %v9472 = vpack.c.b16 %v9336, %v9328
    %v9473 = vpack.c.b16 %v9337, %v9329
    %v9474 = vpack.c.b16 %v9338, %v9330
    %v9475 = vpack.c.b16 %v9339, %v9331
    %v9476 = vpack.c.b16 %v9348, %v9340
    %v9477 = vpack.c.b16 %v9349, %v9341
    %v9478 = vpack.c.b16 %v9350, %v9342
    %v9479 = vpack.c.b16 %v9351, %v9343
    %v9480 = vpack.c.b16 %v9352, %v9344
    %v9481 = vpack.c.b16 %v9353, %v9345
    %v9482 = vpack.c.b16 %v9354, %v9346
    %v9483 = vpack.c.b16 %v9355, %v9347
    %9612 = vmatprep.subr.bf16.mxu0 %v9413
    %9613 = vmatpush1.bf16.msra.mxu0 %v9412
    %9614 = vmatprep.subr.bf16.mxu0 %v9405
    %9615 = vmatpush1.bf16.msra.mxu0 %v9404
    %9616 = vmatprep.subr.bf16.mxu0 %v9397
    %9617 = vmatpush1.bf16.msra.mxu0 %v9396
    %9618 = vmatprep.subr.bf16.mxu0 %v9389
    %9619 = vmatpush1.bf16.msra.mxu0 %v9388
    %9620 = vmatprep.subr.bf16.mxu0 %v9381
    %9621 = vmatpush1.bf16.msra.mxu0 %v9380
    %9622 = vmatprep.subr.bf16.mxu0 %v9373
    %9623 = vmatpush1.bf16.msra.mxu0 %v9372
    %9624 = vmatprep.subr.bf16.mxu0 %v9365
    %9625 = vmatpush1.bf16.msra.mxu0 %v9364
    %9626 = vmatprep.subr.bf16.mxu0 %v9357
    %9627 = vmatpush1.bf16.msra.mxu0 %v9356
    %9628 = vmatprep.subr.bf16.mxu0 %v9477
    %9629 = vmatpush2.bf16.msra.mxu0 %v9476
    %9630 = vmatprep.subr.bf16.mxu0 %v9469
    %9631 = vmatpush2.bf16.msra.mxu0 %v9468
    %9632 = vmatprep.subr.bf16.mxu0 %v9461
    %9633 = vmatpush2.bf16.msra.mxu0 %v9460
    %9634 = vmatprep.subr.bf16.mxu0 %v9453
    %9635 = vmatpush2.bf16.msra.mxu0 %v9452
    %9636 = vmatprep.subr.bf16.mxu0 %v9445
    %9637 = vmatpush2.bf16.msra.mxu0 %v9444
    %9638 = vmatprep.subr.bf16.mxu0 %v9437
    %9639 = vmatpush2.bf16.msra.mxu0 %v9436
    %9640 = vmatprep.subr.bf16.mxu0 %v9429
    %9641 = vmatpush2.bf16.msra.mxu0 %v9428
    %9642 = vmatprep.subr.bf16.mxu0 %v9421
    %9643 = vmatpush2.bf16.msra.mxu0 %v9420
    %9644 = vmatprep.mubr.bf16.mxu0 %v8834
    %9645 = vmatmul.mubr.bf16.gmra.mxu0 %v8824
    %v9646 = vpop.f32.mrf.mxu0
    %v9647 = vadd.f32 0.0, %v9646
    %v9648 = vpop.f32.mrf.mxu0
    %v9649 = vadd.f32 0.0, %v9648
    %v9650 = vpop.f32.mrf.mxu0
    %v9651 = vadd.f32 0.0, %v9650
    %v9652 = vpop.f32.mrf.mxu0
    %v9653 = vadd.f32 0.0, %v9652
    %9654 = vdwg.mxu0
    %9655 = vmatprep.subr.bf16.mxu0 %v9415
    %9656 = vmatpush1.bf16.msra.mxu0 %v9414
    %9657 = vmatprep.subr.bf16.mxu0 %v9407
    %9658 = vmatpush1.bf16.msra.mxu0 %v9406
    %9659 = vmatprep.subr.bf16.mxu0 %v9399
    %9660 = vmatpush1.bf16.msra.mxu0 %v9398
    %9661 = vmatprep.subr.bf16.mxu0 %v9391
    %9662 = vmatpush1.bf16.msra.mxu0 %v9390
    %9663 = vmatprep.subr.bf16.mxu0 %v9383
    %9664 = vmatpush1.bf16.msra.mxu0 %v9382
    %9665 = vmatprep.subr.bf16.mxu0 %v9375
    %9666 = vmatpush1.bf16.msra.mxu0 %v9374
    %9667 = vmatprep.subr.bf16.mxu0 %v9367
    %9668 = vmatpush1.bf16.msra.mxu0 %v9366
    %9669 = vmatprep.subr.bf16.mxu0 %v9359
    %9670 = vmatpush1.bf16.msra.mxu0 %v9358
    %9671 = vmatprep.subr.bf16.mxu0 %v9479
    %9672 = vmatpush2.bf16.msra.mxu0 %v9478
    %9673 = vmatprep.subr.bf16.mxu0 %v9471
    %9674 = vmatpush2.bf16.msra.mxu0 %v9470
    %9675 = vmatprep.subr.bf16.mxu0 %v9463
    %9676 = vmatpush2.bf16.msra.mxu0 %v9462
    %9677 = vmatprep.subr.bf16.mxu0 %v9455
    %9678 = vmatpush2.bf16.msra.mxu0 %v9454
    %9679 = vmatprep.subr.bf16.mxu0 %v9447
    %9680 = vmatpush2.bf16.msra.mxu0 %v9446
    %9681 = vmatprep.subr.bf16.mxu0 %v9439
    %9682 = vmatpush2.bf16.msra.mxu0 %v9438
    %9683 = vmatprep.subr.bf16.mxu0 %v9431
    %9684 = vmatpush2.bf16.msra.mxu0 %v9430
    %9685 = vmatprep.subr.bf16.mxu0 %v9423
    %9686 = vmatpush2.bf16.msra.mxu0 %v9422
    %9687 = vmatprep.mubr.bf16.mxu0 %v8834
    %9688 = vmatmul.mubr.bf16.gmra.mxu0 %v8824
    %v9689 = vpop.f32.mrf.mxu0
    %v9690 = vadd.f32 0.0, %v9689
    %v9691 = vpop.f32.mrf.mxu0
    %v9692 = vadd.f32 0.0, %v9691
    %v9693 = vpop.f32.mrf.mxu0
    %v9694 = vadd.f32 0.0, %v9693
    %v9695 = vpop.f32.mrf.mxu0
    %v9696 = vadd.f32 0.0, %v9695
    %9697 = vdwg.mxu0
    %9698 = vmatprep.subr.bf16.mxu0 %v9417
    %9699 = vmatpush1.bf16.msra.mxu0 %v9416
    %9700 = vmatprep.subr.bf16.mxu0 %v9409
    %9701 = vmatpush1.bf16.msra.mxu0 %v9408
    %9702 = vmatprep.subr.bf16.mxu0 %v9401
    %9703 = vmatpush1.bf16.msra.mxu0 %v9400
    %9704 = vmatprep.subr.bf16.mxu0 %v9393
    %9705 = vmatpush1.bf16.msra.mxu0 %v9392
    %9706 = vmatprep.subr.bf16.mxu0 %v9385
    %9707 = vmatpush1.bf16.msra.mxu0 %v9384
    %9708 = vmatprep.subr.bf16.mxu0 %v9377
    %9709 = vmatpush1.bf16.msra.mxu0 %v9376
    %9710 = vmatprep.subr.bf16.mxu0 %v9369
    %9711 = vmatpush1.bf16.msra.mxu0 %v9368
    %9712 = vmatprep.subr.bf16.mxu0 %v9361
    %9713 = vmatpush1.bf16.msra.mxu0 %v9360
    %9714 = vmatprep.subr.bf16.mxu0 %v9481
    %9715 = vmatpush2.bf16.msra.mxu0 %v9480
    %9716 = vmatprep.subr.bf16.mxu0 %v9473
    %9717 = vmatpush2.bf16.msra.mxu0 %v9472
    %9718 = vmatprep.subr.bf16.mxu0 %v9465
    %9719 = vmatpush2.bf16.msra.mxu0 %v9464
    %9720 = vmatprep.subr.bf16.mxu0 %v9457
    %9721 = vmatpush2.bf16.msra.mxu0 %v9456
    %9722 = vmatprep.subr.bf16.mxu0 %v9449
    %9723 = vmatpush2.bf16.msra.mxu0 %v9448
    %9724 = vmatprep.subr.bf16.mxu0 %v9441
    %9725 = vmatpush2.bf16.msra.mxu0 %v9440
    %9726 = vmatprep.subr.bf16.mxu0 %v9433
    %9727 = vmatpush2.bf16.msra.mxu0 %v9432
    %9728 = vmatprep.subr.bf16.mxu0 %v9425
    %9729 = vmatpush2.bf16.msra.mxu0 %v9424
    %9730 = vmatprep.mubr.bf16.mxu0 %v8834
    %9731 = vmatmul.mubr.bf16.gmra.mxu0 %v8824
    %v9732 = vpop.f32.mrf.mxu0
    %v9733 = vadd.f32 0.0, %v9732
    %v9734 = vpop.f32.mrf.mxu0
    %v9735 = vadd.f32 0.0, %v9734
    %v9736 = vpop.f32.mrf.mxu0
    %v9737 = vadd.f32 0.0, %v9736
    %v9738 = vpop.f32.mrf.mxu0
    %v9739 = vadd.f32 0.0, %v9738
    %9740 = vdwg.mxu0
    %9741 = vmatprep.subr.bf16.mxu0 %v9419
    %9742 = vmatpush1.bf16.msra.mxu0 %v9418
    %9743 = vmatprep.subr.bf16.mxu0 %v9411
    %9744 = vmatpush1.bf16.msra.mxu0 %v9410
    %9745 = vmatprep.subr.bf16.mxu0 %v9403
    %9746 = vmatpush1.bf16.msra.mxu0 %v9402
    %9747 = vmatprep.subr.bf16.mxu0 %v9395
    %9748 = vmatpush1.bf16.msra.mxu0 %v9394
    %9749 = vmatprep.subr.bf16.mxu0 %v9387
    %9750 = vmatpush1.bf16.msra.mxu0 %v9386
    %9751 = vmatprep.subr.bf16.mxu0 %v9379
    %9752 = vmatpush1.bf16.msra.mxu0 %v9378
    %9753 = vmatprep.subr.bf16.mxu0 %v9371
    %9754 = vmatpush1.bf16.msra.mxu0 %v9370
    %9755 = vmatprep.subr.bf16.mxu0 %v9363
    %9756 = vmatpush1.bf16.msra.mxu0 %v9362
    %9757 = vmatprep.subr.bf16.mxu0 %v9483
    %9758 = vmatpush2.bf16.msra.mxu0 %v9482
    %9759 = vmatprep.subr.bf16.mxu0 %v9475
    %9760 = vmatpush2.bf16.msra.mxu0 %v9474
    %9761 = vmatprep.subr.bf16.mxu0 %v9467
    %9762 = vmatpush2.bf16.msra.mxu0 %v9466
    %9763 = vmatprep.subr.bf16.mxu0 %v9459
    %9764 = vmatpush2.bf16.msra.mxu0 %v9458
    %9765 = vmatprep.subr.bf16.mxu0 %v9451
    %9766 = vmatpush2.bf16.msra.mxu0 %v9450
    %9767 = vmatprep.subr.bf16.mxu0 %v9443
    %9768 = vmatpush2.bf16.msra.mxu0 %v9442
    %9769 = vmatprep.subr.bf16.mxu0 %v9435
    %9770 = vmatpush2.bf16.msra.mxu0 %v9434
    %9771 = vmatprep.subr.bf16.mxu0 %v9427
    %9772 = vmatpush2.bf16.msra.mxu0 %v9426
    %9773 = vmatprep.mubr.bf16.mxu0 %v8834
    %9774 = vmatmul.mubr.bf16.gmra.mxu0 %v8824
    %v9775 = vpop.f32.mrf.mxu0
    %v9776 = vadd.f32 0.0, %v9775
    %v9777 = vpop.f32.mrf.mxu0
    %v9778 = vadd.f32 0.0, %v9777
    %v9779 = vpop.f32.mrf.mxu0
    %v9780 = vadd.f32 0.0, %v9779
    %v9781 = vpop.f32.mrf.mxu0
    %v9782 = vadd.f32 0.0, %v9781
    %9783 = vdwg.mxu0
    %v9784 = vld [vmem:[%s2089] sm:$0xff]
    %v9785 = vld [vmem:[%s2089 + $0x8] sm:$0xff]
    %v9786 = vld [vmem:[%s2089 + $0x20] sm:$0xff]
    %v9787 = vld [vmem:[%s2089 + $0x28] sm:$0xff]
    %v9788 = vunpack.c.l.bf16 %v9784
    %v9789 = vunpack.c.h.bf16 %v9784
    %v9790 = vunpack.c.l.bf16 %v9785
    %v9791 = vunpack.c.h.bf16 %v9785
    %v9792 = vunpack.c.l.bf16 %v9786
    %v9793 = vunpack.c.h.bf16 %v9786
    %v9794 = vunpack.c.l.bf16 %v9787
    %v9795 = vunpack.c.h.bf16 %v9787
    %v9796 = vadd.f32 %v9788, %v9647
    %v9797 = vadd.f32 %v9789, %v9649
    %v9798 = vadd.f32 %v9790, %v9690
    %v9799 = vadd.f32 %v9791, %v9692
    %v9800 = vadd.f32 %v9792, %v9651
    %v9801 = vadd.f32 %v9793, %v9653
    %v9802 = vadd.f32 %v9794, %v9694
    %v9803 = vadd.f32 %v9795, %v9696
    %v9804 = vld [vmem:[%s2066 + $0x10] sm:$0xff]
    %v9805 = vld [vmem:[%s2066 + $0x18] sm:$0xff]
    %v9806 = vld [vmem:[%s2066 + $0x30] sm:$0xff]
    %v9807 = vld [vmem:[%s2066 + $0x38] sm:$0xff]
    %v9808 = vunpack.c.l.bf16 %v9804
    %v9809 = vunpack.c.h.bf16 %v9804
    %v9810 = vunpack.c.l.bf16 %v9805
    %v9811 = vunpack.c.h.bf16 %v9805
    %v9812 = vunpack.c.l.bf16 %v9806
    %v9813 = vunpack.c.h.bf16 %v9806
    %v9814 = vunpack.c.l.bf16 %v9807
    %v9815 = vunpack.c.h.bf16 %v9807
    %v9816 = vadd.f32 %v9808, %v9733
    %v9817 = vadd.f32 %v9809, %v9735
    %v9818 = vadd.f32 %v9810, %v9776
    %v9819 = vadd.f32 %v9811, %v9778
    %v9820 = vadd.f32 %v9812, %v9737
    %v9821 = vadd.f32 %v9813, %v9739
    %v9822 = vadd.f32 %v9814, %v9780
    %v9823 = vadd.f32 %v9815, %v9782
    %v9824 = vxor.u32 %v9796, 2147483648
    %v9825 = vxor.u32 %v9800, 2147483648
    %v9826 = vmul.f32 %v9824, 1.442695
    %v9827 = vpow.pop %v9826
    %v9828 = vmul.f32 %v9825, 1.442695
    %v9829 = vpow.pop %v9828
    %v9830 = vadd.f32 %v9827, 1.0
    %v9831 = vadd.f32 %v9829, 1.0
    %v9832 = vrcp.pop %v9830
    %v9833 = vmul.f32 1.0, %v9832
    %v9834 = vrcp.pop %v9831
    %v9835 = vmul.f32 1.0, %v9834
    %v9836 = vxor.u32 %v9797, 2147483648
    %v9837 = vxor.u32 %v9801, 2147483648
    %v9838 = vmul.f32 %v9836, 1.442695
    %v9839 = vpow.pop %v9838
    %v9840 = vmul.f32 %v9837, 1.442695
    %v9841 = vpow.pop %v9840
    %v9842 = vadd.f32 %v9839, 1.0
    %v9843 = vadd.f32 %v9841, 1.0
    %v9844 = vrcp.pop %v9842
    %v9845 = vmul.f32 1.0, %v9844
    %v9846 = vrcp.pop %v9843
    %v9847 = vmul.f32 1.0, %v9846
    %v9848 = vtanh.pop %v9798
    %v9849 = vtanh.pop %v9802
    %v9850 = vxor.u32 %v9799, 2147483648
    %v9851 = vxor.u32 %v9803, 2147483648
    %v9852 = vmul.f32 %v9850, 1.442695
    %v9853 = vpow.pop %v9852
    %v9854 = vmul.f32 %v9851, 1.442695
    %v9855 = vpow.pop %v9854
    %v9856 = vadd.f32 %v9853, 1.0
    %v9857 = vadd.f32 %v9855, 1.0
    %v9858 = vrcp.pop %v9856
    %v9859 = vmul.f32 1.0, %v9858
    %v9860 = vrcp.pop %v9857
    %v9861 = vmul.f32 1.0, %v9860
    %v9862 = vmul.f32 %v9845, %v8770
    %v9863 = vmul.f32 %v9847, %v8771
    %v9864 = vmul.f32 %v9833, %v9848
    %v9865 = vmul.f32 %v9835, %v9849
    %v9866 = vadd.f32 %v9862, %v9864
    %v9867 = vadd.f32 %v9863, %v9865
    %v9868 = vtanh.pop %v9866
    %v9869 = vtanh.pop %v9867
    %v9870 = vmul.f32 %v9859, %v9868
    %v9871 = vmul.f32 %v9861, %v9869
    %v9872 = vxor.u32 %v9816, 2147483648
    %v9873 = vxor.u32 %v9820, 2147483648
    %v9874 = vmul.f32 %v9872, 1.442695
    %v9875 = vpow.pop %v9874
    %v9876 = vmul.f32 %v9873, 1.442695
    %v9877 = vpow.pop %v9876
    %v9878 = vadd.f32 %v9875, 1.0
    %v9879 = vadd.f32 %v9877, 1.0
    %v9880 = vrcp.pop %v9878
    %v9881 = vmul.f32 1.0, %v9880
    %v9882 = vrcp.pop %v9879
    %v9883 = vmul.f32 1.0, %v9882
    %v9884 = vxor.u32 %v9817, 2147483648
    %v9885 = vxor.u32 %v9821, 2147483648
    %v9886 = vmul.f32 %v9884, 1.442695
    %v9887 = vpow.pop %v9886
    %v9888 = vmul.f32 %v9885, 1.442695
    %v9889 = vpow.pop %v9888
    %v9890 = vadd.f32 %v9887, 1.0
    %v9891 = vadd.f32 %v9889, 1.0
    %v9892 = vrcp.pop %v9890
    %v9893 = vmul.f32 1.0, %v9892
    %v9894 = vrcp.pop %v9891
    %v9895 = vmul.f32 1.0, %v9894
    %v9896 = vtanh.pop %v9818
    %v9897 = vtanh.pop %v9822
    %v9898 = vxor.u32 %v9819, 2147483648
    %v9899 = vxor.u32 %v9823, 2147483648
    %v9900 = vmul.f32 %v9898, 1.442695
    %v9901 = vpow.pop %v9900
    %v9902 = vmul.f32 %v9899, 1.442695
    %v9903 = vpow.pop %v9902
    %v9904 = vadd.f32 %v9901, 1.0
    %v9905 = vadd.f32 %v9903, 1.0
    %v9906 = vrcp.pop %v9904
    %v9907 = vmul.f32 1.0, %v9906
    %v9908 = vrcp.pop %v9905
    %v9909 = vmul.f32 1.0, %v9908
    %v9910 = vmul.f32 %v9893, %v8818
    %v9911 = vmul.f32 %v9895, %v8819
    %v9912 = vmul.f32 %v9881, %v9896
    %v9913 = vmul.f32 %v9883, %v9897
    %v9914 = vadd.f32 %v9910, %v9912
    %v9915 = vadd.f32 %v9911, %v9913
    %v9916 = vtanh.pop %v9914
    %v9917 = vtanh.pop %v9915
    %v9918 = vmul.f32 %v9907, %v9916
    %v9919 = vmul.f32 %v9909, %v9917
    %v9920 = vpack.c.bf16 %v9871, %v9870
    %v9922 = vunpack.c.l.b16 %v9920
    %v9923 = vunpack.c.h.b16 %v9920
    %v9924 = vpack.c.b16 %v9922, %v9922
    %v9925 = vpack.c.b16 %v9923, %v9923
    %9928 = vst [vmem:[%s2229] sm:$0xf] %v9924
    %9929 = vst [vmem:[%s2229 + $0x8] sm:$0xf] %v9925
    %v9930 = vpack.c.bf16 %v9919, %v9918
    %v9932 = vunpack.c.l.b16 %v9930
    %v9933 = vunpack.c.h.b16 %v9930
    %v9934 = vpack.c.b16 %v9932, %v9932
    %v9935 = vpack.c.b16 %v9933, %v9933
    %9938 = vst [vmem:[%s2216 + $0x4] sm:$0xf] %v9934
    %9939 = vst [vmem:[%s2216 + $0xc] sm:$0xf] %v9935
    %v9940 = vld [vmem:[#allocation3] sm:$0xff]
    %v9941 = vld [vmem:[#allocation3 + $0x8] sm:$0xff]
    %v9942 = vld [vmem:[#allocation3 + $0x10] sm:$0xff]
    %v9943 = vld [vmem:[#allocation3 + $0x18] sm:$0xff]
    %v9944 = vld [vmem:[#allocation3 + $0x20] sm:$0xff]
    %v9945 = vld [vmem:[#allocation3 + $0x28] sm:$0xff]
    %v9946 = vld [vmem:[#allocation3 + $0x30] sm:$0xff]
    %v9947 = vld [vmem:[#allocation3 + $0x38] sm:$0xff]
    %v9948 = vld [vmem:[#allocation3 + $0x40] sm:$0xff]
    %v9949 = vld [vmem:[#allocation3 + $0x48] sm:$0xff]
    %v9950 = vld [vmem:[#allocation3 + $0x50] sm:$0xff]
    %v9951 = vld [vmem:[#allocation3 + $0x58] sm:$0xff]
    %v9952 = vld [vmem:[#allocation3 + $0x60] sm:$0xff]
    %v9953 = vld [vmem:[#allocation3 + $0x68] sm:$0xff]
    %v9954 = vld [vmem:[#allocation3 + $0x70] sm:$0xff]
    %v9955 = vld [vmem:[#allocation3 + $0x78] sm:$0xff]
    %v9956 = vld [vmem:[#allocation7] sm:$0xf]
    %v9957 = vld [vmem:[#allocation7 + $0x4] sm:$0xf]
    %v9958 = vld [vmem:[#allocation7 + $0x8] sm:$0xf]
    %v9959 = vld [vmem:[#allocation7 + $0xc] sm:$0xf]
    %v9960 = vld [vmem:[#allocation7 + $0x10] sm:$0xf]
    %v9961 = vld [vmem:[#allocation7 + $0x14] sm:$0xf]
    %v9962 = vld [vmem:[#allocation7 + $0x18] sm:$0xf]
    %v9963 = vld [vmem:[#allocation7 + $0x1c] sm:$0xf]
    %v9964 = vld [vmem:[#allocation7 + $0x20] sm:$0xf]
    %v9965 = vld [vmem:[#allocation7 + $0x24] sm:$0xf]
    %v9966 = vld [vmem:[#allocation7 + $0x28] sm:$0xf]
    %v9967 = vld [vmem:[#allocation7 + $0x2c] sm:$0xf]
    %v9968 = vld [vmem:[#allocation7 + $0x30] sm:$0xf]
    %v9969 = vld [vmem:[#allocation7 + $0x34] sm:$0xf]
    %v9970 = vld [vmem:[#allocation7 + $0x38] sm:$0xf]
    %v9971 = vld [vmem:[#allocation7 + $0x3c] sm:$0xf]
    %v9972 = vld [vmem:[#allocation7 + $0x40] sm:$0xf]
    %v9973 = vld [vmem:[#allocation7 + $0x44] sm:$0xf]
    %v9974 = vld [vmem:[#allocation7 + $0x48] sm:$0xf]
    %v9975 = vld [vmem:[#allocation7 + $0x4c] sm:$0xf]
    %v9976 = vld [vmem:[#allocation7 + $0x50] sm:$0xf]
    %v9977 = vld [vmem:[#allocation7 + $0x54] sm:$0xf]
    %v9978 = vld [vmem:[#allocation7 + $0x58] sm:$0xf]
    %v9979 = vld [vmem:[#allocation7 + $0x5c] sm:$0xf]
    %v9980 = vld [vmem:[#allocation7 + $0x60] sm:$0xf]
    %v9981 = vld [vmem:[#allocation7 + $0x64] sm:$0xf]
    %v9982 = vld [vmem:[#allocation7 + $0x68] sm:$0xf]
    %v9983 = vld [vmem:[#allocation7 + $0x6c] sm:$0xf]
    %v9984 = vld [vmem:[#allocation7 + $0x70] sm:$0xf]
    %v9985 = vld [vmem:[#allocation7 + $0x74] sm:$0xf]
    %v9986 = vld [vmem:[#allocation7 + $0x78] sm:$0xf]
    %v9987 = vld [vmem:[#allocation7 + $0x7c] sm:$0xf]
    %v9988 = vld [vmem:[%s5] sm:$0x1]
    %v9990 = vlaneseq
    %v9991 = vshrl.u32 %v9990, 7
    %v9992 = vsub.s32 0, %v9991
    %v9993 = vrot.slane %v9988, %v9992
    %v10011 = vunpack.c.l.b16 %v9940
    %v10012 = vunpack.c.h.b16 %v9940
    %v10013 = vunpack.c.l.b16 %v9941
    %v10014 = vunpack.c.h.b16 %v9941
    %v10015 = vunpack.c.l.b16 %v9942
    %v10016 = vunpack.c.h.b16 %v9942
    %v10017 = vunpack.c.l.b16 %v9943
    %v10018 = vunpack.c.h.b16 %v9943
    %v10019 = vunpack.c.l.b16 %v9944
    %v10020 = vunpack.c.h.b16 %v9944
    %v10021 = vunpack.c.l.b16 %v9945
    %v10022 = vunpack.c.h.b16 %v9945
    %v10023 = vunpack.c.l.b16 %v9946
    %v10024 = vunpack.c.h.b16 %v9946
    %v10025 = vunpack.c.l.b16 %v9947
    %v10026 = vunpack.c.h.b16 %v9947
    %v10027 = vunpack.c.l.b16 %v9948
    %v10028 = vunpack.c.h.b16 %v9948
    %v10029 = vunpack.c.l.b16 %v9949
    %v10030 = vunpack.c.h.b16 %v9949
    %v10031 = vunpack.c.l.b16 %v9950
    %v10032 = vunpack.c.h.b16 %v9950
    %v10033 = vunpack.c.l.b16 %v9951
    %v10034 = vunpack.c.h.b16 %v9951
    %v10035 = vunpack.c.l.b16 %v9952
    %v10036 = vunpack.c.h.b16 %v9952
    %v10037 = vunpack.c.l.b16 %v9953
    %v10038 = vunpack.c.h.b16 %v9953
    %v10039 = vunpack.c.l.b16 %v9954
    %v10040 = vunpack.c.h.b16 %v9954
    %v10041 = vunpack.c.l.b16 %v9955
    %v10042 = vunpack.c.h.b16 %v9955
    %v10043 = vpack.c.b16 %v10013, %v10011
    %v10044 = vpack.c.b16 %v10014, %v10012
    %v10045 = vpack.c.b16 %v10017, %v10015
    %v10046 = vpack.c.b16 %v10018, %v10016
    %v10047 = vpack.c.b16 %v10021, %v10019
    %v10048 = vpack.c.b16 %v10022, %v10020
    %v10049 = vpack.c.b16 %v10025, %v10023
    %v10050 = vpack.c.b16 %v10026, %v10024
    %v10051 = vpack.c.b16 %v10029, %v10027
    %v10052 = vpack.c.b16 %v10030, %v10028
    %v10053 = vpack.c.b16 %v10033, %v10031
    %v10054 = vpack.c.b16 %v10034, %v10032
    %v10055 = vpack.c.b16 %v10037, %v10035
    %v10056 = vpack.c.b16 %v10038, %v10036
    %v10057 = vpack.c.b16 %v10041, %v10039
    %v10058 = vpack.c.b16 %v10042, %v10040
    %v10107 = vunpack.c.l.b16 %v9956
    %v10108 = vunpack.c.l.b16 %v9957
    %v10109 = vunpack.c.l.b16 %v9958
    %v10110 = vunpack.c.l.b16 %v9959
    %v10111 = vunpack.c.l.b16 %v9960
    %v10112 = vunpack.c.l.b16 %v9961
    %v10113 = vunpack.c.l.b16 %v9962
    %v10114 = vunpack.c.l.b16 %v9963
    %v10115 = vunpack.c.l.b16 %v9964
    %v10116 = vunpack.c.l.b16 %v9965
    %v10117 = vunpack.c.l.b16 %v9966
    %v10118 = vunpack.c.l.b16 %v9967
    %v10119 = vunpack.c.l.b16 %v9968
    %v10120 = vunpack.c.l.b16 %v9969
    %v10121 = vunpack.c.l.b16 %v9970
    %v10122 = vunpack.c.l.b16 %v9971
    %v10123 = vunpack.c.l.b16 %v9972
    %v10124 = vunpack.c.l.b16 %v9973
    %v10125 = vunpack.c.l.b16 %v9974
    %v10126 = vunpack.c.l.b16 %v9975
    %v10127 = vunpack.c.l.b16 %v9976
    %v10128 = vunpack.c.l.b16 %v9977
    %v10129 = vunpack.c.l.b16 %v9978
    %v10130 = vunpack.c.l.b16 %v9979
    %v10131 = vunpack.c.l.b16 %v9980
    %v10132 = vunpack.c.l.b16 %v9981
    %v10133 = vunpack.c.l.b16 %v9982
    %v10134 = vunpack.c.l.b16 %v9983
    %v10135 = vunpack.c.l.b16 %v9984
    %v10136 = vunpack.c.l.b16 %v9985
    %v10137 = vunpack.c.l.b16 %v9986
    %v10138 = vunpack.c.l.b16 %v9987
    %v10139 = vpack.c.b16 %v10108, %v10107
    %v10140 = vpack.c.b16 %v10110, %v10109
    %v10141 = vpack.c.b16 %v10112, %v10111
    %v10142 = vpack.c.b16 %v10114, %v10113
    %v10143 = vpack.c.b16 %v10116, %v10115
    %v10144 = vpack.c.b16 %v10118, %v10117
    %v10145 = vpack.c.b16 %v10120, %v10119
    %v10146 = vpack.c.b16 %v10122, %v10121
    %v10147 = vpack.c.b16 %v10124, %v10123
    %v10148 = vpack.c.b16 %v10126, %v10125
    %v10149 = vpack.c.b16 %v10128, %v10127
    %v10150 = vpack.c.b16 %v10130, %v10129
    %v10151 = vpack.c.b16 %v10132, %v10131
    %v10152 = vpack.c.b16 %v10134, %v10133
    %v10153 = vpack.c.b16 %v10136, %v10135
    %v10154 = vpack.c.b16 %v10138, %v10137
    %10171 = vmatprep.subr.bf16.mxu0 0
    %10172 = vmatpush1.bf16.msra.mxu0 %v10146
    %10173 = vmatprep.subr.bf16.mxu0 0
    %10174 = vmatpush1.bf16.msra.mxu0 %v10145
    %10175 = vmatprep.subr.bf16.mxu0 0
    %10176 = vmatpush1.bf16.msra.mxu0 %v10144
    %10177 = vmatprep.subr.bf16.mxu0 0
    %10178 = vmatpush1.bf16.msra.mxu0 %v10143
    %10179 = vmatprep.subr.bf16.mxu0 0
    %10180 = vmatpush1.bf16.msra.mxu0 %v10142
    %10181 = vmatprep.subr.bf16.mxu0 0
    %10182 = vmatpush1.bf16.msra.mxu0 %v10141
    %10183 = vmatprep.subr.bf16.mxu0 0
    %10184 = vmatpush1.bf16.msra.mxu0 %v10140
    %10185 = vmatprep.subr.bf16.mxu0 0
    %10186 = vmatpush1.bf16.msra.mxu0 %v10139
    %10187 = vmatprep.subr.bf16.mxu0 0
    %10188 = vmatpush2.bf16.msra.mxu0 %v10154
    %10189 = vmatprep.subr.bf16.mxu0 0
    %10190 = vmatpush2.bf16.msra.mxu0 %v10153
    %10191 = vmatprep.subr.bf16.mxu0 0
    %10192 = vmatpush2.bf16.msra.mxu0 %v10152
    %10193 = vmatprep.subr.bf16.mxu0 0
    %10194 = vmatpush2.bf16.msra.mxu0 %v10151
    %10195 = vmatprep.subr.bf16.mxu0 0
    %10196 = vmatpush2.bf16.msra.mxu0 %v10150
    %10197 = vmatprep.subr.bf16.mxu0 0
    %10198 = vmatpush2.bf16.msra.mxu0 %v10149
    %10199 = vmatprep.subr.bf16.mxu0 0
    %10200 = vmatpush2.bf16.msra.mxu0 %v10148
    %10201 = vmatprep.subr.bf16.mxu0 0
    %10202 = vmatpush2.bf16.msra.mxu0 %v10147
    %10203 = vmatprep.mubr.bf16.mxu0 %v10044
    %10204 = vmatmul.mubr.bf16.gmra.mxu0 %v10043
    %v10205 = vpop.f32.mrf.mxu0
    %v10206 = vadd.f32 %v9993, %v10205
    %v10207 = vpop.f32.mrf.mxu0
    %v10208 = vpop.f32.mrf.mxu0
    %v10209 = vadd.f32 %v9993, %v10208
    %v10210 = vpop.f32.mrf.mxu0
    %10211 = vmatprep.mubr.bf16.mxu0 %v10046
    %10212 = vmatmul.mubr.bf16.gmra.mxu0 %v10045
    %v10213 = vpop.f32.mrf.mxu0
    %v10214 = vadd.f32 %v9993, %v10213
    %v10215 = vpop.f32.mrf.mxu0
    %v10216 = vpop.f32.mrf.mxu0
    %v10217 = vadd.f32 %v9993, %v10216
    %v10218 = vpop.f32.mrf.mxu0
    %10219 = vmatprep.mubr.bf16.mxu0 %v10048
    %10220 = vmatmul.mubr.bf16.gmra.mxu0 %v10047
    %v10221 = vpop.f32.mrf.mxu0
    %v10222 = vadd.f32 %v9993, %v10221
    %v10223 = vpop.f32.mrf.mxu0
    %v10224 = vpop.f32.mrf.mxu0
    %v10225 = vadd.f32 %v9993, %v10224
    %v10226 = vpop.f32.mrf.mxu0
    %10227 = vmatprep.mubr.bf16.mxu0 %v10050
    %10228 = vmatmul.mubr.bf16.gmra.mxu0 %v10049
    %v10229 = vpop.f32.mrf.mxu0
    %v10230 = vadd.f32 %v9993, %v10229
    %v10231 = vpop.f32.mrf.mxu0
    %v10232 = vpop.f32.mrf.mxu0
    %v10233 = vadd.f32 %v9993, %v10232
    %v10234 = vpop.f32.mrf.mxu0
    %10235 = vmatprep.mubr.bf16.mxu0 %v10052
    %10236 = vmatmul.mubr.bf16.gmra.mxu0 %v10051
    %v10237 = vpop.f32.mrf.mxu0
    %v10238 = vadd.f32 %v9993, %v10237
    %v10239 = vpop.f32.mrf.mxu0
    %v10240 = vpop.f32.mrf.mxu0
    %v10241 = vadd.f32 %v9993, %v10240
    %v10242 = vpop.f32.mrf.mxu0
    %10243 = vmatprep.mubr.bf16.mxu0 %v10054
    %10244 = vmatmul.mubr.bf16.gmra.mxu0 %v10053
    %v10245 = vpop.f32.mrf.mxu0
    %v10246 = vadd.f32 %v9993, %v10245
    %v10247 = vpop.f32.mrf.mxu0
    %v10248 = vpop.f32.mrf.mxu0
    %v10249 = vadd.f32 %v9993, %v10248
    %v10250 = vpop.f32.mrf.mxu0
    %10251 = vmatprep.mubr.bf16.mxu0 %v10056
    %10252 = vmatmul.mubr.bf16.gmra.mxu0 %v10055
    %v10253 = vpop.f32.mrf.mxu0
    %v10254 = vadd.f32 %v9993, %v10253
    %v10255 = vpop.f32.mrf.mxu0
    %v10256 = vpop.f32.mrf.mxu0
    %v10257 = vadd.f32 %v9993, %v10256
    %v10258 = vpop.f32.mrf.mxu0
    %10259 = vmatprep.mubr.bf16.mxu0 %v10058
    %10260 = vmatmul.mubr.bf16.gmra.mxu0 %v10057
    %v10261 = vpop.f32.mrf.mxu0
    %v10262 = vadd.f32 %v9993, %v10261
    %v10263 = vpop.f32.mrf.mxu0
    %v10264 = vpop.f32.mrf.mxu0
    %v10265 = vadd.f32 %v9993, %v10264
    %v10266 = vpop.f32.mrf.mxu0
    %10267 = vdwg.mxu0
    %10268 = vst [vmem:[#allocation9] sm:$0xff] %v10206
    %10269 = vst [vmem:[#allocation9 + $0x8] sm:$0xff] %v10209
    %10270 = vst [vmem:[#allocation9 + $0x10] sm:$0xff] %v10214
    %10271 = vst [vmem:[#allocation9 + $0x18] sm:$0xff] %v10217
    %10272 = vst [vmem:[#allocation9 + $0x20] sm:$0xff] %v10222
    %10273 = vst [vmem:[#allocation9 + $0x28] sm:$0xff] %v10225
    %10274 = vst [vmem:[#allocation9 + $0x30] sm:$0xff] %v10230
    %10275 = vst [vmem:[#allocation9 + $0x38] sm:$0xff] %v10233
    %10276 = vst [vmem:[#allocation9 + $0x40] sm:$0xff] %v10238
    %10277 = vst [vmem:[#allocation9 + $0x48] sm:$0xff] %v10241
    %10278 = vst [vmem:[#allocation9 + $0x50] sm:$0xff] %v10246
    %10279 = vst [vmem:[#allocation9 + $0x58] sm:$0xff] %v10249
    %10280 = vst [vmem:[#allocation9 + $0x60] sm:$0xff] %v10254
    %10281 = vst [vmem:[#allocation9 + $0x68] sm:$0xff] %v10257
    %10282 = vst [vmem:[#allocation9 + $0x70] sm:$0xff] %v10262
    %10283 = vst [vmem:[#allocation9 + $0x78] sm:$0xff] %v10265
    // Predicated region
    $region34: #{tpu_custom_call.1} parent=1 // pred_check
      _
    $region35: #{tpu_custom_call.1} parent=1 // pred_check_branch
      %10285 = sbr.rel (0) target = $region37
    $region36: #{tpu_custom_call.1} parent=1 // pred_region
      %s10287 = ssub.s32 2048, 2048
      %10288 = vsyncadd [#allocation6], %s10287
      %s10289 = sshll.u32 [#allocation9], 4
      %s10290 = int_to_ptr.vmem [resolvable:$true] %s10289
      %10295 = dma.vmem_to_hbm [thread:$0]  %s10290, 2048, %s6, [#allocation6], 128, 128, 8
    $region37: #{tpu_custom_call.1} parent=1 // pred_fallthru
      _
    // Predicated region
    $region38: #{tpu_custom_call.1} parent=1 // pred_check
      _
    $region39: #{tpu_custom_call.1} parent=1 // pred_check_branch
      %10297 = sbr.rel (0) target = $region41
    $region40: #{tpu_custom_call.1} parent=1 // pred_region
      %10298 = dma.done [#allocation6], 2048
    $region41: #{tpu_custom_call.1} parent=1 // pred_fallthru
      _
    %10299 = vsyncpa [#allocation5], 1
    %10300 = vsyncpa [#allocation8], 1
    %10301 = vsyncpa [#allocation6], 1

</llo_original>
